<compile_context>
chip_gen: v7x
topology: tpu7x:2x2x1
jax: 0.10.0
libtpu: 0.0.40
codegen_flags: <defaults>
</compile_context>

<pallas_src>
import functools

import jax
import jax.numpy as jnp
import numpy as np
from jax.experimental import pallas as pl
from jax.experimental.pallas import tpu as pltpu

N_CLASSES = 10
N_HIDDEN = 256
N_INPUT = 28
H4 = 4 * N_HIDDEN


def _cell_update(gates, c_prev):
    """PyTorch LSTM cell nonlinearity. gates: (B, 4H) f32, order (i, f, g, o)."""
    i = jax.nn.sigmoid(gates[:, 0 * N_HIDDEN : 1 * N_HIDDEN])
    f = jax.nn.sigmoid(gates[:, 1 * N_HIDDEN : 2 * N_HIDDEN])
    g = jnp.tanh(gates[:, 2 * N_HIDDEN : 3 * N_HIDDEN])
    o = jax.nn.sigmoid(gates[:, 3 * N_HIDDEN : 4 * N_HIDDEN])
    c_new = f * c_prev + i * g
    h_new = o * jnp.tanh(c_new)
    return h_new, c_new


def rnn_kernel(
    xg1_ref,     # (Tc, Bb, 4H) bf16 : precomputed x @ W_ih1 + b1 for this time tile
    whh1_ref,    # (H, 4H)  bf16     : layer-1 recurrent weights
    wih2_ref,    # (H, 4H)  bf16     : layer-2 input weights
    whh2_ref,    # (H, 4H)  bf16     : layer-2 recurrent weights
    b2_ref,      # (1, 4H)  f32      : layer-2 folded bias
    h2_out_ref,  # (Bb, H)  f32      : final layer-2 hidden state (lane-dense)
    h1s,         # (Bb, H)  f32 scratch : layer-1 h carried across time tiles
    c1s,         # (Bb, H)  f32 scratch
    h2s,         # (Bb, H)  f32 scratch
    c2s,         # (Bb, H)  f32 scratch
    *,
    t_total,     # real (unpadded) sequence length
    tc,          # timesteps per grid step
    unroll,      # inner-loop unroll factor
):
    t = pl.program_id(1)
    nt = pl.num_programs(1)

    @pl.when(t == 0)
    def _():
        h1s[...] = jnp.zeros_like(h1s)
        c1s[...] = jnp.zeros_like(c1s)
        h2s[...] = jnp.zeros_like(h2s)
        c2s[...] = jnp.zeros_like(c2s)

    bb = h1s.shape[0]
    # Loop-invariant hoist: one broadcast instead of one per unrolled timestep.
    b2b = jnp.broadcast_to(b2_ref[...], (bb, b2_ref.shape[1]))

    t0 = t * tc

    def step(tt, carry):
        h1, c1, h2, c2 = carry

        # Layer-2 recurrent dot first: depends only on h2_{t-1}, so these MXU
        # pushes overlap layer-1's EUP/VPU chain below (de-fused from the old
        # single [h1;h2] @ [W_ih2;W_hh2] matmul, which serialized on h1_t and
        # a VMEM concat round-trip).
        g2_rec = jnp.dot(
            h2.astype(jnp.bfloat16), whh2_ref[...],
            preferred_element_type=jnp.float32,
        )

        # ----- layer 1 (input projection hoisted out of the kernel) -----
        g1 = xg1_ref[tt].astype(jnp.float32) + jnp.dot(
            h1.astype(jnp.bfloat16), whh1_ref[...],
            preferred_element_type=jnp.float32,
        )
        h1n, c1n = _cell_update(g1, c1)

        # ----- layer 2 (second half of the gate pre-activation) -----
        g2 = g2_rec + jnp.dot(
            h1n.astype(jnp.bfloat16), wih2_ref[...],
            preferred_element_type=jnp.float32,
        ) + b2b
        h2n, c2n = _cell_update(g2, c2)

        if t_total % tc:  # static: padded tail timesteps exist -> hold state
            keep = jnp.where(t0 + tt < t_total, 1.0, 0.0).astype(jnp.float32)
            drop = 1.0 - keep
            h1n = keep * h1n + drop * h1
            c1n = keep * c1n + drop * c1
            h2n = keep * h2n + drop * h2
            c2n = keep * c2n + drop * c2
        return (h1n, c1n, h2n, c2n)

    # State stays vreg-resident inside the tile; VMEM scratch is touched only
    # at tile entry/exit.  Partial unroll keeps LLO scheduling visibility
    # across steps without bloating the bundle stream.
    carry0 = (h1s[...], c1s[...], h2s[...], c2s[...])
    h1, c1, h2, c2 = jax.lax.fori_loop(0, tc, step, carry0, unroll=unroll)

    h1s[...] = h1
    c1s[...] = c1
    h2s[...] = h2
    c2s[...] = c2

    @pl.when(t == nt - 1)
    def _():
        h2_out_ref[...] = h2


@functools.partial(jax.jit, static_argnames=("batch_blocks", "unroll"))
def rnn_forward(x, params, *, batch_blocks=1, unroll=8):
    """x: (B, T, N_INPUT) float32 -> (B, N_CLASSES) float32.

    batch_blocks: set to 2 on v7x so the leading "parallel" grid axis shards
    batch halves across the two TensorCores; keep 1 on v5e/v6e (splitting the
    batch on a single core only lengthens the latency-bound recurrence).
    """
    B, T, _ = x.shape

    # Batch padding: multiple of 16*batch_blocks, minimum 16, so gate vregs
    # are not mostly empty at tiny B and the bf16 MXU LHS sublane-packs fully.
    bm = 16 * batch_blocks
    B_pad = max(bm, ((B + bm - 1) // bm) * bm)
    Bb = B_pad // batch_blocks

    # Time tiling: Tc <= 32 timesteps per grid step.  Pad T up to a multiple
    # of Tc (masked in-kernel) instead of shrinking Tc to a divisor of T.
    Tc = min(T, 32)
    T_pad = ((T + Tc - 1) // Tc) * Tc
    nt = T_pad // Tc

    x_p = jnp.pad(x, ((0, B_pad - B), (0, T_pad - T), (0, 0)))
    x_tm = jnp.transpose(x_p, (1, 0, 2))  # time-major (T_pad, B_pad, N_INPUT)

    # bf16 MXU operands (f32 accumulation everywhere).
    whh1_bf = params["whh1"].astype(jnp.bfloat16)
    wih2_bf = params["wih2"].astype(jnp.bfloat16)
    whh2_bf = params["whh2"].astype(jnp.bfloat16)

    # Hoisted layer-1 input projection: one big matmul instead of T tiny ones.
    # Stored bf16: it is the only streamed HBM operand.
    xg1 = (
        jnp.einsum(
            "tbi,ig->tbg",
            x_tm.astype(jnp.bfloat16),
            params["wih1"].astype(jnp.bfloat16),
            preferred_element_type=jnp.float32,
        )
        + params["b1"]
    ).astype(jnp.bfloat16)  # (T_pad, B_pad, 4H)

    kernel = functools.partial(
        rnn_kernel, t_total=T, tc=Tc, unroll=max(1, min(unroll, Tc))
    )

    grid_spec = pltpu.PrefetchScalarGridSpec(
        num_scalar_prefetch=0,
        grid=(batch_blocks, nt),
        in_specs=[
            pl.BlockSpec((Tc, Bb, H4), lambda b, t: (t, b, 0)),       # xg1 tile
            pl.BlockSpec((N_HIDDEN, H4), lambda b, t: (0, 0)),        # whh1
            pl.BlockSpec((N_HIDDEN, H4), lambda b, t: (0, 0)),        # wih2
            pl.BlockSpec((N_HIDDEN, H4), lambda b, t: (0, 0)),        # whh2
            pl.BlockSpec((1, H4), lambda b, t: (0, 0)),               # b2
        ],
        out_specs=pl.BlockSpec((Bb, N_HIDDEN), lambda b, t: (b, 0)),
        scratch_shapes=[pltpu.VMEM((Bb, N_HIDDEN), jnp.float32)] * 4,  # h1,c1,h2,c2
    )

    h2_last = pl.pallas_call(
        kernel,
        out_shape=jax.ShapeDtypeStruct((B_pad, N_HIDDEN), jnp.float32),
        grid_spec=grid_spec,
        compiler_params=pltpu.CompilerParams(
            dimension_semantics=("parallel", "arbitrary"),  # batch || , time carries state
            vmem_limit_bytes=32 * 1024 * 1024,
        ),
    )(xg1, whh1_bf, wih2_bf, whh2_bf, params["b2"])

    # Tiny FC head in XLA: in-kernel it would pad N=10 -> 128 lanes and force
    # masked partial stores; out here it is effectively free.
    return h2_last[:B] @ params["fcw"] + params["fcb"]


def init_params(key):
    """Deterministic synthetic parameters (PyTorch-style uniform init, f32)."""
    ks = jax.random.split(key, 9)
    bound = 1.0 / np.sqrt(N_HIDDEN)
    u = lambda k, shape: jax.random.uniform(
        k, shape, jnp.float32, minval=-bound, maxval=bound
    )
    return {
        # stored transposed: (in_dim, 4H); biases = b_ih + b_hh folded together
        "wih1": u(ks[0], (N_INPUT, H4)),
        "whh1": u(ks[1], (N_HIDDEN, H4)),
        "b1": u(ks[2], (1, H4)) + u(ks[3], (1, H4)),
        "wih2": u(ks[4], (N_HIDDEN, H4)),
        "whh2": u(ks[5], (N_HIDDEN, H4)),
        "b2": u(ks[6], (1, H4)) + u(ks[7], (1, H4)),
        "fcw": u(ks[8], (N_HIDDEN, N_CLASSES)),
        "fcb": jnp.zeros((1, N_CLASSES), jnp.float32),
    }


def rnn_forward_ref(x, params, mimic_kernel=False):
    """Pure-JAX reference of the same forward pass (for validation).

    mimic_kernel=True reproduces the kernel's dtype path (bf16 weights,
    bf16-rounded precomputed layer-1 gates, f32 state/gate math).
    """
    B, _, _ = x.shape
    x_tm = jnp.transpose(x, (1, 0, 2))

    if mimic_kernel:
        cast = lambda a: a.astype(jnp.bfloat16)
        xg1 = (
            jnp.einsum(
                "tbi,ig->tbg", cast(x_tm), cast(params["wih1"]),
                preferred_element_type=jnp.float32,
            )
            + params["b1"]
        ).astype(jnp.bfloat16).astype(jnp.float32)
    else:
        cast = lambda a: a
        xg1 = (
            jnp.einsum(
                "tbi,ig->tbg", x_tm, params["wih1"],
                preferred_element_type=jnp.float32,
            )
            + params["b1"]
        )

    whh1 = cast(params["whh1"])
    wih2 = cast(params["wih2"])
    whh2 = cast(params["whh2"])

    def step(carry, xg_t):
        h1, c1, h2, c2 = carry
        g1 = xg_t + jnp.dot(cast(h1), whh1, preferred_element_type=jnp.float32)
        h1, c1 = _cell_update(g1, c1)
        g2 = (
            jnp.dot(cast(h1), wih2, preferred_element_type=jnp.float32)
            + jnp.dot(cast(h2), whh2, preferred_element_type=jnp.float32)
            + params["b2"]
        )
        h2, c2 = _cell_update(g2, c2)
        return (h1, c1, h2, c2), None

    z = jnp.zeros((B, N_HIDDEN), jnp.float32)
    (_, _, h2, _), _ = jax.lax.scan(step, (z, z, z, z), xg1)
    return h2 @ params["fcw"] + params["fcb"]


if __name__ == "__main__":
    B, T = 2, 8
    key = jax.random.PRNGKey(0)
    k_x, k_p = jax.random.split(key)
    x = jax.random.normal(k_x, (B, T, N_INPUT), jnp.float32)
    params = init_params(k_p)

    out = jax.block_until_ready(rnn_forward(x, params))
    assert out.shape == (B, N_CLASSES) and out.dtype == jnp.float32

    # Numerics check against a reference following the same bf16 dtype path.
    ref_bf16 = jax.block_until_ready(rnn_forward_ref(x, params, mimic_kernel=True))
    np.testing.assert_allclose(np.asarray(out), np.asarray(ref_bf16), rtol=2e-3, atol=2e-3)

    # Loose sanity check against the full-f32 PyTorch-equivalent forward
    # (bounds the bf16 approximation error).
    ref_f32 = jax.block_until_ready(rnn_forward_ref(x, params, mimic_kernel=False))
    np.testing.assert_allclose(np.asarray(out), np.asarray(ref_f32), rtol=1e-1, atol=1e-1)

    print("KERNEL_OK")
</pallas_src>

<mosaic_0001>
module attributes {stable_mosaic.version = 11 : i64} {
  func.func @rnn_kernel(%arg0: i32, %arg1: i32, %arg2: memref<8x16x1024xbf16, #tpu.memory_space<vmem>>, %arg3: memref<256x1024xbf16, #tpu.memory_space<vmem>>, %arg4: memref<256x1024xbf16, #tpu.memory_space<vmem>>, %arg5: memref<256x1024xbf16, #tpu.memory_space<vmem>>, %arg6: memref<1x1024xf32, #tpu.memory_space<vmem>>, %arg7: memref<16x256xf32, #tpu.memory_space<vmem>>, %arg8: memref<16x256xf32, #tpu.memory_space<vmem>>, %arg9: memref<16x256xf32, #tpu.memory_space<vmem>>, %arg10: memref<16x256xf32, #tpu.memory_space<vmem>>, %arg11: memref<16x256xf32, #tpu.memory_space<vmem>>) attributes {dimension_semantics = [#tpu.dimension_semantics<parallel>, #tpu.dimension_semantics<arbitrary>], iteration_bounds = array<i64: 1, 1>, scalar_prefetch = 0 : i64, scratch_operands = 4 : i64, tpu.core_type = #tpu.core_type<tc>, window_params = [{transform_indices = @transform_0, window_bounds = array<i64: 8, 16, 1024>}, {pipeline_mode = #tpu.pipeline_mode<synchronous>, transform_indices = @transform_1, window_bounds = array<i64: 256, 1024>}, {pipeline_mode = #tpu.pipeline_mode<synchronous>, transform_indices = @transform_2, window_bounds = array<i64: 256, 1024>}, {pipeline_mode = #tpu.pipeline_mode<synchronous>, transform_indices = @transform_3, window_bounds = array<i64: 256, 1024>}, {pipeline_mode = #tpu.pipeline_mode<synchronous>, transform_indices = @transform_4, window_bounds = array<i64: 1, 1024>}, {transform_indices = @transform_5, window_bounds = array<i64: 16, 256>}]} {
    %c0_i32 = arith.constant 0 : i32
    %0 = arith.cmpi eq, %arg1, %c0_i32 : i32
    %1 = arith.extui %0 : i1 to i32
    %c0_i32_0 = arith.constant 0 : i32
    %2 = arith.cmpi ne, %1, %c0_i32_0 : i32
    scf.if %2 {
      %cst_156 = arith.constant 0.000000e+00 : f32
      %545 = vector.broadcast %cst_156 : f32 to vector<16x256xf32>
      %c0_157 = arith.constant 0 : index
      %c0_158 = arith.constant 0 : index
      %546 = vector.load %arg8[%c0_157, %c0_158] : memref<16x256xf32, #tpu.memory_space<vmem>>, vector<16x256xf32>
      tpu.vector_store %arg8[%c0_157, %c0_158], %545 {strides = array<i32>} : memref<16x256xf32, #tpu.memory_space<vmem>>, vector<16x256xf32>,
      %cst_159 = arith.constant 0.000000e+00 : f32
      %547 = vector.broadcast %cst_159 : f32 to vector<16x256xf32>
      %c0_160 = arith.constant 0 : index
      %c0_161 = arith.constant 0 : index
      %548 = vector.load %arg9[%c0_160, %c0_161] : memref<16x256xf32, #tpu.memory_space<vmem>>, vector<16x256xf32>
      tpu.vector_store %arg9[%c0_160, %c0_161], %547 {strides = array<i32>} : memref<16x256xf32, #tpu.memory_space<vmem>>, vector<16x256xf32>,
      %cst_162 = arith.constant 0.000000e+00 : f32
      %549 = vector.broadcast %cst_162 : f32 to vector<16x256xf32>
      %c0_163 = arith.constant 0 : index
      %c0_164 = arith.constant 0 : index
      %550 = vector.load %arg10[%c0_163, %c0_164] : memref<16x256xf32, #tpu.memory_space<vmem>>, vector<16x256xf32>
      tpu.vector_store %arg10[%c0_163, %c0_164], %549 {strides = array<i32>} : memref<16x256xf32, #tpu.memory_space<vmem>>, vector<16x256xf32>,
      %cst_165 = arith.constant 0.000000e+00 : f32
      %551 = vector.broadcast %cst_165 : f32 to vector<16x256xf32>
      %c0_166 = arith.constant 0 : index
      %c0_167 = arith.constant 0 : index
      %552 = vector.load %arg11[%c0_166, %c0_167] : memref<16x256xf32, #tpu.memory_space<vmem>>, vector<16x256xf32>
      tpu.vector_store %arg11[%c0_166, %c0_167], %551 {strides = array<i32>} : memref<16x256xf32, #tpu.memory_space<vmem>>, vector<16x256xf32>,
    } else {
    }
    %c0 = arith.constant 0 : index
    %c0_1 = arith.constant 0 : index
    %3 = vector.load %arg6[%c0, %c0_1] : memref<1x1024xf32, #tpu.memory_space<vmem>>, vector<1x1024xf32>
    %4 = vector.shape_cast %3 : vector<1x1024xf32> to vector<1x1024xf32>
    %5 = vector.broadcast %4 : vector<1x1024xf32> to vector<16x1024xf32>
    %c0_2 = arith.constant 0 : index
    %c0_3 = arith.constant 0 : index
    %6 = vector.load %arg8[%c0_2, %c0_3] : memref<16x256xf32, #tpu.memory_space<vmem>>, vector<16x256xf32>
    %c0_4 = arith.constant 0 : index
    %c0_5 = arith.constant 0 : index
    %7 = vector.load %arg9[%c0_4, %c0_5] : memref<16x256xf32, #tpu.memory_space<vmem>>, vector<16x256xf32>
    %c0_6 = arith.constant 0 : index
    %c0_7 = arith.constant 0 : index
    %8 = vector.load %arg10[%c0_6, %c0_7] : memref<16x256xf32, #tpu.memory_space<vmem>>, vector<16x256xf32>
    %c0_8 = arith.constant 0 : index
    %c0_9 = arith.constant 0 : index
    %9 = vector.load %arg11[%c0_8, %c0_9] : memref<16x256xf32, #tpu.memory_space<vmem>>, vector<16x256xf32>
    %c0_i32_10 = arith.constant 0 : i32
    %10 = arith.truncf %8 : vector<16x256xf32> to vector<16x256xbf16>
    %c0_11 = arith.constant 0 : index
    %c0_12 = arith.constant 0 : index
    %11 = vector.load %arg5[%c0_11, %c0_12] : memref<256x1024xbf16, #tpu.memory_space<vmem>>, vector<256x1024xbf16>
    %cst = arith.constant dense<0.000000e+00> : vector<16x1024xf32>
    %12 = tpu.matmul %10, %11, %cst {dimension_numbers = #tpu.dot_dimension_numbers<[1], [0], [0], [1], [0, 0, 1, 1], [], []>} : vector<16x256xbf16>, vector<256x1024xbf16>, vector<16x1024xf32> -> vector<16x1024xf32>
    %13 = arith.index_cast %c0_i32_10 : i32 to index
    %c0_13 = arith.constant 0 : index
    %c0_14 = arith.constant 0 : index
    %14 = vector.load %arg2[%13, %c0_13, %c0_14] : memref<8x16x1024xbf16, #tpu.memory_space<vmem>>, vector<1x16x1024xbf16>
    %15 = vector.shape_cast %14 : vector<1x16x1024xbf16> to vector<16x1024xbf16>
    %16 = arith.extf %15 : vector<16x1024xbf16> to vector<16x1024xf32>
    %17 = arith.truncf %6 : vector<16x256xf32> to vector<16x256xbf16>
    %c0_15 = arith.constant 0 : index
    %c0_16 = arith.constant 0 : index
    %18 = vector.load %arg3[%c0_15, %c0_16] : memref<256x1024xbf16, #tpu.memory_space<vmem>>, vector<256x1024xbf16>
    %cst_17 = arith.constant dense<0.000000e+00> : vector<16x1024xf32>
    %19 = tpu.matmul %17, %18, %cst_17 {dimension_numbers = #tpu.dot_dimension_numbers<[1], [0], [0], [1], [0, 0, 1, 1], [], []>} : vector<16x256xbf16>, vector<256x1024xbf16>, vector<16x1024xf32> -> vector<16x1024xf32>
    %20 = arith.addf %16, %19 : vector<16x1024xf32>
    %21 = vector.extract_strided_slice %20 {offsets = [0, 0], sizes = [16, 256], strides = [1, 1]} : vector<16x1024xf32> to vector<16x256xf32>
    %22 = arith.negf %21 : vector<16x256xf32>
    %23 = math.exp %22 : vector<16x256xf32>
    %cst_18 = arith.constant 1.000000e+00 : f32
    %24 = vector.broadcast %cst_18 : f32 to vector<16x256xf32>
    %25 = arith.addf %24, %23 : vector<16x256xf32>
    %26 = arith.divf %24, %25 : vector<16x256xf32>
    %27 = vector.extract_strided_slice %20 {offsets = [0, 256], sizes = [16, 256], strides = [1, 1]} : vector<16x1024xf32> to vector<16x256xf32>
    %28 = arith.negf %27 : vector<16x256xf32>
    %29 = math.exp %28 : vector<16x256xf32>
    %cst_19 = arith.constant 1.000000e+00 : f32
    %30 = vector.broadcast %cst_19 : f32 to vector<16x256xf32>
    %31 = arith.addf %30, %29 : vector<16x256xf32>
    %32 = arith.divf %30, %31 : vector<16x256xf32>
    %33 = vector.extract_strided_slice %20 {offsets = [0, 512], sizes = [16, 256], strides = [1, 1]} : vector<16x1024xf32> to vector<16x256xf32>
    %34 = math.tanh %33 : vector<16x256xf32>
    %35 = vector.extract_strided_slice %20 {offsets = [0, 768], sizes = [16, 256], strides = [1, 1]} : vector<16x1024xf32> to vector<16x256xf32>
    %36 = arith.negf %35 : vector<16x256xf32>
    %37 = math.exp %36 : vector<16x256xf32>
    %cst_20 = arith.constant 1.000000e+00 : f32
    %38 = vector.broadcast %cst_20 : f32 to vector<16x256xf32>
    %39 = arith.addf %38, %37 : vector<16x256xf32>
    %40 = arith.divf %38, %39 : vector<16x256xf32>
    %41 = arith.mulf %32, %7 : vector<16x256xf32>
    %42 = arith.mulf %26, %34 : vector<16x256xf32>
    %43 = arith.addf %41, %42 : vector<16x256xf32>
    %44 = math.tanh %43 : vector<16x256xf32>
    %45 = arith.mulf %40, %44 : vector<16x256xf32>
    %46 = arith.truncf %45 : vector<16x256xf32> to vector<16x256xbf16>
    %c0_21 = arith.constant 0 : index
    %c0_22 = arith.constant 0 : index
    %47 = vector.load %arg4[%c0_21, %c0_22] : memref<256x1024xbf16, #tpu.memory_space<vmem>>, vector<256x1024xbf16>
    %cst_23 = arith.constant dense<0.000000e+00> : vector<16x1024xf32>
    %48 = tpu.matmul %46, %47, %cst_23 {dimension_numbers = #tpu.dot_dimension_numbers<[1], [0], [0], [1], [0, 0, 1, 1], [], []>} : vector<16x256xbf16>, vector<256x1024xbf16>, vector<16x1024xf32> -> vector<16x1024xf32>
    %49 = arith.addf %12, %48 : vector<16x1024xf32>
    %50 = arith.addf %49, %5 : vector<16x1024xf32>
    %51 = vector.extract_strided_slice %50 {offsets = [0, 0], sizes = [16, 256], strides = [1, 1]} : vector<16x1024xf32> to vector<16x256xf32>
    %52 = arith.negf %51 : vector<16x256xf32>
    %53 = math.exp %52 : vector<16x256xf32>
    %cst_24 = arith.constant 1.000000e+00 : f32
    %54 = vector.broadcast %cst_24 : f32 to vector<16x256xf32>
    %55 = arith.addf %54, %53 : vector<16x256xf32>
    %56 = arith.divf %54, %55 : vector<16x256xf32>
    %57 = vector.extract_strided_slice %50 {offsets = [0, 256], sizes = [16, 256], strides = [1, 1]} : vector<16x1024xf32> to vector<16x256xf32>
    %58 = arith.negf %57 : vector<16x256xf32>
    %59 = math.exp %58 : vector<16x256xf32>
    %cst_25 = arith.constant 1.000000e+00 : f32
    %60 = vector.broadcast %cst_25 : f32 to vector<16x256xf32>
    %61 = arith.addf %60, %59 : vector<16x256xf32>
    %62 = arith.divf %60, %61 : vector<16x256xf32>
    %63 = vector.extract_strided_slice %50 {offsets = [0, 512], sizes = [16, 256], strides = [1, 1]} : vector<16x1024xf32> to vector<16x256xf32>
    %64 = math.tanh %63 : vector<16x256xf32>
    %65 = vector.extract_strided_slice %50 {offsets = [0, 768], sizes = [16, 256], strides = [1, 1]} : vector<16x1024xf32> to vector<16x256xf32>
    %66 = arith.negf %65 : vector<16x256xf32>
    %67 = math.exp %66 : vector<16x256xf32>
    %cst_26 = arith.constant 1.000000e+00 : f32
    %68 = vector.broadcast %cst_26 : f32 to vector<16x256xf32>
    %69 = arith.addf %68, %67 : vector<16x256xf32>
    %70 = arith.divf %68, %69 : vector<16x256xf32>
    %71 = arith.mulf %62, %9 : vector<16x256xf32>
    %72 = arith.mulf %56, %64 : vector<16x256xf32>
    %73 = arith.addf %71, %72 : vector<16x256xf32>
    %74 = math.tanh %73 : vector<16x256xf32>
    %75 = arith.mulf %70, %74 : vector<16x256xf32>
    %c1_i32 = arith.constant 1 : i32
    %76 = arith.truncf %75 : vector<16x256xf32> to vector<16x256xbf16>
    %c0_27 = arith.constant 0 : index
    %c0_28 = arith.constant 0 : index
    %77 = vector.load %arg5[%c0_27, %c0_28] : memref<256x1024xbf16, #tpu.memory_space<vmem>>, vector<256x1024xbf16>
    %cst_29 = arith.constant dense<0.000000e+00> : vector<16x1024xf32>
    %78 = tpu.matmul %76, %77, %cst_29 {dimension_numbers = #tpu.dot_dimension_numbers<[1], [0], [0], [1], [0, 0, 1, 1], [], []>} : vector<16x256xbf16>, vector<256x1024xbf16>, vector<16x1024xf32> -> vector<16x1024xf32>
    %79 = arith.index_cast %c1_i32 : i32 to index
    %c0_30 = arith.constant 0 : index
    %c0_31 = arith.constant 0 : index
    %80 = vector.load %arg2[%79, %c0_30, %c0_31] : memref<8x16x1024xbf16, #tpu.memory_space<vmem>>, vector<1x16x1024xbf16>
    %81 = vector.shape_cast %80 : vector<1x16x1024xbf16> to vector<16x1024xbf16>
    %82 = arith.extf %81 : vector<16x1024xbf16> to vector<16x1024xf32>
    %83 = arith.truncf %45 : vector<16x256xf32> to vector<16x256xbf16>
    %c0_32 = arith.constant 0 : index
    %c0_33 = arith.constant 0 : index
    %84 = vector.load %arg3[%c0_32, %c0_33] : memref<256x1024xbf16, #tpu.memory_space<vmem>>, vector<256x1024xbf16>
    %cst_34 = arith.constant dense<0.000000e+00> : vector<16x1024xf32>
    %85 = tpu.matmul %83, %84, %cst_34 {dimension_numbers = #tpu.dot_dimension_numbers<[1], [0], [0], [1], [0, 0, 1, 1], [], []>} : vector<16x256xbf16>, vector<256x1024xbf16>, vector<16x1024xf32> -> vector<16x1024xf32>
    %86 = arith.addf %82, %85 : vector<16x1024xf32>
    %87 = vector.extract_strided_slice %86 {offsets = [0, 0], sizes = [16, 256], strides = [1, 1]} : vector<16x1024xf32> to vector<16x256xf32>
    %88 = arith.negf %87 : vector<16x256xf32>
    %89 = math.exp %88 : vector<16x256xf32>
    %cst_35 = arith.constant 1.000000e+00 : f32
    %90 = vector.broadcast %cst_35 : f32 to vector<16x256xf32>
    %91 = arith.addf %90, %89 : vector<16x256xf32>
    %92 = arith.divf %90, %91 : vector<16x256xf32>
    %93 = vector.extract_strided_slice %86 {offsets = [0, 256], sizes = [16, 256], strides = [1, 1]} : vector<16x1024xf32> to vector<16x256xf32>
    %94 = arith.negf %93 : vector<16x256xf32>
    %95 = math.exp %94 : vector<16x256xf32>
    %cst_36 = arith.constant 1.000000e+00 : f32
    %96 = vector.broadcast %cst_36 : f32 to vector<16x256xf32>
    %97 = arith.addf %96, %95 : vector<16x256xf32>
    %98 = arith.divf %96, %97 : vector<16x256xf32>
    %99 = vector.extract_strided_slice %86 {offsets = [0, 512], sizes = [16, 256], strides = [1, 1]} : vector<16x1024xf32> to vector<16x256xf32>
    %100 = math.tanh %99 : vector<16x256xf32>
    %101 = vector.extract_strided_slice %86 {offsets = [0, 768], sizes = [16, 256], strides = [1, 1]} : vector<16x1024xf32> to vector<16x256xf32>
    %102 = arith.negf %101 : vector<16x256xf32>
    %103 = math.exp %102 : vector<16x256xf32>
    %cst_37 = arith.constant 1.000000e+00 : f32
    %104 = vector.broadcast %cst_37 : f32 to vector<16x256xf32>
    %105 = arith.addf %104, %103 : vector<16x256xf32>
    %106 = arith.divf %104, %105 : vector<16x256xf32>
    %107 = arith.mulf %98, %43 : vector<16x256xf32>
    %108 = arith.mulf %92, %100 : vector<16x256xf32>
    %109 = arith.addf %107, %108 : vector<16x256xf32>
    %110 = math.tanh %109 : vector<16x256xf32>
    %111 = arith.mulf %106, %110 : vector<16x256xf32>
    %112 = arith.truncf %111 : vector<16x256xf32> to vector<16x256xbf16>
    %c0_38 = arith.constant 0 : index
    %c0_39 = arith.constant 0 : index
    %113 = vector.load %arg4[%c0_38, %c0_39] : memref<256x1024xbf16, #tpu.memory_space<vmem>>, vector<256x1024xbf16>
    %cst_40 = arith.constant dense<0.000000e+00> : vector<16x1024xf32>
    %114 = tpu.matmul %112, %113, %cst_40 {dimension_numbers = #tpu.dot_dimension_numbers<[1], [0], [0], [1], [0, 0, 1, 1], [], []>} : vector<16x256xbf16>, vector<256x1024xbf16>, vector<16x1024xf32> -> vector<16x1024xf32>
    %115 = arith.addf %78, %114 : vector<16x1024xf32>
    %116 = arith.addf %115, %5 : vector<16x1024xf32>
    %117 = vector.extract_strided_slice %116 {offsets = [0, 0], sizes = [16, 256], strides = [1, 1]} : vector<16x1024xf32> to vector<16x256xf32>
    %118 = arith.negf %117 : vector<16x256xf32>
    %119 = math.exp %118 : vector<16x256xf32>
    %cst_41 = arith.constant 1.000000e+00 : f32
    %120 = vector.broadcast %cst_41 : f32 to vector<16x256xf32>
    %121 = arith.addf %120, %119 : vector<16x256xf32>
    %122 = arith.divf %120, %121 : vector<16x256xf32>
    %123 = vector.extract_strided_slice %116 {offsets = [0, 256], sizes = [16, 256], strides = [1, 1]} : vector<16x1024xf32> to vector<16x256xf32>
    %124 = arith.negf %123 : vector<16x256xf32>
    %125 = math.exp %124 : vector<16x256xf32>
    %cst_42 = arith.constant 1.000000e+00 : f32
    %126 = vector.broadcast %cst_42 : f32 to vector<16x256xf32>
    %127 = arith.addf %126, %125 : vector<16x256xf32>
    %128 = arith.divf %126, %127 : vector<16x256xf32>
    %129 = vector.extract_strided_slice %116 {offsets = [0, 512], sizes = [16, 256], strides = [1, 1]} : vector<16x1024xf32> to vector<16x256xf32>
    %130 = math.tanh %129 : vector<16x256xf32>
    %131 = vector.extract_strided_slice %116 {offsets = [0, 768], sizes = [16, 256], strides = [1, 1]} : vector<16x1024xf32> to vector<16x256xf32>
    %132 = arith.negf %131 : vector<16x256xf32>
    %133 = math.exp %132 : vector<16x256xf32>
    %cst_43 = arith.constant 1.000000e+00 : f32
    %134 = vector.broadcast %cst_43 : f32 to vector<16x256xf32>
    %135 = arith.addf %134, %133 : vector<16x256xf32>
    %136 = arith.divf %134, %135 : vector<16x256xf32>
    %137 = arith.mulf %128, %73 : vector<16x256xf32>
    %138 = arith.mulf %122, %130 : vector<16x256xf32>
    %139 = arith.addf %137, %138 : vector<16x256xf32>
    %140 = math.tanh %139 : vector<16x256xf32>
    %141 = arith.mulf %136, %140 : vector<16x256xf32>
    %c2_i32 = arith.constant 2 : i32
    %142 = arith.truncf %141 : vector<16x256xf32> to vector<16x256xbf16>
    %c0_44 = arith.constant 0 : index
    %c0_45 = arith.constant 0 : index
    %143 = vector.load %arg5[%c0_44, %c0_45] : memref<256x1024xbf16, #tpu.memory_space<vmem>>, vector<256x1024xbf16>
    %cst_46 = arith.constant dense<0.000000e+00> : vector<16x1024xf32>
    %144 = tpu.matmul %142, %143, %cst_46 {dimension_numbers = #tpu.dot_dimension_numbers<[1], [0], [0], [1], [0, 0, 1, 1], [], []>} : vector<16x256xbf16>, vector<256x1024xbf16>, vector<16x1024xf32> -> vector<16x1024xf32>
    %145 = arith.index_cast %c2_i32 : i32 to index
    %c0_47 = arith.constant 0 : index
    %c0_48 = arith.constant 0 : index
    %146 = vector.load %arg2[%145, %c0_47, %c0_48] : memref<8x16x1024xbf16, #tpu.memory_space<vmem>>, vector<1x16x1024xbf16>
    %147 = vector.shape_cast %146 : vector<1x16x1024xbf16> to vector<16x1024xbf16>
    %148 = arith.extf %147 : vector<16x1024xbf16> to vector<16x1024xf32>
    %149 = arith.truncf %111 : vector<16x256xf32> to vector<16x256xbf16>
    %c0_49 = arith.constant 0 : index
    %c0_50 = arith.constant 0 : index
    %150 = vector.load %arg3[%c0_49, %c0_50] : memref<256x1024xbf16, #tpu.memory_space<vmem>>, vector<256x1024xbf16>
    %cst_51 = arith.constant dense<0.000000e+00> : vector<16x1024xf32>
    %151 = tpu.matmul %149, %150, %cst_51 {dimension_numbers = #tpu.dot_dimension_numbers<[1], [0], [0], [1], [0, 0, 1, 1], [], []>} : vector<16x256xbf16>, vector<256x1024xbf16>, vector<16x1024xf32> -> vector<16x1024xf32>
    %152 = arith.addf %148, %151 : vector<16x1024xf32>
    %153 = vector.extract_strided_slice %152 {offsets = [0, 0], sizes = [16, 256], strides = [1, 1]} : vector<16x1024xf32> to vector<16x256xf32>
    %154 = arith.negf %153 : vector<16x256xf32>
    %155 = math.exp %154 : vector<16x256xf32>
    %cst_52 = arith.constant 1.000000e+00 : f32
    %156 = vector.broadcast %cst_52 : f32 to vector<16x256xf32>
    %157 = arith.addf %156, %155 : vector<16x256xf32>
    %158 = arith.divf %156, %157 : vector<16x256xf32>
    %159 = vector.extract_strided_slice %152 {offsets = [0, 256], sizes = [16, 256], strides = [1, 1]} : vector<16x1024xf32> to vector<16x256xf32>
    %160 = arith.negf %159 : vector<16x256xf32>
    %161 = math.exp %160 : vector<16x256xf32>
    %cst_53 = arith.constant 1.000000e+00 : f32
    %162 = vector.broadcast %cst_53 : f32 to vector<16x256xf32>
    %163 = arith.addf %162, %161 : vector<16x256xf32>
    %164 = arith.divf %162, %163 : vector<16x256xf32>
    %165 = vector.extract_strided_slice %152 {offsets = [0, 512], sizes = [16, 256], strides = [1, 1]} : vector<16x1024xf32> to vector<16x256xf32>
    %166 = math.tanh %165 : vector<16x256xf32>
    %167 = vector.extract_strided_slice %152 {offsets = [0, 768], sizes = [16, 256], strides = [1, 1]} : vector<16x1024xf32> to vector<16x256xf32>
    %168 = arith.negf %167 : vector<16x256xf32>
    %169 = math.exp %168 : vector<16x256xf32>
    %cst_54 = arith.constant 1.000000e+00 : f32
    %170 = vector.broadcast %cst_54 : f32 to vector<16x256xf32>
    %171 = arith.addf %170, %169 : vector<16x256xf32>
    %172 = arith.divf %170, %171 : vector<16x256xf32>
    %173 = arith.mulf %164, %109 : vector<16x256xf32>
    %174 = arith.mulf %158, %166 : vector<16x256xf32>
    %175 = arith.addf %173, %174 : vector<16x256xf32>
    %176 = math.tanh %175 : vector<16x256xf32>
    %177 = arith.mulf %172, %176 : vector<16x256xf32>
    %178 = arith.truncf %177 : vector<16x256xf32> to vector<16x256xbf16>
    %c0_55 = arith.constant 0 : index
    %c0_56 = arith.constant 0 : index
    %179 = vector.load %arg4[%c0_55, %c0_56] : memref<256x1024xbf16, #tpu.memory_space<vmem>>, vector<256x1024xbf16>
    %cst_57 = arith.constant dense<0.000000e+00> : vector<16x1024xf32>
    %180 = tpu.matmul %178, %179, %cst_57 {dimension_numbers = #tpu.dot_dimension_numbers<[1], [0], [0], [1], [0, 0, 1, 1], [], []>} : vector<16x256xbf16>, vector<256x1024xbf16>, vector<16x1024xf32> -> vector<16x1024xf32>
    %181 = arith.addf %144, %180 : vector<16x1024xf32>
    %182 = arith.addf %181, %5 : vector<16x1024xf32>
    %183 = vector.extract_strided_slice %182 {offsets = [0, 0], sizes = [16, 256], strides = [1, 1]} : vector<16x1024xf32> to vector<16x256xf32>
    %184 = arith.negf %183 : vector<16x256xf32>
    %185 = math.exp %184 : vector<16x256xf32>
    %cst_58 = arith.constant 1.000000e+00 : f32
    %186 = vector.broadcast %cst_58 : f32 to vector<16x256xf32>
    %187 = arith.addf %186, %185 : vector<16x256xf32>
    %188 = arith.divf %186, %187 : vector<16x256xf32>
    %189 = vector.extract_strided_slice %182 {offsets = [0, 256], sizes = [16, 256], strides = [1, 1]} : vector<16x1024xf32> to vector<16x256xf32>
    %190 = arith.negf %189 : vector<16x256xf32>
    %191 = math.exp %190 : vector<16x256xf32>
    %cst_59 = arith.constant 1.000000e+00 : f32
    %192 = vector.broadcast %cst_59 : f32 to vector<16x256xf32>
    %193 = arith.addf %192, %191 : vector<16x256xf32>
    %194 = arith.divf %192, %193 : vector<16x256xf32>
    %195 = vector.extract_strided_slice %182 {offsets = [0, 512], sizes = [16, 256], strides = [1, 1]} : vector<16x1024xf32> to vector<16x256xf32>
    %196 = math.tanh %195 : vector<16x256xf32>
    %197 = vector.extract_strided_slice %182 {offsets = [0, 768], sizes = [16, 256], strides = [1, 1]} : vector<16x1024xf32> to vector<16x256xf32>
    %198 = arith.negf %197 : vector<16x256xf32>
    %199 = math.exp %198 : vector<16x256xf32>
    %cst_60 = arith.constant 1.000000e+00 : f32
    %200 = vector.broadcast %cst_60 : f32 to vector<16x256xf32>
    %201 = arith.addf %200, %199 : vector<16x256xf32>
    %202 = arith.divf %200, %201 : vector<16x256xf32>
    %203 = arith.mulf %194, %139 : vector<16x256xf32>
    %204 = arith.mulf %188, %196 : vector<16x256xf32>
    %205 = arith.addf %203, %204 : vector<16x256xf32>
    %206 = math.tanh %205 : vector<16x256xf32>
    %207 = arith.mulf %202, %206 : vector<16x256xf32>
    %c3_i32 = arith.constant 3 : i32
    %208 = arith.truncf %207 : vector<16x256xf32> to vector<16x256xbf16>
    %c0_61 = arith.constant 0 : index
    %c0_62 = arith.constant 0 : index
    %209 = vector.load %arg5[%c0_61, %c0_62] : memref<256x1024xbf16, #tpu.memory_space<vmem>>, vector<256x1024xbf16>
    %cst_63 = arith.constant dense<0.000000e+00> : vector<16x1024xf32>
    %210 = tpu.matmul %208, %209, %cst_63 {dimension_numbers = #tpu.dot_dimension_numbers<[1], [0], [0], [1], [0, 0, 1, 1], [], []>} : vector<16x256xbf16>, vector<256x1024xbf16>, vector<16x1024xf32> -> vector<16x1024xf32>
    %211 = arith.index_cast %c3_i32 : i32 to index
    %c0_64 = arith.constant 0 : index
    %c0_65 = arith.constant 0 : index
    %212 = vector.load %arg2[%211, %c0_64, %c0_65] : memref<8x16x1024xbf16, #tpu.memory_space<vmem>>, vector<1x16x1024xbf16>
    %213 = vector.shape_cast %212 : vector<1x16x1024xbf16> to vector<16x1024xbf16>
    %214 = arith.extf %213 : vector<16x1024xbf16> to vector<16x1024xf32>
    %215 = arith.truncf %177 : vector<16x256xf32> to vector<16x256xbf16>
    %c0_66 = arith.constant 0 : index
    %c0_67 = arith.constant 0 : index
    %216 = vector.load %arg3[%c0_66, %c0_67] : memref<256x1024xbf16, #tpu.memory_space<vmem>>, vector<256x1024xbf16>
    %cst_68 = arith.constant dense<0.000000e+00> : vector<16x1024xf32>
    %217 = tpu.matmul %215, %216, %cst_68 {dimension_numbers = #tpu.dot_dimension_numbers<[1], [0], [0], [1], [0, 0, 1, 1], [], []>} : vector<16x256xbf16>, vector<256x1024xbf16>, vector<16x1024xf32> -> vector<16x1024xf32>
    %218 = arith.addf %214, %217 : vector<16x1024xf32>
    %219 = vector.extract_strided_slice %218 {offsets = [0, 0], sizes = [16, 256], strides = [1, 1]} : vector<16x1024xf32> to vector<16x256xf32>
    %220 = arith.negf %219 : vector<16x256xf32>
    %221 = math.exp %220 : vector<16x256xf32>
    %cst_69 = arith.constant 1.000000e+00 : f32
    %222 = vector.broadcast %cst_69 : f32 to vector<16x256xf32>
    %223 = arith.addf %222, %221 : vector<16x256xf32>
    %224 = arith.divf %222, %223 : vector<16x256xf32>
    %225 = vector.extract_strided_slice %218 {offsets = [0, 256], sizes = [16, 256], strides = [1, 1]} : vector<16x1024xf32> to vector<16x256xf32>
    %226 = arith.negf %225 : vector<16x256xf32>
    %227 = math.exp %226 : vector<16x256xf32>
    %cst_70 = arith.constant 1.000000e+00 : f32
    %228 = vector.broadcast %cst_70 : f32 to vector<16x256xf32>
    %229 = arith.addf %228, %227 : vector<16x256xf32>
    %230 = arith.divf %228, %229 : vector<16x256xf32>
    %231 = vector.extract_strided_slice %218 {offsets = [0, 512], sizes = [16, 256], strides = [1, 1]} : vector<16x1024xf32> to vector<16x256xf32>
    %232 = math.tanh %231 : vector<16x256xf32>
    %233 = vector.extract_strided_slice %218 {offsets = [0, 768], sizes = [16, 256], strides = [1, 1]} : vector<16x1024xf32> to vector<16x256xf32>
    %234 = arith.negf %233 : vector<16x256xf32>
    %235 = math.exp %234 : vector<16x256xf32>
    %cst_71 = arith.constant 1.000000e+00 : f32
    %236 = vector.broadcast %cst_71 : f32 to vector<16x256xf32>
    %237 = arith.addf %236, %235 : vector<16x256xf32>
    %238 = arith.divf %236, %237 : vector<16x256xf32>
    %239 = arith.mulf %230, %175 : vector<16x256xf32>
    %240 = arith.mulf %224, %232 : vector<16x256xf32>
    %241 = arith.addf %239, %240 : vector<16x256xf32>
    %242 = math.tanh %241 : vector<16x256xf32>
    %243 = arith.mulf %238, %242 : vector<16x256xf32>
    %244 = arith.truncf %243 : vector<16x256xf32> to vector<16x256xbf16>
    %c0_72 = arith.constant 0 : index
    %c0_73 = arith.constant 0 : index
    %245 = vector.load %arg4[%c0_72, %c0_73] : memref<256x1024xbf16, #tpu.memory_space<vmem>>, vector<256x1024xbf16>
    %cst_74 = arith.constant dense<0.000000e+00> : vector<16x1024xf32>
    %246 = tpu.matmul %244, %245, %cst_74 {dimension_numbers = #tpu.dot_dimension_numbers<[1], [0], [0], [1], [0, 0, 1, 1], [], []>} : vector<16x256xbf16>, vector<256x1024xbf16>, vector<16x1024xf32> -> vector<16x1024xf32>
    %247 = arith.addf %210, %246 : vector<16x1024xf32>
    %248 = arith.addf %247, %5 : vector<16x1024xf32>
    %249 = vector.extract_strided_slice %248 {offsets = [0, 0], sizes = [16, 256], strides = [1, 1]} : vector<16x1024xf32> to vector<16x256xf32>
    %250 = arith.negf %249 : vector<16x256xf32>
    %251 = math.exp %250 : vector<16x256xf32>
    %cst_75 = arith.constant 1.000000e+00 : f32
    %252 = vector.broadcast %cst_75 : f32 to vector<16x256xf32>
    %253 = arith.addf %252, %251 : vector<16x256xf32>
    %254 = arith.divf %252, %253 : vector<16x256xf32>
    %255 = vector.extract_strided_slice %248 {offsets = [0, 256], sizes = [16, 256], strides = [1, 1]} : vector<16x1024xf32> to vector<16x256xf32>
    %256 = arith.negf %255 : vector<16x256xf32>
    %257 = math.exp %256 : vector<16x256xf32>
    %cst_76 = arith.constant 1.000000e+00 : f32
    %258 = vector.broadcast %cst_76 : f32 to vector<16x256xf32>
    %259 = arith.addf %258, %257 : vector<16x256xf32>
    %260 = arith.divf %258, %259 : vector<16x256xf32>
    %261 = vector.extract_strided_slice %248 {offsets = [0, 512], sizes = [16, 256], strides = [1, 1]} : vector<16x1024xf32> to vector<16x256xf32>
    %262 = math.tanh %261 : vector<16x256xf32>
    %263 = vector.extract_strided_slice %248 {offsets = [0, 768], sizes = [16, 256], strides = [1, 1]} : vector<16x1024xf32> to vector<16x256xf32>
    %264 = arith.negf %263 : vector<16x256xf32>
    %265 = math.exp %264 : vector<16x256xf32>
    %cst_77 = arith.constant 1.000000e+00 : f32
    %266 = vector.broadcast %cst_77 : f32 to vector<16x256xf32>
    %267 = arith.addf %266, %265 : vector<16x256xf32>
    %268 = arith.divf %266, %267 : vector<16x256xf32>
    %269 = arith.mulf %260, %205 : vector<16x256xf32>
    %270 = arith.mulf %254, %262 : vector<16x256xf32>
    %271 = arith.addf %269, %270 : vector<16x256xf32>
    %272 = math.tanh %271 : vector<16x256xf32>
    %273 = arith.mulf %268, %272 : vector<16x256xf32>
    %c4_i32 = arith.constant 4 : i32
    %274 = arith.truncf %273 : vector<16x256xf32> to vector<16x256xbf16>
    %c0_78 = arith.constant 0 : index
    %c0_79 = arith.constant 0 : index
    %275 = vector.load %arg5[%c0_78, %c0_79] : memref<256x1024xbf16, #tpu.memory_space<vmem>>, vector<256x1024xbf16>
    %cst_80 = arith.constant dense<0.000000e+00> : vector<16x1024xf32>
    %276 = tpu.matmul %274, %275, %cst_80 {dimension_numbers = #tpu.dot_dimension_numbers<[1], [0], [0], [1], [0, 0, 1, 1], [], []>} : vector<16x256xbf16>, vector<256x1024xbf16>, vector<16x1024xf32> -> vector<16x1024xf32>
    %277 = arith.index_cast %c4_i32 : i32 to index
    %c0_81 = arith.constant 0 : index
    %c0_82 = arith.constant 0 : index
    %278 = vector.load %arg2[%277, %c0_81, %c0_82] : memref<8x16x1024xbf16, #tpu.memory_space<vmem>>, vector<1x16x1024xbf16>
    %279 = vector.shape_cast %278 : vector<1x16x1024xbf16> to vector<16x1024xbf16>
    %280 = arith.extf %279 : vector<16x1024xbf16> to vector<16x1024xf32>
    %281 = arith.truncf %243 : vector<16x256xf32> to vector<16x256xbf16>
    %c0_83 = arith.constant 0 : index
    %c0_84 = arith.constant 0 : index
    %282 = vector.load %arg3[%c0_83, %c0_84] : memref<256x1024xbf16, #tpu.memory_space<vmem>>, vector<256x1024xbf16>
    %cst_85 = arith.constant dense<0.000000e+00> : vector<16x1024xf32>
    %283 = tpu.matmul %281, %282, %cst_85 {dimension_numbers = #tpu.dot_dimension_numbers<[1], [0], [0], [1], [0, 0, 1, 1], [], []>} : vector<16x256xbf16>, vector<256x1024xbf16>, vector<16x1024xf32> -> vector<16x1024xf32>
    %284 = arith.addf %280, %283 : vector<16x1024xf32>
    %285 = vector.extract_strided_slice %284 {offsets = [0, 0], sizes = [16, 256], strides = [1, 1]} : vector<16x1024xf32> to vector<16x256xf32>
    %286 = arith.negf %285 : vector<16x256xf32>
    %287 = math.exp %286 : vector<16x256xf32>
    %cst_86 = arith.constant 1.000000e+00 : f32
    %288 = vector.broadcast %cst_86 : f32 to vector<16x256xf32>
    %289 = arith.addf %288, %287 : vector<16x256xf32>
    %290 = arith.divf %288, %289 : vector<16x256xf32>
    %291 = vector.extract_strided_slice %284 {offsets = [0, 256], sizes = [16, 256], strides = [1, 1]} : vector<16x1024xf32> to vector<16x256xf32>
    %292 = arith.negf %291 : vector<16x256xf32>
    %293 = math.exp %292 : vector<16x256xf32>
    %cst_87 = arith.constant 1.000000e+00 : f32
    %294 = vector.broadcast %cst_87 : f32 to vector<16x256xf32>
    %295 = arith.addf %294, %293 : vector<16x256xf32>
    %296 = arith.divf %294, %295 : vector<16x256xf32>
    %297 = vector.extract_strided_slice %284 {offsets = [0, 512], sizes = [16, 256], strides = [1, 1]} : vector<16x1024xf32> to vector<16x256xf32>
    %298 = math.tanh %297 : vector<16x256xf32>
    %299 = vector.extract_strided_slice %284 {offsets = [0, 768], sizes = [16, 256], strides = [1, 1]} : vector<16x1024xf32> to vector<16x256xf32>
    %300 = arith.negf %299 : vector<16x256xf32>
    %301 = math.exp %300 : vector<16x256xf32>
    %cst_88 = arith.constant 1.000000e+00 : f32
    %302 = vector.broadcast %cst_88 : f32 to vector<16x256xf32>
    %303 = arith.addf %302, %301 : vector<16x256xf32>
    %304 = arith.divf %302, %303 : vector<16x256xf32>
    %305 = arith.mulf %296, %241 : vector<16x256xf32>
    %306 = arith.mulf %290, %298 : vector<16x256xf32>
    %307 = arith.addf %305, %306 : vector<16x256xf32>
    %308 = math.tanh %307 : vector<16x256xf32>
    %309 = arith.mulf %304, %308 : vector<16x256xf32>
    %310 = arith.truncf %309 : vector<16x256xf32> to vector<16x256xbf16>
    %c0_89 = arith.constant 0 : index
    %c0_90 = arith.constant 0 : index
    %311 = vector.load %arg4[%c0_89, %c0_90] : memref<256x1024xbf16, #tpu.memory_space<vmem>>, vector<256x1024xbf16>
    %cst_91 = arith.constant dense<0.000000e+00> : vector<16x1024xf32>
    %312 = tpu.matmul %310, %311, %cst_91 {dimension_numbers = #tpu.dot_dimension_numbers<[1], [0], [0], [1], [0, 0, 1, 1], [], []>} : vector<16x256xbf16>, vector<256x1024xbf16>, vector<16x1024xf32> -> vector<16x1024xf32>
    %313 = arith.addf %276, %312 : vector<16x1024xf32>
    %314 = arith.addf %313, %5 : vector<16x1024xf32>
    %315 = vector.extract_strided_slice %314 {offsets = [0, 0], sizes = [16, 256], strides = [1, 1]} : vector<16x1024xf32> to vector<16x256xf32>
    %316 = arith.negf %315 : vector<16x256xf32>
    %317 = math.exp %316 : vector<16x256xf32>
    %cst_92 = arith.constant 1.000000e+00 : f32
    %318 = vector.broadcast %cst_92 : f32 to vector<16x256xf32>
    %319 = arith.addf %318, %317 : vector<16x256xf32>
    %320 = arith.divf %318, %319 : vector<16x256xf32>
    %321 = vector.extract_strided_slice %314 {offsets = [0, 256], sizes = [16, 256], strides = [1, 1]} : vector<16x1024xf32> to vector<16x256xf32>
    %322 = arith.negf %321 : vector<16x256xf32>
    %323 = math.exp %322 : vector<16x256xf32>
    %cst_93 = arith.constant 1.000000e+00 : f32
    %324 = vector.broadcast %cst_93 : f32 to vector<16x256xf32>
    %325 = arith.addf %324, %323 : vector<16x256xf32>
    %326 = arith.divf %324, %325 : vector<16x256xf32>
    %327 = vector.extract_strided_slice %314 {offsets = [0, 512], sizes = [16, 256], strides = [1, 1]} : vector<16x1024xf32> to vector<16x256xf32>
    %328 = math.tanh %327 : vector<16x256xf32>
    %329 = vector.extract_strided_slice %314 {offsets = [0, 768], sizes = [16, 256], strides = [1, 1]} : vector<16x1024xf32> to vector<16x256xf32>
    %330 = arith.negf %329 : vector<16x256xf32>
    %331 = math.exp %330 : vector<16x256xf32>
    %cst_94 = arith.constant 1.000000e+00 : f32
    %332 = vector.broadcast %cst_94 : f32 to vector<16x256xf32>
    %333 = arith.addf %332, %331 : vector<16x256xf32>
    %334 = arith.divf %332, %333 : vector<16x256xf32>
    %335 = arith.mulf %326, %271 : vector<16x256xf32>
    %336 = arith.mulf %320, %328 : vector<16x256xf32>
    %337 = arith.addf %335, %336 : vector<16x256xf32>
    %338 = math.tanh %337 : vector<16x256xf32>
    %339 = arith.mulf %334, %338 : vector<16x256xf32>
    %c5_i32 = arith.constant 5 : i32
    %340 = arith.truncf %339 : vector<16x256xf32> to vector<16x256xbf16>
    %c0_95 = arith.constant 0 : index
    %c0_96 = arith.constant 0 : index
    %341 = vector.load %arg5[%c0_95, %c0_96] : memref<256x1024xbf16, #tpu.memory_space<vmem>>, vector<256x1024xbf16>
    %cst_97 = arith.constant dense<0.000000e+00> : vector<16x1024xf32>
    %342 = tpu.matmul %340, %341, %cst_97 {dimension_numbers = #tpu.dot_dimension_numbers<[1], [0], [0], [1], [0, 0, 1, 1], [], []>} : vector<16x256xbf16>, vector<256x1024xbf16>, vector<16x1024xf32> -> vector<16x1024xf32>
    %343 = arith.index_cast %c5_i32 : i32 to index
    %c0_98 = arith.constant 0 : index
    %c0_99 = arith.constant 0 : index
    %344 = vector.load %arg2[%343, %c0_98, %c0_99] : memref<8x16x1024xbf16, #tpu.memory_space<vmem>>, vector<1x16x1024xbf16>
    %345 = vector.shape_cast %344 : vector<1x16x1024xbf16> to vector<16x1024xbf16>
    %346 = arith.extf %345 : vector<16x1024xbf16> to vector<16x1024xf32>
    %347 = arith.truncf %309 : vector<16x256xf32> to vector<16x256xbf16>
    %c0_100 = arith.constant 0 : index
    %c0_101 = arith.constant 0 : index
    %348 = vector.load %arg3[%c0_100, %c0_101] : memref<256x1024xbf16, #tpu.memory_space<vmem>>, vector<256x1024xbf16>
    %cst_102 = arith.constant dense<0.000000e+00> : vector<16x1024xf32>
    %349 = tpu.matmul %347, %348, %cst_102 {dimension_numbers = #tpu.dot_dimension_numbers<[1], [0], [0], [1], [0, 0, 1, 1], [], []>} : vector<16x256xbf16>, vector<256x1024xbf16>, vector<16x1024xf32> -> vector<16x1024xf32>
    %350 = arith.addf %346, %349 : vector<16x1024xf32>
    %351 = vector.extract_strided_slice %350 {offsets = [0, 0], sizes = [16, 256], strides = [1, 1]} : vector<16x1024xf32> to vector<16x256xf32>
    %352 = arith.negf %351 : vector<16x256xf32>
    %353 = math.exp %352 : vector<16x256xf32>
    %cst_103 = arith.constant 1.000000e+00 : f32
    %354 = vector.broadcast %cst_103 : f32 to vector<16x256xf32>
    %355 = arith.addf %354, %353 : vector<16x256xf32>
    %356 = arith.divf %354, %355 : vector<16x256xf32>
    %357 = vector.extract_strided_slice %350 {offsets = [0, 256], sizes = [16, 256], strides = [1, 1]} : vector<16x1024xf32> to vector<16x256xf32>
    %358 = arith.negf %357 : vector<16x256xf32>
    %359 = math.exp %358 : vector<16x256xf32>
    %cst_104 = arith.constant 1.000000e+00 : f32
    %360 = vector.broadcast %cst_104 : f32 to vector<16x256xf32>
    %361 = arith.addf %360, %359 : vector<16x256xf32>
    %362 = arith.divf %360, %361 : vector<16x256xf32>
    %363 = vector.extract_strided_slice %350 {offsets = [0, 512], sizes = [16, 256], strides = [1, 1]} : vector<16x1024xf32> to vector<16x256xf32>
    %364 = math.tanh %363 : vector<16x256xf32>
    %365 = vector.extract_strided_slice %350 {offsets = [0, 768], sizes = [16, 256], strides = [1, 1]} : vector<16x1024xf32> to vector<16x256xf32>
    %366 = arith.negf %365 : vector<16x256xf32>
    %367 = math.exp %366 : vector<16x256xf32>
    %cst_105 = arith.constant 1.000000e+00 : f32
    %368 = vector.broadcast %cst_105 : f32 to vector<16x256xf32>
    %369 = arith.addf %368, %367 : vector<16x256xf32>
    %370 = arith.divf %368, %369 : vector<16x256xf32>
    %371 = arith.mulf %362, %307 : vector<16x256xf32>
    %372 = arith.mulf %356, %364 : vector<16x256xf32>
    %373 = arith.addf %371, %372 : vector<16x256xf32>
    %374 = math.tanh %373 : vector<16x256xf32>
    %375 = arith.mulf %370, %374 : vector<16x256xf32>
    %376 = arith.truncf %375 : vector<16x256xf32> to vector<16x256xbf16>
    %c0_106 = arith.constant 0 : index
    %c0_107 = arith.constant 0 : index
    %377 = vector.load %arg4[%c0_106, %c0_107] : memref<256x1024xbf16, #tpu.memory_space<vmem>>, vector<256x1024xbf16>
    %cst_108 = arith.constant dense<0.000000e+00> : vector<16x1024xf32>
    %378 = tpu.matmul %376, %377, %cst_108 {dimension_numbers = #tpu.dot_dimension_numbers<[1], [0], [0], [1], [0, 0, 1, 1], [], []>} : vector<16x256xbf16>, vector<256x1024xbf16>, vector<16x1024xf32> -> vector<16x1024xf32>
    %379 = arith.addf %342, %378 : vector<16x1024xf32>
    %380 = arith.addf %379, %5 : vector<16x1024xf32>
    %381 = vector.extract_strided_slice %380 {offsets = [0, 0], sizes = [16, 256], strides = [1, 1]} : vector<16x1024xf32> to vector<16x256xf32>
    %382 = arith.negf %381 : vector<16x256xf32>
    %383 = math.exp %382 : vector<16x256xf32>
    %cst_109 = arith.constant 1.000000e+00 : f32
    %384 = vector.broadcast %cst_109 : f32 to vector<16x256xf32>
    %385 = arith.addf %384, %383 : vector<16x256xf32>
    %386 = arith.divf %384, %385 : vector<16x256xf32>
    %387 = vector.extract_strided_slice %380 {offsets = [0, 256], sizes = [16, 256], strides = [1, 1]} : vector<16x1024xf32> to vector<16x256xf32>
    %388 = arith.negf %387 : vector<16x256xf32>
    %389 = math.exp %388 : vector<16x256xf32>
    %cst_110 = arith.constant 1.000000e+00 : f32
    %390 = vector.broadcast %cst_110 : f32 to vector<16x256xf32>
    %391 = arith.addf %390, %389 : vector<16x256xf32>
    %392 = arith.divf %390, %391 : vector<16x256xf32>
    %393 = vector.extract_strided_slice %380 {offsets = [0, 512], sizes = [16, 256], strides = [1, 1]} : vector<16x1024xf32> to vector<16x256xf32>
    %394 = math.tanh %393 : vector<16x256xf32>
    %395 = vector.extract_strided_slice %380 {offsets = [0, 768], sizes = [16, 256], strides = [1, 1]} : vector<16x1024xf32> to vector<16x256xf32>
    %396 = arith.negf %395 : vector<16x256xf32>
    %397 = math.exp %396 : vector<16x256xf32>
    %cst_111 = arith.constant 1.000000e+00 : f32
    %398 = vector.broadcast %cst_111 : f32 to vector<16x256xf32>
    %399 = arith.addf %398, %397 : vector<16x256xf32>
    %400 = arith.divf %398, %399 : vector<16x256xf32>
    %401 = arith.mulf %392, %337 : vector<16x256xf32>
    %402 = arith.mulf %386, %394 : vector<16x256xf32>
    %403 = arith.addf %401, %402 : vector<16x256xf32>
    %404 = math.tanh %403 : vector<16x256xf32>
    %405 = arith.mulf %400, %404 : vector<16x256xf32>
    %c6_i32 = arith.constant 6 : i32
    %406 = arith.truncf %405 : vector<16x256xf32> to vector<16x256xbf16>
    %c0_112 = arith.constant 0 : index
    %c0_113 = arith.constant 0 : index
    %407 = vector.load %arg5[%c0_112, %c0_113] : memref<256x1024xbf16, #tpu.memory_space<vmem>>, vector<256x1024xbf16>
    %cst_114 = arith.constant dense<0.000000e+00> : vector<16x1024xf32>
    %408 = tpu.matmul %406, %407, %cst_114 {dimension_numbers = #tpu.dot_dimension_numbers<[1], [0], [0], [1], [0, 0, 1, 1], [], []>} : vector<16x256xbf16>, vector<256x1024xbf16>, vector<16x1024xf32> -> vector<16x1024xf32>
    %409 = arith.index_cast %c6_i32 : i32 to index
    %c0_115 = arith.constant 0 : index
    %c0_116 = arith.constant 0 : index
    %410 = vector.load %arg2[%409, %c0_115, %c0_116] : memref<8x16x1024xbf16, #tpu.memory_space<vmem>>, vector<1x16x1024xbf16>
    %411 = vector.shape_cast %410 : vector<1x16x1024xbf16> to vector<16x1024xbf16>
    %412 = arith.extf %411 : vector<16x1024xbf16> to vector<16x1024xf32>
    %413 = arith.truncf %375 : vector<16x256xf32> to vector<16x256xbf16>
    %c0_117 = arith.constant 0 : index
    %c0_118 = arith.constant 0 : index
    %414 = vector.load %arg3[%c0_117, %c0_118] : memref<256x1024xbf16, #tpu.memory_space<vmem>>, vector<256x1024xbf16>
    %cst_119 = arith.constant dense<0.000000e+00> : vector<16x1024xf32>
    %415 = tpu.matmul %413, %414, %cst_119 {dimension_numbers = #tpu.dot_dimension_numbers<[1], [0], [0], [1], [0, 0, 1, 1], [], []>} : vector<16x256xbf16>, vector<256x1024xbf16>, vector<16x1024xf32> -> vector<16x1024xf32>
    %416 = arith.addf %412, %415 : vector<16x1024xf32>
    %417 = vector.extract_strided_slice %416 {offsets = [0, 0], sizes = [16, 256], strides = [1, 1]} : vector<16x1024xf32> to vector<16x256xf32>
    %418 = arith.negf %417 : vector<16x256xf32>
    %419 = math.exp %418 : vector<16x256xf32>
    %cst_120 = arith.constant 1.000000e+00 : f32
    %420 = vector.broadcast %cst_120 : f32 to vector<16x256xf32>
    %421 = arith.addf %420, %419 : vector<16x256xf32>
    %422 = arith.divf %420, %421 : vector<16x256xf32>
    %423 = vector.extract_strided_slice %416 {offsets = [0, 256], sizes = [16, 256], strides = [1, 1]} : vector<16x1024xf32> to vector<16x256xf32>
    %424 = arith.negf %423 : vector<16x256xf32>
    %425 = math.exp %424 : vector<16x256xf32>
    %cst_121 = arith.constant 1.000000e+00 : f32
    %426 = vector.broadcast %cst_121 : f32 to vector<16x256xf32>
    %427 = arith.addf %426, %425 : vector<16x256xf32>
    %428 = arith.divf %426, %427 : vector<16x256xf32>
    %429 = vector.extract_strided_slice %416 {offsets = [0, 512], sizes = [16, 256], strides = [1, 1]} : vector<16x1024xf32> to vector<16x256xf32>
    %430 = math.tanh %429 : vector<16x256xf32>
    %431 = vector.extract_strided_slice %416 {offsets = [0, 768], sizes = [16, 256], strides = [1, 1]} : vector<16x1024xf32> to vector<16x256xf32>
    %432 = arith.negf %431 : vector<16x256xf32>
    %433 = math.exp %432 : vector<16x256xf32>
    %cst_122 = arith.constant 1.000000e+00 : f32
    %434 = vector.broadcast %cst_122 : f32 to vector<16x256xf32>
    %435 = arith.addf %434, %433 : vector<16x256xf32>
    %436 = arith.divf %434, %435 : vector<16x256xf32>
    %437 = arith.mulf %428, %373 : vector<16x256xf32>
    %438 = arith.mulf %422, %430 : vector<16x256xf32>
    %439 = arith.addf %437, %438 : vector<16x256xf32>
    %440 = math.tanh %439 : vector<16x256xf32>
    %441 = arith.mulf %436, %440 : vector<16x256xf32>
    %442 = arith.truncf %441 : vector<16x256xf32> to vector<16x256xbf16>
    %c0_123 = arith.constant 0 : index
    %c0_124 = arith.constant 0 : index
    %443 = vector.load %arg4[%c0_123, %c0_124] : memref<256x1024xbf16, #tpu.memory_space<vmem>>, vector<256x1024xbf16>
    %cst_125 = arith.constant dense<0.000000e+00> : vector<16x1024xf32>
    %444 = tpu.matmul %442, %443, %cst_125 {dimension_numbers = #tpu.dot_dimension_numbers<[1], [0], [0], [1], [0, 0, 1, 1], [], []>} : vector<16x256xbf16>, vector<256x1024xbf16>, vector<16x1024xf32> -> vector<16x1024xf32>
    %445 = arith.addf %408, %444 : vector<16x1024xf32>
    %446 = arith.addf %445, %5 : vector<16x1024xf32>
    %447 = vector.extract_strided_slice %446 {offsets = [0, 0], sizes = [16, 256], strides = [1, 1]} : vector<16x1024xf32> to vector<16x256xf32>
    %448 = arith.negf %447 : vector<16x256xf32>
    %449 = math.exp %448 : vector<16x256xf32>
    %cst_126 = arith.constant 1.000000e+00 : f32
    %450 = vector.broadcast %cst_126 : f32 to vector<16x256xf32>
    %451 = arith.addf %450, %449 : vector<16x256xf32>
    %452 = arith.divf %450, %451 : vector<16x256xf32>
    %453 = vector.extract_strided_slice %446 {offsets = [0, 256], sizes = [16, 256], strides = [1, 1]} : vector<16x1024xf32> to vector<16x256xf32>
    %454 = arith.negf %453 : vector<16x256xf32>
    %455 = math.exp %454 : vector<16x256xf32>
    %cst_127 = arith.constant 1.000000e+00 : f32
    %456 = vector.broadcast %cst_127 : f32 to vector<16x256xf32>
    %457 = arith.addf %456, %455 : vector<16x256xf32>
    %458 = arith.divf %456, %457 : vector<16x256xf32>
    %459 = vector.extract_strided_slice %446 {offsets = [0, 512], sizes = [16, 256], strides = [1, 1]} : vector<16x1024xf32> to vector<16x256xf32>
    %460 = math.tanh %459 : vector<16x256xf32>
    %461 = vector.extract_strided_slice %446 {offsets = [0, 768], sizes = [16, 256], strides = [1, 1]} : vector<16x1024xf32> to vector<16x256xf32>
    %462 = arith.negf %461 : vector<16x256xf32>
    %463 = math.exp %462 : vector<16x256xf32>
    %cst_128 = arith.constant 1.000000e+00 : f32
    %464 = vector.broadcast %cst_128 : f32 to vector<16x256xf32>
    %465 = arith.addf %464, %463 : vector<16x256xf32>
    %466 = arith.divf %464, %465 : vector<16x256xf32>
    %467 = arith.mulf %458, %403 : vector<16x256xf32>
    %468 = arith.mulf %452, %460 : vector<16x256xf32>
    %469 = arith.addf %467, %468 : vector<16x256xf32>
    %470 = math.tanh %469 : vector<16x256xf32>
    %471 = arith.mulf %466, %470 : vector<16x256xf32>
    %c7_i32 = arith.constant 7 : i32
    %472 = arith.truncf %471 : vector<16x256xf32> to vector<16x256xbf16>
    %c0_129 = arith.constant 0 : index
    %c0_130 = arith.constant 0 : index
    %473 = vector.load %arg5[%c0_129, %c0_130] : memref<256x1024xbf16, #tpu.memory_space<vmem>>, vector<256x1024xbf16>
    %cst_131 = arith.constant dense<0.000000e+00> : vector<16x1024xf32>
    %474 = tpu.matmul %472, %473, %cst_131 {dimension_numbers = #tpu.dot_dimension_numbers<[1], [0], [0], [1], [0, 0, 1, 1], [], []>} : vector<16x256xbf16>, vector<256x1024xbf16>, vector<16x1024xf32> -> vector<16x1024xf32>
    %475 = arith.index_cast %c7_i32 : i32 to index
    %c0_132 = arith.constant 0 : index
    %c0_133 = arith.constant 0 : index
    %476 = vector.load %arg2[%475, %c0_132, %c0_133] : memref<8x16x1024xbf16, #tpu.memory_space<vmem>>, vector<1x16x1024xbf16>
    %477 = vector.shape_cast %476 : vector<1x16x1024xbf16> to vector<16x1024xbf16>
    %478 = arith.extf %477 : vector<16x1024xbf16> to vector<16x1024xf32>
    %479 = arith.truncf %441 : vector<16x256xf32> to vector<16x256xbf16>
    %c0_134 = arith.constant 0 : index
    %c0_135 = arith.constant 0 : index
    %480 = vector.load %arg3[%c0_134, %c0_135] : memref<256x1024xbf16, #tpu.memory_space<vmem>>, vector<256x1024xbf16>
    %cst_136 = arith.constant dense<0.000000e+00> : vector<16x1024xf32>
    %481 = tpu.matmul %479, %480, %cst_136 {dimension_numbers = #tpu.dot_dimension_numbers<[1], [0], [0], [1], [0, 0, 1, 1], [], []>} : vector<16x256xbf16>, vector<256x1024xbf16>, vector<16x1024xf32> -> vector<16x1024xf32>
    %482 = arith.addf %478, %481 : vector<16x1024xf32>
    %483 = vector.extract_strided_slice %482 {offsets = [0, 0], sizes = [16, 256], strides = [1, 1]} : vector<16x1024xf32> to vector<16x256xf32>
    %484 = arith.negf %483 : vector<16x256xf32>
    %485 = math.exp %484 : vector<16x256xf32>
    %cst_137 = arith.constant 1.000000e+00 : f32
    %486 = vector.broadcast %cst_137 : f32 to vector<16x256xf32>
    %487 = arith.addf %486, %485 : vector<16x256xf32>
    %488 = arith.divf %486, %487 : vector<16x256xf32>
    %489 = vector.extract_strided_slice %482 {offsets = [0, 256], sizes = [16, 256], strides = [1, 1]} : vector<16x1024xf32> to vector<16x256xf32>
    %490 = arith.negf %489 : vector<16x256xf32>
    %491 = math.exp %490 : vector<16x256xf32>
    %cst_138 = arith.constant 1.000000e+00 : f32
    %492 = vector.broadcast %cst_138 : f32 to vector<16x256xf32>
    %493 = arith.addf %492, %491 : vector<16x256xf32>
    %494 = arith.divf %492, %493 : vector<16x256xf32>
    %495 = vector.extract_strided_slice %482 {offsets = [0, 512], sizes = [16, 256], strides = [1, 1]} : vector<16x1024xf32> to vector<16x256xf32>
    %496 = math.tanh %495 : vector<16x256xf32>
    %497 = vector.extract_strided_slice %482 {offsets = [0, 768], sizes = [16, 256], strides = [1, 1]} : vector<16x1024xf32> to vector<16x256xf32>
    %498 = arith.negf %497 : vector<16x256xf32>
    %499 = math.exp %498 : vector<16x256xf32>
    %cst_139 = arith.constant 1.000000e+00 : f32
    %500 = vector.broadcast %cst_139 : f32 to vector<16x256xf32>
    %501 = arith.addf %500, %499 : vector<16x256xf32>
    %502 = arith.divf %500, %501 : vector<16x256xf32>
    %503 = arith.mulf %494, %439 : vector<16x256xf32>
    %504 = arith.mulf %488, %496 : vector<16x256xf32>
    %505 = arith.addf %503, %504 : vector<16x256xf32>
    %506 = math.tanh %505 : vector<16x256xf32>
    %507 = arith.mulf %502, %506 : vector<16x256xf32>
    %508 = arith.truncf %507 : vector<16x256xf32> to vector<16x256xbf16>
    %c0_140 = arith.constant 0 : index
    %c0_141 = arith.constant 0 : index
    %509 = vector.load %arg4[%c0_140, %c0_141] : memref<256x1024xbf16, #tpu.memory_space<vmem>>, vector<256x1024xbf16>
    %cst_142 = arith.constant dense<0.000000e+00> : vector<16x1024xf32>
    %510 = tpu.matmul %508, %509, %cst_142 {dimension_numbers = #tpu.dot_dimension_numbers<[1], [0], [0], [1], [0, 0, 1, 1], [], []>} : vector<16x256xbf16>, vector<256x1024xbf16>, vector<16x1024xf32> -> vector<16x1024xf32>
    %511 = arith.addf %474, %510 : vector<16x1024xf32>
    %512 = arith.addf %511, %5 : vector<16x1024xf32>
    %513 = vector.extract_strided_slice %512 {offsets = [0, 0], sizes = [16, 256], strides = [1, 1]} : vector<16x1024xf32> to vector<16x256xf32>
    %514 = arith.negf %513 : vector<16x256xf32>
    %515 = math.exp %514 : vector<16x256xf32>
    %cst_143 = arith.constant 1.000000e+00 : f32
    %516 = vector.broadcast %cst_143 : f32 to vector<16x256xf32>
    %517 = arith.addf %516, %515 : vector<16x256xf32>
    %518 = arith.divf %516, %517 : vector<16x256xf32>
    %519 = vector.extract_strided_slice %512 {offsets = [0, 256], sizes = [16, 256], strides = [1, 1]} : vector<16x1024xf32> to vector<16x256xf32>
    %520 = arith.negf %519 : vector<16x256xf32>
    %521 = math.exp %520 : vector<16x256xf32>
    %cst_144 = arith.constant 1.000000e+00 : f32
    %522 = vector.broadcast %cst_144 : f32 to vector<16x256xf32>
    %523 = arith.addf %522, %521 : vector<16x256xf32>
    %524 = arith.divf %522, %523 : vector<16x256xf32>
    %525 = vector.extract_strided_slice %512 {offsets = [0, 512], sizes = [16, 256], strides = [1, 1]} : vector<16x1024xf32> to vector<16x256xf32>
    %526 = math.tanh %525 : vector<16x256xf32>
    %527 = vector.extract_strided_slice %512 {offsets = [0, 768], sizes = [16, 256], strides = [1, 1]} : vector<16x1024xf32> to vector<16x256xf32>
    %528 = arith.negf %527 : vector<16x256xf32>
    %529 = math.exp %528 : vector<16x256xf32>
    %cst_145 = arith.constant 1.000000e+00 : f32
    %530 = vector.broadcast %cst_145 : f32 to vector<16x256xf32>
    %531 = arith.addf %530, %529 : vector<16x256xf32>
    %532 = arith.divf %530, %531 : vector<16x256xf32>
    %533 = arith.mulf %524, %469 : vector<16x256xf32>
    %534 = arith.mulf %518, %526 : vector<16x256xf32>
    %535 = arith.addf %533, %534 : vector<16x256xf32>
    %536 = math.tanh %535 : vector<16x256xf32>
    %537 = arith.mulf %532, %536 : vector<16x256xf32>
    %c8_i32 = arith.constant 8 : i32
    %c0_146 = arith.constant 0 : index
    %c0_147 = arith.constant 0 : index
    %538 = vector.load %arg8[%c0_146, %c0_147] : memref<16x256xf32, #tpu.memory_space<vmem>>, vector<16x256xf32>
    tpu.vector_store %arg8[%c0_146, %c0_147], %507 {strides = array<i32>} : memref<16x256xf32, #tpu.memory_space<vmem>>, vector<16x256xf32>,
    %c0_148 = arith.constant 0 : index
    %c0_149 = arith.constant 0 : index
    %539 = vector.load %arg9[%c0_148, %c0_149] : memref<16x256xf32, #tpu.memory_space<vmem>>, vector<16x256xf32>
    tpu.vector_store %arg9[%c0_148, %c0_149], %505 {strides = array<i32>} : memref<16x256xf32, #tpu.memory_space<vmem>>, vector<16x256xf32>,
    %c0_150 = arith.constant 0 : index
    %c0_151 = arith.constant 0 : index
    %540 = vector.load %arg10[%c0_150, %c0_151] : memref<16x256xf32, #tpu.memory_space<vmem>>, vector<16x256xf32>
    tpu.vector_store %arg10[%c0_150, %c0_151], %537 {strides = array<i32>} : memref<16x256xf32, #tpu.memory_space<vmem>>, vector<16x256xf32>,
    %c0_152 = arith.constant 0 : index
    %c0_153 = arith.constant 0 : index
    %541 = vector.load %arg11[%c0_152, %c0_153] : memref<16x256xf32, #tpu.memory_space<vmem>>, vector<16x256xf32>
    tpu.vector_store %arg11[%c0_152, %c0_153], %535 {strides = array<i32>} : memref<16x256xf32, #tpu.memory_space<vmem>>, vector<16x256xf32>,
    %c0_i32_154 = arith.constant 0 : i32
    %542 = arith.cmpi eq, %arg1, %c0_i32_154 : i32
    %543 = arith.extui %542 : i1 to i32
    %c0_i32_155 = arith.constant 0 : i32
    %544 = arith.cmpi ne, %543, %c0_i32_155 : i32
    scf.if %544 {
      %c0_156 = arith.constant 0 : index
      %c0_157 = arith.constant 0 : index
      %545 = vector.load %arg7[%c0_156, %c0_157] : memref<16x256xf32, #tpu.memory_space<vmem>>, vector<16x256xf32>
      tpu.vector_store %arg7[%c0_156, %c0_157], %537 {strides = array<i32>} : memref<16x256xf32, #tpu.memory_space<vmem>>, vector<16x256xf32>,
    } else {
    }
    return
  }
  func.func @transform_0(%arg0: i32, %arg1: i32) -> (i32, i32, i32) {
    %c0_i32 = arith.constant 0 : i32
    %c0_i32_0 = arith.constant 0 : i32
    return %arg1, %arg0, %c0_i32 : i32, i32, i32
  }
  func.func @transform_1(%arg0: i32, %arg1: i32) -> (i32, i32) {
    %c0_i32 = arith.constant 0 : i32
    %c0_i32_0 = arith.constant 0 : i32
    %c0_i32_1 = arith.constant 0 : i32
    return %c0_i32, %c0_i32_0 : i32, i32
  }
  func.func @transform_2(%arg0: i32, %arg1: i32) -> (i32, i32) {
    %c0_i32 = arith.constant 0 : i32
    %c0_i32_0 = arith.constant 0 : i32
    %c0_i32_1 = arith.constant 0 : i32
    return %c0_i32, %c0_i32_0 : i32, i32
  }
  func.func @transform_3(%arg0: i32, %arg1: i32) -> (i32, i32) {
    %c0_i32 = arith.constant 0 : i32
    %c0_i32_0 = arith.constant 0 : i32
    %c0_i32_1 = arith.constant 0 : i32
    return %c0_i32, %c0_i32_0 : i32, i32
  }
  func.func @transform_4(%arg0: i32, %arg1: i32) -> (i32, i32) {
    %c0_i32 = arith.constant 0 : i32
    %c0_i32_0 = arith.constant 0 : i32
    %c0_i32_1 = arith.constant 0 : i32
    return %c0_i32, %c0_i32_0 : i32, i32
  }
  func.func @transform_5(%arg0: i32, %arg1: i32) -> (i32, i32) {
    %c0_i32 = arith.constant 0 : i32
    %c0_i32_0 = arith.constant 0 : i32
    return %arg0, %c0_i32 : i32, i32
  }
}

</mosaic_0001>

<llo_original>
// kernel: rnn_forward.1
$region0: #{rnn_forward.1}
  #allocation0 [shape = 'u32[]', space=smem, size = 0x4, offset = 0x4, fixed_abs, tag = 'smem constant byte address 0x4 - core index']
  #allocation1 [shape = 'u32[144,128]{1,0:T(1,128)}', space=vmem, size = 0x12000, scoped, tag = 'internal scratch']
  #allocation2 [shape = 'f32[16,256]{1,0:T(8,128)}', space=vmem, size = 0x4000, scoped, tag = 'scratch operand']
  #allocation3 [shape = 'f32[16,256]{1,0:T(8,128)}', space=vmem, size = 0x4000, scoped, tag = 'scratch operand']
  #allocation4 [shape = 'f32[16,256]{1,0:T(8,128)}', space=vmem, size = 0x4000, scoped, tag = 'scratch operand']
  #allocation5 [shape = 'f32[16,256]{1,0:T(8,128)}', space=vmem, size = 0x4000, scoped, tag = 'scratch operand']
  %s0 = inlined_call_operand.vmem [shape: bf16[8,16,1024], index: 0, kind: input, shape index: {}]
  %s1 = inlined_call_operand.vmem [shape: bf16[256,1024], index: 1, kind: input, shape index: {}]
  %s2 = inlined_call_operand.vmem [shape: bf16[256,1024], index: 2, kind: input, shape index: {}]
  %s3 = inlined_call_operand.vmem [shape: bf16[256,1024], index: 3, kind: input, shape index: {}]
  %s4 = inlined_call_operand.vmem [shape: f32[1,1024], index: 4, kind: input, shape index: {}]
  %s5 = inlined_call_operand.vmem [shape: f32[16,256], index: 5, kind: output, shape index: {}]
  %s6 = sld [smem:[#allocation0]]
  $region38: #{rnn_forward.1} parent=0
    _
  %s8 = ssub.s32 1, %s6
  %s9 = scalar_select 0, %s8, %s6
  // Predicated region
  $region2: #{rnn_forward.1} parent=0 // pred_check
    _
  $region3: #{rnn_forward.1} parent=0 // pred_check_branch
    %11 = sbr.rel (0) target = $region5
  $region4: #{rnn_forward.1} parent=0 // pred_region
    _
  $region5: #{rnn_forward.1} parent=0 // pred_fallthru
    _
  // Predicated region
  $region6: #{rnn_forward.1} parent=0 // pred_check
    _
  $region7: #{rnn_forward.1} parent=0 // pred_check_branch
    %13 = sbr.rel (0) target = $region9
  $region8: #{rnn_forward.1} parent=0 // pred_region
    _
  $region9: #{rnn_forward.1} parent=0 // pred_fallthru
    _
  // Predicated region
  $region10: #{rnn_forward.1} parent=0 // pred_check
    _
  $region11: #{rnn_forward.1} parent=0 // pred_check_branch
    %15 = sbr.rel (0) target = $region13
  $region12: #{rnn_forward.1} parent=0 // pred_region
    _
  $region13: #{rnn_forward.1} parent=0 // pred_fallthru
    _
  // Predicated region
  $region14: #{rnn_forward.1} parent=0 // pred_check
    _
  $region15: #{rnn_forward.1} parent=0 // pred_check_branch
    %17 = sbr.rel (0) target = $region17
  $region16: #{rnn_forward.1} parent=0 // pred_region
    _
  $region17: #{rnn_forward.1} parent=0 // pred_fallthru
    _
  // Predicated region
  $region18: #{rnn_forward.1} parent=0 // pred_check
    _
  $region19: #{rnn_forward.1} parent=0 // pred_check_branch
    %19 = sbr.rel (0) target = $region21
  $region20: #{rnn_forward.1} parent=0 // pred_region
    _
  $region21: #{rnn_forward.1} parent=0 // pred_fallthru
    _
  %p20 = scmp.eq.s32.totalorder 0, 0
  // Predicated region
  $region22: #{rnn_forward.1} parent=0 // pred_check
    %p21 = pneg %p20
  $region23: #{rnn_forward.1} parent=0 // pred_check_branch
    %23 = sbr.rel (%p21) target = $region25
  $region24: #{rnn_forward.1} parent=0 // pred_region
    %24 = vst [vmem:[#allocation2] sm:$0xff] 0.0
    %25 = vst [vmem:[#allocation2 + $0x8] sm:$0xff] 0.0
    %26 = vst [vmem:[#allocation2 + $0x10] sm:$0xff] 0.0
    %27 = vst [vmem:[#allocation2 + $0x18] sm:$0xff] 0.0
    %28 = vst [vmem:[#allocation3] sm:$0xff] 0.0
    %29 = vst [vmem:[#allocation3 + $0x8] sm:$0xff] 0.0
    %30 = vst [vmem:[#allocation3 + $0x10] sm:$0xff] 0.0
    %31 = vst [vmem:[#allocation3 + $0x18] sm:$0xff] 0.0
    %32 = vst [vmem:[#allocation4] sm:$0xff] 0.0
    %33 = vst [vmem:[#allocation4 + $0x8] sm:$0xff] 0.0
    %34 = vst [vmem:[#allocation4 + $0x10] sm:$0xff] 0.0
    %35 = vst [vmem:[#allocation4 + $0x18] sm:$0xff] 0.0
    %36 = vst [vmem:[#allocation5] sm:$0xff] 0.0
    %37 = vst [vmem:[#allocation5 + $0x8] sm:$0xff] 0.0
    %38 = vst [vmem:[#allocation5 + $0x10] sm:$0xff] 0.0
    %39 = vst [vmem:[#allocation5 + $0x18] sm:$0xff] 0.0
  $region25: #{rnn_forward.1} parent=0 // pred_fallthru
    _
  %v40 = vld [vmem:[%s4] sm:$0xff]
  %v42 = vlaneseq
  %v43 = vshrl.u32 %v42, 7
  %v44 = vsub.s32 0, %v43
  %v45 = vrot.slane %v40, %v44
  %v46 = vlaneseq
  %v47 = vshrl.u32 %v46, 7
  %v48 = vsub.s32 1, %v47
  %v49 = vrot.slane %v40, %v48
  %v50 = vlaneseq
  %v51 = vshrl.u32 %v50, 7
  %v52 = vsub.s32 2, %v51
  %v53 = vrot.slane %v40, %v52
  %v54 = vlaneseq
  %v55 = vshrl.u32 %v54, 7
  %v56 = vsub.s32 3, %v55
  %v57 = vrot.slane %v40, %v56
  %v58 = vlaneseq
  %v59 = vshrl.u32 %v58, 7
  %v60 = vsub.s32 4, %v59
  %v61 = vrot.slane %v40, %v60
  %v62 = vlaneseq
  %v63 = vshrl.u32 %v62, 7
  %v64 = vsub.s32 5, %v63
  %v65 = vrot.slane %v40, %v64
  %v66 = vlaneseq
  %v67 = vshrl.u32 %v66, 7
  %v68 = vsub.s32 6, %v67
  %v69 = vrot.slane %v40, %v68
  %v70 = vlaneseq
  %v71 = vshrl.u32 %v70, 7
  %v72 = vsub.s32 7, %v71
  %v73 = vrot.slane %v40, %v72
  %v82 = vld [vmem:[#allocation2] sm:$0xff]
  %v83 = vld [vmem:[#allocation2 + $0x8] sm:$0xff]
  %v84 = vld [vmem:[#allocation2 + $0x10] sm:$0xff]
  %v85 = vld [vmem:[#allocation2 + $0x18] sm:$0xff]
  %v86 = vld [vmem:[#allocation3] sm:$0xff]
  %v87 = vld [vmem:[#allocation3 + $0x8] sm:$0xff]
  %v88 = vld [vmem:[#allocation3 + $0x10] sm:$0xff]
  %v89 = vld [vmem:[#allocation3 + $0x18] sm:$0xff]
  %v90 = vld [vmem:[#allocation4] sm:$0xff]
  %v91 = vld [vmem:[#allocation4 + $0x8] sm:$0xff]
  %v92 = vld [vmem:[#allocation4 + $0x10] sm:$0xff]
  %v93 = vld [vmem:[#allocation4 + $0x18] sm:$0xff]
  %v94 = vld [vmem:[#allocation5] sm:$0xff]
  %v95 = vld [vmem:[#allocation5 + $0x8] sm:$0xff]
  %v96 = vld [vmem:[#allocation5 + $0x10] sm:$0xff]
  %v97 = vld [vmem:[#allocation5 + $0x18] sm:$0xff]
  %v98 = vpack.c.bf16 %v92, %v90
  %v99 = vpack.c.bf16 %v93, %v91
  %v100 = vld [vmem:[%s3] sm:$0xff]
  %v101 = vld [vmem:[%s3 + $0x8] sm:$0xff]
  %v102 = vld [vmem:[%s3 + $0x10] sm:$0xff]
  %v103 = vld [vmem:[%s3 + $0x18] sm:$0xff]
  %v104 = vld [vmem:[%s3 + $0x20] sm:$0xff]
  %v105 = vld [vmem:[%s3 + $0x28] sm:$0xff]
  %v106 = vld [vmem:[%s3 + $0x30] sm:$0xff]
  %v107 = vld [vmem:[%s3 + $0x38] sm:$0xff]
  %v108 = vld [vmem:[%s3 + $0x40] sm:$0xff]
  %v109 = vld [vmem:[%s3 + $0x48] sm:$0xff]
  %v110 = vld [vmem:[%s3 + $0x50] sm:$0xff]
  %v111 = vld [vmem:[%s3 + $0x58] sm:$0xff]
  %v112 = vld [vmem:[%s3 + $0x60] sm:$0xff]
  %v113 = vld [vmem:[%s3 + $0x68] sm:$0xff]
  %v114 = vld [vmem:[%s3 + $0x70] sm:$0xff]
  %v115 = vld [vmem:[%s3 + $0x78] sm:$0xff]
  %v116 = vld [vmem:[%s3 + $0x80] sm:$0xff]
  %v117 = vld [vmem:[%s3 + $0x88] sm:$0xff]
  %v118 = vld [vmem:[%s3 + $0x90] sm:$0xff]
  %v119 = vld [vmem:[%s3 + $0x98] sm:$0xff]
  %v120 = vld [vmem:[%s3 + $0xa0] sm:$0xff]
  %v121 = vld [vmem:[%s3 + $0xa8] sm:$0xff]
  %v122 = vld [vmem:[%s3 + $0xb0] sm:$0xff]
  %v123 = vld [vmem:[%s3 + $0xb8] sm:$0xff]
  %v124 = vld [vmem:[%s3 + $0xc0] sm:$0xff]
  %v125 = vld [vmem:[%s3 + $0xc8] sm:$0xff]
  %v126 = vld [vmem:[%s3 + $0xd0] sm:$0xff]
  %v127 = vld [vmem:[%s3 + $0xd8] sm:$0xff]
  %v128 = vld [vmem:[%s3 + $0xe0] sm:$0xff]
  %v129 = vld [vmem:[%s3 + $0xe8] sm:$0xff]
  %v130 = vld [vmem:[%s3 + $0xf0] sm:$0xff]
  %v131 = vld [vmem:[%s3 + $0xf8] sm:$0xff]
  %v132 = vld [vmem:[%s3 + $0x100] sm:$0xff]
  %v133 = vld [vmem:[%s3 + $0x108] sm:$0xff]
  %v134 = vld [vmem:[%s3 + $0x110] sm:$0xff]
  %v135 = vld [vmem:[%s3 + $0x118] sm:$0xff]
  %v136 = vld [vmem:[%s3 + $0x120] sm:$0xff]
  %v137 = vld [vmem:[%s3 + $0x128] sm:$0xff]
  %v138 = vld [vmem:[%s3 + $0x130] sm:$0xff]
  %v139 = vld [vmem:[%s3 + $0x138] sm:$0xff]
  %v140 = vld [vmem:[%s3 + $0x140] sm:$0xff]
  %v141 = vld [vmem:[%s3 + $0x148] sm:$0xff]
  %v142 = vld [vmem:[%s3 + $0x150] sm:$0xff]
  %v143 = vld [vmem:[%s3 + $0x158] sm:$0xff]
  %v144 = vld [vmem:[%s3 + $0x160] sm:$0xff]
  %v145 = vld [vmem:[%s3 + $0x168] sm:$0xff]
  %v146 = vld [vmem:[%s3 + $0x170] sm:$0xff]
  %v147 = vld [vmem:[%s3 + $0x178] sm:$0xff]
  %v148 = vld [vmem:[%s3 + $0x180] sm:$0xff]
  %v149 = vld [vmem:[%s3 + $0x188] sm:$0xff]
  %v150 = vld [vmem:[%s3 + $0x190] sm:$0xff]
  %v151 = vld [vmem:[%s3 + $0x198] sm:$0xff]
  %v152 = vld [vmem:[%s3 + $0x1a0] sm:$0xff]
  %v153 = vld [vmem:[%s3 + $0x1a8] sm:$0xff]
  %v154 = vld [vmem:[%s3 + $0x1b0] sm:$0xff]
  %v155 = vld [vmem:[%s3 + $0x1b8] sm:$0xff]
  %v156 = vld [vmem:[%s3 + $0x1c0] sm:$0xff]
  %v157 = vld [vmem:[%s3 + $0x1c8] sm:$0xff]
  %v158 = vld [vmem:[%s3 + $0x1d0] sm:$0xff]
  %v159 = vld [vmem:[%s3 + $0x1d8] sm:$0xff]
  %v160 = vld [vmem:[%s3 + $0x1e0] sm:$0xff]
  %v161 = vld [vmem:[%s3 + $0x1e8] sm:$0xff]
  %v162 = vld [vmem:[%s3 + $0x1f0] sm:$0xff]
  %v163 = vld [vmem:[%s3 + $0x1f8] sm:$0xff]
  %v164 = vld [vmem:[%s3 + $0x200] sm:$0xff]
  %v165 = vld [vmem:[%s3 + $0x208] sm:$0xff]
  %v166 = vld [vmem:[%s3 + $0x210] sm:$0xff]
  %v167 = vld [vmem:[%s3 + $0x218] sm:$0xff]
  %v168 = vld [vmem:[%s3 + $0x220] sm:$0xff]
  %v169 = vld [vmem:[%s3 + $0x228] sm:$0xff]
  %v170 = vld [vmem:[%s3 + $0x230] sm:$0xff]
  %v171 = vld [vmem:[%s3 + $0x238] sm:$0xff]
  %v172 = vld [vmem:[%s3 + $0x240] sm:$0xff]
  %v173 = vld [vmem:[%s3 + $0x248] sm:$0xff]
  %v174 = vld [vmem:[%s3 + $0x250] sm:$0xff]
  %v175 = vld [vmem:[%s3 + $0x258] sm:$0xff]
  %v176 = vld [vmem:[%s3 + $0x260] sm:$0xff]
  %v177 = vld [vmem:[%s3 + $0x268] sm:$0xff]
  %v178 = vld [vmem:[%s3 + $0x270] sm:$0xff]
  %v179 = vld [vmem:[%s3 + $0x278] sm:$0xff]
  %v180 = vld [vmem:[%s3 + $0x280] sm:$0xff]
  %v181 = vld [vmem:[%s3 + $0x288] sm:$0xff]
  %v182 = vld [vmem:[%s3 + $0x290] sm:$0xff]
  %v183 = vld [vmem:[%s3 + $0x298] sm:$0xff]
  %v184 = vld [vmem:[%s3 + $0x2a0] sm:$0xff]
  %v185 = vld [vmem:[%s3 + $0x2a8] sm:$0xff]
  %v186 = vld [vmem:[%s3 + $0x2b0] sm:$0xff]
  %v187 = vld [vmem:[%s3 + $0x2b8] sm:$0xff]
  %v188 = vld [vmem:[%s3 + $0x2c0] sm:$0xff]
  %v189 = vld [vmem:[%s3 + $0x2c8] sm:$0xff]
  %v190 = vld [vmem:[%s3 + $0x2d0] sm:$0xff]
  %v191 = vld [vmem:[%s3 + $0x2d8] sm:$0xff]
  %v192 = vld [vmem:[%s3 + $0x2e0] sm:$0xff]
  %v193 = vld [vmem:[%s3 + $0x2e8] sm:$0xff]
  %v194 = vld [vmem:[%s3 + $0x2f0] sm:$0xff]
  %v195 = vld [vmem:[%s3 + $0x2f8] sm:$0xff]
  %v196 = vld [vmem:[%s3 + $0x300] sm:$0xff]
  %v197 = vld [vmem:[%s3 + $0x308] sm:$0xff]
  %v198 = vld [vmem:[%s3 + $0x310] sm:$0xff]
  %v199 = vld [vmem:[%s3 + $0x318] sm:$0xff]
  %v200 = vld [vmem:[%s3 + $0x320] sm:$0xff]
  %v201 = vld [vmem:[%s3 + $0x328] sm:$0xff]
  %v202 = vld [vmem:[%s3 + $0x330] sm:$0xff]
  %v203 = vld [vmem:[%s3 + $0x338] sm:$0xff]
  %v204 = vld [vmem:[%s3 + $0x340] sm:$0xff]
  %v205 = vld [vmem:[%s3 + $0x348] sm:$0xff]
  %v206 = vld [vmem:[%s3 + $0x350] sm:$0xff]
  %v207 = vld [vmem:[%s3 + $0x358] sm:$0xff]
  %v208 = vld [vmem:[%s3 + $0x360] sm:$0xff]
  %v209 = vld [vmem:[%s3 + $0x368] sm:$0xff]
  %v210 = vld [vmem:[%s3 + $0x370] sm:$0xff]
  %v211 = vld [vmem:[%s3 + $0x378] sm:$0xff]
  %v212 = vld [vmem:[%s3 + $0x380] sm:$0xff]
  %v213 = vld [vmem:[%s3 + $0x388] sm:$0xff]
  %v214 = vld [vmem:[%s3 + $0x390] sm:$0xff]
  %v215 = vld [vmem:[%s3 + $0x398] sm:$0xff]
  %v216 = vld [vmem:[%s3 + $0x3a0] sm:$0xff]
  %v217 = vld [vmem:[%s3 + $0x3a8] sm:$0xff]
  %v218 = vld [vmem:[%s3 + $0x3b0] sm:$0xff]
  %v219 = vld [vmem:[%s3 + $0x3b8] sm:$0xff]
  %v220 = vld [vmem:[%s3 + $0x3c0] sm:$0xff]
  %v221 = vld [vmem:[%s3 + $0x3c8] sm:$0xff]
  %v222 = vld [vmem:[%s3 + $0x3d0] sm:$0xff]
  %v223 = vld [vmem:[%s3 + $0x3d8] sm:$0xff]
  %v224 = vld [vmem:[%s3 + $0x3e0] sm:$0xff]
  %v225 = vld [vmem:[%s3 + $0x3e8] sm:$0xff]
  %v226 = vld [vmem:[%s3 + $0x3f0] sm:$0xff]
  %v227 = vld [vmem:[%s3 + $0x3f8] sm:$0xff]
  %v228 = vld [vmem:[%s0] sm:$0xff]
  %v229 = vld [vmem:[%s0 + $0x8] sm:$0xff]
  %v230 = vld [vmem:[%s0 + $0x10] sm:$0xff]
  %v231 = vld [vmem:[%s0 + $0x18] sm:$0xff]
  %v232 = vld [vmem:[%s0 + $0x20] sm:$0xff]
  %v233 = vld [vmem:[%s0 + $0x28] sm:$0xff]
  %v234 = vld [vmem:[%s0 + $0x30] sm:$0xff]
  %v235 = vld [vmem:[%s0 + $0x38] sm:$0xff]
  %v236 = vunpack.c.l.bf16 %v228
  %v237 = vunpack.c.h.bf16 %v228
  %v238 = vunpack.c.l.bf16 %v229
  %v239 = vunpack.c.h.bf16 %v229
  %v240 = vunpack.c.l.bf16 %v230
  %v241 = vunpack.c.h.bf16 %v230
  %v242 = vunpack.c.l.bf16 %v231
  %v243 = vunpack.c.h.bf16 %v231
  %v244 = vunpack.c.l.bf16 %v232
  %v245 = vunpack.c.h.bf16 %v232
  %v246 = vunpack.c.l.bf16 %v233
  %v247 = vunpack.c.h.bf16 %v233
  %v248 = vunpack.c.l.bf16 %v234
  %v249 = vunpack.c.h.bf16 %v234
  %v250 = vunpack.c.l.bf16 %v235
  %v251 = vunpack.c.h.bf16 %v235
  %v252 = vpack.c.bf16 %v84, %v82
  %v253 = vpack.c.bf16 %v85, %v83
  %v254 = vld [vmem:[%s1] sm:$0xff]
  %v255 = vld [vmem:[%s1 + $0x8] sm:$0xff]
  %v256 = vld [vmem:[%s1 + $0x10] sm:$0xff]
  %v257 = vld [vmem:[%s1 + $0x18] sm:$0xff]
  %v258 = vld [vmem:[%s1 + $0x20] sm:$0xff]
  %v259 = vld [vmem:[%s1 + $0x28] sm:$0xff]
  %v260 = vld [vmem:[%s1 + $0x30] sm:$0xff]
  %v261 = vld [vmem:[%s1 + $0x38] sm:$0xff]
  %v262 = vld [vmem:[%s1 + $0x40] sm:$0xff]
  %v263 = vld [vmem:[%s1 + $0x48] sm:$0xff]
  %v264 = vld [vmem:[%s1 + $0x50] sm:$0xff]
  %v265 = vld [vmem:[%s1 + $0x58] sm:$0xff]
  %v266 = vld [vmem:[%s1 + $0x60] sm:$0xff]
  %v267 = vld [vmem:[%s1 + $0x68] sm:$0xff]
  %v268 = vld [vmem:[%s1 + $0x70] sm:$0xff]
  %v269 = vld [vmem:[%s1 + $0x78] sm:$0xff]
  %v270 = vld [vmem:[%s1 + $0x80] sm:$0xff]
  %v271 = vld [vmem:[%s1 + $0x88] sm:$0xff]
  %v272 = vld [vmem:[%s1 + $0x90] sm:$0xff]
  %v273 = vld [vmem:[%s1 + $0x98] sm:$0xff]
  %v274 = vld [vmem:[%s1 + $0xa0] sm:$0xff]
  %v275 = vld [vmem:[%s1 + $0xa8] sm:$0xff]
  %v276 = vld [vmem:[%s1 + $0xb0] sm:$0xff]
  %v277 = vld [vmem:[%s1 + $0xb8] sm:$0xff]
  %v278 = vld [vmem:[%s1 + $0xc0] sm:$0xff]
  %v279 = vld [vmem:[%s1 + $0xc8] sm:$0xff]
  %v280 = vld [vmem:[%s1 + $0xd0] sm:$0xff]
  %v281 = vld [vmem:[%s1 + $0xd8] sm:$0xff]
  %v282 = vld [vmem:[%s1 + $0xe0] sm:$0xff]
  %v283 = vld [vmem:[%s1 + $0xe8] sm:$0xff]
  %v284 = vld [vmem:[%s1 + $0xf0] sm:$0xff]
  %v285 = vld [vmem:[%s1 + $0xf8] sm:$0xff]
  %v286 = vld [vmem:[%s1 + $0x100] sm:$0xff]
  %v287 = vld [vmem:[%s1 + $0x108] sm:$0xff]
  %v288 = vld [vmem:[%s1 + $0x110] sm:$0xff]
  %v289 = vld [vmem:[%s1 + $0x118] sm:$0xff]
  %v290 = vld [vmem:[%s1 + $0x120] sm:$0xff]
  %v291 = vld [vmem:[%s1 + $0x128] sm:$0xff]
  %v292 = vld [vmem:[%s1 + $0x130] sm:$0xff]
  %v293 = vld [vmem:[%s1 + $0x138] sm:$0xff]
  %v294 = vld [vmem:[%s1 + $0x140] sm:$0xff]
  %v295 = vld [vmem:[%s1 + $0x148] sm:$0xff]
  %v296 = vld [vmem:[%s1 + $0x150] sm:$0xff]
  %v297 = vld [vmem:[%s1 + $0x158] sm:$0xff]
  %v298 = vld [vmem:[%s1 + $0x160] sm:$0xff]
  %v299 = vld [vmem:[%s1 + $0x168] sm:$0xff]
  %v300 = vld [vmem:[%s1 + $0x170] sm:$0xff]
  %v301 = vld [vmem:[%s1 + $0x178] sm:$0xff]
  %v302 = vld [vmem:[%s1 + $0x180] sm:$0xff]
  %v303 = vld [vmem:[%s1 + $0x188] sm:$0xff]
  %v304 = vld [vmem:[%s1 + $0x190] sm:$0xff]
  %v305 = vld [vmem:[%s1 + $0x198] sm:$0xff]
  %v306 = vld [vmem:[%s1 + $0x1a0] sm:$0xff]
  %v307 = vld [vmem:[%s1 + $0x1a8] sm:$0xff]
  %v308 = vld [vmem:[%s1 + $0x1b0] sm:$0xff]
  %v309 = vld [vmem:[%s1 + $0x1b8] sm:$0xff]
  %v310 = vld [vmem:[%s1 + $0x1c0] sm:$0xff]
  %v311 = vld [vmem:[%s1 + $0x1c8] sm:$0xff]
  %v312 = vld [vmem:[%s1 + $0x1d0] sm:$0xff]
  %v313 = vld [vmem:[%s1 + $0x1d8] sm:$0xff]
  %v314 = vld [vmem:[%s1 + $0x1e0] sm:$0xff]
  %v315 = vld [vmem:[%s1 + $0x1e8] sm:$0xff]
  %v316 = vld [vmem:[%s1 + $0x1f0] sm:$0xff]
  %v317 = vld [vmem:[%s1 + $0x1f8] sm:$0xff]
  %v318 = vld [vmem:[%s1 + $0x200] sm:$0xff]
  %v319 = vld [vmem:[%s1 + $0x208] sm:$0xff]
  %v320 = vld [vmem:[%s1 + $0x210] sm:$0xff]
  %v321 = vld [vmem:[%s1 + $0x218] sm:$0xff]
  %v322 = vld [vmem:[%s1 + $0x220] sm:$0xff]
  %v323 = vld [vmem:[%s1 + $0x228] sm:$0xff]
  %v324 = vld [vmem:[%s1 + $0x230] sm:$0xff]
  %v325 = vld [vmem:[%s1 + $0x238] sm:$0xff]
  %v326 = vld [vmem:[%s1 + $0x240] sm:$0xff]
  %v327 = vld [vmem:[%s1 + $0x248] sm:$0xff]
  %v328 = vld [vmem:[%s1 + $0x250] sm:$0xff]
  %v329 = vld [vmem:[%s1 + $0x258] sm:$0xff]
  %v330 = vld [vmem:[%s1 + $0x260] sm:$0xff]
  %v331 = vld [vmem:[%s1 + $0x268] sm:$0xff]
  %v332 = vld [vmem:[%s1 + $0x270] sm:$0xff]
  %v333 = vld [vmem:[%s1 + $0x278] sm:$0xff]
  %v334 = vld [vmem:[%s1 + $0x280] sm:$0xff]
  %v335 = vld [vmem:[%s1 + $0x288] sm:$0xff]
  %v336 = vld [vmem:[%s1 + $0x290] sm:$0xff]
  %v337 = vld [vmem:[%s1 + $0x298] sm:$0xff]
  %v338 = vld [vmem:[%s1 + $0x2a0] sm:$0xff]
  %v339 = vld [vmem:[%s1 + $0x2a8] sm:$0xff]
  %v340 = vld [vmem:[%s1 + $0x2b0] sm:$0xff]
  %v341 = vld [vmem:[%s1 + $0x2b8] sm:$0xff]
  %v342 = vld [vmem:[%s1 + $0x2c0] sm:$0xff]
  %v343 = vld [vmem:[%s1 + $0x2c8] sm:$0xff]
  %v344 = vld [vmem:[%s1 + $0x2d0] sm:$0xff]
  %v345 = vld [vmem:[%s1 + $0x2d8] sm:$0xff]
  %v346 = vld [vmem:[%s1 + $0x2e0] sm:$0xff]
  %v347 = vld [vmem:[%s1 + $0x2e8] sm:$0xff]
  %v348 = vld [vmem:[%s1 + $0x2f0] sm:$0xff]
  %v349 = vld [vmem:[%s1 + $0x2f8] sm:$0xff]
  %v350 = vld [vmem:[%s1 + $0x300] sm:$0xff]
  %v351 = vld [vmem:[%s1 + $0x308] sm:$0xff]
  %v352 = vld [vmem:[%s1 + $0x310] sm:$0xff]
  %v353 = vld [vmem:[%s1 + $0x318] sm:$0xff]
  %v354 = vld [vmem:[%s1 + $0x320] sm:$0xff]
  %v355 = vld [vmem:[%s1 + $0x328] sm:$0xff]
  %v356 = vld [vmem:[%s1 + $0x330] sm:$0xff]
  %v357 = vld [vmem:[%s1 + $0x338] sm:$0xff]
  %v358 = vld [vmem:[%s1 + $0x340] sm:$0xff]
  %v359 = vld [vmem:[%s1 + $0x348] sm:$0xff]
  %v360 = vld [vmem:[%s1 + $0x350] sm:$0xff]
  %v361 = vld [vmem:[%s1 + $0x358] sm:$0xff]
  %v362 = vld [vmem:[%s1 + $0x360] sm:$0xff]
  %v363 = vld [vmem:[%s1 + $0x368] sm:$0xff]
  %v364 = vld [vmem:[%s1 + $0x370] sm:$0xff]
  %v365 = vld [vmem:[%s1 + $0x378] sm:$0xff]
  %v366 = vld [vmem:[%s1 + $0x380] sm:$0xff]
  %v367 = vld [vmem:[%s1 + $0x388] sm:$0xff]
  %v368 = vld [vmem:[%s1 + $0x390] sm:$0xff]
  %v369 = vld [vmem:[%s1 + $0x398] sm:$0xff]
  %v370 = vld [vmem:[%s1 + $0x3a0] sm:$0xff]
  %v371 = vld [vmem:[%s1 + $0x3a8] sm:$0xff]
  %v372 = vld [vmem:[%s1 + $0x3b0] sm:$0xff]
  %v373 = vld [vmem:[%s1 + $0x3b8] sm:$0xff]
  %v374 = vld [vmem:[%s1 + $0x3c0] sm:$0xff]
  %v375 = vld [vmem:[%s1 + $0x3c8] sm:$0xff]
  %v376 = vld [vmem:[%s1 + $0x3d0] sm:$0xff]
  %v377 = vld [vmem:[%s1 + $0x3d8] sm:$0xff]
  %v378 = vld [vmem:[%s1 + $0x3e0] sm:$0xff]
  %v379 = vld [vmem:[%s1 + $0x3e8] sm:$0xff]
  %v380 = vld [vmem:[%s1 + $0x3f0] sm:$0xff]
  %v381 = vld [vmem:[%s1 + $0x3f8] sm:$0xff]
  %v510 = vunpack.c.l.b16 %v254
  %v511 = vunpack.c.h.b16 %v254
  %v512 = vunpack.c.l.b16 %v255
  %v513 = vunpack.c.h.b16 %v255
  %v514 = vunpack.c.l.b16 %v256
  %v515 = vunpack.c.h.b16 %v256
  %v516 = vunpack.c.l.b16 %v257
  %v517 = vunpack.c.h.b16 %v257
  %v518 = vunpack.c.l.b16 %v258
  %v519 = vunpack.c.h.b16 %v258
  %v520 = vunpack.c.l.b16 %v259
  %v521 = vunpack.c.h.b16 %v259
  %v522 = vunpack.c.l.b16 %v260
  %v523 = vunpack.c.h.b16 %v260
  %v524 = vunpack.c.l.b16 %v261
  %v525 = vunpack.c.h.b16 %v261
  %v526 = vunpack.c.l.b16 %v262
  %v527 = vunpack.c.h.b16 %v262
  %v528 = vunpack.c.l.b16 %v263
  %v529 = vunpack.c.h.b16 %v263
  %v530 = vunpack.c.l.b16 %v264
  %v531 = vunpack.c.h.b16 %v264
  %v532 = vunpack.c.l.b16 %v265
  %v533 = vunpack.c.h.b16 %v265
  %v534 = vunpack.c.l.b16 %v266
  %v535 = vunpack.c.h.b16 %v266
  %v536 = vunpack.c.l.b16 %v267
  %v537 = vunpack.c.h.b16 %v267
  %v538 = vunpack.c.l.b16 %v268
  %v539 = vunpack.c.h.b16 %v268
  %v540 = vunpack.c.l.b16 %v269
  %v541 = vunpack.c.h.b16 %v269
  %v542 = vunpack.c.l.b16 %v270
  %v543 = vunpack.c.h.b16 %v270
  %v544 = vunpack.c.l.b16 %v271
  %v545 = vunpack.c.h.b16 %v271
  %v546 = vunpack.c.l.b16 %v272
  %v547 = vunpack.c.h.b16 %v272
  %v548 = vunpack.c.l.b16 %v273
  %v549 = vunpack.c.h.b16 %v273
  %v550 = vunpack.c.l.b16 %v274
  %v551 = vunpack.c.h.b16 %v274
  %v552 = vunpack.c.l.b16 %v275
  %v553 = vunpack.c.h.b16 %v275
  %v554 = vunpack.c.l.b16 %v276
  %v555 = vunpack.c.h.b16 %v276
  %v556 = vunpack.c.l.b16 %v277
  %v557 = vunpack.c.h.b16 %v277
  %v558 = vunpack.c.l.b16 %v278
  %v559 = vunpack.c.h.b16 %v278
  %v560 = vunpack.c.l.b16 %v279
  %v561 = vunpack.c.h.b16 %v279
  %v562 = vunpack.c.l.b16 %v280
  %v563 = vunpack.c.h.b16 %v280
  %v564 = vunpack.c.l.b16 %v281
  %v565 = vunpack.c.h.b16 %v281
  %v566 = vunpack.c.l.b16 %v282
  %v567 = vunpack.c.h.b16 %v282
  %v568 = vunpack.c.l.b16 %v283
  %v569 = vunpack.c.h.b16 %v283
  %v570 = vunpack.c.l.b16 %v284
  %v571 = vunpack.c.h.b16 %v284
  %v572 = vunpack.c.l.b16 %v285
  %v573 = vunpack.c.h.b16 %v285
  %v574 = vunpack.c.l.b16 %v286
  %v575 = vunpack.c.h.b16 %v286
  %v576 = vunpack.c.l.b16 %v287
  %v577 = vunpack.c.h.b16 %v287
  %v578 = vunpack.c.l.b16 %v288
  %v579 = vunpack.c.h.b16 %v288
  %v580 = vunpack.c.l.b16 %v289
  %v581 = vunpack.c.h.b16 %v289
  %v582 = vunpack.c.l.b16 %v290
  %v583 = vunpack.c.h.b16 %v290
  %v584 = vunpack.c.l.b16 %v291
  %v585 = vunpack.c.h.b16 %v291
  %v586 = vunpack.c.l.b16 %v292
  %v587 = vunpack.c.h.b16 %v292
  %v588 = vunpack.c.l.b16 %v293
  %v589 = vunpack.c.h.b16 %v293
  %v590 = vunpack.c.l.b16 %v294
  %v591 = vunpack.c.h.b16 %v294
  %v592 = vunpack.c.l.b16 %v295
  %v593 = vunpack.c.h.b16 %v295
  %v594 = vunpack.c.l.b16 %v296
  %v595 = vunpack.c.h.b16 %v296
  %v596 = vunpack.c.l.b16 %v297
  %v597 = vunpack.c.h.b16 %v297
  %v598 = vunpack.c.l.b16 %v298
  %v599 = vunpack.c.h.b16 %v298
  %v600 = vunpack.c.l.b16 %v299
  %v601 = vunpack.c.h.b16 %v299
  %v602 = vunpack.c.l.b16 %v300
  %v603 = vunpack.c.h.b16 %v300
  %v604 = vunpack.c.l.b16 %v301
  %v605 = vunpack.c.h.b16 %v301
  %v606 = vunpack.c.l.b16 %v302
  %v607 = vunpack.c.h.b16 %v302
  %v608 = vunpack.c.l.b16 %v303
  %v609 = vunpack.c.h.b16 %v303
  %v610 = vunpack.c.l.b16 %v304
  %v611 = vunpack.c.h.b16 %v304
  %v612 = vunpack.c.l.b16 %v305
  %v613 = vunpack.c.h.b16 %v305
  %v614 = vunpack.c.l.b16 %v306
  %v615 = vunpack.c.h.b16 %v306
  %v616 = vunpack.c.l.b16 %v307
  %v617 = vunpack.c.h.b16 %v307
  %v618 = vunpack.c.l.b16 %v308
  %v619 = vunpack.c.h.b16 %v308
  %v620 = vunpack.c.l.b16 %v309
  %v621 = vunpack.c.h.b16 %v309
  %v622 = vunpack.c.l.b16 %v310
  %v623 = vunpack.c.h.b16 %v310
  %v624 = vunpack.c.l.b16 %v311
  %v625 = vunpack.c.h.b16 %v311
  %v626 = vunpack.c.l.b16 %v312
  %v627 = vunpack.c.h.b16 %v312
  %v628 = vunpack.c.l.b16 %v313
  %v629 = vunpack.c.h.b16 %v313
  %v630 = vunpack.c.l.b16 %v314
  %v631 = vunpack.c.h.b16 %v314
  %v632 = vunpack.c.l.b16 %v315
  %v633 = vunpack.c.h.b16 %v315
  %v634 = vunpack.c.l.b16 %v316
  %v635 = vunpack.c.h.b16 %v316
  %v636 = vunpack.c.l.b16 %v317
  %v637 = vunpack.c.h.b16 %v317
  %v638 = vunpack.c.l.b16 %v318
  %v639 = vunpack.c.h.b16 %v318
  %v640 = vunpack.c.l.b16 %v319
  %v641 = vunpack.c.h.b16 %v319
  %v642 = vunpack.c.l.b16 %v320
  %v643 = vunpack.c.h.b16 %v320
  %v644 = vunpack.c.l.b16 %v321
  %v645 = vunpack.c.h.b16 %v321
  %v646 = vunpack.c.l.b16 %v322
  %v647 = vunpack.c.h.b16 %v322
  %v648 = vunpack.c.l.b16 %v323
  %v649 = vunpack.c.h.b16 %v323
  %v650 = vunpack.c.l.b16 %v324
  %v651 = vunpack.c.h.b16 %v324
  %v652 = vunpack.c.l.b16 %v325
  %v653 = vunpack.c.h.b16 %v325
  %v654 = vunpack.c.l.b16 %v326
  %v655 = vunpack.c.h.b16 %v326
  %v656 = vunpack.c.l.b16 %v327
  %v657 = vunpack.c.h.b16 %v327
  %v658 = vunpack.c.l.b16 %v328
  %v659 = vunpack.c.h.b16 %v328
  %v660 = vunpack.c.l.b16 %v329
  %v661 = vunpack.c.h.b16 %v329
  %v662 = vunpack.c.l.b16 %v330
  %v663 = vunpack.c.h.b16 %v330
  %v664 = vunpack.c.l.b16 %v331
  %v665 = vunpack.c.h.b16 %v331
  %v666 = vunpack.c.l.b16 %v332
  %v667 = vunpack.c.h.b16 %v332
  %v668 = vunpack.c.l.b16 %v333
  %v669 = vunpack.c.h.b16 %v333
  %v670 = vunpack.c.l.b16 %v334
  %v671 = vunpack.c.h.b16 %v334
  %v672 = vunpack.c.l.b16 %v335
  %v673 = vunpack.c.h.b16 %v335
  %v674 = vunpack.c.l.b16 %v336
  %v675 = vunpack.c.h.b16 %v336
  %v676 = vunpack.c.l.b16 %v337
  %v677 = vunpack.c.h.b16 %v337
  %v678 = vunpack.c.l.b16 %v338
  %v679 = vunpack.c.h.b16 %v338
  %v680 = vunpack.c.l.b16 %v339
  %v681 = vunpack.c.h.b16 %v339
  %v682 = vunpack.c.l.b16 %v340
  %v683 = vunpack.c.h.b16 %v340
  %v684 = vunpack.c.l.b16 %v341
  %v685 = vunpack.c.h.b16 %v341
  %v686 = vunpack.c.l.b16 %v342
  %v687 = vunpack.c.h.b16 %v342
  %v688 = vunpack.c.l.b16 %v343
  %v689 = vunpack.c.h.b16 %v343
  %v690 = vunpack.c.l.b16 %v344
  %v691 = vunpack.c.h.b16 %v344
  %v692 = vunpack.c.l.b16 %v345
  %v693 = vunpack.c.h.b16 %v345
  %v694 = vunpack.c.l.b16 %v346
  %v695 = vunpack.c.h.b16 %v346
  %v696 = vunpack.c.l.b16 %v347
  %v697 = vunpack.c.h.b16 %v347
  %v698 = vunpack.c.l.b16 %v348
  %v699 = vunpack.c.h.b16 %v348
  %v700 = vunpack.c.l.b16 %v349
  %v701 = vunpack.c.h.b16 %v349
  %v702 = vunpack.c.l.b16 %v350
  %v703 = vunpack.c.h.b16 %v350
  %v704 = vunpack.c.l.b16 %v351
  %v705 = vunpack.c.h.b16 %v351
  %v706 = vunpack.c.l.b16 %v352
  %v707 = vunpack.c.h.b16 %v352
  %v708 = vunpack.c.l.b16 %v353
  %v709 = vunpack.c.h.b16 %v353
  %v710 = vunpack.c.l.b16 %v354
  %v711 = vunpack.c.h.b16 %v354
  %v712 = vunpack.c.l.b16 %v355
  %v713 = vunpack.c.h.b16 %v355
  %v714 = vunpack.c.l.b16 %v356
  %v715 = vunpack.c.h.b16 %v356
  %v716 = vunpack.c.l.b16 %v357
  %v717 = vunpack.c.h.b16 %v357
  %v718 = vunpack.c.l.b16 %v358
  %v719 = vunpack.c.h.b16 %v358
  %v720 = vunpack.c.l.b16 %v359
  %v721 = vunpack.c.h.b16 %v359
  %v722 = vunpack.c.l.b16 %v360
  %v723 = vunpack.c.h.b16 %v360
  %v724 = vunpack.c.l.b16 %v361
  %v725 = vunpack.c.h.b16 %v361
  %v726 = vunpack.c.l.b16 %v362
  %v727 = vunpack.c.h.b16 %v362
  %v728 = vunpack.c.l.b16 %v363
  %v729 = vunpack.c.h.b16 %v363
  %v730 = vunpack.c.l.b16 %v364
  %v731 = vunpack.c.h.b16 %v364
  %v732 = vunpack.c.l.b16 %v365
  %v733 = vunpack.c.h.b16 %v365
  %v734 = vunpack.c.l.b16 %v366
  %v735 = vunpack.c.h.b16 %v366
  %v736 = vunpack.c.l.b16 %v367
  %v737 = vunpack.c.h.b16 %v367
  %v738 = vunpack.c.l.b16 %v368
  %v739 = vunpack.c.h.b16 %v368
  %v740 = vunpack.c.l.b16 %v369
  %v741 = vunpack.c.h.b16 %v369
  %v742 = vunpack.c.l.b16 %v370
  %v743 = vunpack.c.h.b16 %v370
  %v744 = vunpack.c.l.b16 %v371
  %v745 = vunpack.c.h.b16 %v371
  %v746 = vunpack.c.l.b16 %v372
  %v747 = vunpack.c.h.b16 %v372
  %v748 = vunpack.c.l.b16 %v373
  %v749 = vunpack.c.h.b16 %v373
  %v750 = vunpack.c.l.b16 %v374
  %v751 = vunpack.c.h.b16 %v374
  %v752 = vunpack.c.l.b16 %v375
  %v753 = vunpack.c.h.b16 %v375
  %v754 = vunpack.c.l.b16 %v376
  %v755 = vunpack.c.h.b16 %v376
  %v756 = vunpack.c.l.b16 %v377
  %v757 = vunpack.c.h.b16 %v377
  %v758 = vunpack.c.l.b16 %v378
  %v759 = vunpack.c.h.b16 %v378
  %v760 = vunpack.c.l.b16 %v379
  %v761 = vunpack.c.h.b16 %v379
  %v762 = vunpack.c.l.b16 %v380
  %v763 = vunpack.c.h.b16 %v380
  %v764 = vunpack.c.l.b16 %v381
  %v765 = vunpack.c.h.b16 %v381
  %v766 = vpack.c.b16 %v518, %v510
  %v767 = vpack.c.b16 %v519, %v511
  %v768 = vpack.c.b16 %v520, %v512
  %v769 = vpack.c.b16 %v521, %v513
  %v770 = vpack.c.b16 %v522, %v514
  %v771 = vpack.c.b16 %v523, %v515
  %v772 = vpack.c.b16 %v524, %v516
  %v773 = vpack.c.b16 %v525, %v517
  %v774 = vpack.c.b16 %v534, %v526
  %v775 = vpack.c.b16 %v535, %v527
  %v776 = vpack.c.b16 %v536, %v528
  %v777 = vpack.c.b16 %v537, %v529
  %v778 = vpack.c.b16 %v538, %v530
  %v779 = vpack.c.b16 %v539, %v531
  %v780 = vpack.c.b16 %v540, %v532
  %v781 = vpack.c.b16 %v541, %v533
  %v782 = vpack.c.b16 %v550, %v542
  %v783 = vpack.c.b16 %v551, %v543
  %v784 = vpack.c.b16 %v552, %v544
  %v785 = vpack.c.b16 %v553, %v545
  %v786 = vpack.c.b16 %v554, %v546
  %v787 = vpack.c.b16 %v555, %v547
  %v788 = vpack.c.b16 %v556, %v548
  %v789 = vpack.c.b16 %v557, %v549
  %v790 = vpack.c.b16 %v566, %v558
  %v791 = vpack.c.b16 %v567, %v559
  %v792 = vpack.c.b16 %v568, %v560
  %v793 = vpack.c.b16 %v569, %v561
  %v794 = vpack.c.b16 %v570, %v562
  %v795 = vpack.c.b16 %v571, %v563
  %v796 = vpack.c.b16 %v572, %v564
  %v797 = vpack.c.b16 %v573, %v565
  %v798 = vpack.c.b16 %v582, %v574
  %v799 = vpack.c.b16 %v583, %v575
  %v800 = vpack.c.b16 %v584, %v576
  %v801 = vpack.c.b16 %v585, %v577
  %v802 = vpack.c.b16 %v586, %v578
  %v803 = vpack.c.b16 %v587, %v579
  %v804 = vpack.c.b16 %v588, %v580
  %v805 = vpack.c.b16 %v589, %v581
  %v806 = vpack.c.b16 %v598, %v590
  %v807 = vpack.c.b16 %v599, %v591
  %v808 = vpack.c.b16 %v600, %v592
  %v809 = vpack.c.b16 %v601, %v593
  %v810 = vpack.c.b16 %v602, %v594
  %v811 = vpack.c.b16 %v603, %v595
  %v812 = vpack.c.b16 %v604, %v596
  %v813 = vpack.c.b16 %v605, %v597
  %v814 = vpack.c.b16 %v614, %v606
  %v815 = vpack.c.b16 %v615, %v607
  %v816 = vpack.c.b16 %v616, %v608
  %v817 = vpack.c.b16 %v617, %v609
  %v818 = vpack.c.b16 %v618, %v610
  %v819 = vpack.c.b16 %v619, %v611
  %v820 = vpack.c.b16 %v620, %v612
  %v821 = vpack.c.b16 %v621, %v613
  %v822 = vpack.c.b16 %v630, %v622
  %v823 = vpack.c.b16 %v631, %v623
  %v824 = vpack.c.b16 %v632, %v624
  %v825 = vpack.c.b16 %v633, %v625
  %v826 = vpack.c.b16 %v634, %v626
  %v827 = vpack.c.b16 %v635, %v627
  %v828 = vpack.c.b16 %v636, %v628
  %v829 = vpack.c.b16 %v637, %v629
  %v830 = vpack.c.b16 %v646, %v638
  %v831 = vpack.c.b16 %v647, %v639
  %v832 = vpack.c.b16 %v648, %v640
  %v833 = vpack.c.b16 %v649, %v641
  %v834 = vpack.c.b16 %v650, %v642
  %v835 = vpack.c.b16 %v651, %v643
  %v836 = vpack.c.b16 %v652, %v644
  %v837 = vpack.c.b16 %v653, %v645
  %v838 = vpack.c.b16 %v662, %v654
  %v839 = vpack.c.b16 %v663, %v655
  %v840 = vpack.c.b16 %v664, %v656
  %v841 = vpack.c.b16 %v665, %v657
  %v842 = vpack.c.b16 %v666, %v658
  %v843 = vpack.c.b16 %v667, %v659
  %v844 = vpack.c.b16 %v668, %v660
  %v845 = vpack.c.b16 %v669, %v661
  %v846 = vpack.c.b16 %v678, %v670
  %v847 = vpack.c.b16 %v679, %v671
  %v848 = vpack.c.b16 %v680, %v672
  %v849 = vpack.c.b16 %v681, %v673
  %v850 = vpack.c.b16 %v682, %v674
  %v851 = vpack.c.b16 %v683, %v675
  %v852 = vpack.c.b16 %v684, %v676
  %v853 = vpack.c.b16 %v685, %v677
  %v854 = vpack.c.b16 %v694, %v686
  %v855 = vpack.c.b16 %v695, %v687
  %v856 = vpack.c.b16 %v696, %v688
  %v857 = vpack.c.b16 %v697, %v689
  %v858 = vpack.c.b16 %v698, %v690
  %v859 = vpack.c.b16 %v699, %v691
  %v860 = vpack.c.b16 %v700, %v692
  %v861 = vpack.c.b16 %v701, %v693
  %v862 = vpack.c.b16 %v710, %v702
  %v863 = vpack.c.b16 %v711, %v703
  %v864 = vpack.c.b16 %v712, %v704
  %v865 = vpack.c.b16 %v713, %v705
  %v866 = vpack.c.b16 %v714, %v706
  %v867 = vpack.c.b16 %v715, %v707
  %v868 = vpack.c.b16 %v716, %v708
  %v869 = vpack.c.b16 %v717, %v709
  %v870 = vpack.c.b16 %v726, %v718
  %v871 = vpack.c.b16 %v727, %v719
  %v872 = vpack.c.b16 %v728, %v720
  %v873 = vpack.c.b16 %v729, %v721
  %v874 = vpack.c.b16 %v730, %v722
  %v875 = vpack.c.b16 %v731, %v723
  %v876 = vpack.c.b16 %v732, %v724
  %v877 = vpack.c.b16 %v733, %v725
  %v878 = vpack.c.b16 %v742, %v734
  %v879 = vpack.c.b16 %v743, %v735
  %v880 = vpack.c.b16 %v744, %v736
  %v881 = vpack.c.b16 %v745, %v737
  %v882 = vpack.c.b16 %v746, %v738
  %v883 = vpack.c.b16 %v747, %v739
  %v884 = vpack.c.b16 %v748, %v740
  %v885 = vpack.c.b16 %v749, %v741
  %v886 = vpack.c.b16 %v758, %v750
  %v887 = vpack.c.b16 %v759, %v751
  %v888 = vpack.c.b16 %v760, %v752
  %v889 = vpack.c.b16 %v761, %v753
  %v890 = vpack.c.b16 %v762, %v754
  %v891 = vpack.c.b16 %v763, %v755
  %v892 = vpack.c.b16 %v764, %v756
  %v893 = vpack.c.b16 %v765, %v757
  %1022 = vmatprep.subr.bf16.mxu0 %v767
  %1023 = vmatpush1.bf16.msra.mxu0 %v766
  %1024 = vmatprep.subr.bf16.mxu0 %v775
  %1025 = vmatpush1.bf16.msra.mxu0 %v774
  %1026 = vmatprep.subr.bf16.mxu0 %v783
  %1027 = vmatpush1.bf16.msra.mxu0 %v782
  %1028 = vmatprep.subr.bf16.mxu0 %v791
  %1029 = vmatpush1.bf16.msra.mxu0 %v790
  %1030 = vmatprep.subr.bf16.mxu0 %v799
  %1031 = vmatpush1.bf16.msra.mxu0 %v798
  %1032 = vmatprep.subr.bf16.mxu0 %v807
  %1033 = vmatpush1.bf16.msra.mxu0 %v806
  %1034 = vmatprep.subr.bf16.mxu0 %v815
  %1035 = vmatpush1.bf16.msra.mxu0 %v814
  %1036 = vmatprep.subr.bf16.mxu0 %v823
  %1037 = vmatpush1.bf16.msra.mxu0 %v822
  %1038 = vmatprep.subr.bf16.mxu0 %v831
  %1039 = vmatpush1.bf16.msra.mxu0 %v830
  %1040 = vmatprep.subr.bf16.mxu0 %v839
  %1041 = vmatpush1.bf16.msra.mxu0 %v838
  %1042 = vmatprep.subr.bf16.mxu0 %v847
  %1043 = vmatpush1.bf16.msra.mxu0 %v846
  %1044 = vmatprep.subr.bf16.mxu0 %v855
  %1045 = vmatpush1.bf16.msra.mxu0 %v854
  %1046 = vmatprep.subr.bf16.mxu0 %v863
  %1047 = vmatpush1.bf16.msra.mxu0 %v862
  %1048 = vmatprep.subr.bf16.mxu0 %v871
  %1049 = vmatpush1.bf16.msra.mxu0 %v870
  %1050 = vmatprep.subr.bf16.mxu0 %v879
  %1051 = vmatpush1.bf16.msra.mxu0 %v878
  %1052 = vmatprep.subr.bf16.mxu0 %v887
  %1053 = vmatpush1.bf16.msra.mxu0 %v886
  %1054 = vmatprep.mubr.bf16.mxu0 %v253
  %1055 = vmatmul.mubr.bf16.gmra.mrb[0].mxu0 %v252
  %v1056 = vpop.f32.mrb[0].mxu0
  %v1057 = vadd.f32 0.0, %v1056
  %v1058 = vpop.f32.mrb[0].mxu0
  %v1059 = vadd.f32 0.0, %v1058
  %v1060 = vpop.f32.mrb[0].mxu0
  %v1061 = vadd.f32 0.0, %v1060
  %v1062 = vpop.f32.mrb[0].mxu0
  %v1063 = vadd.f32 0.0, %v1062
  %1064 = vdwg.mxu0
  %1065 = vmatprep.subr.bf16.mxu0 %v769
  %1066 = vmatpush1.bf16.msra.mxu0 %v768
  %1067 = vmatprep.subr.bf16.mxu0 %v777
  %1068 = vmatpush1.bf16.msra.mxu0 %v776
  %1069 = vmatprep.subr.bf16.mxu0 %v785
  %1070 = vmatpush1.bf16.msra.mxu0 %v784
  %1071 = vmatprep.subr.bf16.mxu0 %v793
  %1072 = vmatpush1.bf16.msra.mxu0 %v792
  %1073 = vmatprep.subr.bf16.mxu0 %v801
  %1074 = vmatpush1.bf16.msra.mxu0 %v800
  %1075 = vmatprep.subr.bf16.mxu0 %v809
  %1076 = vmatpush1.bf16.msra.mxu0 %v808
  %1077 = vmatprep.subr.bf16.mxu0 %v817
  %1078 = vmatpush1.bf16.msra.mxu0 %v816
  %1079 = vmatprep.subr.bf16.mxu0 %v825
  %1080 = vmatpush1.bf16.msra.mxu0 %v824
  %1081 = vmatprep.subr.bf16.mxu0 %v833
  %1082 = vmatpush1.bf16.msra.mxu0 %v832
  %1083 = vmatprep.subr.bf16.mxu0 %v841
  %1084 = vmatpush1.bf16.msra.mxu0 %v840
  %1085 = vmatprep.subr.bf16.mxu0 %v849
  %1086 = vmatpush1.bf16.msra.mxu0 %v848
  %1087 = vmatprep.subr.bf16.mxu0 %v857
  %1088 = vmatpush1.bf16.msra.mxu0 %v856
  %1089 = vmatprep.subr.bf16.mxu0 %v865
  %1090 = vmatpush1.bf16.msra.mxu0 %v864
  %1091 = vmatprep.subr.bf16.mxu0 %v873
  %1092 = vmatpush1.bf16.msra.mxu0 %v872
  %1093 = vmatprep.subr.bf16.mxu0 %v881
  %1094 = vmatpush1.bf16.msra.mxu0 %v880
  %1095 = vmatprep.subr.bf16.mxu0 %v889
  %1096 = vmatpush1.bf16.msra.mxu0 %v888
  %1097 = vmatprep.mubr.bf16.mxu0 %v253
  %1098 = vmatmul.mubr.bf16.gmra.mrb[0].mxu0 %v252
  %v1099 = vpop.f32.mrb[0].mxu0
  %v1100 = vadd.f32 0.0, %v1099
  %v1101 = vpop.f32.mrb[0].mxu0
  %v1102 = vadd.f32 0.0, %v1101
  %v1103 = vpop.f32.mrb[0].mxu0
  %v1104 = vadd.f32 0.0, %v1103
  %v1105 = vpop.f32.mrb[0].mxu0
  %v1106 = vadd.f32 0.0, %v1105
  %1107 = vdwg.mxu0
  %1108 = vmatprep.subr.bf16.mxu0 %v771
  %1109 = vmatpush1.bf16.msra.mxu0 %v770
  %1110 = vmatprep.subr.bf16.mxu0 %v779
  %1111 = vmatpush1.bf16.msra.mxu0 %v778
  %1112 = vmatprep.subr.bf16.mxu0 %v787
  %1113 = vmatpush1.bf16.msra.mxu0 %v786
  %1114 = vmatprep.subr.bf16.mxu0 %v795
  %1115 = vmatpush1.bf16.msra.mxu0 %v794
  %1116 = vmatprep.subr.bf16.mxu0 %v803
  %1117 = vmatpush1.bf16.msra.mxu0 %v802
  %1118 = vmatprep.subr.bf16.mxu0 %v811
  %1119 = vmatpush1.bf16.msra.mxu0 %v810
  %1120 = vmatprep.subr.bf16.mxu0 %v819
  %1121 = vmatpush1.bf16.msra.mxu0 %v818
  %1122 = vmatprep.subr.bf16.mxu0 %v827
  %1123 = vmatpush1.bf16.msra.mxu0 %v826
  %1124 = vmatprep.subr.bf16.mxu0 %v835
  %1125 = vmatpush1.bf16.msra.mxu0 %v834
  %1126 = vmatprep.subr.bf16.mxu0 %v843
  %1127 = vmatpush1.bf16.msra.mxu0 %v842
  %1128 = vmatprep.subr.bf16.mxu0 %v851
  %1129 = vmatpush1.bf16.msra.mxu0 %v850
  %1130 = vmatprep.subr.bf16.mxu0 %v859
  %1131 = vmatpush1.bf16.msra.mxu0 %v858
  %1132 = vmatprep.subr.bf16.mxu0 %v867
  %1133 = vmatpush1.bf16.msra.mxu0 %v866
  %1134 = vmatprep.subr.bf16.mxu0 %v875
  %1135 = vmatpush1.bf16.msra.mxu0 %v874
  %1136 = vmatprep.subr.bf16.mxu0 %v883
  %1137 = vmatpush1.bf16.msra.mxu0 %v882
  %1138 = vmatprep.subr.bf16.mxu0 %v891
  %1139 = vmatpush1.bf16.msra.mxu0 %v890
  %1140 = vmatprep.mubr.bf16.mxu0 %v253
  %1141 = vmatmul.mubr.bf16.gmra.mrb[0].mxu0 %v252
  %v1142 = vpop.f32.mrb[0].mxu0
  %v1143 = vadd.f32 0.0, %v1142
  %v1144 = vpop.f32.mrb[0].mxu0
  %v1145 = vadd.f32 0.0, %v1144
  %v1146 = vpop.f32.mrb[0].mxu0
  %v1147 = vadd.f32 0.0, %v1146
  %v1148 = vpop.f32.mrb[0].mxu0
  %v1149 = vadd.f32 0.0, %v1148
  %1150 = vdwg.mxu0
  %1151 = vmatprep.subr.bf16.mxu0 %v773
  %1152 = vmatpush1.bf16.msra.mxu0 %v772
  %1153 = vmatprep.subr.bf16.mxu0 %v781
  %1154 = vmatpush1.bf16.msra.mxu0 %v780
  %1155 = vmatprep.subr.bf16.mxu0 %v789
  %1156 = vmatpush1.bf16.msra.mxu0 %v788
  %1157 = vmatprep.subr.bf16.mxu0 %v797
  %1158 = vmatpush1.bf16.msra.mxu0 %v796
  %1159 = vmatprep.subr.bf16.mxu0 %v805
  %1160 = vmatpush1.bf16.msra.mxu0 %v804
  %1161 = vmatprep.subr.bf16.mxu0 %v813
  %1162 = vmatpush1.bf16.msra.mxu0 %v812
  %1163 = vmatprep.subr.bf16.mxu0 %v821
  %1164 = vmatpush1.bf16.msra.mxu0 %v820
  %1165 = vmatprep.subr.bf16.mxu0 %v829
  %1166 = vmatpush1.bf16.msra.mxu0 %v828
  %1167 = vmatprep.subr.bf16.mxu0 %v837
  %1168 = vmatpush1.bf16.msra.mxu0 %v836
  %1169 = vmatprep.subr.bf16.mxu0 %v845
  %1170 = vmatpush1.bf16.msra.mxu0 %v844
  %1171 = vmatprep.subr.bf16.mxu0 %v853
  %1172 = vmatpush1.bf16.msra.mxu0 %v852
  %1173 = vmatprep.subr.bf16.mxu0 %v861
  %1174 = vmatpush1.bf16.msra.mxu0 %v860
  %1175 = vmatprep.subr.bf16.mxu0 %v869
  %1176 = vmatpush1.bf16.msra.mxu0 %v868
  %1177 = vmatprep.subr.bf16.mxu0 %v877
  %1178 = vmatpush1.bf16.msra.mxu0 %v876
  %1179 = vmatprep.subr.bf16.mxu0 %v885
  %1180 = vmatpush1.bf16.msra.mxu0 %v884
  %1181 = vmatprep.subr.bf16.mxu0 %v893
  %1182 = vmatpush1.bf16.msra.mxu0 %v892
  %1183 = vmatprep.mubr.bf16.mxu0 %v253
  %1184 = vmatmul.mubr.bf16.gmra.mrb[0].mxu0 %v252
  %v1185 = vpop.f32.mrb[0].mxu0
  %v1186 = vadd.f32 0.0, %v1185
  %v1187 = vpop.f32.mrb[0].mxu0
  %v1188 = vadd.f32 0.0, %v1187
  %v1189 = vpop.f32.mrb[0].mxu0
  %v1190 = vadd.f32 0.0, %v1189
  %v1191 = vpop.f32.mrb[0].mxu0
  %v1192 = vadd.f32 0.0, %v1191
  %1193 = vdwg.mxu0
  %v1194 = vadd.f32 %v236, %v1057
  %v1195 = vadd.f32 %v237, %v1059
  %v1196 = vadd.f32 %v238, %v1100
  %v1197 = vadd.f32 %v239, %v1102
  %v1198 = vadd.f32 %v240, %v1143
  %v1199 = vadd.f32 %v241, %v1145
  %v1200 = vadd.f32 %v242, %v1186
  %v1201 = vadd.f32 %v243, %v1188
  %v1202 = vadd.f32 %v244, %v1061
  %v1203 = vadd.f32 %v245, %v1063
  %v1204 = vadd.f32 %v246, %v1104
  %v1205 = vadd.f32 %v247, %v1106
  %v1206 = vadd.f32 %v248, %v1147
  %v1207 = vadd.f32 %v249, %v1149
  %v1208 = vadd.f32 %v250, %v1190
  %v1209 = vadd.f32 %v251, %v1192
  %v1210 = vxor.u32 %v1194, 2147483648
  %v1211 = vxor.u32 %v1195, 2147483648
  %v1212 = vxor.u32 %v1202, 2147483648
  %v1213 = vxor.u32 %v1203, 2147483648
  %v1214 = vmul.f32 %v1210, 1.442695
  %v1215 = vpow.pop %v1214
  %v1216 = vmul.f32 %v1211, 1.442695
  %v1217 = vpow.pop %v1216
  %v1218 = vmul.f32 %v1212, 1.442695
  %v1219 = vpow.pop %v1218
  %v1220 = vmul.f32 %v1213, 1.442695
  %v1221 = vpow.pop %v1220
  %v1222 = vadd.f32 %v1215, 1.0
  %v1223 = vadd.f32 %v1217, 1.0
  %v1224 = vadd.f32 %v1219, 1.0
  %v1225 = vadd.f32 %v1221, 1.0
  %v1226 = vrcp.pop %v1222
  %v1227 = vmul.f32 1.0, %v1226
  %v1228 = vrcp.pop %v1223
  %v1229 = vmul.f32 1.0, %v1228
  %v1230 = vrcp.pop %v1224
  %v1231 = vmul.f32 1.0, %v1230
  %v1232 = vrcp.pop %v1225
  %v1233 = vmul.f32 1.0, %v1232
  %v1234 = vxor.u32 %v1196, 2147483648
  %v1235 = vxor.u32 %v1197, 2147483648
  %v1236 = vxor.u32 %v1204, 2147483648
  %v1237 = vxor.u32 %v1205, 2147483648
  %v1238 = vmul.f32 %v1234, 1.442695
  %v1239 = vpow.pop %v1238
  %v1240 = vmul.f32 %v1235, 1.442695
  %v1241 = vpow.pop %v1240
  %v1242 = vmul.f32 %v1236, 1.442695
  %v1243 = vpow.pop %v1242
  %v1244 = vmul.f32 %v1237, 1.442695
  %v1245 = vpow.pop %v1244
  %v1246 = vadd.f32 %v1239, 1.0
  %v1247 = vadd.f32 %v1241, 1.0
  %v1248 = vadd.f32 %v1243, 1.0
  %v1249 = vadd.f32 %v1245, 1.0
  %v1250 = vrcp.pop %v1246
  %v1251 = vmul.f32 1.0, %v1250
  %v1252 = vrcp.pop %v1247
  %v1253 = vmul.f32 1.0, %v1252
  %v1254 = vrcp.pop %v1248
  %v1255 = vmul.f32 1.0, %v1254
  %v1256 = vrcp.pop %v1249
  %v1257 = vmul.f32 1.0, %v1256
  %v1258 = vtanh.pop %v1198
  %v1259 = vtanh.pop %v1199
  %v1260 = vtanh.pop %v1206
  %v1261 = vtanh.pop %v1207
  %v1262 = vxor.u32 %v1200, 2147483648
  %v1263 = vxor.u32 %v1201, 2147483648
  %v1264 = vxor.u32 %v1208, 2147483648
  %v1265 = vxor.u32 %v1209, 2147483648
  %v1266 = vmul.f32 %v1262, 1.442695
  %v1267 = vpow.pop %v1266
  %v1268 = vmul.f32 %v1263, 1.442695
  %v1269 = vpow.pop %v1268
  %v1270 = vmul.f32 %v1264, 1.442695
  %v1271 = vpow.pop %v1270
  %v1272 = vmul.f32 %v1265, 1.442695
  %v1273 = vpow.pop %v1272
  %v1274 = vadd.f32 %v1267, 1.0
  %v1275 = vadd.f32 %v1269, 1.0
  %v1276 = vadd.f32 %v1271, 1.0
  %v1277 = vadd.f32 %v1273, 1.0
  %v1278 = vrcp.pop %v1274
  %v1279 = vmul.f32 1.0, %v1278
  %v1280 = vrcp.pop %v1275
  %v1281 = vmul.f32 1.0, %v1280
  %v1282 = vrcp.pop %v1276
  %v1283 = vmul.f32 1.0, %v1282
  %v1284 = vrcp.pop %v1277
  %v1285 = vmul.f32 1.0, %v1284
  %v1286 = vmul.f32 %v1251, %v86
  %v1287 = vmul.f32 %v1253, %v87
  %v1288 = vmul.f32 %v1255, %v88
  %v1289 = vmul.f32 %v1257, %v89
  %v1290 = vmul.f32 %v1227, %v1258
  %v1291 = vmul.f32 %v1229, %v1259
  %v1292 = vmul.f32 %v1231, %v1260
  %v1293 = vmul.f32 %v1233, %v1261
  %v1294 = vadd.f32 %v1286, %v1290
  %v1295 = vadd.f32 %v1287, %v1291
  %v1296 = vadd.f32 %v1288, %v1292
  %v1297 = vadd.f32 %v1289, %v1293
  %v1298 = vtanh.pop %v1294
  %v1299 = vtanh.pop %v1295
  %v1300 = vtanh.pop %v1296
  %v1301 = vtanh.pop %v1297
  %v1302 = vmul.f32 %v1279, %v1298
  %v1303 = vmul.f32 %v1281, %v1299
  %v1304 = vmul.f32 %v1283, %v1300
  %v1305 = vmul.f32 %v1285, %v1301
  %v1306 = vpack.c.bf16 %v1304, %v1302
  %v1307 = vpack.c.bf16 %v1305, %v1303
  %v1308 = vld [vmem:[%s2] sm:$0xff]
  %v1309 = vld [vmem:[%s2 + $0x8] sm:$0xff]
  %v1310 = vld [vmem:[%s2 + $0x10] sm:$0xff]
  %v1311 = vld [vmem:[%s2 + $0x18] sm:$0xff]
  %v1312 = vld [vmem:[%s2 + $0x20] sm:$0xff]
  %v1313 = vld [vmem:[%s2 + $0x28] sm:$0xff]
  %v1314 = vld [vmem:[%s2 + $0x30] sm:$0xff]
  %v1315 = vld [vmem:[%s2 + $0x38] sm:$0xff]
  %v1316 = vld [vmem:[%s2 + $0x40] sm:$0xff]
  %v1317 = vld [vmem:[%s2 + $0x48] sm:$0xff]
  %v1318 = vld [vmem:[%s2 + $0x50] sm:$0xff]
  %v1319 = vld [vmem:[%s2 + $0x58] sm:$0xff]
  %v1320 = vld [vmem:[%s2 + $0x60] sm:$0xff]
  %v1321 = vld [vmem:[%s2 + $0x68] sm:$0xff]
  %v1322 = vld [vmem:[%s2 + $0x70] sm:$0xff]
  %v1323 = vld [vmem:[%s2 + $0x78] sm:$0xff]
  %v1324 = vld [vmem:[%s2 + $0x80] sm:$0xff]
  %v1325 = vld [vmem:[%s2 + $0x88] sm:$0xff]
  %v1326 = vld [vmem:[%s2 + $0x90] sm:$0xff]
  %v1327 = vld [vmem:[%s2 + $0x98] sm:$0xff]
  %v1328 = vld [vmem:[%s2 + $0xa0] sm:$0xff]
  %v1329 = vld [vmem:[%s2 + $0xa8] sm:$0xff]
  %v1330 = vld [vmem:[%s2 + $0xb0] sm:$0xff]
  %v1331 = vld [vmem:[%s2 + $0xb8] sm:$0xff]
  %v1332 = vld [vmem:[%s2 + $0xc0] sm:$0xff]
  %v1333 = vld [vmem:[%s2 + $0xc8] sm:$0xff]
  %v1334 = vld [vmem:[%s2 + $0xd0] sm:$0xff]
  %v1335 = vld [vmem:[%s2 + $0xd8] sm:$0xff]
  %v1336 = vld [vmem:[%s2 + $0xe0] sm:$0xff]
  %v1337 = vld [vmem:[%s2 + $0xe8] sm:$0xff]
  %v1338 = vld [vmem:[%s2 + $0xf0] sm:$0xff]
  %v1339 = vld [vmem:[%s2 + $0xf8] sm:$0xff]
  %v1340 = vld [vmem:[%s2 + $0x100] sm:$0xff]
  %v1341 = vld [vmem:[%s2 + $0x108] sm:$0xff]
  %v1342 = vld [vmem:[%s2 + $0x110] sm:$0xff]
  %v1343 = vld [vmem:[%s2 + $0x118] sm:$0xff]
  %v1344 = vld [vmem:[%s2 + $0x120] sm:$0xff]
  %v1345 = vld [vmem:[%s2 + $0x128] sm:$0xff]
  %v1346 = vld [vmem:[%s2 + $0x130] sm:$0xff]
  %v1347 = vld [vmem:[%s2 + $0x138] sm:$0xff]
  %v1348 = vld [vmem:[%s2 + $0x140] sm:$0xff]
  %v1349 = vld [vmem:[%s2 + $0x148] sm:$0xff]
  %v1350 = vld [vmem:[%s2 + $0x150] sm:$0xff]
  %v1351 = vld [vmem:[%s2 + $0x158] sm:$0xff]
  %v1352 = vld [vmem:[%s2 + $0x160] sm:$0xff]
  %v1353 = vld [vmem:[%s2 + $0x168] sm:$0xff]
  %v1354 = vld [vmem:[%s2 + $0x170] sm:$0xff]
  %v1355 = vld [vmem:[%s2 + $0x178] sm:$0xff]
  %v1356 = vld [vmem:[%s2 + $0x180] sm:$0xff]
  %v1357 = vld [vmem:[%s2 + $0x188] sm:$0xff]
  %v1358 = vld [vmem:[%s2 + $0x190] sm:$0xff]
  %v1359 = vld [vmem:[%s2 + $0x198] sm:$0xff]
  %v1360 = vld [vmem:[%s2 + $0x1a0] sm:$0xff]
  %v1361 = vld [vmem:[%s2 + $0x1a8] sm:$0xff]
  %v1362 = vld [vmem:[%s2 + $0x1b0] sm:$0xff]
  %v1363 = vld [vmem:[%s2 + $0x1b8] sm:$0xff]
  %v1364 = vld [vmem:[%s2 + $0x1c0] sm:$0xff]
  %v1365 = vld [vmem:[%s2 + $0x1c8] sm:$0xff]
  %v1366 = vld [vmem:[%s2 + $0x1d0] sm:$0xff]
  %v1367 = vld [vmem:[%s2 + $0x1d8] sm:$0xff]
  %v1368 = vld [vmem:[%s2 + $0x1e0] sm:$0xff]
  %v1369 = vld [vmem:[%s2 + $0x1e8] sm:$0xff]
  %v1370 = vld [vmem:[%s2 + $0x1f0] sm:$0xff]
  %v1371 = vld [vmem:[%s2 + $0x1f8] sm:$0xff]
  %v1372 = vld [vmem:[%s2 + $0x200] sm:$0xff]
  %v1373 = vld [vmem:[%s2 + $0x208] sm:$0xff]
  %v1374 = vld [vmem:[%s2 + $0x210] sm:$0xff]
  %v1375 = vld [vmem:[%s2 + $0x218] sm:$0xff]
  %v1376 = vld [vmem:[%s2 + $0x220] sm:$0xff]
  %v1377 = vld [vmem:[%s2 + $0x228] sm:$0xff]
  %v1378 = vld [vmem:[%s2 + $0x230] sm:$0xff]
  %v1379 = vld [vmem:[%s2 + $0x238] sm:$0xff]
  %v1380 = vld [vmem:[%s2 + $0x240] sm:$0xff]
  %v1381 = vld [vmem:[%s2 + $0x248] sm:$0xff]
  %v1382 = vld [vmem:[%s2 + $0x250] sm:$0xff]
  %v1383 = vld [vmem:[%s2 + $0x258] sm:$0xff]
  %v1384 = vld [vmem:[%s2 + $0x260] sm:$0xff]
  %v1385 = vld [vmem:[%s2 + $0x268] sm:$0xff]
  %v1386 = vld [vmem:[%s2 + $0x270] sm:$0xff]
  %v1387 = vld [vmem:[%s2 + $0x278] sm:$0xff]
  %v1388 = vld [vmem:[%s2 + $0x280] sm:$0xff]
  %v1389 = vld [vmem:[%s2 + $0x288] sm:$0xff]
  %v1390 = vld [vmem:[%s2 + $0x290] sm:$0xff]
  %v1391 = vld [vmem:[%s2 + $0x298] sm:$0xff]
  %v1392 = vld [vmem:[%s2 + $0x2a0] sm:$0xff]
  %v1393 = vld [vmem:[%s2 + $0x2a8] sm:$0xff]
  %v1394 = vld [vmem:[%s2 + $0x2b0] sm:$0xff]
  %v1395 = vld [vmem:[%s2 + $0x2b8] sm:$0xff]
  %v1396 = vld [vmem:[%s2 + $0x2c0] sm:$0xff]
  %v1397 = vld [vmem:[%s2 + $0x2c8] sm:$0xff]
  %v1398 = vld [vmem:[%s2 + $0x2d0] sm:$0xff]
  %v1399 = vld [vmem:[%s2 + $0x2d8] sm:$0xff]
  %v1400 = vld [vmem:[%s2 + $0x2e0] sm:$0xff]
  %v1401 = vld [vmem:[%s2 + $0x2e8] sm:$0xff]
  %v1402 = vld [vmem:[%s2 + $0x2f0] sm:$0xff]
  %v1403 = vld [vmem:[%s2 + $0x2f8] sm:$0xff]
  %v1404 = vld [vmem:[%s2 + $0x300] sm:$0xff]
  %v1405 = vld [vmem:[%s2 + $0x308] sm:$0xff]
  %v1406 = vld [vmem:[%s2 + $0x310] sm:$0xff]
  %v1407 = vld [vmem:[%s2 + $0x318] sm:$0xff]
  %v1408 = vld [vmem:[%s2 + $0x320] sm:$0xff]
  %v1409 = vld [vmem:[%s2 + $0x328] sm:$0xff]
  %v1410 = vld [vmem:[%s2 + $0x330] sm:$0xff]
  %v1411 = vld [vmem:[%s2 + $0x338] sm:$0xff]
  %v1412 = vld [vmem:[%s2 + $0x340] sm:$0xff]
  %v1413 = vld [vmem:[%s2 + $0x348] sm:$0xff]
  %v1414 = vld [vmem:[%s2 + $0x350] sm:$0xff]
  %v1415 = vld [vmem:[%s2 + $0x358] sm:$0xff]
  %v1416 = vld [vmem:[%s2 + $0x360] sm:$0xff]
  %v1417 = vld [vmem:[%s2 + $0x368] sm:$0xff]
  %v1418 = vld [vmem:[%s2 + $0x370] sm:$0xff]
  %v1419 = vld [vmem:[%s2 + $0x378] sm:$0xff]
  %v1420 = vld [vmem:[%s2 + $0x380] sm:$0xff]
  %v1421 = vld [vmem:[%s2 + $0x388] sm:$0xff]
  %v1422 = vld [vmem:[%s2 + $0x390] sm:$0xff]
  %v1423 = vld [vmem:[%s2 + $0x398] sm:$0xff]
  %v1424 = vld [vmem:[%s2 + $0x3a0] sm:$0xff]
  %v1425 = vld [vmem:[%s2 + $0x3a8] sm:$0xff]
  %v1426 = vld [vmem:[%s2 + $0x3b0] sm:$0xff]
  %v1427 = vld [vmem:[%s2 + $0x3b8] sm:$0xff]
  %v1428 = vld [vmem:[%s2 + $0x3c0] sm:$0xff]
  %v1429 = vld [vmem:[%s2 + $0x3c8] sm:$0xff]
  %v1430 = vld [vmem:[%s2 + $0x3d0] sm:$0xff]
  %v1431 = vld [vmem:[%s2 + $0x3d8] sm:$0xff]
  %v1432 = vld [vmem:[%s2 + $0x3e0] sm:$0xff]
  %v1433 = vld [vmem:[%s2 + $0x3e8] sm:$0xff]
  %v1434 = vld [vmem:[%s2 + $0x3f0] sm:$0xff]
  %v1435 = vld [vmem:[%s2 + $0x3f8] sm:$0xff]
  %v1564 = vunpack.c.l.b16 %v1308
  %v1565 = vunpack.c.h.b16 %v1308
  %v1566 = vunpack.c.l.b16 %v1309
  %v1567 = vunpack.c.h.b16 %v1309
  %v1568 = vunpack.c.l.b16 %v1310
  %v1569 = vunpack.c.h.b16 %v1310
  %v1570 = vunpack.c.l.b16 %v1311
  %v1571 = vunpack.c.h.b16 %v1311
  %v1572 = vunpack.c.l.b16 %v1312
  %v1573 = vunpack.c.h.b16 %v1312
  %v1574 = vunpack.c.l.b16 %v1313
  %v1575 = vunpack.c.h.b16 %v1313
  %v1576 = vunpack.c.l.b16 %v1314
  %v1577 = vunpack.c.h.b16 %v1314
  %v1578 = vunpack.c.l.b16 %v1315
  %v1579 = vunpack.c.h.b16 %v1315
  %v1580 = vunpack.c.l.b16 %v1316
  %v1581 = vunpack.c.h.b16 %v1316
  %v1582 = vunpack.c.l.b16 %v1317
  %v1583 = vunpack.c.h.b16 %v1317
  %v1584 = vunpack.c.l.b16 %v1318
  %v1585 = vunpack.c.h.b16 %v1318
  %v1586 = vunpack.c.l.b16 %v1319
  %v1587 = vunpack.c.h.b16 %v1319
  %v1588 = vunpack.c.l.b16 %v1320
  %v1589 = vunpack.c.h.b16 %v1320
  %v1590 = vunpack.c.l.b16 %v1321
  %v1591 = vunpack.c.h.b16 %v1321
  %v1592 = vunpack.c.l.b16 %v1322
  %v1593 = vunpack.c.h.b16 %v1322
  %v1594 = vunpack.c.l.b16 %v1323
  %v1595 = vunpack.c.h.b16 %v1323
  %v1596 = vunpack.c.l.b16 %v1324
  %v1597 = vunpack.c.h.b16 %v1324
  %v1598 = vunpack.c.l.b16 %v1325
  %v1599 = vunpack.c.h.b16 %v1325
  %v1600 = vunpack.c.l.b16 %v1326
  %v1601 = vunpack.c.h.b16 %v1326
  %v1602 = vunpack.c.l.b16 %v1327
  %v1603 = vunpack.c.h.b16 %v1327
  %v1604 = vunpack.c.l.b16 %v1328
  %v1605 = vunpack.c.h.b16 %v1328
  %v1606 = vunpack.c.l.b16 %v1329
  %v1607 = vunpack.c.h.b16 %v1329
  %v1608 = vunpack.c.l.b16 %v1330
  %v1609 = vunpack.c.h.b16 %v1330
  %v1610 = vunpack.c.l.b16 %v1331
  %v1611 = vunpack.c.h.b16 %v1331
  %v1612 = vunpack.c.l.b16 %v1332
  %v1613 = vunpack.c.h.b16 %v1332
  %v1614 = vunpack.c.l.b16 %v1333
  %v1615 = vunpack.c.h.b16 %v1333
  %v1616 = vunpack.c.l.b16 %v1334
  %v1617 = vunpack.c.h.b16 %v1334
  %v1618 = vunpack.c.l.b16 %v1335
  %v1619 = vunpack.c.h.b16 %v1335
  %v1620 = vunpack.c.l.b16 %v1336
  %v1621 = vunpack.c.h.b16 %v1336
  %v1622 = vunpack.c.l.b16 %v1337
  %v1623 = vunpack.c.h.b16 %v1337
  %v1624 = vunpack.c.l.b16 %v1338
  %v1625 = vunpack.c.h.b16 %v1338
  %v1626 = vunpack.c.l.b16 %v1339
  %v1627 = vunpack.c.h.b16 %v1339
  %v1628 = vunpack.c.l.b16 %v1340
  %v1629 = vunpack.c.h.b16 %v1340
  %v1630 = vunpack.c.l.b16 %v1341
  %v1631 = vunpack.c.h.b16 %v1341
  %v1632 = vunpack.c.l.b16 %v1342
  %v1633 = vunpack.c.h.b16 %v1342
  %v1634 = vunpack.c.l.b16 %v1343
  %v1635 = vunpack.c.h.b16 %v1343
  %v1636 = vunpack.c.l.b16 %v1344
  %v1637 = vunpack.c.h.b16 %v1344
  %v1638 = vunpack.c.l.b16 %v1345
  %v1639 = vunpack.c.h.b16 %v1345
  %v1640 = vunpack.c.l.b16 %v1346
  %v1641 = vunpack.c.h.b16 %v1346
  %v1642 = vunpack.c.l.b16 %v1347
  %v1643 = vunpack.c.h.b16 %v1347
  %v1644 = vunpack.c.l.b16 %v1348
  %v1645 = vunpack.c.h.b16 %v1348
  %v1646 = vunpack.c.l.b16 %v1349
  %v1647 = vunpack.c.h.b16 %v1349
  %v1648 = vunpack.c.l.b16 %v1350
  %v1649 = vunpack.c.h.b16 %v1350
  %v1650 = vunpack.c.l.b16 %v1351
  %v1651 = vunpack.c.h.b16 %v1351
  %v1652 = vunpack.c.l.b16 %v1352
  %v1653 = vunpack.c.h.b16 %v1352
  %v1654 = vunpack.c.l.b16 %v1353
  %v1655 = vunpack.c.h.b16 %v1353
  %v1656 = vunpack.c.l.b16 %v1354
  %v1657 = vunpack.c.h.b16 %v1354
  %v1658 = vunpack.c.l.b16 %v1355
  %v1659 = vunpack.c.h.b16 %v1355
  %v1660 = vunpack.c.l.b16 %v1356
  %v1661 = vunpack.c.h.b16 %v1356
  %v1662 = vunpack.c.l.b16 %v1357
  %v1663 = vunpack.c.h.b16 %v1357
  %v1664 = vunpack.c.l.b16 %v1358
  %v1665 = vunpack.c.h.b16 %v1358
  %v1666 = vunpack.c.l.b16 %v1359
  %v1667 = vunpack.c.h.b16 %v1359
  %v1668 = vunpack.c.l.b16 %v1360
  %v1669 = vunpack.c.h.b16 %v1360
  %v1670 = vunpack.c.l.b16 %v1361
  %v1671 = vunpack.c.h.b16 %v1361
  %v1672 = vunpack.c.l.b16 %v1362
  %v1673 = vunpack.c.h.b16 %v1362
  %v1674 = vunpack.c.l.b16 %v1363
  %v1675 = vunpack.c.h.b16 %v1363
  %v1676 = vunpack.c.l.b16 %v1364
  %v1677 = vunpack.c.h.b16 %v1364
  %v1678 = vunpack.c.l.b16 %v1365
  %v1679 = vunpack.c.h.b16 %v1365
  %v1680 = vunpack.c.l.b16 %v1366
  %v1681 = vunpack.c.h.b16 %v1366
  %v1682 = vunpack.c.l.b16 %v1367
  %v1683 = vunpack.c.h.b16 %v1367
  %v1684 = vunpack.c.l.b16 %v1368
  %v1685 = vunpack.c.h.b16 %v1368
  %v1686 = vunpack.c.l.b16 %v1369
  %v1687 = vunpack.c.h.b16 %v1369
  %v1688 = vunpack.c.l.b16 %v1370
  %v1689 = vunpack.c.h.b16 %v1370
  %v1690 = vunpack.c.l.b16 %v1371
  %v1691 = vunpack.c.h.b16 %v1371
  %v1692 = vunpack.c.l.b16 %v1372
  %v1693 = vunpack.c.h.b16 %v1372
  %v1694 = vunpack.c.l.b16 %v1373
  %v1695 = vunpack.c.h.b16 %v1373
  %v1696 = vunpack.c.l.b16 %v1374
  %v1697 = vunpack.c.h.b16 %v1374
  %v1698 = vunpack.c.l.b16 %v1375
  %v1699 = vunpack.c.h.b16 %v1375
  %v1700 = vunpack.c.l.b16 %v1376
  %v1701 = vunpack.c.h.b16 %v1376
  %v1702 = vunpack.c.l.b16 %v1377
  %v1703 = vunpack.c.h.b16 %v1377
  %v1704 = vunpack.c.l.b16 %v1378
  %v1705 = vunpack.c.h.b16 %v1378
  %v1706 = vunpack.c.l.b16 %v1379
  %v1707 = vunpack.c.h.b16 %v1379
  %v1708 = vunpack.c.l.b16 %v1380
  %v1709 = vunpack.c.h.b16 %v1380
  %v1710 = vunpack.c.l.b16 %v1381
  %v1711 = vunpack.c.h.b16 %v1381
  %v1712 = vunpack.c.l.b16 %v1382
  %v1713 = vunpack.c.h.b16 %v1382
  %v1714 = vunpack.c.l.b16 %v1383
  %v1715 = vunpack.c.h.b16 %v1383
  %v1716 = vunpack.c.l.b16 %v1384
  %v1717 = vunpack.c.h.b16 %v1384
  %v1718 = vunpack.c.l.b16 %v1385
  %v1719 = vunpack.c.h.b16 %v1385
  %v1720 = vunpack.c.l.b16 %v1386
  %v1721 = vunpack.c.h.b16 %v1386
  %v1722 = vunpack.c.l.b16 %v1387
  %v1723 = vunpack.c.h.b16 %v1387
  %v1724 = vunpack.c.l.b16 %v1388
  %v1725 = vunpack.c.h.b16 %v1388
  %v1726 = vunpack.c.l.b16 %v1389
  %v1727 = vunpack.c.h.b16 %v1389
  %v1728 = vunpack.c.l.b16 %v1390
  %v1729 = vunpack.c.h.b16 %v1390
  %v1730 = vunpack.c.l.b16 %v1391
  %v1731 = vunpack.c.h.b16 %v1391
  %v1732 = vunpack.c.l.b16 %v1392
  %v1733 = vunpack.c.h.b16 %v1392
  %v1734 = vunpack.c.l.b16 %v1393
  %v1735 = vunpack.c.h.b16 %v1393
  %v1736 = vunpack.c.l.b16 %v1394
  %v1737 = vunpack.c.h.b16 %v1394
  %v1738 = vunpack.c.l.b16 %v1395
  %v1739 = vunpack.c.h.b16 %v1395
  %v1740 = vunpack.c.l.b16 %v1396
  %v1741 = vunpack.c.h.b16 %v1396
  %v1742 = vunpack.c.l.b16 %v1397
  %v1743 = vunpack.c.h.b16 %v1397
  %v1744 = vunpack.c.l.b16 %v1398
  %v1745 = vunpack.c.h.b16 %v1398
  %v1746 = vunpack.c.l.b16 %v1399
  %v1747 = vunpack.c.h.b16 %v1399
  %v1748 = vunpack.c.l.b16 %v1400
  %v1749 = vunpack.c.h.b16 %v1400
  %v1750 = vunpack.c.l.b16 %v1401
  %v1751 = vunpack.c.h.b16 %v1401
  %v1752 = vunpack.c.l.b16 %v1402
  %v1753 = vunpack.c.h.b16 %v1402
  %v1754 = vunpack.c.l.b16 %v1403
  %v1755 = vunpack.c.h.b16 %v1403
  %v1756 = vunpack.c.l.b16 %v1404
  %v1757 = vunpack.c.h.b16 %v1404
  %v1758 = vunpack.c.l.b16 %v1405
  %v1759 = vunpack.c.h.b16 %v1405
  %v1760 = vunpack.c.l.b16 %v1406
  %v1761 = vunpack.c.h.b16 %v1406
  %v1762 = vunpack.c.l.b16 %v1407
  %v1763 = vunpack.c.h.b16 %v1407
  %v1764 = vunpack.c.l.b16 %v1408
  %v1765 = vunpack.c.h.b16 %v1408
  %v1766 = vunpack.c.l.b16 %v1409
  %v1767 = vunpack.c.h.b16 %v1409
  %v1768 = vunpack.c.l.b16 %v1410
  %v1769 = vunpack.c.h.b16 %v1410
  %v1770 = vunpack.c.l.b16 %v1411
  %v1771 = vunpack.c.h.b16 %v1411
  %v1772 = vunpack.c.l.b16 %v1412
  %v1773 = vunpack.c.h.b16 %v1412
  %v1774 = vunpack.c.l.b16 %v1413
  %v1775 = vunpack.c.h.b16 %v1413
  %v1776 = vunpack.c.l.b16 %v1414
  %v1777 = vunpack.c.h.b16 %v1414
  %v1778 = vunpack.c.l.b16 %v1415
  %v1779 = vunpack.c.h.b16 %v1415
  %v1780 = vunpack.c.l.b16 %v1416
  %v1781 = vunpack.c.h.b16 %v1416
  %v1782 = vunpack.c.l.b16 %v1417
  %v1783 = vunpack.c.h.b16 %v1417
  %v1784 = vunpack.c.l.b16 %v1418
  %v1785 = vunpack.c.h.b16 %v1418
  %v1786 = vunpack.c.l.b16 %v1419
  %v1787 = vunpack.c.h.b16 %v1419
  %v1788 = vunpack.c.l.b16 %v1420
  %v1789 = vunpack.c.h.b16 %v1420
  %v1790 = vunpack.c.l.b16 %v1421
  %v1791 = vunpack.c.h.b16 %v1421
  %v1792 = vunpack.c.l.b16 %v1422
  %v1793 = vunpack.c.h.b16 %v1422
  %v1794 = vunpack.c.l.b16 %v1423
  %v1795 = vunpack.c.h.b16 %v1423
  %v1796 = vunpack.c.l.b16 %v1424
  %v1797 = vunpack.c.h.b16 %v1424
  %v1798 = vunpack.c.l.b16 %v1425
  %v1799 = vunpack.c.h.b16 %v1425
  %v1800 = vunpack.c.l.b16 %v1426
  %v1801 = vunpack.c.h.b16 %v1426
  %v1802 = vunpack.c.l.b16 %v1427
  %v1803 = vunpack.c.h.b16 %v1427
  %v1804 = vunpack.c.l.b16 %v1428
  %v1805 = vunpack.c.h.b16 %v1428
  %v1806 = vunpack.c.l.b16 %v1429
  %v1807 = vunpack.c.h.b16 %v1429
  %v1808 = vunpack.c.l.b16 %v1430
  %v1809 = vunpack.c.h.b16 %v1430
  %v1810 = vunpack.c.l.b16 %v1431
  %v1811 = vunpack.c.h.b16 %v1431
  %v1812 = vunpack.c.l.b16 %v1432
  %v1813 = vunpack.c.h.b16 %v1432
  %v1814 = vunpack.c.l.b16 %v1433
  %v1815 = vunpack.c.h.b16 %v1433
  %v1816 = vunpack.c.l.b16 %v1434
  %v1817 = vunpack.c.h.b16 %v1434
  %v1818 = vunpack.c.l.b16 %v1435
  %v1819 = vunpack.c.h.b16 %v1435
  %v1820 = vpack.c.b16 %v1572, %v1564
  %v1821 = vpack.c.b16 %v1573, %v1565
  %v1822 = vpack.c.b16 %v1574, %v1566
  %v1823 = vpack.c.b16 %v1575, %v1567
  %v1824 = vpack.c.b16 %v1576, %v1568
  %v1825 = vpack.c.b16 %v1577, %v1569
  %v1826 = vpack.c.b16 %v1578, %v1570
  %v1827 = vpack.c.b16 %v1579, %v1571
  %v1828 = vpack.c.b16 %v1588, %v1580
  %v1829 = vpack.c.b16 %v1589, %v1581
  %v1830 = vpack.c.b16 %v1590, %v1582
  %v1831 = vpack.c.b16 %v1591, %v1583
  %v1832 = vpack.c.b16 %v1592, %v1584
  %v1833 = vpack.c.b16 %v1593, %v1585
  %v1834 = vpack.c.b16 %v1594, %v1586
  %v1835 = vpack.c.b16 %v1595, %v1587
  %v1836 = vpack.c.b16 %v1604, %v1596
  %v1837 = vpack.c.b16 %v1605, %v1597
  %v1838 = vpack.c.b16 %v1606, %v1598
  %v1839 = vpack.c.b16 %v1607, %v1599
  %v1840 = vpack.c.b16 %v1608, %v1600
  %v1841 = vpack.c.b16 %v1609, %v1601
  %v1842 = vpack.c.b16 %v1610, %v1602
  %v1843 = vpack.c.b16 %v1611, %v1603
  %v1844 = vpack.c.b16 %v1620, %v1612
  %v1845 = vpack.c.b16 %v1621, %v1613
  %v1846 = vpack.c.b16 %v1622, %v1614
  %v1847 = vpack.c.b16 %v1623, %v1615
  %v1848 = vpack.c.b16 %v1624, %v1616
  %v1849 = vpack.c.b16 %v1625, %v1617
  %v1850 = vpack.c.b16 %v1626, %v1618
  %v1851 = vpack.c.b16 %v1627, %v1619
  %v1852 = vpack.c.b16 %v1636, %v1628
  %v1853 = vpack.c.b16 %v1637, %v1629
  %v1854 = vpack.c.b16 %v1638, %v1630
  %v1855 = vpack.c.b16 %v1639, %v1631
  %v1856 = vpack.c.b16 %v1640, %v1632
  %v1857 = vpack.c.b16 %v1641, %v1633
  %v1858 = vpack.c.b16 %v1642, %v1634
  %v1859 = vpack.c.b16 %v1643, %v1635
  %v1860 = vpack.c.b16 %v1652, %v1644
  %v1861 = vpack.c.b16 %v1653, %v1645
  %v1862 = vpack.c.b16 %v1654, %v1646
  %v1863 = vpack.c.b16 %v1655, %v1647
  %v1864 = vpack.c.b16 %v1656, %v1648
  %v1865 = vpack.c.b16 %v1657, %v1649
  %v1866 = vpack.c.b16 %v1658, %v1650
  %v1867 = vpack.c.b16 %v1659, %v1651
  %v1868 = vpack.c.b16 %v1668, %v1660
  %v1869 = vpack.c.b16 %v1669, %v1661
  %v1870 = vpack.c.b16 %v1670, %v1662
  %v1871 = vpack.c.b16 %v1671, %v1663
  %v1872 = vpack.c.b16 %v1672, %v1664
  %v1873 = vpack.c.b16 %v1673, %v1665
  %v1874 = vpack.c.b16 %v1674, %v1666
  %v1875 = vpack.c.b16 %v1675, %v1667
  %v1876 = vpack.c.b16 %v1684, %v1676
  %v1877 = vpack.c.b16 %v1685, %v1677
  %v1878 = vpack.c.b16 %v1686, %v1678
  %v1879 = vpack.c.b16 %v1687, %v1679
  %v1880 = vpack.c.b16 %v1688, %v1680
  %v1881 = vpack.c.b16 %v1689, %v1681
  %v1882 = vpack.c.b16 %v1690, %v1682
  %v1883 = vpack.c.b16 %v1691, %v1683
  %v1884 = vpack.c.b16 %v1700, %v1692
  %v1885 = vpack.c.b16 %v1701, %v1693
  %v1886 = vpack.c.b16 %v1702, %v1694
  %v1887 = vpack.c.b16 %v1703, %v1695
  %v1888 = vpack.c.b16 %v1704, %v1696
  %v1889 = vpack.c.b16 %v1705, %v1697
  %v1890 = vpack.c.b16 %v1706, %v1698
  %v1891 = vpack.c.b16 %v1707, %v1699
  %v1892 = vpack.c.b16 %v1716, %v1708
  %v1893 = vpack.c.b16 %v1717, %v1709
  %v1894 = vpack.c.b16 %v1718, %v1710
  %v1895 = vpack.c.b16 %v1719, %v1711
  %v1896 = vpack.c.b16 %v1720, %v1712
  %v1897 = vpack.c.b16 %v1721, %v1713
  %v1898 = vpack.c.b16 %v1722, %v1714
  %v1899 = vpack.c.b16 %v1723, %v1715
  %v1900 = vpack.c.b16 %v1732, %v1724
  %v1901 = vpack.c.b16 %v1733, %v1725
  %v1902 = vpack.c.b16 %v1734, %v1726
  %v1903 = vpack.c.b16 %v1735, %v1727
  %v1904 = vpack.c.b16 %v1736, %v1728
  %v1905 = vpack.c.b16 %v1737, %v1729
  %v1906 = vpack.c.b16 %v1738, %v1730
  %v1907 = vpack.c.b16 %v1739, %v1731
  %v1908 = vpack.c.b16 %v1748, %v1740
  %v1909 = vpack.c.b16 %v1749, %v1741
  %v1910 = vpack.c.b16 %v1750, %v1742
  %v1911 = vpack.c.b16 %v1751, %v1743
  %v1912 = vpack.c.b16 %v1752, %v1744
  %v1913 = vpack.c.b16 %v1753, %v1745
  %v1914 = vpack.c.b16 %v1754, %v1746
  %v1915 = vpack.c.b16 %v1755, %v1747
  %v1916 = vpack.c.b16 %v1764, %v1756
  %v1917 = vpack.c.b16 %v1765, %v1757
  %v1918 = vpack.c.b16 %v1766, %v1758
  %v1919 = vpack.c.b16 %v1767, %v1759
  %v1920 = vpack.c.b16 %v1768, %v1760
  %v1921 = vpack.c.b16 %v1769, %v1761
  %v1922 = vpack.c.b16 %v1770, %v1762
  %v1923 = vpack.c.b16 %v1771, %v1763
  %v1924 = vpack.c.b16 %v1780, %v1772
  %v1925 = vpack.c.b16 %v1781, %v1773
  %v1926 = vpack.c.b16 %v1782, %v1774
  %v1927 = vpack.c.b16 %v1783, %v1775
  %v1928 = vpack.c.b16 %v1784, %v1776
  %v1929 = vpack.c.b16 %v1785, %v1777
  %v1930 = vpack.c.b16 %v1786, %v1778
  %v1931 = vpack.c.b16 %v1787, %v1779
  %v1932 = vpack.c.b16 %v1796, %v1788
  %v1933 = vpack.c.b16 %v1797, %v1789
  %v1934 = vpack.c.b16 %v1798, %v1790
  %v1935 = vpack.c.b16 %v1799, %v1791
  %v1936 = vpack.c.b16 %v1800, %v1792
  %v1937 = vpack.c.b16 %v1801, %v1793
  %v1938 = vpack.c.b16 %v1802, %v1794
  %v1939 = vpack.c.b16 %v1803, %v1795
  %v1940 = vpack.c.b16 %v1812, %v1804
  %v1941 = vpack.c.b16 %v1813, %v1805
  %v1942 = vpack.c.b16 %v1814, %v1806
  %v1943 = vpack.c.b16 %v1815, %v1807
  %v1944 = vpack.c.b16 %v1816, %v1808
  %v1945 = vpack.c.b16 %v1817, %v1809
  %v1946 = vpack.c.b16 %v1818, %v1810
  %v1947 = vpack.c.b16 %v1819, %v1811
  %2076 = vmatprep.subr.bf16.mxu0 %v1821
  %2077 = vmatpush1.bf16.msra.mxu0 %v1820
  %2078 = vmatprep.subr.bf16.mxu0 %v1829
  %2079 = vmatpush1.bf16.msra.mxu0 %v1828
  %2080 = vmatprep.subr.bf16.mxu0 %v1837
  %2081 = vmatpush1.bf16.msra.mxu0 %v1836
  %2082 = vmatprep.subr.bf16.mxu0 %v1845
  %2083 = vmatpush1.bf16.msra.mxu0 %v1844
  %2084 = vmatprep.subr.bf16.mxu0 %v1853
  %2085 = vmatpush1.bf16.msra.mxu0 %v1852
  %2086 = vmatprep.subr.bf16.mxu0 %v1861
  %2087 = vmatpush1.bf16.msra.mxu0 %v1860
  %2088 = vmatprep.subr.bf16.mxu0 %v1869
  %2089 = vmatpush1.bf16.msra.mxu0 %v1868
  %2090 = vmatprep.subr.bf16.mxu0 %v1877
  %2091 = vmatpush1.bf16.msra.mxu0 %v1876
  %2092 = vmatprep.subr.bf16.mxu0 %v1885
  %2093 = vmatpush1.bf16.msra.mxu0 %v1884
  %2094 = vmatprep.subr.bf16.mxu0 %v1893
  %2095 = vmatpush1.bf16.msra.mxu0 %v1892
  %2096 = vmatprep.subr.bf16.mxu0 %v1901
  %2097 = vmatpush1.bf16.msra.mxu0 %v1900
  %2098 = vmatprep.subr.bf16.mxu0 %v1909
  %2099 = vmatpush1.bf16.msra.mxu0 %v1908
  %2100 = vmatprep.subr.bf16.mxu0 %v1917
  %2101 = vmatpush1.bf16.msra.mxu0 %v1916
  %2102 = vmatprep.subr.bf16.mxu0 %v1925
  %2103 = vmatpush1.bf16.msra.mxu0 %v1924
  %2104 = vmatprep.subr.bf16.mxu0 %v1933
  %2105 = vmatpush1.bf16.msra.mxu0 %v1932
  %2106 = vmatprep.subr.bf16.mxu0 %v1941
  %2107 = vmatpush1.bf16.msra.mxu0 %v1940
  %2108 = vmatprep.mubr.bf16.mxu0 %v1307
  %2109 = vmatmul.mubr.bf16.gmra.mrb[0].mxu0 %v1306
  %v2110 = vpop.f32.mrb[0].mxu0
  %v2111 = vadd.f32 0.0, %v2110
  %v2112 = vpop.f32.mrb[0].mxu0
  %v2113 = vadd.f32 0.0, %v2112
  %v2114 = vpop.f32.mrb[0].mxu0
  %v2115 = vadd.f32 0.0, %v2114
  %v2116 = vpop.f32.mrb[0].mxu0
  %v2117 = vadd.f32 0.0, %v2116
  %2118 = vdwg.mxu0
  %2119 = vmatprep.subr.bf16.mxu0 %v1823
  %2120 = vmatpush1.bf16.msra.mxu0 %v1822
  %2121 = vmatprep.subr.bf16.mxu0 %v1831
  %2122 = vmatpush1.bf16.msra.mxu0 %v1830
  %2123 = vmatprep.subr.bf16.mxu0 %v1839
  %2124 = vmatpush1.bf16.msra.mxu0 %v1838
  %2125 = vmatprep.subr.bf16.mxu0 %v1847
  %2126 = vmatpush1.bf16.msra.mxu0 %v1846
  %2127 = vmatprep.subr.bf16.mxu0 %v1855
  %2128 = vmatpush1.bf16.msra.mxu0 %v1854
  %2129 = vmatprep.subr.bf16.mxu0 %v1863
  %2130 = vmatpush1.bf16.msra.mxu0 %v1862
  %2131 = vmatprep.subr.bf16.mxu0 %v1871
  %2132 = vmatpush1.bf16.msra.mxu0 %v1870
  %2133 = vmatprep.subr.bf16.mxu0 %v1879
  %2134 = vmatpush1.bf16.msra.mxu0 %v1878
  %2135 = vmatprep.subr.bf16.mxu0 %v1887
  %2136 = vmatpush1.bf16.msra.mxu0 %v1886
  %2137 = vmatprep.subr.bf16.mxu0 %v1895
  %2138 = vmatpush1.bf16.msra.mxu0 %v1894
  %2139 = vmatprep.subr.bf16.mxu0 %v1903
  %2140 = vmatpush1.bf16.msra.mxu0 %v1902
  %2141 = vmatprep.subr.bf16.mxu0 %v1911
  %2142 = vmatpush1.bf16.msra.mxu0 %v1910
  %2143 = vmatprep.subr.bf16.mxu0 %v1919
  %2144 = vmatpush1.bf16.msra.mxu0 %v1918
  %2145 = vmatprep.subr.bf16.mxu0 %v1927
  %2146 = vmatpush1.bf16.msra.mxu0 %v1926
  %2147 = vmatprep.subr.bf16.mxu0 %v1935
  %2148 = vmatpush1.bf16.msra.mxu0 %v1934
  %2149 = vmatprep.subr.bf16.mxu0 %v1943
  %2150 = vmatpush1.bf16.msra.mxu0 %v1942
  %2151 = vmatprep.mubr.bf16.mxu0 %v1307
  %2152 = vmatmul.mubr.bf16.gmra.mrb[0].mxu0 %v1306
  %v2153 = vpop.f32.mrb[0].mxu0
  %v2154 = vadd.f32 0.0, %v2153
  %v2155 = vpop.f32.mrb[0].mxu0
  %v2156 = vadd.f32 0.0, %v2155
  %v2157 = vpop.f32.mrb[0].mxu0
  %v2158 = vadd.f32 0.0, %v2157
  %v2159 = vpop.f32.mrb[0].mxu0
  %v2160 = vadd.f32 0.0, %v2159
  %2161 = vdwg.mxu0
  %2162 = vmatprep.subr.bf16.mxu0 %v1825
  %2163 = vmatpush1.bf16.msra.mxu0 %v1824
  %2164 = vmatprep.subr.bf16.mxu0 %v1833
  %2165 = vmatpush1.bf16.msra.mxu0 %v1832
  %2166 = vmatprep.subr.bf16.mxu0 %v1841
  %2167 = vmatpush1.bf16.msra.mxu0 %v1840
  %2168 = vmatprep.subr.bf16.mxu0 %v1849
  %2169 = vmatpush1.bf16.msra.mxu0 %v1848
  %2170 = vmatprep.subr.bf16.mxu0 %v1857
  %2171 = vmatpush1.bf16.msra.mxu0 %v1856
  %2172 = vmatprep.subr.bf16.mxu0 %v1865
  %2173 = vmatpush1.bf16.msra.mxu0 %v1864
  %2174 = vmatprep.subr.bf16.mxu0 %v1873
  %2175 = vmatpush1.bf16.msra.mxu0 %v1872
  %2176 = vmatprep.subr.bf16.mxu0 %v1881
  %2177 = vmatpush1.bf16.msra.mxu0 %v1880
  %2178 = vmatprep.subr.bf16.mxu0 %v1889
  %2179 = vmatpush1.bf16.msra.mxu0 %v1888
  %2180 = vmatprep.subr.bf16.mxu0 %v1897
  %2181 = vmatpush1.bf16.msra.mxu0 %v1896
  %2182 = vmatprep.subr.bf16.mxu0 %v1905
  %2183 = vmatpush1.bf16.msra.mxu0 %v1904
  %2184 = vmatprep.subr.bf16.mxu0 %v1913
  %2185 = vmatpush1.bf16.msra.mxu0 %v1912
  %2186 = vmatprep.subr.bf16.mxu0 %v1921
  %2187 = vmatpush1.bf16.msra.mxu0 %v1920
  %2188 = vmatprep.subr.bf16.mxu0 %v1929
  %2189 = vmatpush1.bf16.msra.mxu0 %v1928
  %2190 = vmatprep.subr.bf16.mxu0 %v1937
  %2191 = vmatpush1.bf16.msra.mxu0 %v1936
  %2192 = vmatprep.subr.bf16.mxu0 %v1945
  %2193 = vmatpush1.bf16.msra.mxu0 %v1944
  %2194 = vmatprep.mubr.bf16.mxu0 %v1307
  %2195 = vmatmul.mubr.bf16.gmra.mrb[0].mxu0 %v1306
  %v2196 = vpop.f32.mrb[0].mxu0
  %v2197 = vadd.f32 0.0, %v2196
  %v2198 = vpop.f32.mrb[0].mxu0
  %v2199 = vadd.f32 0.0, %v2198
  %v2200 = vpop.f32.mrb[0].mxu0
  %v2201 = vadd.f32 0.0, %v2200
  %v2202 = vpop.f32.mrb[0].mxu0
  %v2203 = vadd.f32 0.0, %v2202
  %2204 = vdwg.mxu0
  %2205 = vmatprep.subr.bf16.mxu0 %v1827
  %2206 = vmatpush1.bf16.msra.mxu0 %v1826
  %2207 = vmatprep.subr.bf16.mxu0 %v1835
  %2208 = vmatpush1.bf16.msra.mxu0 %v1834
  %2209 = vmatprep.subr.bf16.mxu0 %v1843
  %2210 = vmatpush1.bf16.msra.mxu0 %v1842
  %2211 = vmatprep.subr.bf16.mxu0 %v1851
  %2212 = vmatpush1.bf16.msra.mxu0 %v1850
  %2213 = vmatprep.subr.bf16.mxu0 %v1859
  %2214 = vmatpush1.bf16.msra.mxu0 %v1858
  %2215 = vmatprep.subr.bf16.mxu0 %v1867
  %2216 = vmatpush1.bf16.msra.mxu0 %v1866
  %2217 = vmatprep.subr.bf16.mxu0 %v1875
  %2218 = vmatpush1.bf16.msra.mxu0 %v1874
  %2219 = vmatprep.subr.bf16.mxu0 %v1883
  %2220 = vmatpush1.bf16.msra.mxu0 %v1882
  %2221 = vmatprep.subr.bf16.mxu0 %v1891
  %2222 = vmatpush1.bf16.msra.mxu0 %v1890
  %2223 = vmatprep.subr.bf16.mxu0 %v1899
  %2224 = vmatpush1.bf16.msra.mxu0 %v1898
  %2225 = vmatprep.subr.bf16.mxu0 %v1907
  %2226 = vmatpush1.bf16.msra.mxu0 %v1906
  %2227 = vmatprep.subr.bf16.mxu0 %v1915
  %2228 = vmatpush1.bf16.msra.mxu0 %v1914
  %2229 = vmatprep.subr.bf16.mxu0 %v1923
  %2230 = vmatpush1.bf16.msra.mxu0 %v1922
  %2231 = vmatprep.subr.bf16.mxu0 %v1931
  %2232 = vmatpush1.bf16.msra.mxu0 %v1930
  %2233 = vmatprep.subr.bf16.mxu0 %v1939
  %2234 = vmatpush1.bf16.msra.mxu0 %v1938
  %2235 = vmatprep.subr.bf16.mxu0 %v1947
  %2236 = vmatpush1.bf16.msra.mxu0 %v1946
  %2237 = vmatprep.mubr.bf16.mxu0 %v1307
  %2238 = vmatmul.mubr.bf16.gmra.mrb[0].mxu0 %v1306
  %v2239 = vpop.f32.mrb[0].mxu0
  %v2240 = vadd.f32 0.0, %v2239
  %v2241 = vpop.f32.mrb[0].mxu0
  %v2242 = vadd.f32 0.0, %v2241
  %v2243 = vpop.f32.mrb[0].mxu0
  %v2244 = vadd.f32 0.0, %v2243
  %v2245 = vpop.f32.mrb[0].mxu0
  %v2246 = vadd.f32 0.0, %v2245
  %2247 = vdwg.mxu0
  %v2376 = vunpack.c.l.b16 %v100
  %v2377 = vunpack.c.h.b16 %v100
  %v2378 = vunpack.c.l.b16 %v101
  %v2379 = vunpack.c.h.b16 %v101
  %v2380 = vunpack.c.l.b16 %v102
  %v2381 = vunpack.c.h.b16 %v102
  %v2382 = vunpack.c.l.b16 %v103
  %v2383 = vunpack.c.h.b16 %v103
  %v2384 = vunpack.c.l.b16 %v104
  %v2385 = vunpack.c.h.b16 %v104
  %v2386 = vunpack.c.l.b16 %v105
  %v2387 = vunpack.c.h.b16 %v105
  %v2388 = vunpack.c.l.b16 %v106
  %v2389 = vunpack.c.h.b16 %v106
  %v2390 = vunpack.c.l.b16 %v107
  %v2391 = vunpack.c.h.b16 %v107
  %v2392 = vunpack.c.l.b16 %v108
  %v2393 = vunpack.c.h.b16 %v108
  %v2394 = vunpack.c.l.b16 %v109
  %v2395 = vunpack.c.h.b16 %v109
  %v2396 = vunpack.c.l.b16 %v110
  %v2397 = vunpack.c.h.b16 %v110
  %v2398 = vunpack.c.l.b16 %v111
  %v2399 = vunpack.c.h.b16 %v111
  %v2400 = vunpack.c.l.b16 %v112
  %v2401 = vunpack.c.h.b16 %v112
  %v2402 = vunpack.c.l.b16 %v113
  %v2403 = vunpack.c.h.b16 %v113
  %v2404 = vunpack.c.l.b16 %v114
  %v2405 = vunpack.c.h.b16 %v114
  %v2406 = vunpack.c.l.b16 %v115
  %v2407 = vunpack.c.h.b16 %v115
  %v2408 = vunpack.c.l.b16 %v116
  %v2409 = vunpack.c.h.b16 %v116
  %v2410 = vunpack.c.l.b16 %v117
  %v2411 = vunpack.c.h.b16 %v117
  %v2412 = vunpack.c.l.b16 %v118
  %v2413 = vunpack.c.h.b16 %v118
  %v2414 = vunpack.c.l.b16 %v119
  %v2415 = vunpack.c.h.b16 %v119
  %v2416 = vunpack.c.l.b16 %v120
  %v2417 = vunpack.c.h.b16 %v120
  %v2418 = vunpack.c.l.b16 %v121
  %v2419 = vunpack.c.h.b16 %v121
  %v2420 = vunpack.c.l.b16 %v122
  %v2421 = vunpack.c.h.b16 %v122
  %v2422 = vunpack.c.l.b16 %v123
  %v2423 = vunpack.c.h.b16 %v123
  %v2424 = vunpack.c.l.b16 %v124
  %v2425 = vunpack.c.h.b16 %v124
  %v2426 = vunpack.c.l.b16 %v125
  %v2427 = vunpack.c.h.b16 %v125
  %v2428 = vunpack.c.l.b16 %v126
  %v2429 = vunpack.c.h.b16 %v126
  %v2430 = vunpack.c.l.b16 %v127
  %v2431 = vunpack.c.h.b16 %v127
  %v2432 = vunpack.c.l.b16 %v128
  %v2433 = vunpack.c.h.b16 %v128
  %v2434 = vunpack.c.l.b16 %v129
  %v2435 = vunpack.c.h.b16 %v129
  %v2436 = vunpack.c.l.b16 %v130
  %v2437 = vunpack.c.h.b16 %v130
  %v2438 = vunpack.c.l.b16 %v131
  %v2439 = vunpack.c.h.b16 %v131
  %v2440 = vunpack.c.l.b16 %v132
  %v2441 = vunpack.c.h.b16 %v132
  %v2442 = vunpack.c.l.b16 %v133
  %v2443 = vunpack.c.h.b16 %v133
  %v2444 = vunpack.c.l.b16 %v134
  %v2445 = vunpack.c.h.b16 %v134
  %v2446 = vunpack.c.l.b16 %v135
  %v2447 = vunpack.c.h.b16 %v135
  %v2448 = vunpack.c.l.b16 %v136
  %v2449 = vunpack.c.h.b16 %v136
  %v2450 = vunpack.c.l.b16 %v137
  %v2451 = vunpack.c.h.b16 %v137
  %v2452 = vunpack.c.l.b16 %v138
  %v2453 = vunpack.c.h.b16 %v138
  %v2454 = vunpack.c.l.b16 %v139
  %v2455 = vunpack.c.h.b16 %v139
  %v2456 = vunpack.c.l.b16 %v140
  %v2457 = vunpack.c.h.b16 %v140
  %v2458 = vunpack.c.l.b16 %v141
  %v2459 = vunpack.c.h.b16 %v141
  %v2460 = vunpack.c.l.b16 %v142
  %v2461 = vunpack.c.h.b16 %v142
  %v2462 = vunpack.c.l.b16 %v143
  %v2463 = vunpack.c.h.b16 %v143
  %v2464 = vunpack.c.l.b16 %v144
  %v2465 = vunpack.c.h.b16 %v144
  %v2466 = vunpack.c.l.b16 %v145
  %v2467 = vunpack.c.h.b16 %v145
  %v2468 = vunpack.c.l.b16 %v146
  %v2469 = vunpack.c.h.b16 %v146
  %v2470 = vunpack.c.l.b16 %v147
  %v2471 = vunpack.c.h.b16 %v147
  %v2472 = vunpack.c.l.b16 %v148
  %v2473 = vunpack.c.h.b16 %v148
  %v2474 = vunpack.c.l.b16 %v149
  %v2475 = vunpack.c.h.b16 %v149
  %v2476 = vunpack.c.l.b16 %v150
  %v2477 = vunpack.c.h.b16 %v150
  %v2478 = vunpack.c.l.b16 %v151
  %v2479 = vunpack.c.h.b16 %v151
  %v2480 = vunpack.c.l.b16 %v152
  %v2481 = vunpack.c.h.b16 %v152
  %v2482 = vunpack.c.l.b16 %v153
  %v2483 = vunpack.c.h.b16 %v153
  %v2484 = vunpack.c.l.b16 %v154
  %v2485 = vunpack.c.h.b16 %v154
  %v2486 = vunpack.c.l.b16 %v155
  %v2487 = vunpack.c.h.b16 %v155
  %v2488 = vunpack.c.l.b16 %v156
  %v2489 = vunpack.c.h.b16 %v156
  %v2490 = vunpack.c.l.b16 %v157
  %v2491 = vunpack.c.h.b16 %v157
  %v2492 = vunpack.c.l.b16 %v158
  %v2493 = vunpack.c.h.b16 %v158
  %v2494 = vunpack.c.l.b16 %v159
  %v2495 = vunpack.c.h.b16 %v159
  %v2496 = vunpack.c.l.b16 %v160
  %v2497 = vunpack.c.h.b16 %v160
  %v2498 = vunpack.c.l.b16 %v161
  %v2499 = vunpack.c.h.b16 %v161
  %v2500 = vunpack.c.l.b16 %v162
  %v2501 = vunpack.c.h.b16 %v162
  %v2502 = vunpack.c.l.b16 %v163
  %v2503 = vunpack.c.h.b16 %v163
  %v2504 = vunpack.c.l.b16 %v164
  %v2505 = vunpack.c.h.b16 %v164
  %v2506 = vunpack.c.l.b16 %v165
  %v2507 = vunpack.c.h.b16 %v165
  %v2508 = vunpack.c.l.b16 %v166
  %v2509 = vunpack.c.h.b16 %v166
  %v2510 = vunpack.c.l.b16 %v167
  %v2511 = vunpack.c.h.b16 %v167
  %v2512 = vunpack.c.l.b16 %v168
  %v2513 = vunpack.c.h.b16 %v168
  %v2514 = vunpack.c.l.b16 %v169
  %v2515 = vunpack.c.h.b16 %v169
  %v2516 = vunpack.c.l.b16 %v170
  %v2517 = vunpack.c.h.b16 %v170
  %v2518 = vunpack.c.l.b16 %v171
  %v2519 = vunpack.c.h.b16 %v171
  %v2520 = vunpack.c.l.b16 %v172
  %v2521 = vunpack.c.h.b16 %v172
  %v2522 = vunpack.c.l.b16 %v173
  %v2523 = vunpack.c.h.b16 %v173
  %v2524 = vunpack.c.l.b16 %v174
  %v2525 = vunpack.c.h.b16 %v174
  %v2526 = vunpack.c.l.b16 %v175
  %v2527 = vunpack.c.h.b16 %v175
  %v2528 = vunpack.c.l.b16 %v176
  %v2529 = vunpack.c.h.b16 %v176
  %v2530 = vunpack.c.l.b16 %v177
  %v2531 = vunpack.c.h.b16 %v177
  %v2532 = vunpack.c.l.b16 %v178
  %v2533 = vunpack.c.h.b16 %v178
  %v2534 = vunpack.c.l.b16 %v179
  %v2535 = vunpack.c.h.b16 %v179
  %v2536 = vunpack.c.l.b16 %v180
  %v2537 = vunpack.c.h.b16 %v180
  %v2538 = vunpack.c.l.b16 %v181
  %v2539 = vunpack.c.h.b16 %v181
  %v2540 = vunpack.c.l.b16 %v182
  %v2541 = vunpack.c.h.b16 %v182
  %v2542 = vunpack.c.l.b16 %v183
  %v2543 = vunpack.c.h.b16 %v183
  %v2544 = vunpack.c.l.b16 %v184
  %v2545 = vunpack.c.h.b16 %v184
  %v2546 = vunpack.c.l.b16 %v185
  %v2547 = vunpack.c.h.b16 %v185
  %v2548 = vunpack.c.l.b16 %v186
  %v2549 = vunpack.c.h.b16 %v186
  %v2550 = vunpack.c.l.b16 %v187
  %v2551 = vunpack.c.h.b16 %v187
  %v2552 = vunpack.c.l.b16 %v188
  %v2553 = vunpack.c.h.b16 %v188
  %v2554 = vunpack.c.l.b16 %v189
  %v2555 = vunpack.c.h.b16 %v189
  %v2556 = vunpack.c.l.b16 %v190
  %v2557 = vunpack.c.h.b16 %v190
  %v2558 = vunpack.c.l.b16 %v191
  %v2559 = vunpack.c.h.b16 %v191
  %v2560 = vunpack.c.l.b16 %v192
  %v2561 = vunpack.c.h.b16 %v192
  %v2562 = vunpack.c.l.b16 %v193
  %v2563 = vunpack.c.h.b16 %v193
  %v2564 = vunpack.c.l.b16 %v194
  %v2565 = vunpack.c.h.b16 %v194
  %v2566 = vunpack.c.l.b16 %v195
  %v2567 = vunpack.c.h.b16 %v195
  %v2568 = vunpack.c.l.b16 %v196
  %v2569 = vunpack.c.h.b16 %v196
  %v2570 = vunpack.c.l.b16 %v197
  %v2571 = vunpack.c.h.b16 %v197
  %v2572 = vunpack.c.l.b16 %v198
  %v2573 = vunpack.c.h.b16 %v198
  %v2574 = vunpack.c.l.b16 %v199
  %v2575 = vunpack.c.h.b16 %v199
  %v2576 = vunpack.c.l.b16 %v200
  %v2577 = vunpack.c.h.b16 %v200
  %v2578 = vunpack.c.l.b16 %v201
  %v2579 = vunpack.c.h.b16 %v201
  %v2580 = vunpack.c.l.b16 %v202
  %v2581 = vunpack.c.h.b16 %v202
  %v2582 = vunpack.c.l.b16 %v203
  %v2583 = vunpack.c.h.b16 %v203
  %v2584 = vunpack.c.l.b16 %v204
  %v2585 = vunpack.c.h.b16 %v204
  %v2586 = vunpack.c.l.b16 %v205
  %v2587 = vunpack.c.h.b16 %v205
  %v2588 = vunpack.c.l.b16 %v206
  %v2589 = vunpack.c.h.b16 %v206
  %v2590 = vunpack.c.l.b16 %v207
  %v2591 = vunpack.c.h.b16 %v207
  %v2592 = vunpack.c.l.b16 %v208
  %v2593 = vunpack.c.h.b16 %v208
  %v2594 = vunpack.c.l.b16 %v209
  %v2595 = vunpack.c.h.b16 %v209
  %v2596 = vunpack.c.l.b16 %v210
  %v2597 = vunpack.c.h.b16 %v210
  %v2598 = vunpack.c.l.b16 %v211
  %v2599 = vunpack.c.h.b16 %v211
  %v2600 = vunpack.c.l.b16 %v212
  %v2601 = vunpack.c.h.b16 %v212
  %v2602 = vunpack.c.l.b16 %v213
  %v2603 = vunpack.c.h.b16 %v213
  %v2604 = vunpack.c.l.b16 %v214
  %v2605 = vunpack.c.h.b16 %v214
  %v2606 = vunpack.c.l.b16 %v215
  %v2607 = vunpack.c.h.b16 %v215
  %v2608 = vunpack.c.l.b16 %v216
  %v2609 = vunpack.c.h.b16 %v216
  %v2610 = vunpack.c.l.b16 %v217
  %v2611 = vunpack.c.h.b16 %v217
  %v2612 = vunpack.c.l.b16 %v218
  %v2613 = vunpack.c.h.b16 %v218
  %v2614 = vunpack.c.l.b16 %v219
  %v2615 = vunpack.c.h.b16 %v219
  %v2616 = vunpack.c.l.b16 %v220
  %v2617 = vunpack.c.h.b16 %v220
  %v2618 = vunpack.c.l.b16 %v221
  %v2619 = vunpack.c.h.b16 %v221
  %v2620 = vunpack.c.l.b16 %v222
  %v2621 = vunpack.c.h.b16 %v222
  %v2622 = vunpack.c.l.b16 %v223
  %v2623 = vunpack.c.h.b16 %v223
  %v2624 = vunpack.c.l.b16 %v224
  %v2625 = vunpack.c.h.b16 %v224
  %v2626 = vunpack.c.l.b16 %v225
  %v2627 = vunpack.c.h.b16 %v225
  %v2628 = vunpack.c.l.b16 %v226
  %v2629 = vunpack.c.h.b16 %v226
  %v2630 = vunpack.c.l.b16 %v227
  %v2631 = vunpack.c.h.b16 %v227
  %v2632 = vpack.c.b16 %v2384, %v2376
  %v2633 = vpack.c.b16 %v2385, %v2377
  %v2634 = vpack.c.b16 %v2386, %v2378
  %v2635 = vpack.c.b16 %v2387, %v2379
  %v2636 = vpack.c.b16 %v2388, %v2380
  %v2637 = vpack.c.b16 %v2389, %v2381
  %v2638 = vpack.c.b16 %v2390, %v2382
  %v2639 = vpack.c.b16 %v2391, %v2383
  %v2640 = vpack.c.b16 %v2400, %v2392
  %v2641 = vpack.c.b16 %v2401, %v2393
  %v2642 = vpack.c.b16 %v2402, %v2394
  %v2643 = vpack.c.b16 %v2403, %v2395
  %v2644 = vpack.c.b16 %v2404, %v2396
  %v2645 = vpack.c.b16 %v2405, %v2397
  %v2646 = vpack.c.b16 %v2406, %v2398
  %v2647 = vpack.c.b16 %v2407, %v2399
  %v2648 = vpack.c.b16 %v2416, %v2408
  %v2649 = vpack.c.b16 %v2417, %v2409
  %v2650 = vpack.c.b16 %v2418, %v2410
  %v2651 = vpack.c.b16 %v2419, %v2411
  %v2652 = vpack.c.b16 %v2420, %v2412
  %v2653 = vpack.c.b16 %v2421, %v2413
  %v2654 = vpack.c.b16 %v2422, %v2414
  %v2655 = vpack.c.b16 %v2423, %v2415
  %v2656 = vpack.c.b16 %v2432, %v2424
  %v2657 = vpack.c.b16 %v2433, %v2425
  %v2658 = vpack.c.b16 %v2434, %v2426
  %v2659 = vpack.c.b16 %v2435, %v2427
  %v2660 = vpack.c.b16 %v2436, %v2428
  %v2661 = vpack.c.b16 %v2437, %v2429
  %v2662 = vpack.c.b16 %v2438, %v2430
  %v2663 = vpack.c.b16 %v2439, %v2431
  %v2664 = vpack.c.b16 %v2448, %v2440
  %v2665 = vpack.c.b16 %v2449, %v2441
  %v2666 = vpack.c.b16 %v2450, %v2442
  %v2667 = vpack.c.b16 %v2451, %v2443
  %v2668 = vpack.c.b16 %v2452, %v2444
  %v2669 = vpack.c.b16 %v2453, %v2445
  %v2670 = vpack.c.b16 %v2454, %v2446
  %v2671 = vpack.c.b16 %v2455, %v2447
  %v2672 = vpack.c.b16 %v2464, %v2456
  %v2673 = vpack.c.b16 %v2465, %v2457
  %v2674 = vpack.c.b16 %v2466, %v2458
  %v2675 = vpack.c.b16 %v2467, %v2459
  %v2676 = vpack.c.b16 %v2468, %v2460
  %v2677 = vpack.c.b16 %v2469, %v2461
  %v2678 = vpack.c.b16 %v2470, %v2462
  %v2679 = vpack.c.b16 %v2471, %v2463
  %v2680 = vpack.c.b16 %v2480, %v2472
  %v2681 = vpack.c.b16 %v2481, %v2473
  %v2682 = vpack.c.b16 %v2482, %v2474
  %v2683 = vpack.c.b16 %v2483, %v2475
  %v2684 = vpack.c.b16 %v2484, %v2476
  %v2685 = vpack.c.b16 %v2485, %v2477
  %v2686 = vpack.c.b16 %v2486, %v2478
  %v2687 = vpack.c.b16 %v2487, %v2479
  %v2688 = vpack.c.b16 %v2496, %v2488
  %v2689 = vpack.c.b16 %v2497, %v2489
  %v2690 = vpack.c.b16 %v2498, %v2490
  %v2691 = vpack.c.b16 %v2499, %v2491
  %v2692 = vpack.c.b16 %v2500, %v2492
  %v2693 = vpack.c.b16 %v2501, %v2493
  %v2694 = vpack.c.b16 %v2502, %v2494
  %v2695 = vpack.c.b16 %v2503, %v2495
  %v2696 = vpack.c.b16 %v2512, %v2504
  %v2697 = vpack.c.b16 %v2513, %v2505
  %v2698 = vpack.c.b16 %v2514, %v2506
  %v2699 = vpack.c.b16 %v2515, %v2507
  %v2700 = vpack.c.b16 %v2516, %v2508
  %v2701 = vpack.c.b16 %v2517, %v2509
  %v2702 = vpack.c.b16 %v2518, %v2510
  %v2703 = vpack.c.b16 %v2519, %v2511
  %v2704 = vpack.c.b16 %v2528, %v2520
  %v2705 = vpack.c.b16 %v2529, %v2521
  %v2706 = vpack.c.b16 %v2530, %v2522
  %v2707 = vpack.c.b16 %v2531, %v2523
  %v2708 = vpack.c.b16 %v2532, %v2524
  %v2709 = vpack.c.b16 %v2533, %v2525
  %v2710 = vpack.c.b16 %v2534, %v2526
  %v2711 = vpack.c.b16 %v2535, %v2527
  %v2712 = vpack.c.b16 %v2544, %v2536
  %v2713 = vpack.c.b16 %v2545, %v2537
  %v2714 = vpack.c.b16 %v2546, %v2538
  %v2715 = vpack.c.b16 %v2547, %v2539
  %v2716 = vpack.c.b16 %v2548, %v2540
  %v2717 = vpack.c.b16 %v2549, %v2541
  %v2718 = vpack.c.b16 %v2550, %v2542
  %v2719 = vpack.c.b16 %v2551, %v2543
  %v2720 = vpack.c.b16 %v2560, %v2552
  %v2721 = vpack.c.b16 %v2561, %v2553
  %v2722 = vpack.c.b16 %v2562, %v2554
  %v2723 = vpack.c.b16 %v2563, %v2555
  %v2724 = vpack.c.b16 %v2564, %v2556
  %v2725 = vpack.c.b16 %v2565, %v2557
  %v2726 = vpack.c.b16 %v2566, %v2558
  %v2727 = vpack.c.b16 %v2567, %v2559
  %v2728 = vpack.c.b16 %v2576, %v2568
  %v2729 = vpack.c.b16 %v2577, %v2569
  %v2730 = vpack.c.b16 %v2578, %v2570
  %v2731 = vpack.c.b16 %v2579, %v2571
  %v2732 = vpack.c.b16 %v2580, %v2572
  %v2733 = vpack.c.b16 %v2581, %v2573
  %v2734 = vpack.c.b16 %v2582, %v2574
  %v2735 = vpack.c.b16 %v2583, %v2575
  %v2736 = vpack.c.b16 %v2592, %v2584
  %v2737 = vpack.c.b16 %v2593, %v2585
  %v2738 = vpack.c.b16 %v2594, %v2586
  %v2739 = vpack.c.b16 %v2595, %v2587
  %v2740 = vpack.c.b16 %v2596, %v2588
  %v2741 = vpack.c.b16 %v2597, %v2589
  %v2742 = vpack.c.b16 %v2598, %v2590
  %v2743 = vpack.c.b16 %v2599, %v2591
  %v2744 = vpack.c.b16 %v2608, %v2600
  %v2745 = vpack.c.b16 %v2609, %v2601
  %v2746 = vpack.c.b16 %v2610, %v2602
  %v2747 = vpack.c.b16 %v2611, %v2603
  %v2748 = vpack.c.b16 %v2612, %v2604
  %v2749 = vpack.c.b16 %v2613, %v2605
  %v2750 = vpack.c.b16 %v2614, %v2606
  %v2751 = vpack.c.b16 %v2615, %v2607
  %v2752 = vpack.c.b16 %v2624, %v2616
  %v2753 = vpack.c.b16 %v2625, %v2617
  %v2754 = vpack.c.b16 %v2626, %v2618
  %v2755 = vpack.c.b16 %v2627, %v2619
  %v2756 = vpack.c.b16 %v2628, %v2620
  %v2757 = vpack.c.b16 %v2629, %v2621
  %v2758 = vpack.c.b16 %v2630, %v2622
  %v2759 = vpack.c.b16 %v2631, %v2623
  %2888 = vmatprep.subr.bf16.mxu0 %v2633
  %2889 = vmatpush1.bf16.msra.mxu0 %v2632
  %2890 = vmatprep.subr.bf16.mxu0 %v2641
  %2891 = vmatpush1.bf16.msra.mxu0 %v2640
  %2892 = vmatprep.subr.bf16.mxu0 %v2649
  %2893 = vmatpush1.bf16.msra.mxu0 %v2648
  %2894 = vmatprep.subr.bf16.mxu0 %v2657
  %2895 = vmatpush1.bf16.msra.mxu0 %v2656
  %2896 = vmatprep.subr.bf16.mxu0 %v2665
  %2897 = vmatpush1.bf16.msra.mxu0 %v2664
  %2898 = vmatprep.subr.bf16.mxu0 %v2673
  %2899 = vmatpush1.bf16.msra.mxu0 %v2672
  %2900 = vmatprep.subr.bf16.mxu0 %v2681
  %2901 = vmatpush1.bf16.msra.mxu0 %v2680
  %2902 = vmatprep.subr.bf16.mxu0 %v2689
  %2903 = vmatpush1.bf16.msra.mxu0 %v2688
  %2904 = vmatprep.subr.bf16.mxu0 %v2697
  %2905 = vmatpush1.bf16.msra.mxu0 %v2696
  %2906 = vmatprep.subr.bf16.mxu0 %v2705
  %2907 = vmatpush1.bf16.msra.mxu0 %v2704
  %2908 = vmatprep.subr.bf16.mxu0 %v2713
  %2909 = vmatpush1.bf16.msra.mxu0 %v2712
  %2910 = vmatprep.subr.bf16.mxu0 %v2721
  %2911 = vmatpush1.bf16.msra.mxu0 %v2720
  %2912 = vmatprep.subr.bf16.mxu0 %v2729
  %2913 = vmatpush1.bf16.msra.mxu0 %v2728
  %2914 = vmatprep.subr.bf16.mxu0 %v2737
  %2915 = vmatpush1.bf16.msra.mxu0 %v2736
  %2916 = vmatprep.subr.bf16.mxu0 %v2745
  %2917 = vmatpush1.bf16.msra.mxu0 %v2744
  %2918 = vmatprep.subr.bf16.mxu0 %v2753
  %2919 = vmatpush1.bf16.msra.mxu0 %v2752
  %2920 = vmatprep.mubr.bf16.mxu0 %v99
  %2921 = vmatmul.mubr.bf16.gmra.mrb[0].mxu0 %v98
  %v2922 = vpop.f32.mrb[0].mxu0
  %v2923 = vadd.f32 %v2111, %v2922
  %v2924 = vpop.f32.mrb[0].mxu0
  %v2925 = vadd.f32 %v2113, %v2924
  %v2926 = vpop.f32.mrb[0].mxu0
  %v2927 = vadd.f32 %v2115, %v2926
  %v2928 = vpop.f32.mrb[0].mxu0
  %v2929 = vadd.f32 %v2117, %v2928
  %2930 = vdwg.mxu0
  %2931 = vmatprep.subr.bf16.mxu0 %v2635
  %2932 = vmatpush1.bf16.msra.mxu0 %v2634
  %2933 = vmatprep.subr.bf16.mxu0 %v2643
  %2934 = vmatpush1.bf16.msra.mxu0 %v2642
  %2935 = vmatprep.subr.bf16.mxu0 %v2651
  %2936 = vmatpush1.bf16.msra.mxu0 %v2650
  %2937 = vmatprep.subr.bf16.mxu0 %v2659
  %2938 = vmatpush1.bf16.msra.mxu0 %v2658
  %2939 = vmatprep.subr.bf16.mxu0 %v2667
  %2940 = vmatpush1.bf16.msra.mxu0 %v2666
  %2941 = vmatprep.subr.bf16.mxu0 %v2675
  %2942 = vmatpush1.bf16.msra.mxu0 %v2674
  %2943 = vmatprep.subr.bf16.mxu0 %v2683
  %2944 = vmatpush1.bf16.msra.mxu0 %v2682
  %2945 = vmatprep.subr.bf16.mxu0 %v2691
  %2946 = vmatpush1.bf16.msra.mxu0 %v2690
  %2947 = vmatprep.subr.bf16.mxu0 %v2699
  %2948 = vmatpush1.bf16.msra.mxu0 %v2698
  %2949 = vmatprep.subr.bf16.mxu0 %v2707
  %2950 = vmatpush1.bf16.msra.mxu0 %v2706
  %2951 = vmatprep.subr.bf16.mxu0 %v2715
  %2952 = vmatpush1.bf16.msra.mxu0 %v2714
  %2953 = vmatprep.subr.bf16.mxu0 %v2723
  %2954 = vmatpush1.bf16.msra.mxu0 %v2722
  %2955 = vmatprep.subr.bf16.mxu0 %v2731
  %2956 = vmatpush1.bf16.msra.mxu0 %v2730
  %2957 = vmatprep.subr.bf16.mxu0 %v2739
  %2958 = vmatpush1.bf16.msra.mxu0 %v2738
  %2959 = vmatprep.subr.bf16.mxu0 %v2747
  %2960 = vmatpush1.bf16.msra.mxu0 %v2746
  %2961 = vmatprep.subr.bf16.mxu0 %v2755
  %2962 = vmatpush1.bf16.msra.mxu0 %v2754
  %2963 = vmatprep.mubr.bf16.mxu0 %v99
  %2964 = vmatmul.mubr.bf16.gmra.mrb[0].mxu0 %v98
  %v2965 = vpop.f32.mrb[0].mxu0
  %v2966 = vadd.f32 %v2154, %v2965
  %v2967 = vpop.f32.mrb[0].mxu0
  %v2968 = vadd.f32 %v2156, %v2967
  %v2969 = vpop.f32.mrb[0].mxu0
  %v2970 = vadd.f32 %v2158, %v2969
  %v2971 = vpop.f32.mrb[0].mxu0
  %v2972 = vadd.f32 %v2160, %v2971
  %2973 = vdwg.mxu0
  %2974 = vmatprep.subr.bf16.mxu0 %v2637
  %2975 = vmatpush1.bf16.msra.mxu0 %v2636
  %2976 = vmatprep.subr.bf16.mxu0 %v2645
  %2977 = vmatpush1.bf16.msra.mxu0 %v2644
  %2978 = vmatprep.subr.bf16.mxu0 %v2653
  %2979 = vmatpush1.bf16.msra.mxu0 %v2652
  %2980 = vmatprep.subr.bf16.mxu0 %v2661
  %2981 = vmatpush1.bf16.msra.mxu0 %v2660
  %2982 = vmatprep.subr.bf16.mxu0 %v2669
  %2983 = vmatpush1.bf16.msra.mxu0 %v2668
  %2984 = vmatprep.subr.bf16.mxu0 %v2677
  %2985 = vmatpush1.bf16.msra.mxu0 %v2676
  %2986 = vmatprep.subr.bf16.mxu0 %v2685
  %2987 = vmatpush1.bf16.msra.mxu0 %v2684
  %2988 = vmatprep.subr.bf16.mxu0 %v2693
  %2989 = vmatpush1.bf16.msra.mxu0 %v2692
  %2990 = vmatprep.subr.bf16.mxu0 %v2701
  %2991 = vmatpush1.bf16.msra.mxu0 %v2700
  %2992 = vmatprep.subr.bf16.mxu0 %v2709
  %2993 = vmatpush1.bf16.msra.mxu0 %v2708
  %2994 = vmatprep.subr.bf16.mxu0 %v2717
  %2995 = vmatpush1.bf16.msra.mxu0 %v2716
  %2996 = vmatprep.subr.bf16.mxu0 %v2725
  %2997 = vmatpush1.bf16.msra.mxu0 %v2724
  %2998 = vmatprep.subr.bf16.mxu0 %v2733
  %2999 = vmatpush1.bf16.msra.mxu0 %v2732
  %3000 = vmatprep.subr.bf16.mxu0 %v2741
  %3001 = vmatpush1.bf16.msra.mxu0 %v2740
  %3002 = vmatprep.subr.bf16.mxu0 %v2749
  %3003 = vmatpush1.bf16.msra.mxu0 %v2748
  %3004 = vmatprep.subr.bf16.mxu0 %v2757
  %3005 = vmatpush1.bf16.msra.mxu0 %v2756
  %3006 = vmatprep.mubr.bf16.mxu0 %v99
  %3007 = vmatmul.mubr.bf16.gmra.mrb[0].mxu0 %v98
  %v3008 = vpop.f32.mrb[0].mxu0
  %v3009 = vadd.f32 %v2197, %v3008
  %v3010 = vpop.f32.mrb[0].mxu0
  %v3011 = vadd.f32 %v2199, %v3010
  %v3012 = vpop.f32.mrb[0].mxu0
  %v3013 = vadd.f32 %v2201, %v3012
  %v3014 = vpop.f32.mrb[0].mxu0
  %v3015 = vadd.f32 %v2203, %v3014
  %3016 = vdwg.mxu0
  %3017 = vmatprep.subr.bf16.mxu0 %v2639
  %3018 = vmatpush1.bf16.msra.mxu0 %v2638
  %3019 = vmatprep.subr.bf16.mxu0 %v2647
  %3020 = vmatpush1.bf16.msra.mxu0 %v2646
  %3021 = vmatprep.subr.bf16.mxu0 %v2655
  %3022 = vmatpush1.bf16.msra.mxu0 %v2654
  %3023 = vmatprep.subr.bf16.mxu0 %v2663
  %3024 = vmatpush1.bf16.msra.mxu0 %v2662
  %3025 = vmatprep.subr.bf16.mxu0 %v2671
  %3026 = vmatpush1.bf16.msra.mxu0 %v2670
  %3027 = vmatprep.subr.bf16.mxu0 %v2679
  %3028 = vmatpush1.bf16.msra.mxu0 %v2678
  %3029 = vmatprep.subr.bf16.mxu0 %v2687
  %3030 = vmatpush1.bf16.msra.mxu0 %v2686
  %3031 = vmatprep.subr.bf16.mxu0 %v2695
  %3032 = vmatpush1.bf16.msra.mxu0 %v2694
  %3033 = vmatprep.subr.bf16.mxu0 %v2703
  %3034 = vmatpush1.bf16.msra.mxu0 %v2702
  %3035 = vmatprep.subr.bf16.mxu0 %v2711
  %3036 = vmatpush1.bf16.msra.mxu0 %v2710
  %3037 = vmatprep.subr.bf16.mxu0 %v2719
  %3038 = vmatpush1.bf16.msra.mxu0 %v2718
  %3039 = vmatprep.subr.bf16.mxu0 %v2727
  %3040 = vmatpush1.bf16.msra.mxu0 %v2726
  %3041 = vmatprep.subr.bf16.mxu0 %v2735
  %3042 = vmatpush1.bf16.msra.mxu0 %v2734
  %3043 = vmatprep.subr.bf16.mxu0 %v2743
  %3044 = vmatpush1.bf16.msra.mxu0 %v2742
  %3045 = vmatprep.subr.bf16.mxu0 %v2751
  %3046 = vmatpush1.bf16.msra.mxu0 %v2750
  %3047 = vmatprep.subr.bf16.mxu0 %v2759
  %3048 = vmatpush1.bf16.msra.mxu0 %v2758
  %3049 = vmatprep.mubr.bf16.mxu0 %v99
  %3050 = vmatmul.mubr.bf16.gmra.mrb[0].mxu0 %v98
  %v3051 = vpop.f32.mrb[0].mxu0
  %v3052 = vadd.f32 %v2240, %v3051
  %v3053 = vpop.f32.mrb[0].mxu0
  %v3054 = vadd.f32 %v2242, %v3053
  %v3055 = vpop.f32.mrb[0].mxu0
  %v3056 = vadd.f32 %v2244, %v3055
  %v3057 = vpop.f32.mrb[0].mxu0
  %v3058 = vadd.f32 %v2246, %v3057
  %3059 = vdwg.mxu0
  %v3060 = vadd.f32 %v2923, %v45
  %v3061 = vadd.f32 %v2925, %v49
  %v3062 = vadd.f32 %v2966, %v53
  %v3063 = vadd.f32 %v2968, %v57
  %v3064 = vadd.f32 %v3009, %v61
  %v3065 = vadd.f32 %v3011, %v65
  %v3066 = vadd.f32 %v3052, %v69
  %v3067 = vadd.f32 %v3054, %v73
  %v3068 = vadd.f32 %v2927, %v45
  %v3069 = vadd.f32 %v2929, %v49
  %v3070 = vadd.f32 %v2970, %v53
  %v3071 = vadd.f32 %v2972, %v57
  %v3072 = vadd.f32 %v3013, %v61
  %v3073 = vadd.f32 %v3015, %v65
  %v3074 = vadd.f32 %v3056, %v69
  %v3075 = vadd.f32 %v3058, %v73
  %v3076 = vxor.u32 %v3060, 2147483648
  %v3077 = vxor.u32 %v3061, 2147483648
  %v3078 = vxor.u32 %v3068, 2147483648
  %v3079 = vxor.u32 %v3069, 2147483648
  %v3080 = vmul.f32 %v3076, 1.442695
  %v3081 = vpow.pop %v3080
  %v3082 = vmul.f32 %v3077, 1.442695
  %v3083 = vpow.pop %v3082
  %v3084 = vmul.f32 %v3078, 1.442695
  %v3085 = vpow.pop %v3084
  %v3086 = vmul.f32 %v3079, 1.442695
  %v3087 = vpow.pop %v3086
  %v3088 = vadd.f32 %v3081, 1.0
  %v3089 = vadd.f32 %v3083, 1.0
  %v3090 = vadd.f32 %v3085, 1.0
  %v3091 = vadd.f32 %v3087, 1.0
  %v3092 = vrcp.pop %v3088
  %v3093 = vmul.f32 1.0, %v3092
  %v3094 = vrcp.pop %v3089
  %v3095 = vmul.f32 1.0, %v3094
  %v3096 = vrcp.pop %v3090
  %v3097 = vmul.f32 1.0, %v3096
  %v3098 = vrcp.pop %v3091
  %v3099 = vmul.f32 1.0, %v3098
  %v3100 = vxor.u32 %v3062, 2147483648
  %v3101 = vxor.u32 %v3063, 2147483648
  %v3102 = vxor.u32 %v3070, 2147483648
  %v3103 = vxor.u32 %v3071, 2147483648
  %v3104 = vmul.f32 %v3100, 1.442695
  %v3105 = vpow.pop %v3104
  %v3106 = vmul.f32 %v3101, 1.442695
  %v3107 = vpow.pop %v3106
  %v3108 = vmul.f32 %v3102, 1.442695
  %v3109 = vpow.pop %v3108
  %v3110 = vmul.f32 %v3103, 1.442695
  %v3111 = vpow.pop %v3110
  %v3112 = vadd.f32 %v3105, 1.0
  %v3113 = vadd.f32 %v3107, 1.0
  %v3114 = vadd.f32 %v3109, 1.0
  %v3115 = vadd.f32 %v3111, 1.0
  %v3116 = vrcp.pop %v3112
  %v3117 = vmul.f32 1.0, %v3116
  %v3118 = vrcp.pop %v3113
  %v3119 = vmul.f32 1.0, %v3118
  %v3120 = vrcp.pop %v3114
  %v3121 = vmul.f32 1.0, %v3120
  %v3122 = vrcp.pop %v3115
  %v3123 = vmul.f32 1.0, %v3122
  %v3124 = vtanh.pop %v3064
  %v3125 = vtanh.pop %v3065
  %v3126 = vtanh.pop %v3072
  %v3127 = vtanh.pop %v3073
  %v3128 = vxor.u32 %v3066, 2147483648
  %v3129 = vxor.u32 %v3067, 2147483648
  %v3130 = vxor.u32 %v3074, 2147483648
  %v3131 = vxor.u32 %v3075, 2147483648
  %v3132 = vmul.f32 %v3128, 1.442695
  %v3133 = vpow.pop %v3132
  %v3134 = vmul.f32 %v3129, 1.442695
  %v3135 = vpow.pop %v3134
  %v3136 = vmul.f32 %v3130, 1.442695
  %v3137 = vpow.pop %v3136
  %v3138 = vmul.f32 %v3131, 1.442695
  %v3139 = vpow.pop %v3138
  %v3140 = vadd.f32 %v3133, 1.0
  %v3141 = vadd.f32 %v3135, 1.0
  %v3142 = vadd.f32 %v3137, 1.0
  %v3143 = vadd.f32 %v3139, 1.0
  %v3144 = vrcp.pop %v3140
  %v3145 = vmul.f32 1.0, %v3144
  %v3146 = vrcp.pop %v3141
  %v3147 = vmul.f32 1.0, %v3146
  %v3148 = vrcp.pop %v3142
  %v3149 = vmul.f32 1.0, %v3148
  %v3150 = vrcp.pop %v3143
  %v3151 = vmul.f32 1.0, %v3150
  %v3152 = vmul.f32 %v3117, %v94
  %v3153 = vmul.f32 %v3119, %v95
  %v3154 = vmul.f32 %v3121, %v96
  %v3155 = vmul.f32 %v3123, %v97
  %v3156 = vmul.f32 %v3093, %v3124
  %v3157 = vmul.f32 %v3095, %v3125
  %v3158 = vmul.f32 %v3097, %v3126
  %v3159 = vmul.f32 %v3099, %v3127
  %v3160 = vadd.f32 %v3152, %v3156
  %v3161 = vadd.f32 %v3153, %v3157
  %v3162 = vadd.f32 %v3154, %v3158
  %v3163 = vadd.f32 %v3155, %v3159
  %v3164 = vtanh.pop %v3160
  %v3165 = vtanh.pop %v3161
  %v3166 = vtanh.pop %v3162
  %v3167 = vtanh.pop %v3163
  %v3168 = vmul.f32 %v3145, %v3164
  %v3169 = vmul.f32 %v3147, %v3165
  %v3170 = vmul.f32 %v3149, %v3166
  %v3171 = vmul.f32 %v3151, %v3167
  %v3172 = vpack.c.bf16 %v3170, %v3168
  %v3173 = vpack.c.bf16 %v3171, %v3169
  %s3174 = scalar_lea.vmem %s0, 64
  %v3175 = vld [vmem:[%s3174] sm:$0xff]
  %v3176 = vld [vmem:[%s3174 + $0x8] sm:$0xff]
  %v3177 = vld [vmem:[%s3174 + $0x10] sm:$0xff]
  %v3178 = vld [vmem:[%s3174 + $0x18] sm:$0xff]
  %v3179 = vld [vmem:[%s3174 + $0x20] sm:$0xff]
  %v3180 = vld [vmem:[%s3174 + $0x28] sm:$0xff]
  %v3181 = vld [vmem:[%s3174 + $0x30] sm:$0xff]
  %v3182 = vld [vmem:[%s3174 + $0x38] sm:$0xff]
  %v3183 = vunpack.c.l.bf16 %v3175
  %v3184 = vunpack.c.h.bf16 %v3175
  %v3185 = vunpack.c.l.bf16 %v3176
  %v3186 = vunpack.c.h.bf16 %v3176
  %v3187 = vunpack.c.l.bf16 %v3177
  %v3188 = vunpack.c.h.bf16 %v3177
  %v3189 = vunpack.c.l.bf16 %v3178
  %v3190 = vunpack.c.h.bf16 %v3178
  %v3191 = vunpack.c.l.bf16 %v3179
  %v3192 = vunpack.c.h.bf16 %v3179
  %v3193 = vunpack.c.l.bf16 %v3180
  %v3194 = vunpack.c.h.bf16 %v3180
  %v3195 = vunpack.c.l.bf16 %v3181
  %v3196 = vunpack.c.h.bf16 %v3181
  %v3197 = vunpack.c.l.bf16 %v3182
  %v3198 = vunpack.c.h.bf16 %v3182
  %3199 = vmatprep.subr.bf16.mxu0 %v767
  %3200 = vmatpush1.bf16.msra.mxu0 %v766
  %3201 = vmatprep.subr.bf16.mxu0 %v775
  %3202 = vmatpush1.bf16.msra.mxu0 %v774
  %3203 = vmatprep.subr.bf16.mxu0 %v783
  %3204 = vmatpush1.bf16.msra.mxu0 %v782
  %3205 = vmatprep.subr.bf16.mxu0 %v791
  %3206 = vmatpush1.bf16.msra.mxu0 %v790
  %3207 = vmatprep.subr.bf16.mxu0 %v799
  %3208 = vmatpush1.bf16.msra.mxu0 %v798
  %3209 = vmatprep.subr.bf16.mxu0 %v807
  %3210 = vmatpush1.bf16.msra.mxu0 %v806
  %3211 = vmatprep.subr.bf16.mxu0 %v815
  %3212 = vmatpush1.bf16.msra.mxu0 %v814
  %3213 = vmatprep.subr.bf16.mxu0 %v823
  %3214 = vmatpush1.bf16.msra.mxu0 %v822
  %3215 = vmatprep.subr.bf16.mxu0 %v831
  %3216 = vmatpush1.bf16.msra.mxu0 %v830
  %3217 = vmatprep.subr.bf16.mxu0 %v839
  %3218 = vmatpush1.bf16.msra.mxu0 %v838
  %3219 = vmatprep.subr.bf16.mxu0 %v847
  %3220 = vmatpush1.bf16.msra.mxu0 %v846
  %3221 = vmatprep.subr.bf16.mxu0 %v855
  %3222 = vmatpush1.bf16.msra.mxu0 %v854
  %3223 = vmatprep.subr.bf16.mxu0 %v863
  %3224 = vmatpush1.bf16.msra.mxu0 %v862
  %3225 = vmatprep.subr.bf16.mxu0 %v871
  %3226 = vmatpush1.bf16.msra.mxu0 %v870
  %3227 = vmatprep.subr.bf16.mxu0 %v879
  %3228 = vmatpush1.bf16.msra.mxu0 %v878
  %3229 = vmatprep.subr.bf16.mxu0 %v887
  %3230 = vmatpush1.bf16.msra.mxu0 %v886
  %3231 = vmatprep.mubr.bf16.mxu0 %v1307
  %3232 = vmatmul.mubr.bf16.gmra.mrb[0].mxu0 %v1306
  %v3233 = vpop.f32.mrb[0].mxu0
  %v3234 = vadd.f32 0.0, %v3233
  %v3235 = vpop.f32.mrb[0].mxu0
  %v3236 = vadd.f32 0.0, %v3235
  %v3237 = vpop.f32.mrb[0].mxu0
  %v3238 = vadd.f32 0.0, %v3237
  %v3239 = vpop.f32.mrb[0].mxu0
  %v3240 = vadd.f32 0.0, %v3239
  %3241 = vdwg.mxu0
  %3242 = vmatprep.subr.bf16.mxu0 %v769
  %3243 = vmatpush1.bf16.msra.mxu0 %v768
  %3244 = vmatprep.subr.bf16.mxu0 %v777
  %3245 = vmatpush1.bf16.msra.mxu0 %v776
  %3246 = vmatprep.subr.bf16.mxu0 %v785
  %3247 = vmatpush1.bf16.msra.mxu0 %v784
  %3248 = vmatprep.subr.bf16.mxu0 %v793
  %3249 = vmatpush1.bf16.msra.mxu0 %v792
  %3250 = vmatprep.subr.bf16.mxu0 %v801
  %3251 = vmatpush1.bf16.msra.mxu0 %v800
  %3252 = vmatprep.subr.bf16.mxu0 %v809
  %3253 = vmatpush1.bf16.msra.mxu0 %v808
  %3254 = vmatprep.subr.bf16.mxu0 %v817
  %3255 = vmatpush1.bf16.msra.mxu0 %v816
  %3256 = vmatprep.subr.bf16.mxu0 %v825
  %3257 = vmatpush1.bf16.msra.mxu0 %v824
  %3258 = vmatprep.subr.bf16.mxu0 %v833
  %3259 = vmatpush1.bf16.msra.mxu0 %v832
  %3260 = vmatprep.subr.bf16.mxu0 %v841
  %3261 = vmatpush1.bf16.msra.mxu0 %v840
  %3262 = vmatprep.subr.bf16.mxu0 %v849
  %3263 = vmatpush1.bf16.msra.mxu0 %v848
  %3264 = vmatprep.subr.bf16.mxu0 %v857
  %3265 = vmatpush1.bf16.msra.mxu0 %v856
  %3266 = vmatprep.subr.bf16.mxu0 %v865
  %3267 = vmatpush1.bf16.msra.mxu0 %v864
  %3268 = vmatprep.subr.bf16.mxu0 %v873
  %3269 = vmatpush1.bf16.msra.mxu0 %v872
  %3270 = vmatprep.subr.bf16.mxu0 %v881
  %3271 = vmatpush1.bf16.msra.mxu0 %v880
  %3272 = vmatprep.subr.bf16.mxu0 %v889
  %3273 = vmatpush1.bf16.msra.mxu0 %v888
  %3274 = vmatprep.mubr.bf16.mxu0 %v1307
  %3275 = vmatmul.mubr.bf16.gmra.mrb[0].mxu0 %v1306
  %v3276 = vpop.f32.mrb[0].mxu0
  %v3277 = vadd.f32 0.0, %v3276
  %v3278 = vpop.f32.mrb[0].mxu0
  %v3279 = vadd.f32 0.0, %v3278
  %v3280 = vpop.f32.mrb[0].mxu0
  %v3281 = vadd.f32 0.0, %v3280
  %v3282 = vpop.f32.mrb[0].mxu0
  %v3283 = vadd.f32 0.0, %v3282
  %3284 = vdwg.mxu0
  %3285 = vmatprep.subr.bf16.mxu0 %v771
  %3286 = vmatpush1.bf16.msra.mxu0 %v770
  %3287 = vmatprep.subr.bf16.mxu0 %v779
  %3288 = vmatpush1.bf16.msra.mxu0 %v778
  %3289 = vmatprep.subr.bf16.mxu0 %v787
  %3290 = vmatpush1.bf16.msra.mxu0 %v786
  %3291 = vmatprep.subr.bf16.mxu0 %v795
  %3292 = vmatpush1.bf16.msra.mxu0 %v794
  %3293 = vmatprep.subr.bf16.mxu0 %v803
  %3294 = vmatpush1.bf16.msra.mxu0 %v802
  %3295 = vmatprep.subr.bf16.mxu0 %v811
  %3296 = vmatpush1.bf16.msra.mxu0 %v810
  %3297 = vmatprep.subr.bf16.mxu0 %v819
  %3298 = vmatpush1.bf16.msra.mxu0 %v818
  %3299 = vmatprep.subr.bf16.mxu0 %v827
  %3300 = vmatpush1.bf16.msra.mxu0 %v826
  %3301 = vmatprep.subr.bf16.mxu0 %v835
  %3302 = vmatpush1.bf16.msra.mxu0 %v834
  %3303 = vmatprep.subr.bf16.mxu0 %v843
  %3304 = vmatpush1.bf16.msra.mxu0 %v842
  %3305 = vmatprep.subr.bf16.mxu0 %v851
  %3306 = vmatpush1.bf16.msra.mxu0 %v850
  %3307 = vmatprep.subr.bf16.mxu0 %v859
  %3308 = vmatpush1.bf16.msra.mxu0 %v858
  %3309 = vmatprep.subr.bf16.mxu0 %v867
  %3310 = vmatpush1.bf16.msra.mxu0 %v866
  %3311 = vmatprep.subr.bf16.mxu0 %v875
  %3312 = vmatpush1.bf16.msra.mxu0 %v874
  %3313 = vmatprep.subr.bf16.mxu0 %v883
  %3314 = vmatpush1.bf16.msra.mxu0 %v882
  %3315 = vmatprep.subr.bf16.mxu0 %v891
  %3316 = vmatpush1.bf16.msra.mxu0 %v890
  %3317 = vmatprep.mubr.bf16.mxu0 %v1307
  %3318 = vmatmul.mubr.bf16.gmra.mrb[0].mxu0 %v1306
  %v3319 = vpop.f32.mrb[0].mxu0
  %v3320 = vadd.f32 0.0, %v3319
  %v3321 = vpop.f32.mrb[0].mxu0
  %v3322 = vadd.f32 0.0, %v3321
  %v3323 = vpop.f32.mrb[0].mxu0
  %v3324 = vadd.f32 0.0, %v3323
  %v3325 = vpop.f32.mrb[0].mxu0
  %v3326 = vadd.f32 0.0, %v3325
  %3327 = vdwg.mxu0
  %3328 = vmatprep.subr.bf16.mxu0 %v773
  %3329 = vmatpush1.bf16.msra.mxu0 %v772
  %3330 = vmatprep.subr.bf16.mxu0 %v781
  %3331 = vmatpush1.bf16.msra.mxu0 %v780
  %3332 = vmatprep.subr.bf16.mxu0 %v789
  %3333 = vmatpush1.bf16.msra.mxu0 %v788
  %3334 = vmatprep.subr.bf16.mxu0 %v797
  %3335 = vmatpush1.bf16.msra.mxu0 %v796
  %3336 = vmatprep.subr.bf16.mxu0 %v805
  %3337 = vmatpush1.bf16.msra.mxu0 %v804
  %3338 = vmatprep.subr.bf16.mxu0 %v813
  %3339 = vmatpush1.bf16.msra.mxu0 %v812
  %3340 = vmatprep.subr.bf16.mxu0 %v821
  %3341 = vmatpush1.bf16.msra.mxu0 %v820
  %3342 = vmatprep.subr.bf16.mxu0 %v829
  %3343 = vmatpush1.bf16.msra.mxu0 %v828
  %3344 = vmatprep.subr.bf16.mxu0 %v837
  %3345 = vmatpush1.bf16.msra.mxu0 %v836
  %3346 = vmatprep.subr.bf16.mxu0 %v845
  %3347 = vmatpush1.bf16.msra.mxu0 %v844
  %3348 = vmatprep.subr.bf16.mxu0 %v853
  %3349 = vmatpush1.bf16.msra.mxu0 %v852
  %3350 = vmatprep.subr.bf16.mxu0 %v861
  %3351 = vmatpush1.bf16.msra.mxu0 %v860
  %3352 = vmatprep.subr.bf16.mxu0 %v869
  %3353 = vmatpush1.bf16.msra.mxu0 %v868
  %3354 = vmatprep.subr.bf16.mxu0 %v877
  %3355 = vmatpush1.bf16.msra.mxu0 %v876
  %3356 = vmatprep.subr.bf16.mxu0 %v885
  %3357 = vmatpush1.bf16.msra.mxu0 %v884
  %3358 = vmatprep.subr.bf16.mxu0 %v893
  %3359 = vmatpush1.bf16.msra.mxu0 %v892
  %3360 = vmatprep.mubr.bf16.mxu0 %v1307
  %3361 = vmatmul.mubr.bf16.gmra.mrb[0].mxu0 %v1306
  %v3362 = vpop.f32.mrb[0].mxu0
  %v3363 = vadd.f32 0.0, %v3362
  %v3364 = vpop.f32.mrb[0].mxu0
  %v3365 = vadd.f32 0.0, %v3364
  %v3366 = vpop.f32.mrb[0].mxu0
  %v3367 = vadd.f32 0.0, %v3366
  %v3368 = vpop.f32.mrb[0].mxu0
  %v3369 = vadd.f32 0.0, %v3368
  %3370 = vdwg.mxu0
  %v3371 = vadd.f32 %v3183, %v3234
  %v3372 = vadd.f32 %v3184, %v3236
  %v3373 = vadd.f32 %v3185, %v3277
  %v3374 = vadd.f32 %v3186, %v3279
  %v3375 = vadd.f32 %v3187, %v3320
  %v3376 = vadd.f32 %v3188, %v3322
  %v3377 = vadd.f32 %v3189, %v3363
  %v3378 = vadd.f32 %v3190, %v3365
  %v3379 = vadd.f32 %v3191, %v3238
  %v3380 = vadd.f32 %v3192, %v3240
  %v3381 = vadd.f32 %v3193, %v3281
  %v3382 = vadd.f32 %v3194, %v3283
  %v3383 = vadd.f32 %v3195, %v3324
  %v3384 = vadd.f32 %v3196, %v3326
  %v3385 = vadd.f32 %v3197, %v3367
  %v3386 = vadd.f32 %v3198, %v3369
  %v3387 = vxor.u32 %v3371, 2147483648
  %v3388 = vxor.u32 %v3372, 2147483648
  %v3389 = vxor.u32 %v3379, 2147483648
  %v3390 = vxor.u32 %v3380, 2147483648
  %v3391 = vmul.f32 %v3387, 1.442695
  %v3392 = vpow.pop %v3391
  %v3393 = vmul.f32 %v3388, 1.442695
  %v3394 = vpow.pop %v3393
  %v3395 = vmul.f32 %v3389, 1.442695
  %v3396 = vpow.pop %v3395
  %v3397 = vmul.f32 %v3390, 1.442695
  %v3398 = vpow.pop %v3397
  %v3399 = vadd.f32 %v3392, 1.0
  %v3400 = vadd.f32 %v3394, 1.0
  %v3401 = vadd.f32 %v3396, 1.0
  %v3402 = vadd.f32 %v3398, 1.0
  %v3403 = vrcp.pop %v3399
  %v3404 = vmul.f32 1.0, %v3403
  %v3405 = vrcp.pop %v3400
  %v3406 = vmul.f32 1.0, %v3405
  %v3407 = vrcp.pop %v3401
  %v3408 = vmul.f32 1.0, %v3407
  %v3409 = vrcp.pop %v3402
  %v3410 = vmul.f32 1.0, %v3409
  %v3411 = vxor.u32 %v3373, 2147483648
  %v3412 = vxor.u32 %v3374, 2147483648
  %v3413 = vxor.u32 %v3381, 2147483648
  %v3414 = vxor.u32 %v3382, 2147483648
  %v3415 = vmul.f32 %v3411, 1.442695
  %v3416 = vpow.pop %v3415
  %v3417 = vmul.f32 %v3412, 1.442695
  %v3418 = vpow.pop %v3417
  %v3419 = vmul.f32 %v3413, 1.442695
  %v3420 = vpow.pop %v3419
  %v3421 = vmul.f32 %v3414, 1.442695
  %v3422 = vpow.pop %v3421
  %v3423 = vadd.f32 %v3416, 1.0
  %v3424 = vadd.f32 %v3418, 1.0
  %v3425 = vadd.f32 %v3420, 1.0
  %v3426 = vadd.f32 %v3422, 1.0
  %v3427 = vrcp.pop %v3423
  %v3428 = vmul.f32 1.0, %v3427
  %v3429 = vrcp.pop %v3424
  %v3430 = vmul.f32 1.0, %v3429
  %v3431 = vrcp.pop %v3425
  %v3432 = vmul.f32 1.0, %v3431
  %v3433 = vrcp.pop %v3426
  %v3434 = vmul.f32 1.0, %v3433
  %v3435 = vtanh.pop %v3375
  %v3436 = vtanh.pop %v3376
  %v3437 = vtanh.pop %v3383
  %v3438 = vtanh.pop %v3384
  %v3439 = vxor.u32 %v3377, 2147483648
  %v3440 = vxor.u32 %v3378, 2147483648
  %v3441 = vxor.u32 %v3385, 2147483648
  %v3442 = vxor.u32 %v3386, 2147483648
  %v3443 = vmul.f32 %v3439, 1.442695
  %v3444 = vpow.pop %v3443
  %v3445 = vmul.f32 %v3440, 1.442695
  %v3446 = vpow.pop %v3445
  %v3447 = vmul.f32 %v3441, 1.442695
  %v3448 = vpow.pop %v3447
  %v3449 = vmul.f32 %v3442, 1.442695
  %v3450 = vpow.pop %v3449
  %v3451 = vadd.f32 %v3444, 1.0
  %v3452 = vadd.f32 %v3446, 1.0
  %v3453 = vadd.f32 %v3448, 1.0
  %v3454 = vadd.f32 %v3450, 1.0
  %v3455 = vrcp.pop %v3451
  %v3456 = vmul.f32 1.0, %v3455
  %v3457 = vrcp.pop %v3452
  %v3458 = vmul.f32 1.0, %v3457
  %v3459 = vrcp.pop %v3453
  %v3460 = vmul.f32 1.0, %v3459
  %v3461 = vrcp.pop %v3454
  %v3462 = vmul.f32 1.0, %v3461
  %v3463 = vmul.f32 %v3428, %v1294
  %v3464 = vmul.f32 %v3430, %v1295
  %v3465 = vmul.f32 %v3432, %v1296
  %v3466 = vmul.f32 %v3434, %v1297
  %v3467 = vmul.f32 %v3404, %v3435
  %v3468 = vmul.f32 %v3406, %v3436
  %v3469 = vmul.f32 %v3408, %v3437
  %v3470 = vmul.f32 %v3410, %v3438
  %v3471 = vadd.f32 %v3463, %v3467
  %v3472 = vadd.f32 %v3464, %v3468
  %v3473 = vadd.f32 %v3465, %v3469
  %v3474 = vadd.f32 %v3466, %v3470
  %v3475 = vtanh.pop %v3471
  %v3476 = vtanh.pop %v3472
  %v3477 = vtanh.pop %v3473
  %v3478 = vtanh.pop %v3474
  %v3479 = vmul.f32 %v3456, %v3475
  %v3480 = vmul.f32 %v3458, %v3476
  %v3481 = vmul.f32 %v3460, %v3477
  %v3482 = vmul.f32 %v3462, %v3478
  %v3483 = vpack.c.bf16 %v3481, %v3479
  %v3484 = vpack.c.bf16 %v3482, %v3480
  %3485 = vmatprep.subr.bf16.mxu0 %v1821
  %3486 = vmatpush1.bf16.msra.mxu0 %v1820
  %3487 = vmatprep.subr.bf16.mxu0 %v1829
  %3488 = vmatpush1.bf16.msra.mxu0 %v1828
  %3489 = vmatprep.subr.bf16.mxu0 %v1837
  %3490 = vmatpush1.bf16.msra.mxu0 %v1836
  %3491 = vmatprep.subr.bf16.mxu0 %v1845
  %3492 = vmatpush1.bf16.msra.mxu0 %v1844
  %3493 = vmatprep.subr.bf16.mxu0 %v1853
  %3494 = vmatpush1.bf16.msra.mxu0 %v1852
  %3495 = vmatprep.subr.bf16.mxu0 %v1861
  %3496 = vmatpush1.bf16.msra.mxu0 %v1860
  %3497 = vmatprep.subr.bf16.mxu0 %v1869
  %3498 = vmatpush1.bf16.msra.mxu0 %v1868
  %3499 = vmatprep.subr.bf16.mxu0 %v1877
  %3500 = vmatpush1.bf16.msra.mxu0 %v1876
  %3501 = vmatprep.subr.bf16.mxu0 %v1885
  %3502 = vmatpush1.bf16.msra.mxu0 %v1884
  %3503 = vmatprep.subr.bf16.mxu0 %v1893
  %3504 = vmatpush1.bf16.msra.mxu0 %v1892
  %3505 = vmatprep.subr.bf16.mxu0 %v1901
  %3506 = vmatpush1.bf16.msra.mxu0 %v1900
  %3507 = vmatprep.subr.bf16.mxu0 %v1909
  %3508 = vmatpush1.bf16.msra.mxu0 %v1908
  %3509 = vmatprep.subr.bf16.mxu0 %v1917
  %3510 = vmatpush1.bf16.msra.mxu0 %v1916
  %3511 = vmatprep.subr.bf16.mxu0 %v1925
  %3512 = vmatpush1.bf16.msra.mxu0 %v1924
  %3513 = vmatprep.subr.bf16.mxu0 %v1933
  %3514 = vmatpush1.bf16.msra.mxu0 %v1932
  %3515 = vmatprep.subr.bf16.mxu0 %v1941
  %3516 = vmatpush1.bf16.msra.mxu0 %v1940
  %3517 = vmatprep.mubr.bf16.mxu0 %v3484
  %3518 = vmatmul.mubr.bf16.gmra.mrb[0].mxu0 %v3483
  %v3519 = vpop.f32.mrb[0].mxu0
  %v3520 = vadd.f32 0.0, %v3519
  %v3521 = vpop.f32.mrb[0].mxu0
  %v3522 = vadd.f32 0.0, %v3521
  %v3523 = vpop.f32.mrb[0].mxu0
  %v3524 = vadd.f32 0.0, %v3523
  %v3525 = vpop.f32.mrb[0].mxu0
  %v3526 = vadd.f32 0.0, %v3525
  %3527 = vdwg.mxu0
  %3528 = vmatprep.subr.bf16.mxu0 %v1823
  %3529 = vmatpush1.bf16.msra.mxu0 %v1822
  %3530 = vmatprep.subr.bf16.mxu0 %v1831
  %3531 = vmatpush1.bf16.msra.mxu0 %v1830
  %3532 = vmatprep.subr.bf16.mxu0 %v1839
  %3533 = vmatpush1.bf16.msra.mxu0 %v1838
  %3534 = vmatprep.subr.bf16.mxu0 %v1847
  %3535 = vmatpush1.bf16.msra.mxu0 %v1846
  %3536 = vmatprep.subr.bf16.mxu0 %v1855
  %3537 = vmatpush1.bf16.msra.mxu0 %v1854
  %3538 = vmatprep.subr.bf16.mxu0 %v1863
  %3539 = vmatpush1.bf16.msra.mxu0 %v1862
  %3540 = vmatprep.subr.bf16.mxu0 %v1871
  %3541 = vmatpush1.bf16.msra.mxu0 %v1870
  %3542 = vmatprep.subr.bf16.mxu0 %v1879
  %3543 = vmatpush1.bf16.msra.mxu0 %v1878
  %3544 = vmatprep.subr.bf16.mxu0 %v1887
  %3545 = vmatpush1.bf16.msra.mxu0 %v1886
  %3546 = vmatprep.subr.bf16.mxu0 %v1895
  %3547 = vmatpush1.bf16.msra.mxu0 %v1894
  %3548 = vmatprep.subr.bf16.mxu0 %v1903
  %3549 = vmatpush1.bf16.msra.mxu0 %v1902
  %3550 = vmatprep.subr.bf16.mxu0 %v1911
  %3551 = vmatpush1.bf16.msra.mxu0 %v1910
  %3552 = vmatprep.subr.bf16.mxu0 %v1919
  %3553 = vmatpush1.bf16.msra.mxu0 %v1918
  %3554 = vmatprep.subr.bf16.mxu0 %v1927
  %3555 = vmatpush1.bf16.msra.mxu0 %v1926
  %3556 = vmatprep.subr.bf16.mxu0 %v1935
  %3557 = vmatpush1.bf16.msra.mxu0 %v1934
  %3558 = vmatprep.subr.bf16.mxu0 %v1943
  %3559 = vmatpush1.bf16.msra.mxu0 %v1942
  %3560 = vmatprep.mubr.bf16.mxu0 %v3484
  %3561 = vmatmul.mubr.bf16.gmra.mrb[0].mxu0 %v3483
  %v3562 = vpop.f32.mrb[0].mxu0
  %v3563 = vadd.f32 0.0, %v3562
  %v3564 = vpop.f32.mrb[0].mxu0
  %v3565 = vadd.f32 0.0, %v3564
  %v3566 = vpop.f32.mrb[0].mxu0
  %v3567 = vadd.f32 0.0, %v3566
  %v3568 = vpop.f32.mrb[0].mxu0
  %v3569 = vadd.f32 0.0, %v3568
  %3570 = vdwg.mxu0
  %3571 = vmatprep.subr.bf16.mxu0 %v1825
  %3572 = vmatpush1.bf16.msra.mxu0 %v1824
  %3573 = vmatprep.subr.bf16.mxu0 %v1833
  %3574 = vmatpush1.bf16.msra.mxu0 %v1832
  %3575 = vmatprep.subr.bf16.mxu0 %v1841
  %3576 = vmatpush1.bf16.msra.mxu0 %v1840
  %3577 = vmatprep.subr.bf16.mxu0 %v1849
  %3578 = vmatpush1.bf16.msra.mxu0 %v1848
  %3579 = vmatprep.subr.bf16.mxu0 %v1857
  %3580 = vmatpush1.bf16.msra.mxu0 %v1856
  %3581 = vmatprep.subr.bf16.mxu0 %v1865
  %3582 = vmatpush1.bf16.msra.mxu0 %v1864
  %3583 = vmatprep.subr.bf16.mxu0 %v1873
  %3584 = vmatpush1.bf16.msra.mxu0 %v1872
  %3585 = vmatprep.subr.bf16.mxu0 %v1881
  %3586 = vmatpush1.bf16.msra.mxu0 %v1880
  %3587 = vmatprep.subr.bf16.mxu0 %v1889
  %3588 = vmatpush1.bf16.msra.mxu0 %v1888
  %3589 = vmatprep.subr.bf16.mxu0 %v1897
  %3590 = vmatpush1.bf16.msra.mxu0 %v1896
  %3591 = vmatprep.subr.bf16.mxu0 %v1905
  %3592 = vmatpush1.bf16.msra.mxu0 %v1904
  %3593 = vmatprep.subr.bf16.mxu0 %v1913
  %3594 = vmatpush1.bf16.msra.mxu0 %v1912
  %3595 = vmatprep.subr.bf16.mxu0 %v1921
  %3596 = vmatpush1.bf16.msra.mxu0 %v1920
  %3597 = vmatprep.subr.bf16.mxu0 %v1929
  %3598 = vmatpush1.bf16.msra.mxu0 %v1928
  %3599 = vmatprep.subr.bf16.mxu0 %v1937
  %3600 = vmatpush1.bf16.msra.mxu0 %v1936
  %3601 = vmatprep.subr.bf16.mxu0 %v1945
  %3602 = vmatpush1.bf16.msra.mxu0 %v1944
  %3603 = vmatprep.mubr.bf16.mxu0 %v3484
  %3604 = vmatmul.mubr.bf16.gmra.mrb[0].mxu0 %v3483
  %v3605 = vpop.f32.mrb[0].mxu0
  %v3606 = vadd.f32 0.0, %v3605
  %v3607 = vpop.f32.mrb[0].mxu0
  %v3608 = vadd.f32 0.0, %v3607
  %v3609 = vpop.f32.mrb[0].mxu0
  %v3610 = vadd.f32 0.0, %v3609
  %v3611 = vpop.f32.mrb[0].mxu0
  %v3612 = vadd.f32 0.0, %v3611
  %3613 = vdwg.mxu0
  %3614 = vmatprep.subr.bf16.mxu0 %v1827
  %3615 = vmatpush1.bf16.msra.mxu0 %v1826
  %3616 = vmatprep.subr.bf16.mxu0 %v1835
  %3617 = vmatpush1.bf16.msra.mxu0 %v1834
  %3618 = vmatprep.subr.bf16.mxu0 %v1843
  %3619 = vmatpush1.bf16.msra.mxu0 %v1842
  %3620 = vmatprep.subr.bf16.mxu0 %v1851
  %3621 = vmatpush1.bf16.msra.mxu0 %v1850
  %3622 = vmatprep.subr.bf16.mxu0 %v1859
  %3623 = vmatpush1.bf16.msra.mxu0 %v1858
  %3624 = vmatprep.subr.bf16.mxu0 %v1867
  %3625 = vmatpush1.bf16.msra.mxu0 %v1866
  %3626 = vmatprep.subr.bf16.mxu0 %v1875
  %3627 = vmatpush1.bf16.msra.mxu0 %v1874
  %3628 = vmatprep.subr.bf16.mxu0 %v1883
  %3629 = vmatpush1.bf16.msra.mxu0 %v1882
  %3630 = vmatprep.subr.bf16.mxu0 %v1891
  %3631 = vmatpush1.bf16.msra.mxu0 %v1890
  %3632 = vmatprep.subr.bf16.mxu0 %v1899
  %3633 = vmatpush1.bf16.msra.mxu0 %v1898
  %3634 = vmatprep.subr.bf16.mxu0 %v1907
  %3635 = vmatpush1.bf16.msra.mxu0 %v1906
  %3636 = vmatprep.subr.bf16.mxu0 %v1915
  %3637 = vmatpush1.bf16.msra.mxu0 %v1914
  %3638 = vmatprep.subr.bf16.mxu0 %v1923
  %3639 = vmatpush1.bf16.msra.mxu0 %v1922
  %3640 = vmatprep.subr.bf16.mxu0 %v1931
  %3641 = vmatpush1.bf16.msra.mxu0 %v1930
  %3642 = vmatprep.subr.bf16.mxu0 %v1939
  %3643 = vmatpush1.bf16.msra.mxu0 %v1938
  %3644 = vmatprep.subr.bf16.mxu0 %v1947
  %3645 = vmatpush1.bf16.msra.mxu0 %v1946
  %3646 = vmatprep.mubr.bf16.mxu0 %v3484
  %3647 = vmatmul.mubr.bf16.gmra.mrb[0].mxu0 %v3483
  %v3648 = vpop.f32.mrb[0].mxu0
  %v3649 = vadd.f32 0.0, %v3648
  %v3650 = vpop.f32.mrb[0].mxu0
  %v3651 = vadd.f32 0.0, %v3650
  %v3652 = vpop.f32.mrb[0].mxu0
  %v3653 = vadd.f32 0.0, %v3652
  %v3654 = vpop.f32.mrb[0].mxu0
  %v3655 = vadd.f32 0.0, %v3654
  %3656 = vdwg.mxu0
  %3657 = vmatprep.subr.bf16.mxu0 %v2633
  %3658 = vmatpush1.bf16.msra.mxu0 %v2632
  %3659 = vmatprep.subr.bf16.mxu0 %v2641
  %3660 = vmatpush1.bf16.msra.mxu0 %v2640
  %3661 = vmatprep.subr.bf16.mxu0 %v2649
  %3662 = vmatpush1.bf16.msra.mxu0 %v2648
  %3663 = vmatprep.subr.bf16.mxu0 %v2657
  %3664 = vmatpush1.bf16.msra.mxu0 %v2656
  %3665 = vmatprep.subr.bf16.mxu0 %v2665
  %3666 = vmatpush1.bf16.msra.mxu0 %v2664
  %3667 = vmatprep.subr.bf16.mxu0 %v2673
  %3668 = vmatpush1.bf16.msra.mxu0 %v2672
  %3669 = vmatprep.subr.bf16.mxu0 %v2681
  %3670 = vmatpush1.bf16.msra.mxu0 %v2680
  %3671 = vmatprep.subr.bf16.mxu0 %v2689
  %3672 = vmatpush1.bf16.msra.mxu0 %v2688
  %3673 = vmatprep.subr.bf16.mxu0 %v2697
  %3674 = vmatpush1.bf16.msra.mxu0 %v2696
  %3675 = vmatprep.subr.bf16.mxu0 %v2705
  %3676 = vmatpush1.bf16.msra.mxu0 %v2704
  %3677 = vmatprep.subr.bf16.mxu0 %v2713
  %3678 = vmatpush1.bf16.msra.mxu0 %v2712
  %3679 = vmatprep.subr.bf16.mxu0 %v2721
  %3680 = vmatpush1.bf16.msra.mxu0 %v2720
  %3681 = vmatprep.subr.bf16.mxu0 %v2729
  %3682 = vmatpush1.bf16.msra.mxu0 %v2728
  %3683 = vmatprep.subr.bf16.mxu0 %v2737
  %3684 = vmatpush1.bf16.msra.mxu0 %v2736
  %3685 = vmatprep.subr.bf16.mxu0 %v2745
  %3686 = vmatpush1.bf16.msra.mxu0 %v2744
  %3687 = vmatprep.subr.bf16.mxu0 %v2753
  %3688 = vmatpush1.bf16.msra.mxu0 %v2752
  %3689 = vmatprep.mubr.bf16.mxu0 %v3173
  %3690 = vmatmul.mubr.bf16.gmra.mrb[0].mxu0 %v3172
  %v3691 = vpop.f32.mrb[0].mxu0
  %v3692 = vadd.f32 %v3520, %v3691
  %v3693 = vpop.f32.mrb[0].mxu0
  %v3694 = vadd.f32 %v3522, %v3693
  %v3695 = vpop.f32.mrb[0].mxu0
  %v3696 = vadd.f32 %v3524, %v3695
  %v3697 = vpop.f32.mrb[0].mxu0
  %v3698 = vadd.f32 %v3526, %v3697
  %3699 = vdwg.mxu0
  %3700 = vmatprep.subr.bf16.mxu0 %v2635
  %3701 = vmatpush1.bf16.msra.mxu0 %v2634
  %3702 = vmatprep.subr.bf16.mxu0 %v2643
  %3703 = vmatpush1.bf16.msra.mxu0 %v2642
  %3704 = vmatprep.subr.bf16.mxu0 %v2651
  %3705 = vmatpush1.bf16.msra.mxu0 %v2650
  %3706 = vmatprep.subr.bf16.mxu0 %v2659
  %3707 = vmatpush1.bf16.msra.mxu0 %v2658
  %3708 = vmatprep.subr.bf16.mxu0 %v2667
  %3709 = vmatpush1.bf16.msra.mxu0 %v2666
  %3710 = vmatprep.subr.bf16.mxu0 %v2675
  %3711 = vmatpush1.bf16.msra.mxu0 %v2674
  %3712 = vmatprep.subr.bf16.mxu0 %v2683
  %3713 = vmatpush1.bf16.msra.mxu0 %v2682
  %3714 = vmatprep.subr.bf16.mxu0 %v2691
  %3715 = vmatpush1.bf16.msra.mxu0 %v2690
  %3716 = vmatprep.subr.bf16.mxu0 %v2699
  %3717 = vmatpush1.bf16.msra.mxu0 %v2698
  %3718 = vmatprep.subr.bf16.mxu0 %v2707
  %3719 = vmatpush1.bf16.msra.mxu0 %v2706
  %3720 = vmatprep.subr.bf16.mxu0 %v2715
  %3721 = vmatpush1.bf16.msra.mxu0 %v2714
  %3722 = vmatprep.subr.bf16.mxu0 %v2723
  %3723 = vmatpush1.bf16.msra.mxu0 %v2722
  %3724 = vmatprep.subr.bf16.mxu0 %v2731
  %3725 = vmatpush1.bf16.msra.mxu0 %v2730
  %3726 = vmatprep.subr.bf16.mxu0 %v2739
  %3727 = vmatpush1.bf16.msra.mxu0 %v2738
  %3728 = vmatprep.subr.bf16.mxu0 %v2747
  %3729 = vmatpush1.bf16.msra.mxu0 %v2746
  %3730 = vmatprep.subr.bf16.mxu0 %v2755
  %3731 = vmatpush1.bf16.msra.mxu0 %v2754
  %3732 = vmatprep.mubr.bf16.mxu0 %v3173
  %3733 = vmatmul.mubr.bf16.gmra.mrb[0].mxu0 %v3172
  %v3734 = vpop.f32.mrb[0].mxu0
  %v3735 = vadd.f32 %v3563, %v3734
  %v3736 = vpop.f32.mrb[0].mxu0
  %v3737 = vadd.f32 %v3565, %v3736
  %v3738 = vpop.f32.mrb[0].mxu0
  %v3739 = vadd.f32 %v3567, %v3738
  %v3740 = vpop.f32.mrb[0].mxu0
  %v3741 = vadd.f32 %v3569, %v3740
  %3742 = vdwg.mxu0
  %3743 = vmatprep.subr.bf16.mxu0 %v2637
  %3744 = vmatpush1.bf16.msra.mxu0 %v2636
  %3745 = vmatprep.subr.bf16.mxu0 %v2645
  %3746 = vmatpush1.bf16.msra.mxu0 %v2644
  %3747 = vmatprep.subr.bf16.mxu0 %v2653
  %3748 = vmatpush1.bf16.msra.mxu0 %v2652
  %3749 = vmatprep.subr.bf16.mxu0 %v2661
  %3750 = vmatpush1.bf16.msra.mxu0 %v2660
  %3751 = vmatprep.subr.bf16.mxu0 %v2669
  %3752 = vmatpush1.bf16.msra.mxu0 %v2668
  %3753 = vmatprep.subr.bf16.mxu0 %v2677
  %3754 = vmatpush1.bf16.msra.mxu0 %v2676
  %3755 = vmatprep.subr.bf16.mxu0 %v2685
  %3756 = vmatpush1.bf16.msra.mxu0 %v2684
  %3757 = vmatprep.subr.bf16.mxu0 %v2693
  %3758 = vmatpush1.bf16.msra.mxu0 %v2692
  %3759 = vmatprep.subr.bf16.mxu0 %v2701
  %3760 = vmatpush1.bf16.msra.mxu0 %v2700
  %3761 = vmatprep.subr.bf16.mxu0 %v2709
  %3762 = vmatpush1.bf16.msra.mxu0 %v2708
  %3763 = vmatprep.subr.bf16.mxu0 %v2717
  %3764 = vmatpush1.bf16.msra.mxu0 %v2716
  %3765 = vmatprep.subr.bf16.mxu0 %v2725
  %3766 = vmatpush1.bf16.msra.mxu0 %v2724
  %3767 = vmatprep.subr.bf16.mxu0 %v2733
  %3768 = vmatpush1.bf16.msra.mxu0 %v2732
  %3769 = vmatprep.subr.bf16.mxu0 %v2741
  %3770 = vmatpush1.bf16.msra.mxu0 %v2740
  %3771 = vmatprep.subr.bf16.mxu0 %v2749
  %3772 = vmatpush1.bf16.msra.mxu0 %v2748
  %3773 = vmatprep.subr.bf16.mxu0 %v2757
  %3774 = vmatpush1.bf16.msra.mxu0 %v2756
  %3775 = vmatprep.mubr.bf16.mxu0 %v3173
  %3776 = vmatmul.mubr.bf16.gmra.mrb[0].mxu0 %v3172
  %v3777 = vpop.f32.mrb[0].mxu0
  %v3778 = vadd.f32 %v3606, %v3777
  %v3779 = vpop.f32.mrb[0].mxu0
  %v3780 = vadd.f32 %v3608, %v3779
  %v3781 = vpop.f32.mrb[0].mxu0
  %v3782 = vadd.f32 %v3610, %v3781
  %v3783 = vpop.f32.mrb[0].mxu0
  %v3784 = vadd.f32 %v3612, %v3783
  %3785 = vdwg.mxu0
  %3786 = vmatprep.subr.bf16.mxu0 %v2639
  %3787 = vmatpush1.bf16.msra.mxu0 %v2638
  %3788 = vmatprep.subr.bf16.mxu0 %v2647
  %3789 = vmatpush1.bf16.msra.mxu0 %v2646
  %3790 = vmatprep.subr.bf16.mxu0 %v2655
  %3791 = vmatpush1.bf16.msra.mxu0 %v2654
  %3792 = vmatprep.subr.bf16.mxu0 %v2663
  %3793 = vmatpush1.bf16.msra.mxu0 %v2662
  %3794 = vmatprep.subr.bf16.mxu0 %v2671
  %3795 = vmatpush1.bf16.msra.mxu0 %v2670
  %3796 = vmatprep.subr.bf16.mxu0 %v2679
  %3797 = vmatpush1.bf16.msra.mxu0 %v2678
  %3798 = vmatprep.subr.bf16.mxu0 %v2687
  %3799 = vmatpush1.bf16.msra.mxu0 %v2686
  %3800 = vmatprep.subr.bf16.mxu0 %v2695
  %3801 = vmatpush1.bf16.msra.mxu0 %v2694
  %3802 = vmatprep.subr.bf16.mxu0 %v2703
  %3803 = vmatpush1.bf16.msra.mxu0 %v2702
  %3804 = vmatprep.subr.bf16.mxu0 %v2711
  %3805 = vmatpush1.bf16.msra.mxu0 %v2710
  %3806 = vmatprep.subr.bf16.mxu0 %v2719
  %3807 = vmatpush1.bf16.msra.mxu0 %v2718
  %3808 = vmatprep.subr.bf16.mxu0 %v2727
  %3809 = vmatpush1.bf16.msra.mxu0 %v2726
  %3810 = vmatprep.subr.bf16.mxu0 %v2735
  %3811 = vmatpush1.bf16.msra.mxu0 %v2734
  %3812 = vmatprep.subr.bf16.mxu0 %v2743
  %3813 = vmatpush1.bf16.msra.mxu0 %v2742
  %3814 = vmatprep.subr.bf16.mxu0 %v2751
  %3815 = vmatpush1.bf16.msra.mxu0 %v2750
  %3816 = vmatprep.subr.bf16.mxu0 %v2759
  %3817 = vmatpush1.bf16.msra.mxu0 %v2758
  %3818 = vmatprep.mubr.bf16.mxu0 %v3173
  %3819 = vmatmul.mubr.bf16.gmra.mrb[0].mxu0 %v3172
  %v3820 = vpop.f32.mrb[0].mxu0
  %v3821 = vadd.f32 %v3649, %v3820
  %v3822 = vpop.f32.mrb[0].mxu0
  %v3823 = vadd.f32 %v3651, %v3822
  %v3824 = vpop.f32.mrb[0].mxu0
  %v3825 = vadd.f32 %v3653, %v3824
  %v3826 = vpop.f32.mrb[0].mxu0
  %v3827 = vadd.f32 %v3655, %v3826
  %3828 = vdwg.mxu0
  %v3829 = vadd.f32 %v3692, %v45
  %v3830 = vadd.f32 %v3694, %v49
  %v3831 = vadd.f32 %v3735, %v53
  %v3832 = vadd.f32 %v3737, %v57
  %v3833 = vadd.f32 %v3778, %v61
  %v3834 = vadd.f32 %v3780, %v65
  %v3835 = vadd.f32 %v3821, %v69
  %v3836 = vadd.f32 %v3823, %v73
  %v3837 = vadd.f32 %v3696, %v45
  %v3838 = vadd.f32 %v3698, %v49
  %v3839 = vadd.f32 %v3739, %v53
  %v3840 = vadd.f32 %v3741, %v57
  %v3841 = vadd.f32 %v3782, %v61
  %v3842 = vadd.f32 %v3784, %v65
  %v3843 = vadd.f32 %v3825, %v69
  %v3844 = vadd.f32 %v3827, %v73
  %v3845 = vxor.u32 %v3829, 2147483648
  %v3846 = vxor.u32 %v3830, 2147483648
  %v3847 = vxor.u32 %v3837, 2147483648
  %v3848 = vxor.u32 %v3838, 2147483648
  %v3849 = vmul.f32 %v3845, 1.442695
  %v3850 = vpow.pop %v3849
  %v3851 = vmul.f32 %v3846, 1.442695
  %v3852 = vpow.pop %v3851
  %v3853 = vmul.f32 %v3847, 1.442695
  %v3854 = vpow.pop %v3853
  %v3855 = vmul.f32 %v3848, 1.442695
  %v3856 = vpow.pop %v3855
  %v3857 = vadd.f32 %v3850, 1.0
  %v3858 = vadd.f32 %v3852, 1.0
  %v3859 = vadd.f32 %v3854, 1.0
  %v3860 = vadd.f32 %v3856, 1.0
  %v3861 = vrcp.pop %v3857
  %v3862 = vmul.f32 1.0, %v3861
  %v3863 = vrcp.pop %v3858
  %v3864 = vmul.f32 1.0, %v3863
  %v3865 = vrcp.pop %v3859
  %v3866 = vmul.f32 1.0, %v3865
  %v3867 = vrcp.pop %v3860
  %v3868 = vmul.f32 1.0, %v3867
  %v3869 = vxor.u32 %v3831, 2147483648
  %v3870 = vxor.u32 %v3832, 2147483648
  %v3871 = vxor.u32 %v3839, 2147483648
  %v3872 = vxor.u32 %v3840, 2147483648
  %v3873 = vmul.f32 %v3869, 1.442695
  %v3874 = vpow.pop %v3873
  %v3875 = vmul.f32 %v3870, 1.442695
  %v3876 = vpow.pop %v3875
  %v3877 = vmul.f32 %v3871, 1.442695
  %v3878 = vpow.pop %v3877
  %v3879 = vmul.f32 %v3872, 1.442695
  %v3880 = vpow.pop %v3879
  %v3881 = vadd.f32 %v3874, 1.0
  %v3882 = vadd.f32 %v3876, 1.0
  %v3883 = vadd.f32 %v3878, 1.0
  %v3884 = vadd.f32 %v3880, 1.0
  %v3885 = vrcp.pop %v3881
  %v3886 = vmul.f32 1.0, %v3885
  %v3887 = vrcp.pop %v3882
  %v3888 = vmul.f32 1.0, %v3887
  %v3889 = vrcp.pop %v3883
  %v3890 = vmul.f32 1.0, %v3889
  %v3891 = vrcp.pop %v3884
  %v3892 = vmul.f32 1.0, %v3891
  %v3893 = vtanh.pop %v3833
  %v3894 = vtanh.pop %v3834
  %v3895 = vtanh.pop %v3841
  %v3896 = vtanh.pop %v3842
  %v3897 = vxor.u32 %v3835, 2147483648
  %v3898 = vxor.u32 %v3836, 2147483648
  %v3899 = vxor.u32 %v3843, 2147483648
  %v3900 = vxor.u32 %v3844, 2147483648
  %v3901 = vmul.f32 %v3897, 1.442695
  %v3902 = vpow.pop %v3901
  %v3903 = vmul.f32 %v3898, 1.442695
  %v3904 = vpow.pop %v3903
  %v3905 = vmul.f32 %v3899, 1.442695
  %v3906 = vpow.pop %v3905
  %v3907 = vmul.f32 %v3900, 1.442695
  %v3908 = vpow.pop %v3907
  %v3909 = vadd.f32 %v3902, 1.0
  %v3910 = vadd.f32 %v3904, 1.0
  %v3911 = vadd.f32 %v3906, 1.0
  %v3912 = vadd.f32 %v3908, 1.0
  %v3913 = vrcp.pop %v3909
  %v3914 = vmul.f32 1.0, %v3913
  %v3915 = vrcp.pop %v3910
  %v3916 = vmul.f32 1.0, %v3915
  %v3917 = vrcp.pop %v3911
  %v3918 = vmul.f32 1.0, %v3917
  %v3919 = vrcp.pop %v3912
  %v3920 = vmul.f32 1.0, %v3919
  %v3921 = vmul.f32 %v3886, %v3160
  %v3922 = vmul.f32 %v3888, %v3161
  %v3923 = vmul.f32 %v3890, %v3162
  %v3924 = vmul.f32 %v3892, %v3163
  %v3925 = vmul.f32 %v3862, %v3893
  %v3926 = vmul.f32 %v3864, %v3894
  %v3927 = vmul.f32 %v3866, %v3895
  %v3928 = vmul.f32 %v3868, %v3896
  %v3929 = vadd.f32 %v3921, %v3925
  %v3930 = vadd.f32 %v3922, %v3926
  %v3931 = vadd.f32 %v3923, %v3927
  %v3932 = vadd.f32 %v3924, %v3928
  %v3933 = vtanh.pop %v3929
  %v3934 = vtanh.pop %v3930
  %v3935 = vtanh.pop %v3931
  %v3936 = vtanh.pop %v3932
  %v3937 = vmul.f32 %v3914, %v3933
  %v3938 = vmul.f32 %v3916, %v3934
  %v3939 = vmul.f32 %v3918, %v3935
  %v3940 = vmul.f32 %v3920, %v3936
  %v3941 = vpack.c.bf16 %v3939, %v3937
  %v3942 = vpack.c.bf16 %v3940, %v3938
  %s3943 = scalar_lea.vmem %s0, 128
  %v3944 = vld [vmem:[%s3943] sm:$0xff]
  %v3945 = vld [vmem:[%s3943 + $0x8] sm:$0xff]
  %v3946 = vld [vmem:[%s3943 + $0x10] sm:$0xff]
  %v3947 = vld [vmem:[%s3943 + $0x18] sm:$0xff]
  %v3948 = vld [vmem:[%s3943 + $0x20] sm:$0xff]
  %v3949 = vld [vmem:[%s3943 + $0x28] sm:$0xff]
  %v3950 = vld [vmem:[%s3943 + $0x30] sm:$0xff]
  %v3951 = vld [vmem:[%s3943 + $0x38] sm:$0xff]
  %v3952 = vunpack.c.l.bf16 %v3944
  %v3953 = vunpack.c.h.bf16 %v3944
  %v3954 = vunpack.c.l.bf16 %v3945
  %v3955 = vunpack.c.h.bf16 %v3945
  %v3956 = vunpack.c.l.bf16 %v3946
  %v3957 = vunpack.c.h.bf16 %v3946
  %v3958 = vunpack.c.l.bf16 %v3947
  %v3959 = vunpack.c.h.bf16 %v3947
  %v3960 = vunpack.c.l.bf16 %v3948
  %v3961 = vunpack.c.h.bf16 %v3948
  %v3962 = vunpack.c.l.bf16 %v3949
  %v3963 = vunpack.c.h.bf16 %v3949
  %v3964 = vunpack.c.l.bf16 %v3950
  %v3965 = vunpack.c.h.bf16 %v3950
  %v3966 = vunpack.c.l.bf16 %v3951
  %v3967 = vunpack.c.h.bf16 %v3951
  %3968 = vmatprep.subr.bf16.mxu0 %v767
  %3969 = vmatpush1.bf16.msra.mxu0 %v766
  %3970 = vmatprep.subr.bf16.mxu0 %v775
  %3971 = vmatpush1.bf16.msra.mxu0 %v774
  %3972 = vmatprep.subr.bf16.mxu0 %v783
  %3973 = vmatpush1.bf16.msra.mxu0 %v782
  %3974 = vmatprep.subr.bf16.mxu0 %v791
  %3975 = vmatpush1.bf16.msra.mxu0 %v790
  %3976 = vmatprep.subr.bf16.mxu0 %v799
  %3977 = vmatpush1.bf16.msra.mxu0 %v798
  %3978 = vmatprep.subr.bf16.mxu0 %v807
  %3979 = vmatpush1.bf16.msra.mxu0 %v806
  %3980 = vmatprep.subr.bf16.mxu0 %v815
  %3981 = vmatpush1.bf16.msra.mxu0 %v814
  %3982 = vmatprep.subr.bf16.mxu0 %v823
  %3983 = vmatpush1.bf16.msra.mxu0 %v822
  %3984 = vmatprep.subr.bf16.mxu0 %v831
  %3985 = vmatpush1.bf16.msra.mxu0 %v830
  %3986 = vmatprep.subr.bf16.mxu0 %v839
  %3987 = vmatpush1.bf16.msra.mxu0 %v838
  %3988 = vmatprep.subr.bf16.mxu0 %v847
  %3989 = vmatpush1.bf16.msra.mxu0 %v846
  %3990 = vmatprep.subr.bf16.mxu0 %v855
  %3991 = vmatpush1.bf16.msra.mxu0 %v854
  %3992 = vmatprep.subr.bf16.mxu0 %v863
  %3993 = vmatpush1.bf16.msra.mxu0 %v862
  %3994 = vmatprep.subr.bf16.mxu0 %v871
  %3995 = vmatpush1.bf16.msra.mxu0 %v870
  %3996 = vmatprep.subr.bf16.mxu0 %v879
  %3997 = vmatpush1.bf16.msra.mxu0 %v878
  %3998 = vmatprep.subr.bf16.mxu0 %v887
  %3999 = vmatpush1.bf16.msra.mxu0 %v886
  %4000 = vmatprep.mubr.bf16.mxu0 %v3484
  %4001 = vmatmul.mubr.bf16.gmra.mrb[0].mxu0 %v3483
  %v4002 = vpop.f32.mrb[0].mxu0
  %v4003 = vadd.f32 0.0, %v4002
  %v4004 = vpop.f32.mrb[0].mxu0
  %v4005 = vadd.f32 0.0, %v4004
  %v4006 = vpop.f32.mrb[0].mxu0
  %v4007 = vadd.f32 0.0, %v4006
  %v4008 = vpop.f32.mrb[0].mxu0
  %v4009 = vadd.f32 0.0, %v4008
  %4010 = vdwg.mxu0
  %4011 = vmatprep.subr.bf16.mxu0 %v769
  %4012 = vmatpush1.bf16.msra.mxu0 %v768
  %4013 = vmatprep.subr.bf16.mxu0 %v777
  %4014 = vmatpush1.bf16.msra.mxu0 %v776
  %4015 = vmatprep.subr.bf16.mxu0 %v785
  %4016 = vmatpush1.bf16.msra.mxu0 %v784
  %4017 = vmatprep.subr.bf16.mxu0 %v793
  %4018 = vmatpush1.bf16.msra.mxu0 %v792
  %4019 = vmatprep.subr.bf16.mxu0 %v801
  %4020 = vmatpush1.bf16.msra.mxu0 %v800
  %4021 = vmatprep.subr.bf16.mxu0 %v809
  %4022 = vmatpush1.bf16.msra.mxu0 %v808
  %4023 = vmatprep.subr.bf16.mxu0 %v817
  %4024 = vmatpush1.bf16.msra.mxu0 %v816
  %4025 = vmatprep.subr.bf16.mxu0 %v825
  %4026 = vmatpush1.bf16.msra.mxu0 %v824
  %4027 = vmatprep.subr.bf16.mxu0 %v833
  %4028 = vmatpush1.bf16.msra.mxu0 %v832
  %4029 = vmatprep.subr.bf16.mxu0 %v841
  %4030 = vmatpush1.bf16.msra.mxu0 %v840
  %4031 = vmatprep.subr.bf16.mxu0 %v849
  %4032 = vmatpush1.bf16.msra.mxu0 %v848
  %4033 = vmatprep.subr.bf16.mxu0 %v857
  %4034 = vmatpush1.bf16.msra.mxu0 %v856
  %4035 = vmatprep.subr.bf16.mxu0 %v865
  %4036 = vmatpush1.bf16.msra.mxu0 %v864
  %4037 = vmatprep.subr.bf16.mxu0 %v873
  %4038 = vmatpush1.bf16.msra.mxu0 %v872
  %4039 = vmatprep.subr.bf16.mxu0 %v881
  %4040 = vmatpush1.bf16.msra.mxu0 %v880
  %4041 = vmatprep.subr.bf16.mxu0 %v889
  %4042 = vmatpush1.bf16.msra.mxu0 %v888
  %4043 = vmatprep.mubr.bf16.mxu0 %v3484
  %4044 = vmatmul.mubr.bf16.gmra.mrb[0].mxu0 %v3483
  %v4045 = vpop.f32.mrb[0].mxu0
  %v4046 = vadd.f32 0.0, %v4045
  %v4047 = vpop.f32.mrb[0].mxu0
  %v4048 = vadd.f32 0.0, %v4047
  %v4049 = vpop.f32.mrb[0].mxu0
  %v4050 = vadd.f32 0.0, %v4049
  %v4051 = vpop.f32.mrb[0].mxu0
  %v4052 = vadd.f32 0.0, %v4051
  %4053 = vdwg.mxu0
  %4054 = vmatprep.subr.bf16.mxu0 %v771
  %4055 = vmatpush1.bf16.msra.mxu0 %v770
  %4056 = vmatprep.subr.bf16.mxu0 %v779
  %4057 = vmatpush1.bf16.msra.mxu0 %v778
  %4058 = vmatprep.subr.bf16.mxu0 %v787
  %4059 = vmatpush1.bf16.msra.mxu0 %v786
  %4060 = vmatprep.subr.bf16.mxu0 %v795
  %4061 = vmatpush1.bf16.msra.mxu0 %v794
  %4062 = vmatprep.subr.bf16.mxu0 %v803
  %4063 = vmatpush1.bf16.msra.mxu0 %v802
  %4064 = vmatprep.subr.bf16.mxu0 %v811
  %4065 = vmatpush1.bf16.msra.mxu0 %v810
  %4066 = vmatprep.subr.bf16.mxu0 %v819
  %4067 = vmatpush1.bf16.msra.mxu0 %v818
  %4068 = vmatprep.subr.bf16.mxu0 %v827
  %4069 = vmatpush1.bf16.msra.mxu0 %v826
  %4070 = vmatprep.subr.bf16.mxu0 %v835
  %4071 = vmatpush1.bf16.msra.mxu0 %v834
  %4072 = vmatprep.subr.bf16.mxu0 %v843
  %4073 = vmatpush1.bf16.msra.mxu0 %v842
  %4074 = vmatprep.subr.bf16.mxu0 %v851
  %4075 = vmatpush1.bf16.msra.mxu0 %v850
  %4076 = vmatprep.subr.bf16.mxu0 %v859
  %4077 = vmatpush1.bf16.msra.mxu0 %v858
  %4078 = vmatprep.subr.bf16.mxu0 %v867
  %4079 = vmatpush1.bf16.msra.mxu0 %v866
  %4080 = vmatprep.subr.bf16.mxu0 %v875
  %4081 = vmatpush1.bf16.msra.mxu0 %v874
  %4082 = vmatprep.subr.bf16.mxu0 %v883
  %4083 = vmatpush1.bf16.msra.mxu0 %v882
  %4084 = vmatprep.subr.bf16.mxu0 %v891
  %4085 = vmatpush1.bf16.msra.mxu0 %v890
  %4086 = vmatprep.mubr.bf16.mxu0 %v3484
  %4087 = vmatmul.mubr.bf16.gmra.mrb[0].mxu0 %v3483
  %v4088 = vpop.f32.mrb[0].mxu0
  %v4089 = vadd.f32 0.0, %v4088
  %v4090 = vpop.f32.mrb[0].mxu0
  %v4091 = vadd.f32 0.0, %v4090
  %v4092 = vpop.f32.mrb[0].mxu0
  %v4093 = vadd.f32 0.0, %v4092
  %v4094 = vpop.f32.mrb[0].mxu0
  %v4095 = vadd.f32 0.0, %v4094
  %4096 = vdwg.mxu0
  %4097 = vmatprep.subr.bf16.mxu0 %v773
  %4098 = vmatpush1.bf16.msra.mxu0 %v772
  %4099 = vmatprep.subr.bf16.mxu0 %v781
  %4100 = vmatpush1.bf16.msra.mxu0 %v780
  %4101 = vmatprep.subr.bf16.mxu0 %v789
  %4102 = vmatpush1.bf16.msra.mxu0 %v788
  %4103 = vmatprep.subr.bf16.mxu0 %v797
  %4104 = vmatpush1.bf16.msra.mxu0 %v796
  %4105 = vmatprep.subr.bf16.mxu0 %v805
  %4106 = vmatpush1.bf16.msra.mxu0 %v804
  %4107 = vmatprep.subr.bf16.mxu0 %v813
  %4108 = vmatpush1.bf16.msra.mxu0 %v812
  %4109 = vmatprep.subr.bf16.mxu0 %v821
  %4110 = vmatpush1.bf16.msra.mxu0 %v820
  %4111 = vmatprep.subr.bf16.mxu0 %v829
  %4112 = vmatpush1.bf16.msra.mxu0 %v828
  %4113 = vmatprep.subr.bf16.mxu0 %v837
  %4114 = vmatpush1.bf16.msra.mxu0 %v836
  %4115 = vmatprep.subr.bf16.mxu0 %v845
  %4116 = vmatpush1.bf16.msra.mxu0 %v844
  %4117 = vmatprep.subr.bf16.mxu0 %v853
  %4118 = vmatpush1.bf16.msra.mxu0 %v852
  %4119 = vmatprep.subr.bf16.mxu0 %v861
  %4120 = vmatpush1.bf16.msra.mxu0 %v860
  %4121 = vmatprep.subr.bf16.mxu0 %v869
  %4122 = vmatpush1.bf16.msra.mxu0 %v868
  %4123 = vmatprep.subr.bf16.mxu0 %v877
  %4124 = vmatpush1.bf16.msra.mxu0 %v876
  %4125 = vmatprep.subr.bf16.mxu0 %v885
  %4126 = vmatpush1.bf16.msra.mxu0 %v884
  %4127 = vmatprep.subr.bf16.mxu0 %v893
  %4128 = vmatpush1.bf16.msra.mxu0 %v892
  %4129 = vmatprep.mubr.bf16.mxu0 %v3484
  %4130 = vmatmul.mubr.bf16.gmra.mrb[0].mxu0 %v3483
  %v4131 = vpop.f32.mrb[0].mxu0
  %v4132 = vadd.f32 0.0, %v4131
  %v4133 = vpop.f32.mrb[0].mxu0
  %v4134 = vadd.f32 0.0, %v4133
  %v4135 = vpop.f32.mrb[0].mxu0
  %v4136 = vadd.f32 0.0, %v4135
  %v4137 = vpop.f32.mrb[0].mxu0
  %v4138 = vadd.f32 0.0, %v4137
  %4139 = vdwg.mxu0
  %v4140 = vadd.f32 %v3952, %v4003
  %v4141 = vadd.f32 %v3953, %v4005
  %v4142 = vadd.f32 %v3954, %v4046
  %v4143 = vadd.f32 %v3955, %v4048
  %v4144 = vadd.f32 %v3956, %v4089
  %v4145 = vadd.f32 %v3957, %v4091
  %v4146 = vadd.f32 %v3958, %v4132
  %v4147 = vadd.f32 %v3959, %v4134
  %v4148 = vadd.f32 %v3960, %v4007
  %v4149 = vadd.f32 %v3961, %v4009
  %v4150 = vadd.f32 %v3962, %v4050
  %v4151 = vadd.f32 %v3963, %v4052
  %v4152 = vadd.f32 %v3964, %v4093
  %v4153 = vadd.f32 %v3965, %v4095
  %v4154 = vadd.f32 %v3966, %v4136
  %v4155 = vadd.f32 %v3967, %v4138
  %v4156 = vxor.u32 %v4140, 2147483648
  %v4157 = vxor.u32 %v4141, 2147483648
  %v4158 = vxor.u32 %v4148, 2147483648
  %v4159 = vxor.u32 %v4149, 2147483648
  %v4160 = vmul.f32 %v4156, 1.442695
  %v4161 = vpow.pop %v4160
  %v4162 = vmul.f32 %v4157, 1.442695
  %v4163 = vpow.pop %v4162
  %v4164 = vmul.f32 %v4158, 1.442695
  %v4165 = vpow.pop %v4164
  %v4166 = vmul.f32 %v4159, 1.442695
  %v4167 = vpow.pop %v4166
  %v4168 = vadd.f32 %v4161, 1.0
  %v4169 = vadd.f32 %v4163, 1.0
  %v4170 = vadd.f32 %v4165, 1.0
  %v4171 = vadd.f32 %v4167, 1.0
  %v4172 = vrcp.pop %v4168
  %v4173 = vmul.f32 1.0, %v4172
  %v4174 = vrcp.pop %v4169
  %v4175 = vmul.f32 1.0, %v4174
  %v4176 = vrcp.pop %v4170
  %v4177 = vmul.f32 1.0, %v4176
  %v4178 = vrcp.pop %v4171
  %v4179 = vmul.f32 1.0, %v4178
  %v4180 = vxor.u32 %v4142, 2147483648
  %v4181 = vxor.u32 %v4143, 2147483648
  %v4182 = vxor.u32 %v4150, 2147483648
  %v4183 = vxor.u32 %v4151, 2147483648
  %v4184 = vmul.f32 %v4180, 1.442695
  %v4185 = vpow.pop %v4184
  %v4186 = vmul.f32 %v4181, 1.442695
  %v4187 = vpow.pop %v4186
  %v4188 = vmul.f32 %v4182, 1.442695
  %v4189 = vpow.pop %v4188
  %v4190 = vmul.f32 %v4183, 1.442695
  %v4191 = vpow.pop %v4190
  %v4192 = vadd.f32 %v4185, 1.0
  %v4193 = vadd.f32 %v4187, 1.0
  %v4194 = vadd.f32 %v4189, 1.0
  %v4195 = vadd.f32 %v4191, 1.0
  %v4196 = vrcp.pop %v4192
  %v4197 = vmul.f32 1.0, %v4196
  %v4198 = vrcp.pop %v4193
  %v4199 = vmul.f32 1.0, %v4198
  %v4200 = vrcp.pop %v4194
  %v4201 = vmul.f32 1.0, %v4200
  %v4202 = vrcp.pop %v4195
  %v4203 = vmul.f32 1.0, %v4202
  %v4204 = vtanh.pop %v4144
  %v4205 = vtanh.pop %v4145
  %v4206 = vtanh.pop %v4152
  %v4207 = vtanh.pop %v4153
  %v4208 = vxor.u32 %v4146, 2147483648
  %v4209 = vxor.u32 %v4147, 2147483648
  %v4210 = vxor.u32 %v4154, 2147483648
  %v4211 = vxor.u32 %v4155, 2147483648
  %v4212 = vmul.f32 %v4208, 1.442695
  %v4213 = vpow.pop %v4212
  %v4214 = vmul.f32 %v4209, 1.442695
  %v4215 = vpow.pop %v4214
  %v4216 = vmul.f32 %v4210, 1.442695
  %v4217 = vpow.pop %v4216
  %v4218 = vmul.f32 %v4211, 1.442695
  %v4219 = vpow.pop %v4218
  %v4220 = vadd.f32 %v4213, 1.0
  %v4221 = vadd.f32 %v4215, 1.0
  %v4222 = vadd.f32 %v4217, 1.0
  %v4223 = vadd.f32 %v4219, 1.0
  %v4224 = vrcp.pop %v4220
  %v4225 = vmul.f32 1.0, %v4224
  %v4226 = vrcp.pop %v4221
  %v4227 = vmul.f32 1.0, %v4226
  %v4228 = vrcp.pop %v4222
  %v4229 = vmul.f32 1.0, %v4228
  %v4230 = vrcp.pop %v4223
  %v4231 = vmul.f32 1.0, %v4230
  %v4232 = vmul.f32 %v4197, %v3471
  %v4233 = vmul.f32 %v4199, %v3472
  %v4234 = vmul.f32 %v4201, %v3473
  %v4235 = vmul.f32 %v4203, %v3474
  %v4236 = vmul.f32 %v4173, %v4204
  %v4237 = vmul.f32 %v4175, %v4205
  %v4238 = vmul.f32 %v4177, %v4206
  %v4239 = vmul.f32 %v4179, %v4207
  %v4240 = vadd.f32 %v4232, %v4236
  %v4241 = vadd.f32 %v4233, %v4237
  %v4242 = vadd.f32 %v4234, %v4238
  %v4243 = vadd.f32 %v4235, %v4239
  %v4244 = vtanh.pop %v4240
  %v4245 = vtanh.pop %v4241
  %v4246 = vtanh.pop %v4242
  %v4247 = vtanh.pop %v4243
  %v4248 = vmul.f32 %v4225, %v4244
  %v4249 = vmul.f32 %v4227, %v4245
  %v4250 = vmul.f32 %v4229, %v4246
  %v4251 = vmul.f32 %v4231, %v4247
  %v4252 = vpack.c.bf16 %v4250, %v4248
  %v4253 = vpack.c.bf16 %v4251, %v4249
  %4254 = vmatprep.subr.bf16.mxu0 %v1821
  %4255 = vmatpush1.bf16.msra.mxu0 %v1820
  %4256 = vmatprep.subr.bf16.mxu0 %v1829
  %4257 = vmatpush1.bf16.msra.mxu0 %v1828
  %4258 = vmatprep.subr.bf16.mxu0 %v1837
  %4259 = vmatpush1.bf16.msra.mxu0 %v1836
  %4260 = vmatprep.subr.bf16.mxu0 %v1845
  %4261 = vmatpush1.bf16.msra.mxu0 %v1844
  %4262 = vmatprep.subr.bf16.mxu0 %v1853
  %4263 = vmatpush1.bf16.msra.mxu0 %v1852
  %4264 = vmatprep.subr.bf16.mxu0 %v1861
  %4265 = vmatpush1.bf16.msra.mxu0 %v1860
  %4266 = vmatprep.subr.bf16.mxu0 %v1869
  %4267 = vmatpush1.bf16.msra.mxu0 %v1868
  %4268 = vmatprep.subr.bf16.mxu0 %v1877
  %4269 = vmatpush1.bf16.msra.mxu0 %v1876
  %4270 = vmatprep.subr.bf16.mxu0 %v1885
  %4271 = vmatpush1.bf16.msra.mxu0 %v1884
  %4272 = vmatprep.subr.bf16.mxu0 %v1893
  %4273 = vmatpush1.bf16.msra.mxu0 %v1892
  %4274 = vmatprep.subr.bf16.mxu0 %v1901
  %4275 = vmatpush1.bf16.msra.mxu0 %v1900
  %4276 = vmatprep.subr.bf16.mxu0 %v1909
  %4277 = vmatpush1.bf16.msra.mxu0 %v1908
  %4278 = vmatprep.subr.bf16.mxu0 %v1917
  %4279 = vmatpush1.bf16.msra.mxu0 %v1916
  %4280 = vmatprep.subr.bf16.mxu0 %v1925
  %4281 = vmatpush1.bf16.msra.mxu0 %v1924
  %4282 = vmatprep.subr.bf16.mxu0 %v1933
  %4283 = vmatpush1.bf16.msra.mxu0 %v1932
  %4284 = vmatprep.subr.bf16.mxu0 %v1941
  %4285 = vmatpush1.bf16.msra.mxu0 %v1940
  %4286 = vmatprep.mubr.bf16.mxu0 %v4253
  %4287 = vmatmul.mubr.bf16.gmra.mrb[0].mxu0 %v4252
  %v4288 = vpop.f32.mrb[0].mxu0
  %v4289 = vadd.f32 0.0, %v4288
  %v4290 = vpop.f32.mrb[0].mxu0
  %v4291 = vadd.f32 0.0, %v4290
  %v4292 = vpop.f32.mrb[0].mxu0
  %v4293 = vadd.f32 0.0, %v4292
  %v4294 = vpop.f32.mrb[0].mxu0
  %v4295 = vadd.f32 0.0, %v4294
  %4296 = vdwg.mxu0
  %4297 = vmatprep.subr.bf16.mxu0 %v1823
  %4298 = vmatpush1.bf16.msra.mxu0 %v1822
  %4299 = vmatprep.subr.bf16.mxu0 %v1831
  %4300 = vmatpush1.bf16.msra.mxu0 %v1830
  %4301 = vmatprep.subr.bf16.mxu0 %v1839
  %4302 = vmatpush1.bf16.msra.mxu0 %v1838
  %4303 = vmatprep.subr.bf16.mxu0 %v1847
  %4304 = vmatpush1.bf16.msra.mxu0 %v1846
  %4305 = vmatprep.subr.bf16.mxu0 %v1855
  %4306 = vmatpush1.bf16.msra.mxu0 %v1854
  %4307 = vmatprep.subr.bf16.mxu0 %v1863
  %4308 = vmatpush1.bf16.msra.mxu0 %v1862
  %4309 = vmatprep.subr.bf16.mxu0 %v1871
  %4310 = vmatpush1.bf16.msra.mxu0 %v1870
  %4311 = vmatprep.subr.bf16.mxu0 %v1879
  %4312 = vmatpush1.bf16.msra.mxu0 %v1878
  %4313 = vmatprep.subr.bf16.mxu0 %v1887
  %4314 = vmatpush1.bf16.msra.mxu0 %v1886
  %4315 = vmatprep.subr.bf16.mxu0 %v1895
  %4316 = vmatpush1.bf16.msra.mxu0 %v1894
  %4317 = vmatprep.subr.bf16.mxu0 %v1903
  %4318 = vmatpush1.bf16.msra.mxu0 %v1902
  %4319 = vmatprep.subr.bf16.mxu0 %v1911
  %4320 = vmatpush1.bf16.msra.mxu0 %v1910
  %4321 = vmatprep.subr.bf16.mxu0 %v1919
  %4322 = vmatpush1.bf16.msra.mxu0 %v1918
  %4323 = vmatprep.subr.bf16.mxu0 %v1927
  %4324 = vmatpush1.bf16.msra.mxu0 %v1926
  %4325 = vmatprep.subr.bf16.mxu0 %v1935
  %4326 = vmatpush1.bf16.msra.mxu0 %v1934
  %4327 = vmatprep.subr.bf16.mxu0 %v1943
  %4328 = vmatpush1.bf16.msra.mxu0 %v1942
  %4329 = vmatprep.mubr.bf16.mxu0 %v4253
  %4330 = vmatmul.mubr.bf16.gmra.mrb[0].mxu0 %v4252
  %v4331 = vpop.f32.mrb[0].mxu0
  %v4332 = vadd.f32 0.0, %v4331
  %v4333 = vpop.f32.mrb[0].mxu0
  %v4334 = vadd.f32 0.0, %v4333
  %v4335 = vpop.f32.mrb[0].mxu0
  %v4336 = vadd.f32 0.0, %v4335
  %v4337 = vpop.f32.mrb[0].mxu0
  %v4338 = vadd.f32 0.0, %v4337
  %4339 = vdwg.mxu0
  %4340 = vmatprep.subr.bf16.mxu0 %v1825
  %4341 = vmatpush1.bf16.msra.mxu0 %v1824
  %4342 = vmatprep.subr.bf16.mxu0 %v1833
  %4343 = vmatpush1.bf16.msra.mxu0 %v1832
  %4344 = vmatprep.subr.bf16.mxu0 %v1841
  %4345 = vmatpush1.bf16.msra.mxu0 %v1840
  %4346 = vmatprep.subr.bf16.mxu0 %v1849
  %4347 = vmatpush1.bf16.msra.mxu0 %v1848
  %4348 = vmatprep.subr.bf16.mxu0 %v1857
  %4349 = vmatpush1.bf16.msra.mxu0 %v1856
  %4350 = vmatprep.subr.bf16.mxu0 %v1865
  %4351 = vmatpush1.bf16.msra.mxu0 %v1864
  %4352 = vmatprep.subr.bf16.mxu0 %v1873
  %4353 = vmatpush1.bf16.msra.mxu0 %v1872
  %4354 = vmatprep.subr.bf16.mxu0 %v1881
  %4355 = vmatpush1.bf16.msra.mxu0 %v1880
  %4356 = vmatprep.subr.bf16.mxu0 %v1889
  %4357 = vmatpush1.bf16.msra.mxu0 %v1888
  %4358 = vmatprep.subr.bf16.mxu0 %v1897
  %4359 = vmatpush1.bf16.msra.mxu0 %v1896
  %4360 = vmatprep.subr.bf16.mxu0 %v1905
  %4361 = vmatpush1.bf16.msra.mxu0 %v1904
  %4362 = vmatprep.subr.bf16.mxu0 %v1913
  %4363 = vmatpush1.bf16.msra.mxu0 %v1912
  %4364 = vmatprep.subr.bf16.mxu0 %v1921
  %4365 = vmatpush1.bf16.msra.mxu0 %v1920
  %4366 = vmatprep.subr.bf16.mxu0 %v1929
  %4367 = vmatpush1.bf16.msra.mxu0 %v1928
  %4368 = vmatprep.subr.bf16.mxu0 %v1937
  %4369 = vmatpush1.bf16.msra.mxu0 %v1936
  %4370 = vmatprep.subr.bf16.mxu0 %v1945
  %4371 = vmatpush1.bf16.msra.mxu0 %v1944
  %4372 = vmatprep.mubr.bf16.mxu0 %v4253
  %4373 = vmatmul.mubr.bf16.gmra.mrb[0].mxu0 %v4252
  %v4374 = vpop.f32.mrb[0].mxu0
  %v4375 = vadd.f32 0.0, %v4374
  %v4376 = vpop.f32.mrb[0].mxu0
  %v4377 = vadd.f32 0.0, %v4376
  %v4378 = vpop.f32.mrb[0].mxu0
  %v4379 = vadd.f32 0.0, %v4378
  %v4380 = vpop.f32.mrb[0].mxu0
  %v4381 = vadd.f32 0.0, %v4380
  %4382 = vdwg.mxu0
  %4383 = vmatprep.subr.bf16.mxu0 %v1827
  %4384 = vmatpush1.bf16.msra.mxu0 %v1826
  %4385 = vmatprep.subr.bf16.mxu0 %v1835
  %4386 = vmatpush1.bf16.msra.mxu0 %v1834
  %4387 = vmatprep.subr.bf16.mxu0 %v1843
  %4388 = vmatpush1.bf16.msra.mxu0 %v1842
  %4389 = vmatprep.subr.bf16.mxu0 %v1851
  %4390 = vmatpush1.bf16.msra.mxu0 %v1850
  %4391 = vmatprep.subr.bf16.mxu0 %v1859
  %4392 = vmatpush1.bf16.msra.mxu0 %v1858
  %4393 = vmatprep.subr.bf16.mxu0 %v1867
  %4394 = vmatpush1.bf16.msra.mxu0 %v1866
  %4395 = vmatprep.subr.bf16.mxu0 %v1875
  %4396 = vmatpush1.bf16.msra.mxu0 %v1874
  %4397 = vmatprep.subr.bf16.mxu0 %v1883
  %4398 = vmatpush1.bf16.msra.mxu0 %v1882
  %4399 = vmatprep.subr.bf16.mxu0 %v1891
  %4400 = vmatpush1.bf16.msra.mxu0 %v1890
  %4401 = vmatprep.subr.bf16.mxu0 %v1899
  %4402 = vmatpush1.bf16.msra.mxu0 %v1898
  %4403 = vmatprep.subr.bf16.mxu0 %v1907
  %4404 = vmatpush1.bf16.msra.mxu0 %v1906
  %4405 = vmatprep.subr.bf16.mxu0 %v1915
  %4406 = vmatpush1.bf16.msra.mxu0 %v1914
  %4407 = vmatprep.subr.bf16.mxu0 %v1923
  %4408 = vmatpush1.bf16.msra.mxu0 %v1922
  %4409 = vmatprep.subr.bf16.mxu0 %v1931
  %4410 = vmatpush1.bf16.msra.mxu0 %v1930
  %4411 = vmatprep.subr.bf16.mxu0 %v1939
  %4412 = vmatpush1.bf16.msra.mxu0 %v1938
  %4413 = vmatprep.subr.bf16.mxu0 %v1947
  %4414 = vmatpush1.bf16.msra.mxu0 %v1946
  %4415 = vmatprep.mubr.bf16.mxu0 %v4253
  %4416 = vmatmul.mubr.bf16.gmra.mrb[0].mxu0 %v4252
  %v4417 = vpop.f32.mrb[0].mxu0
  %v4418 = vadd.f32 0.0, %v4417
  %v4419 = vpop.f32.mrb[0].mxu0
  %v4420 = vadd.f32 0.0, %v4419
  %v4421 = vpop.f32.mrb[0].mxu0
  %v4422 = vadd.f32 0.0, %v4421
  %v4423 = vpop.f32.mrb[0].mxu0
  %v4424 = vadd.f32 0.0, %v4423
  %4425 = vdwg.mxu0
  %4426 = vmatprep.subr.bf16.mxu0 %v2633
  %4427 = vmatpush1.bf16.msra.mxu0 %v2632
  %4428 = vmatprep.subr.bf16.mxu0 %v2641
  %4429 = vmatpush1.bf16.msra.mxu0 %v2640
  %4430 = vmatprep.subr.bf16.mxu0 %v2649
  %4431 = vmatpush1.bf16.msra.mxu0 %v2648
  %4432 = vmatprep.subr.bf16.mxu0 %v2657
  %4433 = vmatpush1.bf16.msra.mxu0 %v2656
  %4434 = vmatprep.subr.bf16.mxu0 %v2665
  %4435 = vmatpush1.bf16.msra.mxu0 %v2664
  %4436 = vmatprep.subr.bf16.mxu0 %v2673
  %4437 = vmatpush1.bf16.msra.mxu0 %v2672
  %4438 = vmatprep.subr.bf16.mxu0 %v2681
  %4439 = vmatpush1.bf16.msra.mxu0 %v2680
  %4440 = vmatprep.subr.bf16.mxu0 %v2689
  %4441 = vmatpush1.bf16.msra.mxu0 %v2688
  %4442 = vmatprep.subr.bf16.mxu0 %v2697
  %4443 = vmatpush1.bf16.msra.mxu0 %v2696
  %4444 = vmatprep.subr.bf16.mxu0 %v2705
  %4445 = vmatpush1.bf16.msra.mxu0 %v2704
  %4446 = vmatprep.subr.bf16.mxu0 %v2713
  %4447 = vmatpush1.bf16.msra.mxu0 %v2712
  %4448 = vmatprep.subr.bf16.mxu0 %v2721
  %4449 = vmatpush1.bf16.msra.mxu0 %v2720
  %4450 = vmatprep.subr.bf16.mxu0 %v2729
  %4451 = vmatpush1.bf16.msra.mxu0 %v2728
  %4452 = vmatprep.subr.bf16.mxu0 %v2737
  %4453 = vmatpush1.bf16.msra.mxu0 %v2736
  %4454 = vmatprep.subr.bf16.mxu0 %v2745
  %4455 = vmatpush1.bf16.msra.mxu0 %v2744
  %4456 = vmatprep.subr.bf16.mxu0 %v2753
  %4457 = vmatpush1.bf16.msra.mxu0 %v2752
  %4458 = vmatprep.mubr.bf16.mxu0 %v3942
  %4459 = vmatmul.mubr.bf16.gmra.mrb[0].mxu0 %v3941
  %v4460 = vpop.f32.mrb[0].mxu0
  %v4461 = vadd.f32 %v4289, %v4460
  %v4462 = vpop.f32.mrb[0].mxu0
  %v4463 = vadd.f32 %v4291, %v4462
  %v4464 = vpop.f32.mrb[0].mxu0
  %v4465 = vadd.f32 %v4293, %v4464
  %v4466 = vpop.f32.mrb[0].mxu0
  %v4467 = vadd.f32 %v4295, %v4466
  %4468 = vdwg.mxu0
  %4469 = vmatprep.subr.bf16.mxu0 %v2635
  %4470 = vmatpush1.bf16.msra.mxu0 %v2634
  %4471 = vmatprep.subr.bf16.mxu0 %v2643
  %4472 = vmatpush1.bf16.msra.mxu0 %v2642
  %4473 = vmatprep.subr.bf16.mxu0 %v2651
  %4474 = vmatpush1.bf16.msra.mxu0 %v2650
  %4475 = vmatprep.subr.bf16.mxu0 %v2659
  %4476 = vmatpush1.bf16.msra.mxu0 %v2658
  %4477 = vmatprep.subr.bf16.mxu0 %v2667
  %4478 = vmatpush1.bf16.msra.mxu0 %v2666
  %4479 = vmatprep.subr.bf16.mxu0 %v2675
  %4480 = vmatpush1.bf16.msra.mxu0 %v2674
  %4481 = vmatprep.subr.bf16.mxu0 %v2683
  %4482 = vmatpush1.bf16.msra.mxu0 %v2682
  %4483 = vmatprep.subr.bf16.mxu0 %v2691
  %4484 = vmatpush1.bf16.msra.mxu0 %v2690
  %4485 = vmatprep.subr.bf16.mxu0 %v2699
  %4486 = vmatpush1.bf16.msra.mxu0 %v2698
  %4487 = vmatprep.subr.bf16.mxu0 %v2707
  %4488 = vmatpush1.bf16.msra.mxu0 %v2706
  %4489 = vmatprep.subr.bf16.mxu0 %v2715
  %4490 = vmatpush1.bf16.msra.mxu0 %v2714
  %4491 = vmatprep.subr.bf16.mxu0 %v2723
  %4492 = vmatpush1.bf16.msra.mxu0 %v2722
  %4493 = vmatprep.subr.bf16.mxu0 %v2731
  %4494 = vmatpush1.bf16.msra.mxu0 %v2730
  %4495 = vmatprep.subr.bf16.mxu0 %v2739
  %4496 = vmatpush1.bf16.msra.mxu0 %v2738
  %4497 = vmatprep.subr.bf16.mxu0 %v2747
  %4498 = vmatpush1.bf16.msra.mxu0 %v2746
  %4499 = vmatprep.subr.bf16.mxu0 %v2755
  %4500 = vmatpush1.bf16.msra.mxu0 %v2754
  %4501 = vmatprep.mubr.bf16.mxu0 %v3942
  %4502 = vmatmul.mubr.bf16.gmra.mrb[0].mxu0 %v3941
  %v4503 = vpop.f32.mrb[0].mxu0
  %v4504 = vadd.f32 %v4332, %v4503
  %v4505 = vpop.f32.mrb[0].mxu0
  %v4506 = vadd.f32 %v4334, %v4505
  %v4507 = vpop.f32.mrb[0].mxu0
  %v4508 = vadd.f32 %v4336, %v4507
  %v4509 = vpop.f32.mrb[0].mxu0
  %v4510 = vadd.f32 %v4338, %v4509
  %4511 = vdwg.mxu0
  %4512 = vmatprep.subr.bf16.mxu0 %v2637
  %4513 = vmatpush1.bf16.msra.mxu0 %v2636
  %4514 = vmatprep.subr.bf16.mxu0 %v2645
  %4515 = vmatpush1.bf16.msra.mxu0 %v2644
  %4516 = vmatprep.subr.bf16.mxu0 %v2653
  %4517 = vmatpush1.bf16.msra.mxu0 %v2652
  %4518 = vmatprep.subr.bf16.mxu0 %v2661
  %4519 = vmatpush1.bf16.msra.mxu0 %v2660
  %4520 = vmatprep.subr.bf16.mxu0 %v2669
  %4521 = vmatpush1.bf16.msra.mxu0 %v2668
  %4522 = vmatprep.subr.bf16.mxu0 %v2677
  %4523 = vmatpush1.bf16.msra.mxu0 %v2676
  %4524 = vmatprep.subr.bf16.mxu0 %v2685
  %4525 = vmatpush1.bf16.msra.mxu0 %v2684
  %4526 = vmatprep.subr.bf16.mxu0 %v2693
  %4527 = vmatpush1.bf16.msra.mxu0 %v2692
  %4528 = vmatprep.subr.bf16.mxu0 %v2701
  %4529 = vmatpush1.bf16.msra.mxu0 %v2700
  %4530 = vmatprep.subr.bf16.mxu0 %v2709
  %4531 = vmatpush1.bf16.msra.mxu0 %v2708
  %4532 = vmatprep.subr.bf16.mxu0 %v2717
  %4533 = vmatpush1.bf16.msra.mxu0 %v2716
  %4534 = vmatprep.subr.bf16.mxu0 %v2725
  %4535 = vmatpush1.bf16.msra.mxu0 %v2724
  %4536 = vmatprep.subr.bf16.mxu0 %v2733
  %4537 = vmatpush1.bf16.msra.mxu0 %v2732
  %4538 = vmatprep.subr.bf16.mxu0 %v2741
  %4539 = vmatpush1.bf16.msra.mxu0 %v2740
  %4540 = vmatprep.subr.bf16.mxu0 %v2749
  %4541 = vmatpush1.bf16.msra.mxu0 %v2748
  %4542 = vmatprep.subr.bf16.mxu0 %v2757
  %4543 = vmatpush1.bf16.msra.mxu0 %v2756
  %4544 = vmatprep.mubr.bf16.mxu0 %v3942
  %4545 = vmatmul.mubr.bf16.gmra.mrb[0].mxu0 %v3941
  %v4546 = vpop.f32.mrb[0].mxu0
  %v4547 = vadd.f32 %v4375, %v4546
  %v4548 = vpop.f32.mrb[0].mxu0
  %v4549 = vadd.f32 %v4377, %v4548
  %v4550 = vpop.f32.mrb[0].mxu0
  %v4551 = vadd.f32 %v4379, %v4550
  %v4552 = vpop.f32.mrb[0].mxu0
  %v4553 = vadd.f32 %v4381, %v4552
  %4554 = vdwg.mxu0
  %4555 = vmatprep.subr.bf16.mxu0 %v2639
  %4556 = vmatpush1.bf16.msra.mxu0 %v2638
  %4557 = vmatprep.subr.bf16.mxu0 %v2647
  %4558 = vmatpush1.bf16.msra.mxu0 %v2646
  %4559 = vmatprep.subr.bf16.mxu0 %v2655
  %4560 = vmatpush1.bf16.msra.mxu0 %v2654
  %4561 = vmatprep.subr.bf16.mxu0 %v2663
  %4562 = vmatpush1.bf16.msra.mxu0 %v2662
  %4563 = vmatprep.subr.bf16.mxu0 %v2671
  %4564 = vmatpush1.bf16.msra.mxu0 %v2670
  %4565 = vmatprep.subr.bf16.mxu0 %v2679
  %4566 = vmatpush1.bf16.msra.mxu0 %v2678
  %4567 = vmatprep.subr.bf16.mxu0 %v2687
  %4568 = vmatpush1.bf16.msra.mxu0 %v2686
  %4569 = vmatprep.subr.bf16.mxu0 %v2695
  %4570 = vmatpush1.bf16.msra.mxu0 %v2694
  %4571 = vmatprep.subr.bf16.mxu0 %v2703
  %4572 = vmatpush1.bf16.msra.mxu0 %v2702
  %4573 = vmatprep.subr.bf16.mxu0 %v2711
  %4574 = vmatpush1.bf16.msra.mxu0 %v2710
  %4575 = vmatprep.subr.bf16.mxu0 %v2719
  %4576 = vmatpush1.bf16.msra.mxu0 %v2718
  %4577 = vmatprep.subr.bf16.mxu0 %v2727
  %4578 = vmatpush1.bf16.msra.mxu0 %v2726
  %4579 = vmatprep.subr.bf16.mxu0 %v2735
  %4580 = vmatpush1.bf16.msra.mxu0 %v2734
  %4581 = vmatprep.subr.bf16.mxu0 %v2743
  %4582 = vmatpush1.bf16.msra.mxu0 %v2742
  %4583 = vmatprep.subr.bf16.mxu0 %v2751
  %4584 = vmatpush1.bf16.msra.mxu0 %v2750
  %4585 = vmatprep.subr.bf16.mxu0 %v2759
  %4586 = vmatpush1.bf16.msra.mxu0 %v2758
  %4587 = vmatprep.mubr.bf16.mxu0 %v3942
  %4588 = vmatmul.mubr.bf16.gmra.mrb[0].mxu0 %v3941
  %v4589 = vpop.f32.mrb[0].mxu0
  %v4590 = vadd.f32 %v4418, %v4589
  %v4591 = vpop.f32.mrb[0].mxu0
  %v4592 = vadd.f32 %v4420, %v4591
  %v4593 = vpop.f32.mrb[0].mxu0
  %v4594 = vadd.f32 %v4422, %v4593
  %v4595 = vpop.f32.mrb[0].mxu0
  %v4596 = vadd.f32 %v4424, %v4595
  %4597 = vdwg.mxu0
  %v4598 = vadd.f32 %v4461, %v45
  %v4599 = vadd.f32 %v4463, %v49
  %v4600 = vadd.f32 %v4504, %v53
  %v4601 = vadd.f32 %v4506, %v57
  %v4602 = vadd.f32 %v4547, %v61
  %v4603 = vadd.f32 %v4549, %v65
  %v4604 = vadd.f32 %v4590, %v69
  %v4605 = vadd.f32 %v4592, %v73
  %v4606 = vadd.f32 %v4465, %v45
  %v4607 = vadd.f32 %v4467, %v49
  %v4608 = vadd.f32 %v4508, %v53
  %v4609 = vadd.f32 %v4510, %v57
  %v4610 = vadd.f32 %v4551, %v61
  %v4611 = vadd.f32 %v4553, %v65
  %v4612 = vadd.f32 %v4594, %v69
  %v4613 = vadd.f32 %v4596, %v73
  %v4614 = vxor.u32 %v4598, 2147483648
  %v4615 = vxor.u32 %v4599, 2147483648
  %v4616 = vxor.u32 %v4606, 2147483648
  %v4617 = vxor.u32 %v4607, 2147483648
  %v4618 = vmul.f32 %v4614, 1.442695
  %v4619 = vpow.pop %v4618
  %v4620 = vmul.f32 %v4615, 1.442695
  %v4621 = vpow.pop %v4620
  %v4622 = vmul.f32 %v4616, 1.442695
  %v4623 = vpow.pop %v4622
  %v4624 = vmul.f32 %v4617, 1.442695
  %v4625 = vpow.pop %v4624
  %v4626 = vadd.f32 %v4619, 1.0
  %v4627 = vadd.f32 %v4621, 1.0
  %v4628 = vadd.f32 %v4623, 1.0
  %v4629 = vadd.f32 %v4625, 1.0
  %v4630 = vrcp.pop %v4626
  %v4631 = vmul.f32 1.0, %v4630
  %v4632 = vrcp.pop %v4627
  %v4633 = vmul.f32 1.0, %v4632
  %v4634 = vrcp.pop %v4628
  %v4635 = vmul.f32 1.0, %v4634
  %v4636 = vrcp.pop %v4629
  %v4637 = vmul.f32 1.0, %v4636
  %v4638 = vxor.u32 %v4600, 2147483648
  %v4639 = vxor.u32 %v4601, 2147483648
  %v4640 = vxor.u32 %v4608, 2147483648
  %v4641 = vxor.u32 %v4609, 2147483648
  %v4642 = vmul.f32 %v4638, 1.442695
  %v4643 = vpow.pop %v4642
  %v4644 = vmul.f32 %v4639, 1.442695
  %v4645 = vpow.pop %v4644
  %v4646 = vmul.f32 %v4640, 1.442695
  %v4647 = vpow.pop %v4646
  %v4648 = vmul.f32 %v4641, 1.442695
  %v4649 = vpow.pop %v4648
  %v4650 = vadd.f32 %v4643, 1.0
  %v4651 = vadd.f32 %v4645, 1.0
  %v4652 = vadd.f32 %v4647, 1.0
  %v4653 = vadd.f32 %v4649, 1.0
  %v4654 = vrcp.pop %v4650
  %v4655 = vmul.f32 1.0, %v4654
  %v4656 = vrcp.pop %v4651
  %v4657 = vmul.f32 1.0, %v4656
  %v4658 = vrcp.pop %v4652
  %v4659 = vmul.f32 1.0, %v4658
  %v4660 = vrcp.pop %v4653
  %v4661 = vmul.f32 1.0, %v4660
  %v4662 = vtanh.pop %v4602
  %v4663 = vtanh.pop %v4603
  %v4664 = vtanh.pop %v4610
  %v4665 = vtanh.pop %v4611
  %v4666 = vxor.u32 %v4604, 2147483648
  %v4667 = vxor.u32 %v4605, 2147483648
  %v4668 = vxor.u32 %v4612, 2147483648
  %v4669 = vxor.u32 %v4613, 2147483648
  %v4670 = vmul.f32 %v4666, 1.442695
  %v4671 = vpow.pop %v4670
  %v4672 = vmul.f32 %v4667, 1.442695
  %v4673 = vpow.pop %v4672
  %v4674 = vmul.f32 %v4668, 1.442695
  %v4675 = vpow.pop %v4674
  %v4676 = vmul.f32 %v4669, 1.442695
  %v4677 = vpow.pop %v4676
  %v4678 = vadd.f32 %v4671, 1.0
  %v4679 = vadd.f32 %v4673, 1.0
  %v4680 = vadd.f32 %v4675, 1.0
  %v4681 = vadd.f32 %v4677, 1.0
  %v4682 = vrcp.pop %v4678
  %v4683 = vmul.f32 1.0, %v4682
  %v4684 = vrcp.pop %v4679
  %v4685 = vmul.f32 1.0, %v4684
  %v4686 = vrcp.pop %v4680
  %v4687 = vmul.f32 1.0, %v4686
  %v4688 = vrcp.pop %v4681
  %v4689 = vmul.f32 1.0, %v4688
  %v4690 = vmul.f32 %v4655, %v3929
  %v4691 = vmul.f32 %v4657, %v3930
  %v4692 = vmul.f32 %v4659, %v3931
  %v4693 = vmul.f32 %v4661, %v3932
  %v4694 = vmul.f32 %v4631, %v4662
  %v4695 = vmul.f32 %v4633, %v4663
  %v4696 = vmul.f32 %v4635, %v4664
  %v4697 = vmul.f32 %v4637, %v4665
  %v4698 = vadd.f32 %v4690, %v4694
  %v4699 = vadd.f32 %v4691, %v4695
  %v4700 = vadd.f32 %v4692, %v4696
  %v4701 = vadd.f32 %v4693, %v4697
  %v4702 = vtanh.pop %v4698
  %v4703 = vtanh.pop %v4699
  %v4704 = vtanh.pop %v4700
  %v4705 = vtanh.pop %v4701
  %v4706 = vmul.f32 %v4683, %v4702
  %v4707 = vmul.f32 %v4685, %v4703
  %v4708 = vmul.f32 %v4687, %v4704
  %v4709 = vmul.f32 %v4689, %v4705
  %v4710 = vpack.c.bf16 %v4708, %v4706
  %v4711 = vpack.c.bf16 %v4709, %v4707
  %s4712 = scalar_lea.vmem %s0, 192
  %v4713 = vld [vmem:[%s4712] sm:$0xff]
  %v4714 = vld [vmem:[%s4712 + $0x8] sm:$0xff]
  %v4715 = vld [vmem:[%s4712 + $0x10] sm:$0xff]
  %v4716 = vld [vmem:[%s4712 + $0x18] sm:$0xff]
  %v4717 = vld [vmem:[%s4712 + $0x20] sm:$0xff]
  %v4718 = vld [vmem:[%s4712 + $0x28] sm:$0xff]
  %v4719 = vld [vmem:[%s4712 + $0x30] sm:$0xff]
  %v4720 = vld [vmem:[%s4712 + $0x38] sm:$0xff]
  %v4721 = vunpack.c.l.bf16 %v4713
  %v4722 = vunpack.c.h.bf16 %v4713
  %v4723 = vunpack.c.l.bf16 %v4714
  %v4724 = vunpack.c.h.bf16 %v4714
  %v4725 = vunpack.c.l.bf16 %v4715
  %v4726 = vunpack.c.h.bf16 %v4715
  %v4727 = vunpack.c.l.bf16 %v4716
  %v4728 = vunpack.c.h.bf16 %v4716
  %v4729 = vunpack.c.l.bf16 %v4717
  %v4730 = vunpack.c.h.bf16 %v4717
  %v4731 = vunpack.c.l.bf16 %v4718
  %v4732 = vunpack.c.h.bf16 %v4718
  %v4733 = vunpack.c.l.bf16 %v4719
  %v4734 = vunpack.c.h.bf16 %v4719
  %v4735 = vunpack.c.l.bf16 %v4720
  %v4736 = vunpack.c.h.bf16 %v4720
  %4737 = vmatprep.subr.bf16.mxu0 %v767
  %4738 = vmatpush1.bf16.msra.mxu0 %v766
  %4739 = vmatprep.subr.bf16.mxu0 %v775
  %4740 = vmatpush1.bf16.msra.mxu0 %v774
  %4741 = vmatprep.subr.bf16.mxu0 %v783
  %4742 = vmatpush1.bf16.msra.mxu0 %v782
  %4743 = vmatprep.subr.bf16.mxu0 %v791
  %4744 = vmatpush1.bf16.msra.mxu0 %v790
  %4745 = vmatprep.subr.bf16.mxu0 %v799
  %4746 = vmatpush1.bf16.msra.mxu0 %v798
  %4747 = vmatprep.subr.bf16.mxu0 %v807
  %4748 = vmatpush1.bf16.msra.mxu0 %v806
  %4749 = vmatprep.subr.bf16.mxu0 %v815
  %4750 = vmatpush1.bf16.msra.mxu0 %v814
  %4751 = vmatprep.subr.bf16.mxu0 %v823
  %4752 = vmatpush1.bf16.msra.mxu0 %v822
  %4753 = vmatprep.subr.bf16.mxu0 %v831
  %4754 = vmatpush1.bf16.msra.mxu0 %v830
  %4755 = vmatprep.subr.bf16.mxu0 %v839
  %4756 = vmatpush1.bf16.msra.mxu0 %v838
  %4757 = vmatprep.subr.bf16.mxu0 %v847
  %4758 = vmatpush1.bf16.msra.mxu0 %v846
  %4759 = vmatprep.subr.bf16.mxu0 %v855
  %4760 = vmatpush1.bf16.msra.mxu0 %v854
  %4761 = vmatprep.subr.bf16.mxu0 %v863
  %4762 = vmatpush1.bf16.msra.mxu0 %v862
  %4763 = vmatprep.subr.bf16.mxu0 %v871
  %4764 = vmatpush1.bf16.msra.mxu0 %v870
  %4765 = vmatprep.subr.bf16.mxu0 %v879
  %4766 = vmatpush1.bf16.msra.mxu0 %v878
  %4767 = vmatprep.subr.bf16.mxu0 %v887
  %4768 = vmatpush1.bf16.msra.mxu0 %v886
  %4769 = vmatprep.mubr.bf16.mxu0 %v4253
  %4770 = vmatmul.mubr.bf16.gmra.mrb[0].mxu0 %v4252
  %v4771 = vpop.f32.mrb[0].mxu0
  %v4772 = vadd.f32 0.0, %v4771
  %v4773 = vpop.f32.mrb[0].mxu0
  %v4774 = vadd.f32 0.0, %v4773
  %v4775 = vpop.f32.mrb[0].mxu0
  %v4776 = vadd.f32 0.0, %v4775
  %v4777 = vpop.f32.mrb[0].mxu0
  %v4778 = vadd.f32 0.0, %v4777
  %4779 = vdwg.mxu0
  %4780 = vmatprep.subr.bf16.mxu0 %v769
  %4781 = vmatpush1.bf16.msra.mxu0 %v768
  %4782 = vmatprep.subr.bf16.mxu0 %v777
  %4783 = vmatpush1.bf16.msra.mxu0 %v776
  %4784 = vmatprep.subr.bf16.mxu0 %v785
  %4785 = vmatpush1.bf16.msra.mxu0 %v784
  %4786 = vmatprep.subr.bf16.mxu0 %v793
  %4787 = vmatpush1.bf16.msra.mxu0 %v792
  %4788 = vmatprep.subr.bf16.mxu0 %v801
  %4789 = vmatpush1.bf16.msra.mxu0 %v800
  %4790 = vmatprep.subr.bf16.mxu0 %v809
  %4791 = vmatpush1.bf16.msra.mxu0 %v808
  %4792 = vmatprep.subr.bf16.mxu0 %v817
  %4793 = vmatpush1.bf16.msra.mxu0 %v816
  %4794 = vmatprep.subr.bf16.mxu0 %v825
  %4795 = vmatpush1.bf16.msra.mxu0 %v824
  %4796 = vmatprep.subr.bf16.mxu0 %v833
  %4797 = vmatpush1.bf16.msra.mxu0 %v832
  %4798 = vmatprep.subr.bf16.mxu0 %v841
  %4799 = vmatpush1.bf16.msra.mxu0 %v840
  %4800 = vmatprep.subr.bf16.mxu0 %v849
  %4801 = vmatpush1.bf16.msra.mxu0 %v848
  %4802 = vmatprep.subr.bf16.mxu0 %v857
  %4803 = vmatpush1.bf16.msra.mxu0 %v856
  %4804 = vmatprep.subr.bf16.mxu0 %v865
  %4805 = vmatpush1.bf16.msra.mxu0 %v864
  %4806 = vmatprep.subr.bf16.mxu0 %v873
  %4807 = vmatpush1.bf16.msra.mxu0 %v872
  %4808 = vmatprep.subr.bf16.mxu0 %v881
  %4809 = vmatpush1.bf16.msra.mxu0 %v880
  %4810 = vmatprep.subr.bf16.mxu0 %v889
  %4811 = vmatpush1.bf16.msra.mxu0 %v888
  %4812 = vmatprep.mubr.bf16.mxu0 %v4253
  %4813 = vmatmul.mubr.bf16.gmra.mrb[0].mxu0 %v4252
  %v4814 = vpop.f32.mrb[0].mxu0
  %v4815 = vadd.f32 0.0, %v4814
  %v4816 = vpop.f32.mrb[0].mxu0
  %v4817 = vadd.f32 0.0, %v4816
  %v4818 = vpop.f32.mrb[0].mxu0
  %v4819 = vadd.f32 0.0, %v4818
  %v4820 = vpop.f32.mrb[0].mxu0
  %v4821 = vadd.f32 0.0, %v4820
  %4822 = vdwg.mxu0
  %4823 = vmatprep.subr.bf16.mxu0 %v771
  %4824 = vmatpush1.bf16.msra.mxu0 %v770
  %4825 = vmatprep.subr.bf16.mxu0 %v779
  %4826 = vmatpush1.bf16.msra.mxu0 %v778
  %4827 = vmatprep.subr.bf16.mxu0 %v787
  %4828 = vmatpush1.bf16.msra.mxu0 %v786
  %4829 = vmatprep.subr.bf16.mxu0 %v795
  %4830 = vmatpush1.bf16.msra.mxu0 %v794
  %4831 = vmatprep.subr.bf16.mxu0 %v803
  %4832 = vmatpush1.bf16.msra.mxu0 %v802
  %4833 = vmatprep.subr.bf16.mxu0 %v811
  %4834 = vmatpush1.bf16.msra.mxu0 %v810
  %4835 = vmatprep.subr.bf16.mxu0 %v819
  %4836 = vmatpush1.bf16.msra.mxu0 %v818
  %4837 = vmatprep.subr.bf16.mxu0 %v827
  %4838 = vmatpush1.bf16.msra.mxu0 %v826
  %4839 = vmatprep.subr.bf16.mxu0 %v835
  %4840 = vmatpush1.bf16.msra.mxu0 %v834
  %4841 = vmatprep.subr.bf16.mxu0 %v843
  %4842 = vmatpush1.bf16.msra.mxu0 %v842
  %4843 = vmatprep.subr.bf16.mxu0 %v851
  %4844 = vmatpush1.bf16.msra.mxu0 %v850
  %4845 = vmatprep.subr.bf16.mxu0 %v859
  %4846 = vmatpush1.bf16.msra.mxu0 %v858
  %4847 = vmatprep.subr.bf16.mxu0 %v867
  %4848 = vmatpush1.bf16.msra.mxu0 %v866
  %4849 = vmatprep.subr.bf16.mxu0 %v875
  %4850 = vmatpush1.bf16.msra.mxu0 %v874
  %4851 = vmatprep.subr.bf16.mxu0 %v883
  %4852 = vmatpush1.bf16.msra.mxu0 %v882
  %4853 = vmatprep.subr.bf16.mxu0 %v891
  %4854 = vmatpush1.bf16.msra.mxu0 %v890
  %4855 = vmatprep.mubr.bf16.mxu0 %v4253
  %4856 = vmatmul.mubr.bf16.gmra.mrb[0].mxu0 %v4252
  %v4857 = vpop.f32.mrb[0].mxu0
  %v4858 = vadd.f32 0.0, %v4857
  %v4859 = vpop.f32.mrb[0].mxu0
  %v4860 = vadd.f32 0.0, %v4859
  %v4861 = vpop.f32.mrb[0].mxu0
  %v4862 = vadd.f32 0.0, %v4861
  %v4863 = vpop.f32.mrb[0].mxu0
  %v4864 = vadd.f32 0.0, %v4863
  %4865 = vdwg.mxu0
  %4866 = vmatprep.subr.bf16.mxu0 %v773
  %4867 = vmatpush1.bf16.msra.mxu0 %v772
  %4868 = vmatprep.subr.bf16.mxu0 %v781
  %4869 = vmatpush1.bf16.msra.mxu0 %v780
  %4870 = vmatprep.subr.bf16.mxu0 %v789
  %4871 = vmatpush1.bf16.msra.mxu0 %v788
  %4872 = vmatprep.subr.bf16.mxu0 %v797
  %4873 = vmatpush1.bf16.msra.mxu0 %v796
  %4874 = vmatprep.subr.bf16.mxu0 %v805
  %4875 = vmatpush1.bf16.msra.mxu0 %v804
  %4876 = vmatprep.subr.bf16.mxu0 %v813
  %4877 = vmatpush1.bf16.msra.mxu0 %v812
  %4878 = vmatprep.subr.bf16.mxu0 %v821
  %4879 = vmatpush1.bf16.msra.mxu0 %v820
  %4880 = vmatprep.subr.bf16.mxu0 %v829
  %4881 = vmatpush1.bf16.msra.mxu0 %v828
  %4882 = vmatprep.subr.bf16.mxu0 %v837
  %4883 = vmatpush1.bf16.msra.mxu0 %v836
  %4884 = vmatprep.subr.bf16.mxu0 %v845
  %4885 = vmatpush1.bf16.msra.mxu0 %v844
  %4886 = vmatprep.subr.bf16.mxu0 %v853
  %4887 = vmatpush1.bf16.msra.mxu0 %v852
  %4888 = vmatprep.subr.bf16.mxu0 %v861
  %4889 = vmatpush1.bf16.msra.mxu0 %v860
  %4890 = vmatprep.subr.bf16.mxu0 %v869
  %4891 = vmatpush1.bf16.msra.mxu0 %v868
  %4892 = vmatprep.subr.bf16.mxu0 %v877
  %4893 = vmatpush1.bf16.msra.mxu0 %v876
  %4894 = vmatprep.subr.bf16.mxu0 %v885
  %4895 = vmatpush1.bf16.msra.mxu0 %v884
  %4896 = vmatprep.subr.bf16.mxu0 %v893
  %4897 = vmatpush1.bf16.msra.mxu0 %v892
  %4898 = vmatprep.mubr.bf16.mxu0 %v4253
  %4899 = vmatmul.mubr.bf16.gmra.mrb[0].mxu0 %v4252
  %v4900 = vpop.f32.mrb[0].mxu0
  %v4901 = vadd.f32 0.0, %v4900
  %v4902 = vpop.f32.mrb[0].mxu0
  %v4903 = vadd.f32 0.0, %v4902
  %v4904 = vpop.f32.mrb[0].mxu0
  %v4905 = vadd.f32 0.0, %v4904
  %v4906 = vpop.f32.mrb[0].mxu0
  %v4907 = vadd.f32 0.0, %v4906
  %4908 = vdwg.mxu0
  %v4909 = vadd.f32 %v4721, %v4772
  %v4910 = vadd.f32 %v4722, %v4774
  %v4911 = vadd.f32 %v4723, %v4815
  %v4912 = vadd.f32 %v4724, %v4817
  %v4913 = vadd.f32 %v4725, %v4858
  %v4914 = vadd.f32 %v4726, %v4860
  %v4915 = vadd.f32 %v4727, %v4901
  %v4916 = vadd.f32 %v4728, %v4903
  %v4917 = vadd.f32 %v4729, %v4776
  %v4918 = vadd.f32 %v4730, %v4778
  %v4919 = vadd.f32 %v4731, %v4819
  %v4920 = vadd.f32 %v4732, %v4821
  %v4921 = vadd.f32 %v4733, %v4862
  %v4922 = vadd.f32 %v4734, %v4864
  %v4923 = vadd.f32 %v4735, %v4905
  %v4924 = vadd.f32 %v4736, %v4907
  %v4925 = vxor.u32 %v4909, 2147483648
  %v4926 = vxor.u32 %v4910, 2147483648
  %v4927 = vxor.u32 %v4917, 2147483648
  %v4928 = vxor.u32 %v4918, 2147483648
  %v4929 = vmul.f32 %v4925, 1.442695
  %v4930 = vpow.pop %v4929
  %v4931 = vmul.f32 %v4926, 1.442695
  %v4932 = vpow.pop %v4931
  %v4933 = vmul.f32 %v4927, 1.442695
  %v4934 = vpow.pop %v4933
  %v4935 = vmul.f32 %v4928, 1.442695
  %v4936 = vpow.pop %v4935
  %v4937 = vadd.f32 %v4930, 1.0
  %v4938 = vadd.f32 %v4932, 1.0
  %v4939 = vadd.f32 %v4934, 1.0
  %v4940 = vadd.f32 %v4936, 1.0
  %v4941 = vrcp.pop %v4937
  %v4942 = vmul.f32 1.0, %v4941
  %v4943 = vrcp.pop %v4938
  %v4944 = vmul.f32 1.0, %v4943
  %v4945 = vrcp.pop %v4939
  %v4946 = vmul.f32 1.0, %v4945
  %v4947 = vrcp.pop %v4940
  %v4948 = vmul.f32 1.0, %v4947
  %v4949 = vxor.u32 %v4911, 2147483648
  %v4950 = vxor.u32 %v4912, 2147483648
  %v4951 = vxor.u32 %v4919, 2147483648
  %v4952 = vxor.u32 %v4920, 2147483648
  %v4953 = vmul.f32 %v4949, 1.442695
  %v4954 = vpow.pop %v4953
  %v4955 = vmul.f32 %v4950, 1.442695
  %v4956 = vpow.pop %v4955
  %v4957 = vmul.f32 %v4951, 1.442695
  %v4958 = vpow.pop %v4957
  %v4959 = vmul.f32 %v4952, 1.442695
  %v4960 = vpow.pop %v4959
  %v4961 = vadd.f32 %v4954, 1.0
  %v4962 = vadd.f32 %v4956, 1.0
  %v4963 = vadd.f32 %v4958, 1.0
  %v4964 = vadd.f32 %v4960, 1.0
  %v4965 = vrcp.pop %v4961
  %v4966 = vmul.f32 1.0, %v4965
  %v4967 = vrcp.pop %v4962
  %v4968 = vmul.f32 1.0, %v4967
  %v4969 = vrcp.pop %v4963
  %v4970 = vmul.f32 1.0, %v4969
  %v4971 = vrcp.pop %v4964
  %v4972 = vmul.f32 1.0, %v4971
  %v4973 = vtanh.pop %v4913
  %v4974 = vtanh.pop %v4914
  %v4975 = vtanh.pop %v4921
  %v4976 = vtanh.pop %v4922
  %v4977 = vxor.u32 %v4915, 2147483648
  %v4978 = vxor.u32 %v4916, 2147483648
  %v4979 = vxor.u32 %v4923, 2147483648
  %v4980 = vxor.u32 %v4924, 2147483648
  %v4981 = vmul.f32 %v4977, 1.442695
  %v4982 = vpow.pop %v4981
  %v4983 = vmul.f32 %v4978, 1.442695
  %v4984 = vpow.pop %v4983
  %v4985 = vmul.f32 %v4979, 1.442695
  %v4986 = vpow.pop %v4985
  %v4987 = vmul.f32 %v4980, 1.442695
  %v4988 = vpow.pop %v4987
  %v4989 = vadd.f32 %v4982, 1.0
  %v4990 = vadd.f32 %v4984, 1.0
  %v4991 = vadd.f32 %v4986, 1.0
  %v4992 = vadd.f32 %v4988, 1.0
  %v4993 = vrcp.pop %v4989
  %v4994 = vmul.f32 1.0, %v4993
  %v4995 = vrcp.pop %v4990
  %v4996 = vmul.f32 1.0, %v4995
  %v4997 = vrcp.pop %v4991
  %v4998 = vmul.f32 1.0, %v4997
  %v4999 = vrcp.pop %v4992
  %v5000 = vmul.f32 1.0, %v4999
  %v5001 = vmul.f32 %v4966, %v4240
  %v5002 = vmul.f32 %v4968, %v4241
  %v5003 = vmul.f32 %v4970, %v4242
  %v5004 = vmul.f32 %v4972, %v4243
  %v5005 = vmul.f32 %v4942, %v4973
  %v5006 = vmul.f32 %v4944, %v4974
  %v5007 = vmul.f32 %v4946, %v4975
  %v5008 = vmul.f32 %v4948, %v4976
  %v5009 = vadd.f32 %v5001, %v5005
  %v5010 = vadd.f32 %v5002, %v5006
  %v5011 = vadd.f32 %v5003, %v5007
  %v5012 = vadd.f32 %v5004, %v5008
  %v5013 = vtanh.pop %v5009
  %v5014 = vtanh.pop %v5010
  %v5015 = vtanh.pop %v5011
  %v5016 = vtanh.pop %v5012
  %v5017 = vmul.f32 %v4994, %v5013
  %v5018 = vmul.f32 %v4996, %v5014
  %v5019 = vmul.f32 %v4998, %v5015
  %v5020 = vmul.f32 %v5000, %v5016
  %v5021 = vpack.c.bf16 %v5019, %v5017
  %v5022 = vpack.c.bf16 %v5020, %v5018
  %5023 = vmatprep.subr.bf16.mxu0 %v1821
  %5024 = vmatpush1.bf16.msra.mxu0 %v1820
  %5025 = vmatprep.subr.bf16.mxu0 %v1829
  %5026 = vmatpush1.bf16.msra.mxu0 %v1828
  %5027 = vmatprep.subr.bf16.mxu0 %v1837
  %5028 = vmatpush1.bf16.msra.mxu0 %v1836
  %5029 = vmatprep.subr.bf16.mxu0 %v1845
  %5030 = vmatpush1.bf16.msra.mxu0 %v1844
  %5031 = vmatprep.subr.bf16.mxu0 %v1853
  %5032 = vmatpush1.bf16.msra.mxu0 %v1852
  %5033 = vmatprep.subr.bf16.mxu0 %v1861
  %5034 = vmatpush1.bf16.msra.mxu0 %v1860
  %5035 = vmatprep.subr.bf16.mxu0 %v1869
  %5036 = vmatpush1.bf16.msra.mxu0 %v1868
  %5037 = vmatprep.subr.bf16.mxu0 %v1877
  %5038 = vmatpush1.bf16.msra.mxu0 %v1876
  %5039 = vmatprep.subr.bf16.mxu0 %v1885
  %5040 = vmatpush1.bf16.msra.mxu0 %v1884
  %5041 = vmatprep.subr.bf16.mxu0 %v1893
  %5042 = vmatpush1.bf16.msra.mxu0 %v1892
  %5043 = vmatprep.subr.bf16.mxu0 %v1901
  %5044 = vmatpush1.bf16.msra.mxu0 %v1900
  %5045 = vmatprep.subr.bf16.mxu0 %v1909
  %5046 = vmatpush1.bf16.msra.mxu0 %v1908
  %5047 = vmatprep.subr.bf16.mxu0 %v1917
  %5048 = vmatpush1.bf16.msra.mxu0 %v1916
  %5049 = vmatprep.subr.bf16.mxu0 %v1925
  %5050 = vmatpush1.bf16.msra.mxu0 %v1924
  %5051 = vmatprep.subr.bf16.mxu0 %v1933
  %5052 = vmatpush1.bf16.msra.mxu0 %v1932
  %5053 = vmatprep.subr.bf16.mxu0 %v1941
  %5054 = vmatpush1.bf16.msra.mxu0 %v1940
  %5055 = vmatprep.mubr.bf16.mxu0 %v5022
  %5056 = vmatmul.mubr.bf16.gmra.mrb[0].mxu0 %v5021
  %v5057 = vpop.f32.mrb[0].mxu0
  %v5058 = vadd.f32 0.0, %v5057
  %v5059 = vpop.f32.mrb[0].mxu0
  %v5060 = vadd.f32 0.0, %v5059
  %v5061 = vpop.f32.mrb[0].mxu0
  %v5062 = vadd.f32 0.0, %v5061
  %v5063 = vpop.f32.mrb[0].mxu0
  %v5064 = vadd.f32 0.0, %v5063
  %5065 = vdwg.mxu0
  %5066 = vmatprep.subr.bf16.mxu0 %v1823
  %5067 = vmatpush1.bf16.msra.mxu0 %v1822
  %5068 = vmatprep.subr.bf16.mxu0 %v1831
  %5069 = vmatpush1.bf16.msra.mxu0 %v1830
  %5070 = vmatprep.subr.bf16.mxu0 %v1839
  %5071 = vmatpush1.bf16.msra.mxu0 %v1838
  %5072 = vmatprep.subr.bf16.mxu0 %v1847
  %5073 = vmatpush1.bf16.msra.mxu0 %v1846
  %5074 = vmatprep.subr.bf16.mxu0 %v1855
  %5075 = vmatpush1.bf16.msra.mxu0 %v1854
  %5076 = vmatprep.subr.bf16.mxu0 %v1863
  %5077 = vmatpush1.bf16.msra.mxu0 %v1862
  %5078 = vmatprep.subr.bf16.mxu0 %v1871
  %5079 = vmatpush1.bf16.msra.mxu0 %v1870
  %5080 = vmatprep.subr.bf16.mxu0 %v1879
  %5081 = vmatpush1.bf16.msra.mxu0 %v1878
  %5082 = vmatprep.subr.bf16.mxu0 %v1887
  %5083 = vmatpush1.bf16.msra.mxu0 %v1886
  %5084 = vmatprep.subr.bf16.mxu0 %v1895
  %5085 = vmatpush1.bf16.msra.mxu0 %v1894
  %5086 = vmatprep.subr.bf16.mxu0 %v1903
  %5087 = vmatpush1.bf16.msra.mxu0 %v1902
  %5088 = vmatprep.subr.bf16.mxu0 %v1911
  %5089 = vmatpush1.bf16.msra.mxu0 %v1910
  %5090 = vmatprep.subr.bf16.mxu0 %v1919
  %5091 = vmatpush1.bf16.msra.mxu0 %v1918
  %5092 = vmatprep.subr.bf16.mxu0 %v1927
  %5093 = vmatpush1.bf16.msra.mxu0 %v1926
  %5094 = vmatprep.subr.bf16.mxu0 %v1935
  %5095 = vmatpush1.bf16.msra.mxu0 %v1934
  %5096 = vmatprep.subr.bf16.mxu0 %v1943
  %5097 = vmatpush1.bf16.msra.mxu0 %v1942
  %5098 = vmatprep.mubr.bf16.mxu0 %v5022
  %5099 = vmatmul.mubr.bf16.gmra.mrb[0].mxu0 %v5021
  %v5100 = vpop.f32.mrb[0].mxu0
  %v5101 = vadd.f32 0.0, %v5100
  %v5102 = vpop.f32.mrb[0].mxu0
  %v5103 = vadd.f32 0.0, %v5102
  %v5104 = vpop.f32.mrb[0].mxu0
  %v5105 = vadd.f32 0.0, %v5104
  %v5106 = vpop.f32.mrb[0].mxu0
  %v5107 = vadd.f32 0.0, %v5106
  %5108 = vdwg.mxu0
  %5109 = vmatprep.subr.bf16.mxu0 %v1825
  %5110 = vmatpush1.bf16.msra.mxu0 %v1824
  %5111 = vmatprep.subr.bf16.mxu0 %v1833
  %5112 = vmatpush1.bf16.msra.mxu0 %v1832
  %5113 = vmatprep.subr.bf16.mxu0 %v1841
  %5114 = vmatpush1.bf16.msra.mxu0 %v1840
  %5115 = vmatprep.subr.bf16.mxu0 %v1849
  %5116 = vmatpush1.bf16.msra.mxu0 %v1848
  %5117 = vmatprep.subr.bf16.mxu0 %v1857
  %5118 = vmatpush1.bf16.msra.mxu0 %v1856
  %5119 = vmatprep.subr.bf16.mxu0 %v1865
  %5120 = vmatpush1.bf16.msra.mxu0 %v1864
  %5121 = vmatprep.subr.bf16.mxu0 %v1873
  %5122 = vmatpush1.bf16.msra.mxu0 %v1872
  %5123 = vmatprep.subr.bf16.mxu0 %v1881
  %5124 = vmatpush1.bf16.msra.mxu0 %v1880
  %5125 = vmatprep.subr.bf16.mxu0 %v1889
  %5126 = vmatpush1.bf16.msra.mxu0 %v1888
  %5127 = vmatprep.subr.bf16.mxu0 %v1897
  %5128 = vmatpush1.bf16.msra.mxu0 %v1896
  %5129 = vmatprep.subr.bf16.mxu0 %v1905
  %5130 = vmatpush1.bf16.msra.mxu0 %v1904
  %5131 = vmatprep.subr.bf16.mxu0 %v1913
  %5132 = vmatpush1.bf16.msra.mxu0 %v1912
  %5133 = vmatprep.subr.bf16.mxu0 %v1921
  %5134 = vmatpush1.bf16.msra.mxu0 %v1920
  %5135 = vmatprep.subr.bf16.mxu0 %v1929
  %5136 = vmatpush1.bf16.msra.mxu0 %v1928
  %5137 = vmatprep.subr.bf16.mxu0 %v1937
  %5138 = vmatpush1.bf16.msra.mxu0 %v1936
  %5139 = vmatprep.subr.bf16.mxu0 %v1945
  %5140 = vmatpush1.bf16.msra.mxu0 %v1944
  %5141 = vmatprep.mubr.bf16.mxu0 %v5022
  %5142 = vmatmul.mubr.bf16.gmra.mrb[0].mxu0 %v5021
  %v5143 = vpop.f32.mrb[0].mxu0
  %v5144 = vadd.f32 0.0, %v5143
  %v5145 = vpop.f32.mrb[0].mxu0
  %v5146 = vadd.f32 0.0, %v5145
  %v5147 = vpop.f32.mrb[0].mxu0
  %v5148 = vadd.f32 0.0, %v5147
  %v5149 = vpop.f32.mrb[0].mxu0
  %v5150 = vadd.f32 0.0, %v5149
  %5151 = vdwg.mxu0
  %5152 = vmatprep.subr.bf16.mxu0 %v1827
  %5153 = vmatpush1.bf16.msra.mxu0 %v1826
  %5154 = vmatprep.subr.bf16.mxu0 %v1835
  %5155 = vmatpush1.bf16.msra.mxu0 %v1834
  %5156 = vmatprep.subr.bf16.mxu0 %v1843
  %5157 = vmatpush1.bf16.msra.mxu0 %v1842
  %5158 = vmatprep.subr.bf16.mxu0 %v1851
  %5159 = vmatpush1.bf16.msra.mxu0 %v1850
  %5160 = vmatprep.subr.bf16.mxu0 %v1859
  %5161 = vmatpush1.bf16.msra.mxu0 %v1858
  %5162 = vmatprep.subr.bf16.mxu0 %v1867
  %5163 = vmatpush1.bf16.msra.mxu0 %v1866
  %5164 = vmatprep.subr.bf16.mxu0 %v1875
  %5165 = vmatpush1.bf16.msra.mxu0 %v1874
  %5166 = vmatprep.subr.bf16.mxu0 %v1883
  %5167 = vmatpush1.bf16.msra.mxu0 %v1882
  %5168 = vmatprep.subr.bf16.mxu0 %v1891
  %5169 = vmatpush1.bf16.msra.mxu0 %v1890
  %5170 = vmatprep.subr.bf16.mxu0 %v1899
  %5171 = vmatpush1.bf16.msra.mxu0 %v1898
  %5172 = vmatprep.subr.bf16.mxu0 %v1907
  %5173 = vmatpush1.bf16.msra.mxu0 %v1906
  %5174 = vmatprep.subr.bf16.mxu0 %v1915
  %5175 = vmatpush1.bf16.msra.mxu0 %v1914
  %5176 = vmatprep.subr.bf16.mxu0 %v1923
  %5177 = vmatpush1.bf16.msra.mxu0 %v1922
  %5178 = vmatprep.subr.bf16.mxu0 %v1931
  %5179 = vmatpush1.bf16.msra.mxu0 %v1930
  %5180 = vmatprep.subr.bf16.mxu0 %v1939
  %5181 = vmatpush1.bf16.msra.mxu0 %v1938
  %5182 = vmatprep.subr.bf16.mxu0 %v1947
  %5183 = vmatpush1.bf16.msra.mxu0 %v1946
  %5184 = vmatprep.mubr.bf16.mxu0 %v5022
  %5185 = vmatmul.mubr.bf16.gmra.mrb[0].mxu0 %v5021
  %v5186 = vpop.f32.mrb[0].mxu0
  %v5187 = vadd.f32 0.0, %v5186
  %v5188 = vpop.f32.mrb[0].mxu0
  %v5189 = vadd.f32 0.0, %v5188
  %v5190 = vpop.f32.mrb[0].mxu0
  %v5191 = vadd.f32 0.0, %v5190
  %v5192 = vpop.f32.mrb[0].mxu0
  %v5193 = vadd.f32 0.0, %v5192
  %5194 = vdwg.mxu0
  %5195 = vmatprep.subr.bf16.mxu0 %v2633
  %5196 = vmatpush1.bf16.msra.mxu0 %v2632
  %5197 = vmatprep.subr.bf16.mxu0 %v2641
  %5198 = vmatpush1.bf16.msra.mxu0 %v2640
  %5199 = vmatprep.subr.bf16.mxu0 %v2649
  %5200 = vmatpush1.bf16.msra.mxu0 %v2648
  %5201 = vmatprep.subr.bf16.mxu0 %v2657
  %5202 = vmatpush1.bf16.msra.mxu0 %v2656
  %5203 = vmatprep.subr.bf16.mxu0 %v2665
  %5204 = vmatpush1.bf16.msra.mxu0 %v2664
  %5205 = vmatprep.subr.bf16.mxu0 %v2673
  %5206 = vmatpush1.bf16.msra.mxu0 %v2672
  %5207 = vmatprep.subr.bf16.mxu0 %v2681
  %5208 = vmatpush1.bf16.msra.mxu0 %v2680
  %5209 = vmatprep.subr.bf16.mxu0 %v2689
  %5210 = vmatpush1.bf16.msra.mxu0 %v2688
  %5211 = vmatprep.subr.bf16.mxu0 %v2697
  %5212 = vmatpush1.bf16.msra.mxu0 %v2696
  %5213 = vmatprep.subr.bf16.mxu0 %v2705
  %5214 = vmatpush1.bf16.msra.mxu0 %v2704
  %5215 = vmatprep.subr.bf16.mxu0 %v2713
  %5216 = vmatpush1.bf16.msra.mxu0 %v2712
  %5217 = vmatprep.subr.bf16.mxu0 %v2721
  %5218 = vmatpush1.bf16.msra.mxu0 %v2720
  %5219 = vmatprep.subr.bf16.mxu0 %v2729
  %5220 = vmatpush1.bf16.msra.mxu0 %v2728
  %5221 = vmatprep.subr.bf16.mxu0 %v2737
  %5222 = vmatpush1.bf16.msra.mxu0 %v2736
  %5223 = vmatprep.subr.bf16.mxu0 %v2745
  %5224 = vmatpush1.bf16.msra.mxu0 %v2744
  %5225 = vmatprep.subr.bf16.mxu0 %v2753
  %5226 = vmatpush1.bf16.msra.mxu0 %v2752
  %5227 = vmatprep.mubr.bf16.mxu0 %v4711
  %5228 = vmatmul.mubr.bf16.gmra.mrb[0].mxu0 %v4710
  %v5229 = vpop.f32.mrb[0].mxu0
  %v5230 = vadd.f32 %v5058, %v5229
  %v5231 = vpop.f32.mrb[0].mxu0
  %v5232 = vadd.f32 %v5060, %v5231
  %v5233 = vpop.f32.mrb[0].mxu0
  %v5234 = vadd.f32 %v5062, %v5233
  %v5235 = vpop.f32.mrb[0].mxu0
  %v5236 = vadd.f32 %v5064, %v5235
  %5237 = vdwg.mxu0
  %5238 = vmatprep.subr.bf16.mxu0 %v2635
  %5239 = vmatpush1.bf16.msra.mxu0 %v2634
  %5240 = vmatprep.subr.bf16.mxu0 %v2643
  %5241 = vmatpush1.bf16.msra.mxu0 %v2642
  %5242 = vmatprep.subr.bf16.mxu0 %v2651
  %5243 = vmatpush1.bf16.msra.mxu0 %v2650
  %5244 = vmatprep.subr.bf16.mxu0 %v2659
  %5245 = vmatpush1.bf16.msra.mxu0 %v2658
  %5246 = vmatprep.subr.bf16.mxu0 %v2667
  %5247 = vmatpush1.bf16.msra.mxu0 %v2666
  %5248 = vmatprep.subr.bf16.mxu0 %v2675
  %5249 = vmatpush1.bf16.msra.mxu0 %v2674
  %5250 = vmatprep.subr.bf16.mxu0 %v2683
  %5251 = vmatpush1.bf16.msra.mxu0 %v2682
  %5252 = vmatprep.subr.bf16.mxu0 %v2691
  %5253 = vmatpush1.bf16.msra.mxu0 %v2690
  %5254 = vmatprep.subr.bf16.mxu0 %v2699
  %5255 = vmatpush1.bf16.msra.mxu0 %v2698
  %5256 = vmatprep.subr.bf16.mxu0 %v2707
  %5257 = vmatpush1.bf16.msra.mxu0 %v2706
  %5258 = vmatprep.subr.bf16.mxu0 %v2715
  %5259 = vmatpush1.bf16.msra.mxu0 %v2714
  %5260 = vmatprep.subr.bf16.mxu0 %v2723
  %5261 = vmatpush1.bf16.msra.mxu0 %v2722
  %5262 = vmatprep.subr.bf16.mxu0 %v2731
  %5263 = vmatpush1.bf16.msra.mxu0 %v2730
  %5264 = vmatprep.subr.bf16.mxu0 %v2739
  %5265 = vmatpush1.bf16.msra.mxu0 %v2738
  %5266 = vmatprep.subr.bf16.mxu0 %v2747
  %5267 = vmatpush1.bf16.msra.mxu0 %v2746
  %5268 = vmatprep.subr.bf16.mxu0 %v2755
  %5269 = vmatpush1.bf16.msra.mxu0 %v2754
  %5270 = vmatprep.mubr.bf16.mxu0 %v4711
  %5271 = vmatmul.mubr.bf16.gmra.mrb[0].mxu0 %v4710
  %v5272 = vpop.f32.mrb[0].mxu0
  %v5273 = vadd.f32 %v5101, %v5272
  %v5274 = vpop.f32.mrb[0].mxu0
  %v5275 = vadd.f32 %v5103, %v5274
  %v5276 = vpop.f32.mrb[0].mxu0
  %v5277 = vadd.f32 %v5105, %v5276
  %v5278 = vpop.f32.mrb[0].mxu0
  %v5279 = vadd.f32 %v5107, %v5278
  %5280 = vdwg.mxu0
  %5281 = vmatprep.subr.bf16.mxu0 %v2637
  %5282 = vmatpush1.bf16.msra.mxu0 %v2636
  %5283 = vmatprep.subr.bf16.mxu0 %v2645
  %5284 = vmatpush1.bf16.msra.mxu0 %v2644
  %5285 = vmatprep.subr.bf16.mxu0 %v2653
  %5286 = vmatpush1.bf16.msra.mxu0 %v2652
  %5287 = vmatprep.subr.bf16.mxu0 %v2661
  %5288 = vmatpush1.bf16.msra.mxu0 %v2660
  %5289 = vmatprep.subr.bf16.mxu0 %v2669
  %5290 = vmatpush1.bf16.msra.mxu0 %v2668
  %5291 = vmatprep.subr.bf16.mxu0 %v2677
  %5292 = vmatpush1.bf16.msra.mxu0 %v2676
  %5293 = vmatprep.subr.bf16.mxu0 %v2685
  %5294 = vmatpush1.bf16.msra.mxu0 %v2684
  %5295 = vmatprep.subr.bf16.mxu0 %v2693
  %5296 = vmatpush1.bf16.msra.mxu0 %v2692
  %5297 = vmatprep.subr.bf16.mxu0 %v2701
  %5298 = vmatpush1.bf16.msra.mxu0 %v2700
  %5299 = vmatprep.subr.bf16.mxu0 %v2709
  %5300 = vmatpush1.bf16.msra.mxu0 %v2708
  %5301 = vmatprep.subr.bf16.mxu0 %v2717
  %5302 = vmatpush1.bf16.msra.mxu0 %v2716
  %5303 = vmatprep.subr.bf16.mxu0 %v2725
  %5304 = vmatpush1.bf16.msra.mxu0 %v2724
  %5305 = vmatprep.subr.bf16.mxu0 %v2733
  %5306 = vmatpush1.bf16.msra.mxu0 %v2732
  %5307 = vmatprep.subr.bf16.mxu0 %v2741
  %5308 = vmatpush1.bf16.msra.mxu0 %v2740
  %5309 = vmatprep.subr.bf16.mxu0 %v2749
  %5310 = vmatpush1.bf16.msra.mxu0 %v2748
  %5311 = vmatprep.subr.bf16.mxu0 %v2757
  %5312 = vmatpush1.bf16.msra.mxu0 %v2756
  %5313 = vmatprep.mubr.bf16.mxu0 %v4711
  %5314 = vmatmul.mubr.bf16.gmra.mrb[0].mxu0 %v4710
  %v5315 = vpop.f32.mrb[0].mxu0
  %v5316 = vadd.f32 %v5144, %v5315
  %v5317 = vpop.f32.mrb[0].mxu0
  %v5318 = vadd.f32 %v5146, %v5317
  %v5319 = vpop.f32.mrb[0].mxu0
  %v5320 = vadd.f32 %v5148, %v5319
  %v5321 = vpop.f32.mrb[0].mxu0
  %v5322 = vadd.f32 %v5150, %v5321
  %5323 = vdwg.mxu0
  %5324 = vmatprep.subr.bf16.mxu0 %v2639
  %5325 = vmatpush1.bf16.msra.mxu0 %v2638
  %5326 = vmatprep.subr.bf16.mxu0 %v2647
  %5327 = vmatpush1.bf16.msra.mxu0 %v2646
  %5328 = vmatprep.subr.bf16.mxu0 %v2655
  %5329 = vmatpush1.bf16.msra.mxu0 %v2654
  %5330 = vmatprep.subr.bf16.mxu0 %v2663
  %5331 = vmatpush1.bf16.msra.mxu0 %v2662
  %5332 = vmatprep.subr.bf16.mxu0 %v2671
  %5333 = vmatpush1.bf16.msra.mxu0 %v2670
  %5334 = vmatprep.subr.bf16.mxu0 %v2679
  %5335 = vmatpush1.bf16.msra.mxu0 %v2678
  %5336 = vmatprep.subr.bf16.mxu0 %v2687
  %5337 = vmatpush1.bf16.msra.mxu0 %v2686
  %5338 = vmatprep.subr.bf16.mxu0 %v2695
  %5339 = vmatpush1.bf16.msra.mxu0 %v2694
  %5340 = vmatprep.subr.bf16.mxu0 %v2703
  %5341 = vmatpush1.bf16.msra.mxu0 %v2702
  %5342 = vmatprep.subr.bf16.mxu0 %v2711
  %5343 = vmatpush1.bf16.msra.mxu0 %v2710
  %5344 = vmatprep.subr.bf16.mxu0 %v2719
  %5345 = vmatpush1.bf16.msra.mxu0 %v2718
  %5346 = vmatprep.subr.bf16.mxu0 %v2727
  %5347 = vmatpush1.bf16.msra.mxu0 %v2726
  %5348 = vmatprep.subr.bf16.mxu0 %v2735
  %5349 = vmatpush1.bf16.msra.mxu0 %v2734
  %5350 = vmatprep.subr.bf16.mxu0 %v2743
  %5351 = vmatpush1.bf16.msra.mxu0 %v2742
  %5352 = vmatprep.subr.bf16.mxu0 %v2751
  %5353 = vmatpush1.bf16.msra.mxu0 %v2750
  %5354 = vmatprep.subr.bf16.mxu0 %v2759
  %5355 = vmatpush1.bf16.msra.mxu0 %v2758
  %5356 = vmatprep.mubr.bf16.mxu0 %v4711
  %5357 = vmatmul.mubr.bf16.gmra.mrb[0].mxu0 %v4710
  %v5358 = vpop.f32.mrb[0].mxu0
  %v5359 = vadd.f32 %v5187, %v5358
  %v5360 = vpop.f32.mrb[0].mxu0
  %v5361 = vadd.f32 %v5189, %v5360
  %v5362 = vpop.f32.mrb[0].mxu0
  %v5363 = vadd.f32 %v5191, %v5362
  %v5364 = vpop.f32.mrb[0].mxu0
  %v5365 = vadd.f32 %v5193, %v5364
  %5366 = vdwg.mxu0
  %v5367 = vadd.f32 %v5230, %v45
  %v5368 = vadd.f32 %v5232, %v49
  %v5369 = vadd.f32 %v5273, %v53
  %v5370 = vadd.f32 %v5275, %v57
  %v5371 = vadd.f32 %v5316, %v61
  %v5372 = vadd.f32 %v5318, %v65
  %v5373 = vadd.f32 %v5359, %v69
  %v5374 = vadd.f32 %v5361, %v73
  %v5375 = vadd.f32 %v5234, %v45
  %v5376 = vadd.f32 %v5236, %v49
  %v5377 = vadd.f32 %v5277, %v53
  %v5378 = vadd.f32 %v5279, %v57
  %v5379 = vadd.f32 %v5320, %v61
  %v5380 = vadd.f32 %v5322, %v65
  %v5381 = vadd.f32 %v5363, %v69
  %v5382 = vadd.f32 %v5365, %v73
  %v5383 = vxor.u32 %v5367, 2147483648
  %v5384 = vxor.u32 %v5368, 2147483648
  %v5385 = vxor.u32 %v5375, 2147483648
  %v5386 = vxor.u32 %v5376, 2147483648
  %v5387 = vmul.f32 %v5383, 1.442695
  %v5388 = vpow.pop %v5387
  %v5389 = vmul.f32 %v5384, 1.442695
  %v5390 = vpow.pop %v5389
  %v5391 = vmul.f32 %v5385, 1.442695
  %v5392 = vpow.pop %v5391
  %v5393 = vmul.f32 %v5386, 1.442695
  %v5394 = vpow.pop %v5393
  %v5395 = vadd.f32 %v5388, 1.0
  %v5396 = vadd.f32 %v5390, 1.0
  %v5397 = vadd.f32 %v5392, 1.0
  %v5398 = vadd.f32 %v5394, 1.0
  %v5399 = vrcp.pop %v5395
  %v5400 = vmul.f32 1.0, %v5399
  %v5401 = vrcp.pop %v5396
  %v5402 = vmul.f32 1.0, %v5401
  %v5403 = vrcp.pop %v5397
  %v5404 = vmul.f32 1.0, %v5403
  %v5405 = vrcp.pop %v5398
  %v5406 = vmul.f32 1.0, %v5405
  %v5407 = vxor.u32 %v5369, 2147483648
  %v5408 = vxor.u32 %v5370, 2147483648
  %v5409 = vxor.u32 %v5377, 2147483648
  %v5410 = vxor.u32 %v5378, 2147483648
  %v5411 = vmul.f32 %v5407, 1.442695
  %v5412 = vpow.pop %v5411
  %v5413 = vmul.f32 %v5408, 1.442695
  %v5414 = vpow.pop %v5413
  %v5415 = vmul.f32 %v5409, 1.442695
  %v5416 = vpow.pop %v5415
  %v5417 = vmul.f32 %v5410, 1.442695
  %v5418 = vpow.pop %v5417
  %v5419 = vadd.f32 %v5412, 1.0
  %v5420 = vadd.f32 %v5414, 1.0
  %v5421 = vadd.f32 %v5416, 1.0
  %v5422 = vadd.f32 %v5418, 1.0
  %v5423 = vrcp.pop %v5419
  %v5424 = vmul.f32 1.0, %v5423
  %v5425 = vrcp.pop %v5420
  %v5426 = vmul.f32 1.0, %v5425
  %v5427 = vrcp.pop %v5421
  %v5428 = vmul.f32 1.0, %v5427
  %v5429 = vrcp.pop %v5422
  %v5430 = vmul.f32 1.0, %v5429
  %v5431 = vtanh.pop %v5371
  %v5432 = vtanh.pop %v5372
  %v5433 = vtanh.pop %v5379
  %v5434 = vtanh.pop %v5380
  %v5435 = vxor.u32 %v5373, 2147483648
  %v5436 = vxor.u32 %v5374, 2147483648
  %v5437 = vxor.u32 %v5381, 2147483648
  %v5438 = vxor.u32 %v5382, 2147483648
  %v5439 = vmul.f32 %v5435, 1.442695
  %v5440 = vpow.pop %v5439
  %v5441 = vmul.f32 %v5436, 1.442695
  %v5442 = vpow.pop %v5441
  %v5443 = vmul.f32 %v5437, 1.442695
  %v5444 = vpow.pop %v5443
  %v5445 = vmul.f32 %v5438, 1.442695
  %v5446 = vpow.pop %v5445
  %v5447 = vadd.f32 %v5440, 1.0
  %v5448 = vadd.f32 %v5442, 1.0
  %v5449 = vadd.f32 %v5444, 1.0
  %v5450 = vadd.f32 %v5446, 1.0
  %v5451 = vrcp.pop %v5447
  %v5452 = vmul.f32 1.0, %v5451
  %v5453 = vrcp.pop %v5448
  %v5454 = vmul.f32 1.0, %v5453
  %v5455 = vrcp.pop %v5449
  %v5456 = vmul.f32 1.0, %v5455
  %v5457 = vrcp.pop %v5450
  %v5458 = vmul.f32 1.0, %v5457
  %v5459 = vmul.f32 %v5424, %v4698
  %v5460 = vmul.f32 %v5426, %v4699
  %v5461 = vmul.f32 %v5428, %v4700
  %v5462 = vmul.f32 %v5430, %v4701
  %v5463 = vmul.f32 %v5400, %v5431
  %v5464 = vmul.f32 %v5402, %v5432
  %v5465 = vmul.f32 %v5404, %v5433
  %v5466 = vmul.f32 %v5406, %v5434
  %v5467 = vadd.f32 %v5459, %v5463
  %v5468 = vadd.f32 %v5460, %v5464
  %v5469 = vadd.f32 %v5461, %v5465
  %v5470 = vadd.f32 %v5462, %v5466
  %v5471 = vtanh.pop %v5467
  %v5472 = vtanh.pop %v5468
  %v5473 = vtanh.pop %v5469
  %v5474 = vtanh.pop %v5470
  %v5475 = vmul.f32 %v5452, %v5471
  %v5476 = vmul.f32 %v5454, %v5472
  %v5477 = vmul.f32 %v5456, %v5473
  %v5478 = vmul.f32 %v5458, %v5474
  %v5479 = vpack.c.bf16 %v5477, %v5475
  %v5480 = vpack.c.bf16 %v5478, %v5476
  %s5481 = scalar_lea.vmem %s0, 256
  %v5482 = vld [vmem:[%s5481] sm:$0xff]
  %v5483 = vld [vmem:[%s5481 + $0x8] sm:$0xff]
  %v5484 = vld [vmem:[%s5481 + $0x10] sm:$0xff]
  %v5485 = vld [vmem:[%s5481 + $0x18] sm:$0xff]
  %v5486 = vld [vmem:[%s5481 + $0x20] sm:$0xff]
  %v5487 = vld [vmem:[%s5481 + $0x28] sm:$0xff]
  %v5488 = vld [vmem:[%s5481 + $0x30] sm:$0xff]
  %v5489 = vld [vmem:[%s5481 + $0x38] sm:$0xff]
  %v5490 = vunpack.c.l.bf16 %v5482
  %v5491 = vunpack.c.h.bf16 %v5482
  %v5492 = vunpack.c.l.bf16 %v5483
  %v5493 = vunpack.c.h.bf16 %v5483
  %v5494 = vunpack.c.l.bf16 %v5484
  %v5495 = vunpack.c.h.bf16 %v5484
  %v5496 = vunpack.c.l.bf16 %v5485
  %v5497 = vunpack.c.h.bf16 %v5485
  %v5498 = vunpack.c.l.bf16 %v5486
  %v5499 = vunpack.c.h.bf16 %v5486
  %v5500 = vunpack.c.l.bf16 %v5487
  %v5501 = vunpack.c.h.bf16 %v5487
  %v5502 = vunpack.c.l.bf16 %v5488
  %v5503 = vunpack.c.h.bf16 %v5488
  %v5504 = vunpack.c.l.bf16 %v5489
  %v5505 = vunpack.c.h.bf16 %v5489
  %5506 = vmatprep.subr.bf16.mxu0 %v767
  %5507 = vmatpush1.bf16.msra.mxu0 %v766
  %5508 = vmatprep.subr.bf16.mxu0 %v775
  %5509 = vmatpush1.bf16.msra.mxu0 %v774
  %5510 = vmatprep.subr.bf16.mxu0 %v783
  %5511 = vmatpush1.bf16.msra.mxu0 %v782
  %5512 = vmatprep.subr.bf16.mxu0 %v791
  %5513 = vmatpush1.bf16.msra.mxu0 %v790
  %5514 = vmatprep.subr.bf16.mxu0 %v799
  %5515 = vmatpush1.bf16.msra.mxu0 %v798
  %5516 = vmatprep.subr.bf16.mxu0 %v807
  %5517 = vmatpush1.bf16.msra.mxu0 %v806
  %5518 = vmatprep.subr.bf16.mxu0 %v815
  %5519 = vmatpush1.bf16.msra.mxu0 %v814
  %5520 = vmatprep.subr.bf16.mxu0 %v823
  %5521 = vmatpush1.bf16.msra.mxu0 %v822
  %5522 = vmatprep.subr.bf16.mxu0 %v831
  %5523 = vmatpush1.bf16.msra.mxu0 %v830
  %5524 = vmatprep.subr.bf16.mxu0 %v839
  %5525 = vmatpush1.bf16.msra.mxu0 %v838
  %5526 = vmatprep.subr.bf16.mxu0 %v847
  %5527 = vmatpush1.bf16.msra.mxu0 %v846
  %5528 = vmatprep.subr.bf16.mxu0 %v855
  %5529 = vmatpush1.bf16.msra.mxu0 %v854
  %5530 = vmatprep.subr.bf16.mxu0 %v863
  %5531 = vmatpush1.bf16.msra.mxu0 %v862
  %5532 = vmatprep.subr.bf16.mxu0 %v871
  %5533 = vmatpush1.bf16.msra.mxu0 %v870
  %5534 = vmatprep.subr.bf16.mxu0 %v879
  %5535 = vmatpush1.bf16.msra.mxu0 %v878
  %5536 = vmatprep.subr.bf16.mxu0 %v887
  %5537 = vmatpush1.bf16.msra.mxu0 %v886
  %5538 = vmatprep.mubr.bf16.mxu0 %v5022
  %5539 = vmatmul.mubr.bf16.gmra.mrb[0].mxu0 %v5021
  %v5540 = vpop.f32.mrb[0].mxu0
  %v5541 = vadd.f32 0.0, %v5540
  %v5542 = vpop.f32.mrb[0].mxu0
  %v5543 = vadd.f32 0.0, %v5542
  %v5544 = vpop.f32.mrb[0].mxu0
  %v5545 = vadd.f32 0.0, %v5544
  %v5546 = vpop.f32.mrb[0].mxu0
  %v5547 = vadd.f32 0.0, %v5546
  %5548 = vdwg.mxu0
  %5549 = vmatprep.subr.bf16.mxu0 %v769
  %5550 = vmatpush1.bf16.msra.mxu0 %v768
  %5551 = vmatprep.subr.bf16.mxu0 %v777
  %5552 = vmatpush1.bf16.msra.mxu0 %v776
  %5553 = vmatprep.subr.bf16.mxu0 %v785
  %5554 = vmatpush1.bf16.msra.mxu0 %v784
  %5555 = vmatprep.subr.bf16.mxu0 %v793
  %5556 = vmatpush1.bf16.msra.mxu0 %v792
  %5557 = vmatprep.subr.bf16.mxu0 %v801
  %5558 = vmatpush1.bf16.msra.mxu0 %v800
  %5559 = vmatprep.subr.bf16.mxu0 %v809
  %5560 = vmatpush1.bf16.msra.mxu0 %v808
  %5561 = vmatprep.subr.bf16.mxu0 %v817
  %5562 = vmatpush1.bf16.msra.mxu0 %v816
  %5563 = vmatprep.subr.bf16.mxu0 %v825
  %5564 = vmatpush1.bf16.msra.mxu0 %v824
  %5565 = vmatprep.subr.bf16.mxu0 %v833
  %5566 = vmatpush1.bf16.msra.mxu0 %v832
  %5567 = vmatprep.subr.bf16.mxu0 %v841
  %5568 = vmatpush1.bf16.msra.mxu0 %v840
  %5569 = vmatprep.subr.bf16.mxu0 %v849
  %5570 = vmatpush1.bf16.msra.mxu0 %v848
  %5571 = vmatprep.subr.bf16.mxu0 %v857
  %5572 = vmatpush1.bf16.msra.mxu0 %v856
  %5573 = vmatprep.subr.bf16.mxu0 %v865
  %5574 = vmatpush1.bf16.msra.mxu0 %v864
  %5575 = vmatprep.subr.bf16.mxu0 %v873
  %5576 = vmatpush1.bf16.msra.mxu0 %v872
  %5577 = vmatprep.subr.bf16.mxu0 %v881
  %5578 = vmatpush1.bf16.msra.mxu0 %v880
  %5579 = vmatprep.subr.bf16.mxu0 %v889
  %5580 = vmatpush1.bf16.msra.mxu0 %v888
  %5581 = vmatprep.mubr.bf16.mxu0 %v5022
  %5582 = vmatmul.mubr.bf16.gmra.mrb[0].mxu0 %v5021
  %v5583 = vpop.f32.mrb[0].mxu0
  %v5584 = vadd.f32 0.0, %v5583
  %v5585 = vpop.f32.mrb[0].mxu0
  %v5586 = vadd.f32 0.0, %v5585
  %v5587 = vpop.f32.mrb[0].mxu0
  %v5588 = vadd.f32 0.0, %v5587
  %v5589 = vpop.f32.mrb[0].mxu0
  %v5590 = vadd.f32 0.0, %v5589
  %5591 = vdwg.mxu0
  %5592 = vmatprep.subr.bf16.mxu0 %v771
  %5593 = vmatpush1.bf16.msra.mxu0 %v770
  %5594 = vmatprep.subr.bf16.mxu0 %v779
  %5595 = vmatpush1.bf16.msra.mxu0 %v778
  %5596 = vmatprep.subr.bf16.mxu0 %v787
  %5597 = vmatpush1.bf16.msra.mxu0 %v786
  %5598 = vmatprep.subr.bf16.mxu0 %v795
  %5599 = vmatpush1.bf16.msra.mxu0 %v794
  %5600 = vmatprep.subr.bf16.mxu0 %v803
  %5601 = vmatpush1.bf16.msra.mxu0 %v802
  %5602 = vmatprep.subr.bf16.mxu0 %v811
  %5603 = vmatpush1.bf16.msra.mxu0 %v810
  %5604 = vmatprep.subr.bf16.mxu0 %v819
  %5605 = vmatpush1.bf16.msra.mxu0 %v818
  %5606 = vmatprep.subr.bf16.mxu0 %v827
  %5607 = vmatpush1.bf16.msra.mxu0 %v826
  %5608 = vmatprep.subr.bf16.mxu0 %v835
  %5609 = vmatpush1.bf16.msra.mxu0 %v834
  %5610 = vmatprep.subr.bf16.mxu0 %v843
  %5611 = vmatpush1.bf16.msra.mxu0 %v842
  %5612 = vmatprep.subr.bf16.mxu0 %v851
  %5613 = vmatpush1.bf16.msra.mxu0 %v850
  %5614 = vmatprep.subr.bf16.mxu0 %v859
  %5615 = vmatpush1.bf16.msra.mxu0 %v858
  %5616 = vmatprep.subr.bf16.mxu0 %v867
  %5617 = vmatpush1.bf16.msra.mxu0 %v866
  %5618 = vmatprep.subr.bf16.mxu0 %v875
  %5619 = vmatpush1.bf16.msra.mxu0 %v874
  %5620 = vmatprep.subr.bf16.mxu0 %v883
  %5621 = vmatpush1.bf16.msra.mxu0 %v882
  %5622 = vmatprep.subr.bf16.mxu0 %v891
  %5623 = vmatpush1.bf16.msra.mxu0 %v890
  %5624 = vmatprep.mubr.bf16.mxu0 %v5022
  %5625 = vmatmul.mubr.bf16.gmra.mrb[0].mxu0 %v5021
  %v5626 = vpop.f32.mrb[0].mxu0
  %v5627 = vadd.f32 0.0, %v5626
  %v5628 = vpop.f32.mrb[0].mxu0
  %v5629 = vadd.f32 0.0, %v5628
  %v5630 = vpop.f32.mrb[0].mxu0
  %v5631 = vadd.f32 0.0, %v5630
  %v5632 = vpop.f32.mrb[0].mxu0
  %v5633 = vadd.f32 0.0, %v5632
  %5634 = vdwg.mxu0
  %5635 = vmatprep.subr.bf16.mxu0 %v773
  %5636 = vmatpush1.bf16.msra.mxu0 %v772
  %5637 = vmatprep.subr.bf16.mxu0 %v781
  %5638 = vmatpush1.bf16.msra.mxu0 %v780
  %5639 = vmatprep.subr.bf16.mxu0 %v789
  %5640 = vmatpush1.bf16.msra.mxu0 %v788
  %5641 = vmatprep.subr.bf16.mxu0 %v797
  %5642 = vmatpush1.bf16.msra.mxu0 %v796
  %5643 = vmatprep.subr.bf16.mxu0 %v805
  %5644 = vmatpush1.bf16.msra.mxu0 %v804
  %5645 = vmatprep.subr.bf16.mxu0 %v813
  %5646 = vmatpush1.bf16.msra.mxu0 %v812
  %5647 = vmatprep.subr.bf16.mxu0 %v821
  %5648 = vmatpush1.bf16.msra.mxu0 %v820
  %5649 = vmatprep.subr.bf16.mxu0 %v829
  %5650 = vmatpush1.bf16.msra.mxu0 %v828
  %5651 = vmatprep.subr.bf16.mxu0 %v837
  %5652 = vmatpush1.bf16.msra.mxu0 %v836
  %5653 = vmatprep.subr.bf16.mxu0 %v845
  %5654 = vmatpush1.bf16.msra.mxu0 %v844
  %5655 = vmatprep.subr.bf16.mxu0 %v853
  %5656 = vmatpush1.bf16.msra.mxu0 %v852
  %5657 = vmatprep.subr.bf16.mxu0 %v861
  %5658 = vmatpush1.bf16.msra.mxu0 %v860
  %5659 = vmatprep.subr.bf16.mxu0 %v869
  %5660 = vmatpush1.bf16.msra.mxu0 %v868
  %5661 = vmatprep.subr.bf16.mxu0 %v877
  %5662 = vmatpush1.bf16.msra.mxu0 %v876
  %5663 = vmatprep.subr.bf16.mxu0 %v885
  %5664 = vmatpush1.bf16.msra.mxu0 %v884
  %5665 = vmatprep.subr.bf16.mxu0 %v893
  %5666 = vmatpush1.bf16.msra.mxu0 %v892
  %5667 = vmatprep.mubr.bf16.mxu0 %v5022
  %5668 = vmatmul.mubr.bf16.gmra.mrb[0].mxu0 %v5021
  %v5669 = vpop.f32.mrb[0].mxu0
  %v5670 = vadd.f32 0.0, %v5669
  %v5671 = vpop.f32.mrb[0].mxu0
  %v5672 = vadd.f32 0.0, %v5671
  %v5673 = vpop.f32.mrb[0].mxu0
  %v5674 = vadd.f32 0.0, %v5673
  %v5675 = vpop.f32.mrb[0].mxu0
  %v5676 = vadd.f32 0.0, %v5675
  %5677 = vdwg.mxu0
  %v5678 = vadd.f32 %v5490, %v5541
  %v5679 = vadd.f32 %v5491, %v5543
  %v5680 = vadd.f32 %v5492, %v5584
  %v5681 = vadd.f32 %v5493, %v5586
  %v5682 = vadd.f32 %v5494, %v5627
  %v5683 = vadd.f32 %v5495, %v5629
  %v5684 = vadd.f32 %v5496, %v5670
  %v5685 = vadd.f32 %v5497, %v5672
  %v5686 = vadd.f32 %v5498, %v5545
  %v5687 = vadd.f32 %v5499, %v5547
  %v5688 = vadd.f32 %v5500, %v5588
  %v5689 = vadd.f32 %v5501, %v5590
  %v5690 = vadd.f32 %v5502, %v5631
  %v5691 = vadd.f32 %v5503, %v5633
  %v5692 = vadd.f32 %v5504, %v5674
  %v5693 = vadd.f32 %v5505, %v5676
  %v5694 = vxor.u32 %v5678, 2147483648
  %v5695 = vxor.u32 %v5679, 2147483648
  %v5696 = vxor.u32 %v5686, 2147483648
  %v5697 = vxor.u32 %v5687, 2147483648
  %v5698 = vmul.f32 %v5694, 1.442695
  %v5699 = vpow.pop %v5698
  %v5700 = vmul.f32 %v5695, 1.442695
  %v5701 = vpow.pop %v5700
  %v5702 = vmul.f32 %v5696, 1.442695
  %v5703 = vpow.pop %v5702
  %v5704 = vmul.f32 %v5697, 1.442695
  %v5705 = vpow.pop %v5704
  %v5706 = vadd.f32 %v5699, 1.0
  %v5707 = vadd.f32 %v5701, 1.0
  %v5708 = vadd.f32 %v5703, 1.0
  %v5709 = vadd.f32 %v5705, 1.0
  %v5710 = vrcp.pop %v5706
  %v5711 = vmul.f32 1.0, %v5710
  %v5712 = vrcp.pop %v5707
  %v5713 = vmul.f32 1.0, %v5712
  %v5714 = vrcp.pop %v5708
  %v5715 = vmul.f32 1.0, %v5714
  %v5716 = vrcp.pop %v5709
  %v5717 = vmul.f32 1.0, %v5716
  %v5718 = vxor.u32 %v5680, 2147483648
  %v5719 = vxor.u32 %v5681, 2147483648
  %v5720 = vxor.u32 %v5688, 2147483648
  %v5721 = vxor.u32 %v5689, 2147483648
  %v5722 = vmul.f32 %v5718, 1.442695
  %v5723 = vpow.pop %v5722
  %v5724 = vmul.f32 %v5719, 1.442695
  %v5725 = vpow.pop %v5724
  %v5726 = vmul.f32 %v5720, 1.442695
  %v5727 = vpow.pop %v5726
  %v5728 = vmul.f32 %v5721, 1.442695
  %v5729 = vpow.pop %v5728
  %v5730 = vadd.f32 %v5723, 1.0
  %v5731 = vadd.f32 %v5725, 1.0
  %v5732 = vadd.f32 %v5727, 1.0
  %v5733 = vadd.f32 %v5729, 1.0
  %v5734 = vrcp.pop %v5730
  %v5735 = vmul.f32 1.0, %v5734
  %v5736 = vrcp.pop %v5731
  %v5737 = vmul.f32 1.0, %v5736
  %v5738 = vrcp.pop %v5732
  %v5739 = vmul.f32 1.0, %v5738
  %v5740 = vrcp.pop %v5733
  %v5741 = vmul.f32 1.0, %v5740
  %v5742 = vtanh.pop %v5682
  %v5743 = vtanh.pop %v5683
  %v5744 = vtanh.pop %v5690
  %v5745 = vtanh.pop %v5691
  %v5746 = vxor.u32 %v5684, 2147483648
  %v5747 = vxor.u32 %v5685, 2147483648
  %v5748 = vxor.u32 %v5692, 2147483648
  %v5749 = vxor.u32 %v5693, 2147483648
  %v5750 = vmul.f32 %v5746, 1.442695
  %v5751 = vpow.pop %v5750
  %v5752 = vmul.f32 %v5747, 1.442695
  %v5753 = vpow.pop %v5752
  %v5754 = vmul.f32 %v5748, 1.442695
  %v5755 = vpow.pop %v5754
  %v5756 = vmul.f32 %v5749, 1.442695
  %v5757 = vpow.pop %v5756
  %v5758 = vadd.f32 %v5751, 1.0
  %v5759 = vadd.f32 %v5753, 1.0
  %v5760 = vadd.f32 %v5755, 1.0
  %v5761 = vadd.f32 %v5757, 1.0
  %v5762 = vrcp.pop %v5758
  %v5763 = vmul.f32 1.0, %v5762
  %v5764 = vrcp.pop %v5759
  %v5765 = vmul.f32 1.0, %v5764
  %v5766 = vrcp.pop %v5760
  %v5767 = vmul.f32 1.0, %v5766
  %v5768 = vrcp.pop %v5761
  %v5769 = vmul.f32 1.0, %v5768
  %v5770 = vmul.f32 %v5735, %v5009
  %v5771 = vmul.f32 %v5737, %v5010
  %v5772 = vmul.f32 %v5739, %v5011
  %v5773 = vmul.f32 %v5741, %v5012
  %v5774 = vmul.f32 %v5711, %v5742
  %v5775 = vmul.f32 %v5713, %v5743
  %v5776 = vmul.f32 %v5715, %v5744
  %v5777 = vmul.f32 %v5717, %v5745
  %v5778 = vadd.f32 %v5770, %v5774
  %v5779 = vadd.f32 %v5771, %v5775
  %v5780 = vadd.f32 %v5772, %v5776
  %v5781 = vadd.f32 %v5773, %v5777
  %v5782 = vtanh.pop %v5778
  %v5783 = vtanh.pop %v5779
  %v5784 = vtanh.pop %v5780
  %v5785 = vtanh.pop %v5781
  %v5786 = vmul.f32 %v5763, %v5782
  %v5787 = vmul.f32 %v5765, %v5783
  %v5788 = vmul.f32 %v5767, %v5784
  %v5789 = vmul.f32 %v5769, %v5785
  %v5790 = vpack.c.bf16 %v5788, %v5786
  %v5791 = vpack.c.bf16 %v5789, %v5787
  %5792 = vmatprep.subr.bf16.mxu0 %v1821
  %5793 = vmatpush1.bf16.msra.mxu0 %v1820
  %5794 = vmatprep.subr.bf16.mxu0 %v1829
  %5795 = vmatpush1.bf16.msra.mxu0 %v1828
  %5796 = vmatprep.subr.bf16.mxu0 %v1837
  %5797 = vmatpush1.bf16.msra.mxu0 %v1836
  %5798 = vmatprep.subr.bf16.mxu0 %v1845
  %5799 = vmatpush1.bf16.msra.mxu0 %v1844
  %5800 = vmatprep.subr.bf16.mxu0 %v1853
  %5801 = vmatpush1.bf16.msra.mxu0 %v1852
  %5802 = vmatprep.subr.bf16.mxu0 %v1861
  %5803 = vmatpush1.bf16.msra.mxu0 %v1860
  %5804 = vmatprep.subr.bf16.mxu0 %v1869
  %5805 = vmatpush1.bf16.msra.mxu0 %v1868
  %5806 = vmatprep.subr.bf16.mxu0 %v1877
  %5807 = vmatpush1.bf16.msra.mxu0 %v1876
  %5808 = vmatprep.subr.bf16.mxu0 %v1885
  %5809 = vmatpush1.bf16.msra.mxu0 %v1884
  %5810 = vmatprep.subr.bf16.mxu0 %v1893
  %5811 = vmatpush1.bf16.msra.mxu0 %v1892
  %5812 = vmatprep.subr.bf16.mxu0 %v1901
  %5813 = vmatpush1.bf16.msra.mxu0 %v1900
  %5814 = vmatprep.subr.bf16.mxu0 %v1909
  %5815 = vmatpush1.bf16.msra.mxu0 %v1908
  %5816 = vmatprep.subr.bf16.mxu0 %v1917
  %5817 = vmatpush1.bf16.msra.mxu0 %v1916
  %5818 = vmatprep.subr.bf16.mxu0 %v1925
  %5819 = vmatpush1.bf16.msra.mxu0 %v1924
  %5820 = vmatprep.subr.bf16.mxu0 %v1933
  %5821 = vmatpush1.bf16.msra.mxu0 %v1932
  %5822 = vmatprep.subr.bf16.mxu0 %v1941
  %5823 = vmatpush1.bf16.msra.mxu0 %v1940
  %5824 = vmatprep.mubr.bf16.mxu0 %v5791
  %5825 = vmatmul.mubr.bf16.gmra.mrb[0].mxu0 %v5790
  %v5826 = vpop.f32.mrb[0].mxu0
  %v5827 = vadd.f32 0.0, %v5826
  %v5828 = vpop.f32.mrb[0].mxu0
  %v5829 = vadd.f32 0.0, %v5828
  %v5830 = vpop.f32.mrb[0].mxu0
  %v5831 = vadd.f32 0.0, %v5830
  %v5832 = vpop.f32.mrb[0].mxu0
  %v5833 = vadd.f32 0.0, %v5832
  %5834 = vdwg.mxu0
  %5835 = vmatprep.subr.bf16.mxu0 %v1823
  %5836 = vmatpush1.bf16.msra.mxu0 %v1822
  %5837 = vmatprep.subr.bf16.mxu0 %v1831
  %5838 = vmatpush1.bf16.msra.mxu0 %v1830
  %5839 = vmatprep.subr.bf16.mxu0 %v1839
  %5840 = vmatpush1.bf16.msra.mxu0 %v1838
  %5841 = vmatprep.subr.bf16.mxu0 %v1847
  %5842 = vmatpush1.bf16.msra.mxu0 %v1846
  %5843 = vmatprep.subr.bf16.mxu0 %v1855
  %5844 = vmatpush1.bf16.msra.mxu0 %v1854
  %5845 = vmatprep.subr.bf16.mxu0 %v1863
  %5846 = vmatpush1.bf16.msra.mxu0 %v1862
  %5847 = vmatprep.subr.bf16.mxu0 %v1871
  %5848 = vmatpush1.bf16.msra.mxu0 %v1870
  %5849 = vmatprep.subr.bf16.mxu0 %v1879
  %5850 = vmatpush1.bf16.msra.mxu0 %v1878
  %5851 = vmatprep.subr.bf16.mxu0 %v1887
  %5852 = vmatpush1.bf16.msra.mxu0 %v1886
  %5853 = vmatprep.subr.bf16.mxu0 %v1895
  %5854 = vmatpush1.bf16.msra.mxu0 %v1894
  %5855 = vmatprep.subr.bf16.mxu0 %v1903
  %5856 = vmatpush1.bf16.msra.mxu0 %v1902
  %5857 = vmatprep.subr.bf16.mxu0 %v1911
  %5858 = vmatpush1.bf16.msra.mxu0 %v1910
  %5859 = vmatprep.subr.bf16.mxu0 %v1919
  %5860 = vmatpush1.bf16.msra.mxu0 %v1918
  %5861 = vmatprep.subr.bf16.mxu0 %v1927
  %5862 = vmatpush1.bf16.msra.mxu0 %v1926
  %5863 = vmatprep.subr.bf16.mxu0 %v1935
  %5864 = vmatpush1.bf16.msra.mxu0 %v1934
  %5865 = vmatprep.subr.bf16.mxu0 %v1943
  %5866 = vmatpush1.bf16.msra.mxu0 %v1942
  %5867 = vmatprep.mubr.bf16.mxu0 %v5791
  %5868 = vmatmul.mubr.bf16.gmra.mrb[0].mxu0 %v5790
  %v5869 = vpop.f32.mrb[0].mxu0
  %v5870 = vadd.f32 0.0, %v5869
  %v5871 = vpop.f32.mrb[0].mxu0
  %v5872 = vadd.f32 0.0, %v5871
  %v5873 = vpop.f32.mrb[0].mxu0
  %v5874 = vadd.f32 0.0, %v5873
  %v5875 = vpop.f32.mrb[0].mxu0
  %v5876 = vadd.f32 0.0, %v5875
  %5877 = vdwg.mxu0
  %5878 = vmatprep.subr.bf16.mxu0 %v1825
  %5879 = vmatpush1.bf16.msra.mxu0 %v1824
  %5880 = vmatprep.subr.bf16.mxu0 %v1833
  %5881 = vmatpush1.bf16.msra.mxu0 %v1832
  %5882 = vmatprep.subr.bf16.mxu0 %v1841
  %5883 = vmatpush1.bf16.msra.mxu0 %v1840
  %5884 = vmatprep.subr.bf16.mxu0 %v1849
  %5885 = vmatpush1.bf16.msra.mxu0 %v1848
  %5886 = vmatprep.subr.bf16.mxu0 %v1857
  %5887 = vmatpush1.bf16.msra.mxu0 %v1856
  %5888 = vmatprep.subr.bf16.mxu0 %v1865
  %5889 = vmatpush1.bf16.msra.mxu0 %v1864
  %5890 = vmatprep.subr.bf16.mxu0 %v1873
  %5891 = vmatpush1.bf16.msra.mxu0 %v1872
  %5892 = vmatprep.subr.bf16.mxu0 %v1881
  %5893 = vmatpush1.bf16.msra.mxu0 %v1880
  %5894 = vmatprep.subr.bf16.mxu0 %v1889
  %5895 = vmatpush1.bf16.msra.mxu0 %v1888
  %5896 = vmatprep.subr.bf16.mxu0 %v1897
  %5897 = vmatpush1.bf16.msra.mxu0 %v1896
  %5898 = vmatprep.subr.bf16.mxu0 %v1905
  %5899 = vmatpush1.bf16.msra.mxu0 %v1904
  %5900 = vmatprep.subr.bf16.mxu0 %v1913
  %5901 = vmatpush1.bf16.msra.mxu0 %v1912
  %5902 = vmatprep.subr.bf16.mxu0 %v1921
  %5903 = vmatpush1.bf16.msra.mxu0 %v1920
  %5904 = vmatprep.subr.bf16.mxu0 %v1929
  %5905 = vmatpush1.bf16.msra.mxu0 %v1928
  %5906 = vmatprep.subr.bf16.mxu0 %v1937
  %5907 = vmatpush1.bf16.msra.mxu0 %v1936
  %5908 = vmatprep.subr.bf16.mxu0 %v1945
  %5909 = vmatpush1.bf16.msra.mxu0 %v1944
  %5910 = vmatprep.mubr.bf16.mxu0 %v5791
  %5911 = vmatmul.mubr.bf16.gmra.mrb[0].mxu0 %v5790
  %v5912 = vpop.f32.mrb[0].mxu0
  %v5913 = vadd.f32 0.0, %v5912
  %v5914 = vpop.f32.mrb[0].mxu0
  %v5915 = vadd.f32 0.0, %v5914
  %v5916 = vpop.f32.mrb[0].mxu0
  %v5917 = vadd.f32 0.0, %v5916
  %v5918 = vpop.f32.mrb[0].mxu0
  %v5919 = vadd.f32 0.0, %v5918
  %5920 = vdwg.mxu0
  %5921 = vmatprep.subr.bf16.mxu0 %v1827
  %5922 = vmatpush1.bf16.msra.mxu0 %v1826
  %5923 = vmatprep.subr.bf16.mxu0 %v1835
  %5924 = vmatpush1.bf16.msra.mxu0 %v1834
  %5925 = vmatprep.subr.bf16.mxu0 %v1843
  %5926 = vmatpush1.bf16.msra.mxu0 %v1842
  %5927 = vmatprep.subr.bf16.mxu0 %v1851
  %5928 = vmatpush1.bf16.msra.mxu0 %v1850
  %5929 = vmatprep.subr.bf16.mxu0 %v1859
  %5930 = vmatpush1.bf16.msra.mxu0 %v1858
  %5931 = vmatprep.subr.bf16.mxu0 %v1867
  %5932 = vmatpush1.bf16.msra.mxu0 %v1866
  %5933 = vmatprep.subr.bf16.mxu0 %v1875
  %5934 = vmatpush1.bf16.msra.mxu0 %v1874
  %5935 = vmatprep.subr.bf16.mxu0 %v1883
  %5936 = vmatpush1.bf16.msra.mxu0 %v1882
  %5937 = vmatprep.subr.bf16.mxu0 %v1891
  %5938 = vmatpush1.bf16.msra.mxu0 %v1890
  %5939 = vmatprep.subr.bf16.mxu0 %v1899
  %5940 = vmatpush1.bf16.msra.mxu0 %v1898
  %5941 = vmatprep.subr.bf16.mxu0 %v1907
  %5942 = vmatpush1.bf16.msra.mxu0 %v1906
  %5943 = vmatprep.subr.bf16.mxu0 %v1915
  %5944 = vmatpush1.bf16.msra.mxu0 %v1914
  %5945 = vmatprep.subr.bf16.mxu0 %v1923
  %5946 = vmatpush1.bf16.msra.mxu0 %v1922
  %5947 = vmatprep.subr.bf16.mxu0 %v1931
  %5948 = vmatpush1.bf16.msra.mxu0 %v1930
  %5949 = vmatprep.subr.bf16.mxu0 %v1939
  %5950 = vmatpush1.bf16.msra.mxu0 %v1938
  %5951 = vmatprep.subr.bf16.mxu0 %v1947
  %5952 = vmatpush1.bf16.msra.mxu0 %v1946
  %5953 = vmatprep.mubr.bf16.mxu0 %v5791
  %5954 = vmatmul.mubr.bf16.gmra.mrb[0].mxu0 %v5790
  %v5955 = vpop.f32.mrb[0].mxu0
  %v5956 = vadd.f32 0.0, %v5955
  %v5957 = vpop.f32.mrb[0].mxu0
  %v5958 = vadd.f32 0.0, %v5957
  %v5959 = vpop.f32.mrb[0].mxu0
  %v5960 = vadd.f32 0.0, %v5959
  %v5961 = vpop.f32.mrb[0].mxu0
  %v5962 = vadd.f32 0.0, %v5961
  %5963 = vdwg.mxu0
  %5964 = vmatprep.subr.bf16.mxu0 %v2633
  %5965 = vmatpush1.bf16.msra.mxu0 %v2632
  %5966 = vmatprep.subr.bf16.mxu0 %v2641
  %5967 = vmatpush1.bf16.msra.mxu0 %v2640
  %5968 = vmatprep.subr.bf16.mxu0 %v2649
  %5969 = vmatpush1.bf16.msra.mxu0 %v2648
  %5970 = vmatprep.subr.bf16.mxu0 %v2657
  %5971 = vmatpush1.bf16.msra.mxu0 %v2656
  %5972 = vmatprep.subr.bf16.mxu0 %v2665
  %5973 = vmatpush1.bf16.msra.mxu0 %v2664
  %5974 = vmatprep.subr.bf16.mxu0 %v2673
  %5975 = vmatpush1.bf16.msra.mxu0 %v2672
  %5976 = vmatprep.subr.bf16.mxu0 %v2681
  %5977 = vmatpush1.bf16.msra.mxu0 %v2680
  %5978 = vmatprep.subr.bf16.mxu0 %v2689
  %5979 = vmatpush1.bf16.msra.mxu0 %v2688
  %5980 = vmatprep.subr.bf16.mxu0 %v2697
  %5981 = vmatpush1.bf16.msra.mxu0 %v2696
  %5982 = vmatprep.subr.bf16.mxu0 %v2705
  %5983 = vmatpush1.bf16.msra.mxu0 %v2704
  %5984 = vmatprep.subr.bf16.mxu0 %v2713
  %5985 = vmatpush1.bf16.msra.mxu0 %v2712
  %5986 = vmatprep.subr.bf16.mxu0 %v2721
  %5987 = vmatpush1.bf16.msra.mxu0 %v2720
  %5988 = vmatprep.subr.bf16.mxu0 %v2729
  %5989 = vmatpush1.bf16.msra.mxu0 %v2728
  %5990 = vmatprep.subr.bf16.mxu0 %v2737
  %5991 = vmatpush1.bf16.msra.mxu0 %v2736
  %5992 = vmatprep.subr.bf16.mxu0 %v2745
  %5993 = vmatpush1.bf16.msra.mxu0 %v2744
  %5994 = vmatprep.subr.bf16.mxu0 %v2753
  %5995 = vmatpush1.bf16.msra.mxu0 %v2752
  %5996 = vmatprep.mubr.bf16.mxu0 %v5480
  %5997 = vmatmul.mubr.bf16.gmra.mrb[0].mxu0 %v5479
  %v5998 = vpop.f32.mrb[0].mxu0
  %v5999 = vadd.f32 %v5827, %v5998
  %v6000 = vpop.f32.mrb[0].mxu0
  %v6001 = vadd.f32 %v5829, %v6000
  %v6002 = vpop.f32.mrb[0].mxu0
  %v6003 = vadd.f32 %v5831, %v6002
  %v6004 = vpop.f32.mrb[0].mxu0
  %v6005 = vadd.f32 %v5833, %v6004
  %6006 = vdwg.mxu0
  %6007 = vmatprep.subr.bf16.mxu0 %v2635
  %6008 = vmatpush1.bf16.msra.mxu0 %v2634
  %6009 = vmatprep.subr.bf16.mxu0 %v2643
  %6010 = vmatpush1.bf16.msra.mxu0 %v2642
  %6011 = vmatprep.subr.bf16.mxu0 %v2651
  %6012 = vmatpush1.bf16.msra.mxu0 %v2650
  %6013 = vmatprep.subr.bf16.mxu0 %v2659
  %6014 = vmatpush1.bf16.msra.mxu0 %v2658
  %6015 = vmatprep.subr.bf16.mxu0 %v2667
  %6016 = vmatpush1.bf16.msra.mxu0 %v2666
  %6017 = vmatprep.subr.bf16.mxu0 %v2675
  %6018 = vmatpush1.bf16.msra.mxu0 %v2674
  %6019 = vmatprep.subr.bf16.mxu0 %v2683
  %6020 = vmatpush1.bf16.msra.mxu0 %v2682
  %6021 = vmatprep.subr.bf16.mxu0 %v2691
  %6022 = vmatpush1.bf16.msra.mxu0 %v2690
  %6023 = vmatprep.subr.bf16.mxu0 %v2699
  %6024 = vmatpush1.bf16.msra.mxu0 %v2698
  %6025 = vmatprep.subr.bf16.mxu0 %v2707
  %6026 = vmatpush1.bf16.msra.mxu0 %v2706
  %6027 = vmatprep.subr.bf16.mxu0 %v2715
  %6028 = vmatpush1.bf16.msra.mxu0 %v2714
  %6029 = vmatprep.subr.bf16.mxu0 %v2723
  %6030 = vmatpush1.bf16.msra.mxu0 %v2722
  %6031 = vmatprep.subr.bf16.mxu0 %v2731
  %6032 = vmatpush1.bf16.msra.mxu0 %v2730
  %6033 = vmatprep.subr.bf16.mxu0 %v2739
  %6034 = vmatpush1.bf16.msra.mxu0 %v2738
  %6035 = vmatprep.subr.bf16.mxu0 %v2747
  %6036 = vmatpush1.bf16.msra.mxu0 %v2746
  %6037 = vmatprep.subr.bf16.mxu0 %v2755
  %6038 = vmatpush1.bf16.msra.mxu0 %v2754
  %6039 = vmatprep.mubr.bf16.mxu0 %v5480
  %6040 = vmatmul.mubr.bf16.gmra.mrb[0].mxu0 %v5479
  %v6041 = vpop.f32.mrb[0].mxu0
  %v6042 = vadd.f32 %v5870, %v6041
  %v6043 = vpop.f32.mrb[0].mxu0
  %v6044 = vadd.f32 %v5872, %v6043
  %v6045 = vpop.f32.mrb[0].mxu0
  %v6046 = vadd.f32 %v5874, %v6045
  %v6047 = vpop.f32.mrb[0].mxu0
  %v6048 = vadd.f32 %v5876, %v6047
  %6049 = vdwg.mxu0
  %6050 = vmatprep.subr.bf16.mxu0 %v2637
  %6051 = vmatpush1.bf16.msra.mxu0 %v2636
  %6052 = vmatprep.subr.bf16.mxu0 %v2645
  %6053 = vmatpush1.bf16.msra.mxu0 %v2644
  %6054 = vmatprep.subr.bf16.mxu0 %v2653
  %6055 = vmatpush1.bf16.msra.mxu0 %v2652
  %6056 = vmatprep.subr.bf16.mxu0 %v2661
  %6057 = vmatpush1.bf16.msra.mxu0 %v2660
  %6058 = vmatprep.subr.bf16.mxu0 %v2669
  %6059 = vmatpush1.bf16.msra.mxu0 %v2668
  %6060 = vmatprep.subr.bf16.mxu0 %v2677
  %6061 = vmatpush1.bf16.msra.mxu0 %v2676
  %6062 = vmatprep.subr.bf16.mxu0 %v2685
  %6063 = vmatpush1.bf16.msra.mxu0 %v2684
  %6064 = vmatprep.subr.bf16.mxu0 %v2693
  %6065 = vmatpush1.bf16.msra.mxu0 %v2692
  %6066 = vmatprep.subr.bf16.mxu0 %v2701
  %6067 = vmatpush1.bf16.msra.mxu0 %v2700
  %6068 = vmatprep.subr.bf16.mxu0 %v2709
  %6069 = vmatpush1.bf16.msra.mxu0 %v2708
  %6070 = vmatprep.subr.bf16.mxu0 %v2717
  %6071 = vmatpush1.bf16.msra.mxu0 %v2716
  %6072 = vmatprep.subr.bf16.mxu0 %v2725
  %6073 = vmatpush1.bf16.msra.mxu0 %v2724
  %6074 = vmatprep.subr.bf16.mxu0 %v2733
  %6075 = vmatpush1.bf16.msra.mxu0 %v2732
  %6076 = vmatprep.subr.bf16.mxu0 %v2741
  %6077 = vmatpush1.bf16.msra.mxu0 %v2740
  %6078 = vmatprep.subr.bf16.mxu0 %v2749
  %6079 = vmatpush1.bf16.msra.mxu0 %v2748
  %6080 = vmatprep.subr.bf16.mxu0 %v2757
  %6081 = vmatpush1.bf16.msra.mxu0 %v2756
  %6082 = vmatprep.mubr.bf16.mxu0 %v5480
  %6083 = vmatmul.mubr.bf16.gmra.mrb[0].mxu0 %v5479
  %v6084 = vpop.f32.mrb[0].mxu0
  %v6085 = vadd.f32 %v5913, %v6084
  %v6086 = vpop.f32.mrb[0].mxu0
  %v6087 = vadd.f32 %v5915, %v6086
  %v6088 = vpop.f32.mrb[0].mxu0
  %v6089 = vadd.f32 %v5917, %v6088
  %v6090 = vpop.f32.mrb[0].mxu0
  %v6091 = vadd.f32 %v5919, %v6090
  %6092 = vdwg.mxu0
  %6093 = vmatprep.subr.bf16.mxu0 %v2639
  %6094 = vmatpush1.bf16.msra.mxu0 %v2638
  %6095 = vmatprep.subr.bf16.mxu0 %v2647
  %6096 = vmatpush1.bf16.msra.mxu0 %v2646
  %6097 = vmatprep.subr.bf16.mxu0 %v2655
  %6098 = vmatpush1.bf16.msra.mxu0 %v2654
  %6099 = vmatprep.subr.bf16.mxu0 %v2663
  %6100 = vmatpush1.bf16.msra.mxu0 %v2662
  %6101 = vmatprep.subr.bf16.mxu0 %v2671
  %6102 = vmatpush1.bf16.msra.mxu0 %v2670
  %6103 = vmatprep.subr.bf16.mxu0 %v2679
  %6104 = vmatpush1.bf16.msra.mxu0 %v2678
  %6105 = vmatprep.subr.bf16.mxu0 %v2687
  %6106 = vmatpush1.bf16.msra.mxu0 %v2686
  %6107 = vmatprep.subr.bf16.mxu0 %v2695
  %6108 = vmatpush1.bf16.msra.mxu0 %v2694
  %6109 = vmatprep.subr.bf16.mxu0 %v2703
  %6110 = vmatpush1.bf16.msra.mxu0 %v2702
  %6111 = vmatprep.subr.bf16.mxu0 %v2711
  %6112 = vmatpush1.bf16.msra.mxu0 %v2710
  %6113 = vmatprep.subr.bf16.mxu0 %v2719
  %6114 = vmatpush1.bf16.msra.mxu0 %v2718
  %6115 = vmatprep.subr.bf16.mxu0 %v2727
  %6116 = vmatpush1.bf16.msra.mxu0 %v2726
  %6117 = vmatprep.subr.bf16.mxu0 %v2735
  %6118 = vmatpush1.bf16.msra.mxu0 %v2734
  %6119 = vmatprep.subr.bf16.mxu0 %v2743
  %6120 = vmatpush1.bf16.msra.mxu0 %v2742
  %6121 = vmatprep.subr.bf16.mxu0 %v2751
  %6122 = vmatpush1.bf16.msra.mxu0 %v2750
  %6123 = vmatprep.subr.bf16.mxu0 %v2759
  %6124 = vmatpush1.bf16.msra.mxu0 %v2758
  %6125 = vmatprep.mubr.bf16.mxu0 %v5480
  %6126 = vmatmul.mubr.bf16.gmra.mrb[0].mxu0 %v5479
  %v6127 = vpop.f32.mrb[0].mxu0
  %v6128 = vadd.f32 %v5956, %v6127
  %v6129 = vpop.f32.mrb[0].mxu0
  %v6130 = vadd.f32 %v5958, %v6129
  %v6131 = vpop.f32.mrb[0].mxu0
  %v6132 = vadd.f32 %v5960, %v6131
  %v6133 = vpop.f32.mrb[0].mxu0
  %v6134 = vadd.f32 %v5962, %v6133
  %6135 = vdwg.mxu0
  %v6136 = vadd.f32 %v5999, %v45
  %v6137 = vadd.f32 %v6001, %v49
  %v6138 = vadd.f32 %v6042, %v53
  %v6139 = vadd.f32 %v6044, %v57
  %v6140 = vadd.f32 %v6085, %v61
  %v6141 = vadd.f32 %v6087, %v65
  %v6142 = vadd.f32 %v6128, %v69
  %v6143 = vadd.f32 %v6130, %v73
  %v6144 = vadd.f32 %v6003, %v45
  %v6145 = vadd.f32 %v6005, %v49
  %v6146 = vadd.f32 %v6046, %v53
  %v6147 = vadd.f32 %v6048, %v57
  %v6148 = vadd.f32 %v6089, %v61
  %v6149 = vadd.f32 %v6091, %v65
  %v6150 = vadd.f32 %v6132, %v69
  %v6151 = vadd.f32 %v6134, %v73
  %v6152 = vxor.u32 %v6136, 2147483648
  %v6153 = vxor.u32 %v6137, 2147483648
  %v6154 = vxor.u32 %v6144, 2147483648
  %v6155 = vxor.u32 %v6145, 2147483648
  %v6156 = vmul.f32 %v6152, 1.442695
  %v6157 = vpow.pop %v6156
  %v6158 = vmul.f32 %v6153, 1.442695
  %v6159 = vpow.pop %v6158
  %v6160 = vmul.f32 %v6154, 1.442695
  %v6161 = vpow.pop %v6160
  %v6162 = vmul.f32 %v6155, 1.442695
  %v6163 = vpow.pop %v6162
  %v6164 = vadd.f32 %v6157, 1.0
  %v6165 = vadd.f32 %v6159, 1.0
  %v6166 = vadd.f32 %v6161, 1.0
  %v6167 = vadd.f32 %v6163, 1.0
  %v6168 = vrcp.pop %v6164
  %v6169 = vmul.f32 1.0, %v6168
  %v6170 = vrcp.pop %v6165
  %v6171 = vmul.f32 1.0, %v6170
  %v6172 = vrcp.pop %v6166
  %v6173 = vmul.f32 1.0, %v6172
  %v6174 = vrcp.pop %v6167
  %v6175 = vmul.f32 1.0, %v6174
  %v6176 = vxor.u32 %v6138, 2147483648
  %v6177 = vxor.u32 %v6139, 2147483648
  %v6178 = vxor.u32 %v6146, 2147483648
  %v6179 = vxor.u32 %v6147, 2147483648
  %v6180 = vmul.f32 %v6176, 1.442695
  %v6181 = vpow.pop %v6180
  %v6182 = vmul.f32 %v6177, 1.442695
  %v6183 = vpow.pop %v6182
  %v6184 = vmul.f32 %v6178, 1.442695
  %v6185 = vpow.pop %v6184
  %v6186 = vmul.f32 %v6179, 1.442695
  %v6187 = vpow.pop %v6186
  %v6188 = vadd.f32 %v6181, 1.0
  %v6189 = vadd.f32 %v6183, 1.0
  %v6190 = vadd.f32 %v6185, 1.0
  %v6191 = vadd.f32 %v6187, 1.0
  %v6192 = vrcp.pop %v6188
  %v6193 = vmul.f32 1.0, %v6192
  %v6194 = vrcp.pop %v6189
  %v6195 = vmul.f32 1.0, %v6194
  %v6196 = vrcp.pop %v6190
  %v6197 = vmul.f32 1.0, %v6196
  %v6198 = vrcp.pop %v6191
  %v6199 = vmul.f32 1.0, %v6198
  %v6200 = vtanh.pop %v6140
  %v6201 = vtanh.pop %v6141
  %v6202 = vtanh.pop %v6148
  %v6203 = vtanh.pop %v6149
  %v6204 = vxor.u32 %v6142, 2147483648
  %v6205 = vxor.u32 %v6143, 2147483648
  %v6206 = vxor.u32 %v6150, 2147483648
  %v6207 = vxor.u32 %v6151, 2147483648
  %v6208 = vmul.f32 %v6204, 1.442695
  %v6209 = vpow.pop %v6208
  %v6210 = vmul.f32 %v6205, 1.442695
  %v6211 = vpow.pop %v6210
  %v6212 = vmul.f32 %v6206, 1.442695
  %v6213 = vpow.pop %v6212
  %v6214 = vmul.f32 %v6207, 1.442695
  %v6215 = vpow.pop %v6214
  %v6216 = vadd.f32 %v6209, 1.0
  %v6217 = vadd.f32 %v6211, 1.0
  %v6218 = vadd.f32 %v6213, 1.0
  %v6219 = vadd.f32 %v6215, 1.0
  %v6220 = vrcp.pop %v6216
  %v6221 = vmul.f32 1.0, %v6220
  %v6222 = vrcp.pop %v6217
  %v6223 = vmul.f32 1.0, %v6222
  %v6224 = vrcp.pop %v6218
  %v6225 = vmul.f32 1.0, %v6224
  %v6226 = vrcp.pop %v6219
  %v6227 = vmul.f32 1.0, %v6226
  %v6228 = vmul.f32 %v6193, %v5467
  %v6229 = vmul.f32 %v6195, %v5468
  %v6230 = vmul.f32 %v6197, %v5469
  %v6231 = vmul.f32 %v6199, %v5470
  %v6232 = vmul.f32 %v6169, %v6200
  %v6233 = vmul.f32 %v6171, %v6201
  %v6234 = vmul.f32 %v6173, %v6202
  %v6235 = vmul.f32 %v6175, %v6203
  %v6236 = vadd.f32 %v6228, %v6232
  %v6237 = vadd.f32 %v6229, %v6233
  %v6238 = vadd.f32 %v6230, %v6234
  %v6239 = vadd.f32 %v6231, %v6235
  %v6240 = vtanh.pop %v6236
  %v6241 = vtanh.pop %v6237
  %v6242 = vtanh.pop %v6238
  %v6243 = vtanh.pop %v6239
  %v6244 = vmul.f32 %v6221, %v6240
  %v6245 = vmul.f32 %v6223, %v6241
  %v6246 = vmul.f32 %v6225, %v6242
  %v6247 = vmul.f32 %v6227, %v6243
  %v6248 = vpack.c.bf16 %v6246, %v6244
  %v6249 = vpack.c.bf16 %v6247, %v6245
  %s6250 = scalar_lea.vmem %s0, 320
  %v6251 = vld [vmem:[%s6250] sm:$0xff]
  %v6252 = vld [vmem:[%s6250 + $0x8] sm:$0xff]
  %v6253 = vld [vmem:[%s6250 + $0x10] sm:$0xff]
  %v6254 = vld [vmem:[%s6250 + $0x18] sm:$0xff]
  %v6255 = vld [vmem:[%s6250 + $0x20] sm:$0xff]
  %v6256 = vld [vmem:[%s6250 + $0x28] sm:$0xff]
  %v6257 = vld [vmem:[%s6250 + $0x30] sm:$0xff]
  %v6258 = vld [vmem:[%s6250 + $0x38] sm:$0xff]
  %v6259 = vunpack.c.l.bf16 %v6251
  %v6260 = vunpack.c.h.bf16 %v6251
  %v6261 = vunpack.c.l.bf16 %v6252
  %v6262 = vunpack.c.h.bf16 %v6252
  %v6263 = vunpack.c.l.bf16 %v6253
  %v6264 = vunpack.c.h.bf16 %v6253
  %v6265 = vunpack.c.l.bf16 %v6254
  %v6266 = vunpack.c.h.bf16 %v6254
  %v6267 = vunpack.c.l.bf16 %v6255
  %v6268 = vunpack.c.h.bf16 %v6255
  %v6269 = vunpack.c.l.bf16 %v6256
  %v6270 = vunpack.c.h.bf16 %v6256
  %v6271 = vunpack.c.l.bf16 %v6257
  %v6272 = vunpack.c.h.bf16 %v6257
  %v6273 = vunpack.c.l.bf16 %v6258
  %v6274 = vunpack.c.h.bf16 %v6258
  %6275 = vmatprep.subr.bf16.mxu0 %v767
  %6276 = vmatpush1.bf16.msra.mxu0 %v766
  %6277 = vmatprep.subr.bf16.mxu0 %v775
  %6278 = vmatpush1.bf16.msra.mxu0 %v774
  %6279 = vmatprep.subr.bf16.mxu0 %v783
  %6280 = vmatpush1.bf16.msra.mxu0 %v782
  %6281 = vmatprep.subr.bf16.mxu0 %v791
  %6282 = vmatpush1.bf16.msra.mxu0 %v790
  %6283 = vmatprep.subr.bf16.mxu0 %v799
  %6284 = vmatpush1.bf16.msra.mxu0 %v798
  %6285 = vmatprep.subr.bf16.mxu0 %v807
  %6286 = vmatpush1.bf16.msra.mxu0 %v806
  %6287 = vmatprep.subr.bf16.mxu0 %v815
  %6288 = vmatpush1.bf16.msra.mxu0 %v814
  %6289 = vmatprep.subr.bf16.mxu0 %v823
  %6290 = vmatpush1.bf16.msra.mxu0 %v822
  %6291 = vmatprep.subr.bf16.mxu0 %v831
  %6292 = vmatpush1.bf16.msra.mxu0 %v830
  %6293 = vmatprep.subr.bf16.mxu0 %v839
  %6294 = vmatpush1.bf16.msra.mxu0 %v838
  %6295 = vmatprep.subr.bf16.mxu0 %v847
  %6296 = vmatpush1.bf16.msra.mxu0 %v846
  %6297 = vmatprep.subr.bf16.mxu0 %v855
  %6298 = vmatpush1.bf16.msra.mxu0 %v854
  %6299 = vmatprep.subr.bf16.mxu0 %v863
  %6300 = vmatpush1.bf16.msra.mxu0 %v862
  %6301 = vmatprep.subr.bf16.mxu0 %v871
  %6302 = vmatpush1.bf16.msra.mxu0 %v870
  %6303 = vmatprep.subr.bf16.mxu0 %v879
  %6304 = vmatpush1.bf16.msra.mxu0 %v878
  %6305 = vmatprep.subr.bf16.mxu0 %v887
  %6306 = vmatpush1.bf16.msra.mxu0 %v886
  %6307 = vmatprep.mubr.bf16.mxu0 %v5791
  %6308 = vmatmul.mubr.bf16.gmra.mrb[0].mxu0 %v5790
  %v6309 = vpop.f32.mrb[0].mxu0
  %v6310 = vadd.f32 0.0, %v6309
  %v6311 = vpop.f32.mrb[0].mxu0
  %v6312 = vadd.f32 0.0, %v6311
  %v6313 = vpop.f32.mrb[0].mxu0
  %v6314 = vadd.f32 0.0, %v6313
  %v6315 = vpop.f32.mrb[0].mxu0
  %v6316 = vadd.f32 0.0, %v6315
  %6317 = vdwg.mxu0
  %6318 = vmatprep.subr.bf16.mxu0 %v769
  %6319 = vmatpush1.bf16.msra.mxu0 %v768
  %6320 = vmatprep.subr.bf16.mxu0 %v777
  %6321 = vmatpush1.bf16.msra.mxu0 %v776
  %6322 = vmatprep.subr.bf16.mxu0 %v785
  %6323 = vmatpush1.bf16.msra.mxu0 %v784
  %6324 = vmatprep.subr.bf16.mxu0 %v793
  %6325 = vmatpush1.bf16.msra.mxu0 %v792
  %6326 = vmatprep.subr.bf16.mxu0 %v801
  %6327 = vmatpush1.bf16.msra.mxu0 %v800
  %6328 = vmatprep.subr.bf16.mxu0 %v809
  %6329 = vmatpush1.bf16.msra.mxu0 %v808
  %6330 = vmatprep.subr.bf16.mxu0 %v817
  %6331 = vmatpush1.bf16.msra.mxu0 %v816
  %6332 = vmatprep.subr.bf16.mxu0 %v825
  %6333 = vmatpush1.bf16.msra.mxu0 %v824
  %6334 = vmatprep.subr.bf16.mxu0 %v833
  %6335 = vmatpush1.bf16.msra.mxu0 %v832
  %6336 = vmatprep.subr.bf16.mxu0 %v841
  %6337 = vmatpush1.bf16.msra.mxu0 %v840
  %6338 = vmatprep.subr.bf16.mxu0 %v849
  %6339 = vmatpush1.bf16.msra.mxu0 %v848
  %6340 = vmatprep.subr.bf16.mxu0 %v857
  %6341 = vmatpush1.bf16.msra.mxu0 %v856
  %6342 = vmatprep.subr.bf16.mxu0 %v865
  %6343 = vmatpush1.bf16.msra.mxu0 %v864
  %6344 = vmatprep.subr.bf16.mxu0 %v873
  %6345 = vmatpush1.bf16.msra.mxu0 %v872
  %6346 = vmatprep.subr.bf16.mxu0 %v881
  %6347 = vmatpush1.bf16.msra.mxu0 %v880
  %6348 = vmatprep.subr.bf16.mxu0 %v889
  %6349 = vmatpush1.bf16.msra.mxu0 %v888
  %6350 = vmatprep.mubr.bf16.mxu0 %v5791
  %6351 = vmatmul.mubr.bf16.gmra.mrb[0].mxu0 %v5790
  %v6352 = vpop.f32.mrb[0].mxu0
  %v6353 = vadd.f32 0.0, %v6352
  %v6354 = vpop.f32.mrb[0].mxu0
  %v6355 = vadd.f32 0.0, %v6354
  %v6356 = vpop.f32.mrb[0].mxu0
  %v6357 = vadd.f32 0.0, %v6356
  %v6358 = vpop.f32.mrb[0].mxu0
  %v6359 = vadd.f32 0.0, %v6358
  %6360 = vdwg.mxu0
  %6361 = vmatprep.subr.bf16.mxu0 %v771
  %6362 = vmatpush1.bf16.msra.mxu0 %v770
  %6363 = vmatprep.subr.bf16.mxu0 %v779
  %6364 = vmatpush1.bf16.msra.mxu0 %v778
  %6365 = vmatprep.subr.bf16.mxu0 %v787
  %6366 = vmatpush1.bf16.msra.mxu0 %v786
  %6367 = vmatprep.subr.bf16.mxu0 %v795
  %6368 = vmatpush1.bf16.msra.mxu0 %v794
  %6369 = vmatprep.subr.bf16.mxu0 %v803
  %6370 = vmatpush1.bf16.msra.mxu0 %v802
  %6371 = vmatprep.subr.bf16.mxu0 %v811
  %6372 = vmatpush1.bf16.msra.mxu0 %v810
  %6373 = vmatprep.subr.bf16.mxu0 %v819
  %6374 = vmatpush1.bf16.msra.mxu0 %v818
  %6375 = vmatprep.subr.bf16.mxu0 %v827
  %6376 = vmatpush1.bf16.msra.mxu0 %v826
  %6377 = vmatprep.subr.bf16.mxu0 %v835
  %6378 = vmatpush1.bf16.msra.mxu0 %v834
  %6379 = vmatprep.subr.bf16.mxu0 %v843
  %6380 = vmatpush1.bf16.msra.mxu0 %v842
  %6381 = vmatprep.subr.bf16.mxu0 %v851
  %6382 = vmatpush1.bf16.msra.mxu0 %v850
  %6383 = vmatprep.subr.bf16.mxu0 %v859
  %6384 = vmatpush1.bf16.msra.mxu0 %v858
  %6385 = vmatprep.subr.bf16.mxu0 %v867
  %6386 = vmatpush1.bf16.msra.mxu0 %v866
  %6387 = vmatprep.subr.bf16.mxu0 %v875
  %6388 = vmatpush1.bf16.msra.mxu0 %v874
  %6389 = vmatprep.subr.bf16.mxu0 %v883
  %6390 = vmatpush1.bf16.msra.mxu0 %v882
  %6391 = vmatprep.subr.bf16.mxu0 %v891
  %6392 = vmatpush1.bf16.msra.mxu0 %v890
  %6393 = vmatprep.mubr.bf16.mxu0 %v5791
  %6394 = vmatmul.mubr.bf16.gmra.mrb[0].mxu0 %v5790
  %v6395 = vpop.f32.mrb[0].mxu0
  %v6396 = vadd.f32 0.0, %v6395
  %v6397 = vpop.f32.mrb[0].mxu0
  %v6398 = vadd.f32 0.0, %v6397
  %v6399 = vpop.f32.mrb[0].mxu0
  %v6400 = vadd.f32 0.0, %v6399
  %v6401 = vpop.f32.mrb[0].mxu0
  %v6402 = vadd.f32 0.0, %v6401
  %6403 = vdwg.mxu0
  %6404 = vmatprep.subr.bf16.mxu0 %v773
  %6405 = vmatpush1.bf16.msra.mxu0 %v772
  %6406 = vmatprep.subr.bf16.mxu0 %v781
  %6407 = vmatpush1.bf16.msra.mxu0 %v780
  %6408 = vmatprep.subr.bf16.mxu0 %v789
  %6409 = vmatpush1.bf16.msra.mxu0 %v788
  %6410 = vmatprep.subr.bf16.mxu0 %v797
  %6411 = vmatpush1.bf16.msra.mxu0 %v796
  %6412 = vmatprep.subr.bf16.mxu0 %v805
  %6413 = vmatpush1.bf16.msra.mxu0 %v804
  %6414 = vmatprep.subr.bf16.mxu0 %v813
  %6415 = vmatpush1.bf16.msra.mxu0 %v812
  %6416 = vmatprep.subr.bf16.mxu0 %v821
  %6417 = vmatpush1.bf16.msra.mxu0 %v820
  %6418 = vmatprep.subr.bf16.mxu0 %v829
  %6419 = vmatpush1.bf16.msra.mxu0 %v828
  %6420 = vmatprep.subr.bf16.mxu0 %v837
  %6421 = vmatpush1.bf16.msra.mxu0 %v836
  %6422 = vmatprep.subr.bf16.mxu0 %v845
  %6423 = vmatpush1.bf16.msra.mxu0 %v844
  %6424 = vmatprep.subr.bf16.mxu0 %v853
  %6425 = vmatpush1.bf16.msra.mxu0 %v852
  %6426 = vmatprep.subr.bf16.mxu0 %v861
  %6427 = vmatpush1.bf16.msra.mxu0 %v860
  %6428 = vmatprep.subr.bf16.mxu0 %v869
  %6429 = vmatpush1.bf16.msra.mxu0 %v868
  %6430 = vmatprep.subr.bf16.mxu0 %v877
  %6431 = vmatpush1.bf16.msra.mxu0 %v876
  %6432 = vmatprep.subr.bf16.mxu0 %v885
  %6433 = vmatpush1.bf16.msra.mxu0 %v884
  %6434 = vmatprep.subr.bf16.mxu0 %v893
  %6435 = vmatpush1.bf16.msra.mxu0 %v892
  %6436 = vmatprep.mubr.bf16.mxu0 %v5791
  %6437 = vmatmul.mubr.bf16.gmra.mrb[0].mxu0 %v5790
  %v6438 = vpop.f32.mrb[0].mxu0
  %v6439 = vadd.f32 0.0, %v6438
  %v6440 = vpop.f32.mrb[0].mxu0
  %v6441 = vadd.f32 0.0, %v6440
  %v6442 = vpop.f32.mrb[0].mxu0
  %v6443 = vadd.f32 0.0, %v6442
  %v6444 = vpop.f32.mrb[0].mxu0
  %v6445 = vadd.f32 0.0, %v6444
  %6446 = vdwg.mxu0
  %v6447 = vadd.f32 %v6259, %v6310
  %v6448 = vadd.f32 %v6260, %v6312
  %v6449 = vadd.f32 %v6261, %v6353
  %v6450 = vadd.f32 %v6262, %v6355
  %v6451 = vadd.f32 %v6263, %v6396
  %v6452 = vadd.f32 %v6264, %v6398
  %v6453 = vadd.f32 %v6265, %v6439
  %v6454 = vadd.f32 %v6266, %v6441
  %v6455 = vadd.f32 %v6267, %v6314
  %v6456 = vadd.f32 %v6268, %v6316
  %v6457 = vadd.f32 %v6269, %v6357
  %v6458 = vadd.f32 %v6270, %v6359
  %v6459 = vadd.f32 %v6271, %v6400
  %v6460 = vadd.f32 %v6272, %v6402
  %v6461 = vadd.f32 %v6273, %v6443
  %v6462 = vadd.f32 %v6274, %v6445
  %v6463 = vxor.u32 %v6447, 2147483648
  %v6464 = vxor.u32 %v6448, 2147483648
  %v6465 = vxor.u32 %v6455, 2147483648
  %v6466 = vxor.u32 %v6456, 2147483648
  %v6467 = vmul.f32 %v6463, 1.442695
  %v6468 = vpow.pop %v6467
  %v6469 = vmul.f32 %v6464, 1.442695
  %v6470 = vpow.pop %v6469
  %v6471 = vmul.f32 %v6465, 1.442695
  %v6472 = vpow.pop %v6471
  %v6473 = vmul.f32 %v6466, 1.442695
  %v6474 = vpow.pop %v6473
  %v6475 = vadd.f32 %v6468, 1.0
  %v6476 = vadd.f32 %v6470, 1.0
  %v6477 = vadd.f32 %v6472, 1.0
  %v6478 = vadd.f32 %v6474, 1.0
  %v6479 = vrcp.pop %v6475
  %v6480 = vmul.f32 1.0, %v6479
  %v6481 = vrcp.pop %v6476
  %v6482 = vmul.f32 1.0, %v6481
  %v6483 = vrcp.pop %v6477
  %v6484 = vmul.f32 1.0, %v6483
  %v6485 = vrcp.pop %v6478
  %v6486 = vmul.f32 1.0, %v6485
  %v6487 = vxor.u32 %v6449, 2147483648
  %v6488 = vxor.u32 %v6450, 2147483648
  %v6489 = vxor.u32 %v6457, 2147483648
  %v6490 = vxor.u32 %v6458, 2147483648
  %v6491 = vmul.f32 %v6487, 1.442695
  %v6492 = vpow.pop %v6491
  %v6493 = vmul.f32 %v6488, 1.442695
  %v6494 = vpow.pop %v6493
  %v6495 = vmul.f32 %v6489, 1.442695
  %v6496 = vpow.pop %v6495
  %v6497 = vmul.f32 %v6490, 1.442695
  %v6498 = vpow.pop %v6497
  %v6499 = vadd.f32 %v6492, 1.0
  %v6500 = vadd.f32 %v6494, 1.0
  %v6501 = vadd.f32 %v6496, 1.0
  %v6502 = vadd.f32 %v6498, 1.0
  %v6503 = vrcp.pop %v6499
  %v6504 = vmul.f32 1.0, %v6503
  %v6505 = vrcp.pop %v6500
  %v6506 = vmul.f32 1.0, %v6505
  %v6507 = vrcp.pop %v6501
  %v6508 = vmul.f32 1.0, %v6507
  %v6509 = vrcp.pop %v6502
  %v6510 = vmul.f32 1.0, %v6509
  %v6511 = vtanh.pop %v6451
  %v6512 = vtanh.pop %v6452
  %v6513 = vtanh.pop %v6459
  %v6514 = vtanh.pop %v6460
  %v6515 = vxor.u32 %v6453, 2147483648
  %v6516 = vxor.u32 %v6454, 2147483648
  %v6517 = vxor.u32 %v6461, 2147483648
  %v6518 = vxor.u32 %v6462, 2147483648
  %v6519 = vmul.f32 %v6515, 1.442695
  %v6520 = vpow.pop %v6519
  %v6521 = vmul.f32 %v6516, 1.442695
  %v6522 = vpow.pop %v6521
  %v6523 = vmul.f32 %v6517, 1.442695
  %v6524 = vpow.pop %v6523
  %v6525 = vmul.f32 %v6518, 1.442695
  %v6526 = vpow.pop %v6525
  %v6527 = vadd.f32 %v6520, 1.0
  %v6528 = vadd.f32 %v6522, 1.0
  %v6529 = vadd.f32 %v6524, 1.0
  %v6530 = vadd.f32 %v6526, 1.0
  %v6531 = vrcp.pop %v6527
  %v6532 = vmul.f32 1.0, %v6531
  %v6533 = vrcp.pop %v6528
  %v6534 = vmul.f32 1.0, %v6533
  %v6535 = vrcp.pop %v6529
  %v6536 = vmul.f32 1.0, %v6535
  %v6537 = vrcp.pop %v6530
  %v6538 = vmul.f32 1.0, %v6537
  %v6539 = vmul.f32 %v6504, %v5778
  %v6540 = vmul.f32 %v6506, %v5779
  %v6541 = vmul.f32 %v6508, %v5780
  %v6542 = vmul.f32 %v6510, %v5781
  %v6543 = vmul.f32 %v6480, %v6511
  %v6544 = vmul.f32 %v6482, %v6512
  %v6545 = vmul.f32 %v6484, %v6513
  %v6546 = vmul.f32 %v6486, %v6514
  %v6547 = vadd.f32 %v6539, %v6543
  %v6548 = vadd.f32 %v6540, %v6544
  %v6549 = vadd.f32 %v6541, %v6545
  %v6550 = vadd.f32 %v6542, %v6546
  %v6551 = vtanh.pop %v6547
  %v6552 = vtanh.pop %v6548
  %v6553 = vtanh.pop %v6549
  %v6554 = vtanh.pop %v6550
  %v6555 = vmul.f32 %v6532, %v6551
  %v6556 = vmul.f32 %v6534, %v6552
  %v6557 = vmul.f32 %v6536, %v6553
  %v6558 = vmul.f32 %v6538, %v6554
  %v6559 = vpack.c.bf16 %v6557, %v6555
  %v6560 = vpack.c.bf16 %v6558, %v6556
  %6561 = vmatprep.subr.bf16.mxu0 %v1821
  %6562 = vmatpush1.bf16.msra.mxu0 %v1820
  %6563 = vmatprep.subr.bf16.mxu0 %v1829
  %6564 = vmatpush1.bf16.msra.mxu0 %v1828
  %6565 = vmatprep.subr.bf16.mxu0 %v1837
  %6566 = vmatpush1.bf16.msra.mxu0 %v1836
  %6567 = vmatprep.subr.bf16.mxu0 %v1845
  %6568 = vmatpush1.bf16.msra.mxu0 %v1844
  %6569 = vmatprep.subr.bf16.mxu0 %v1853
  %6570 = vmatpush1.bf16.msra.mxu0 %v1852
  %6571 = vmatprep.subr.bf16.mxu0 %v1861
  %6572 = vmatpush1.bf16.msra.mxu0 %v1860
  %6573 = vmatprep.subr.bf16.mxu0 %v1869
  %6574 = vmatpush1.bf16.msra.mxu0 %v1868
  %6575 = vmatprep.subr.bf16.mxu0 %v1877
  %6576 = vmatpush1.bf16.msra.mxu0 %v1876
  %6577 = vmatprep.subr.bf16.mxu0 %v1885
  %6578 = vmatpush1.bf16.msra.mxu0 %v1884
  %6579 = vmatprep.subr.bf16.mxu0 %v1893
  %6580 = vmatpush1.bf16.msra.mxu0 %v1892
  %6581 = vmatprep.subr.bf16.mxu0 %v1901
  %6582 = vmatpush1.bf16.msra.mxu0 %v1900
  %6583 = vmatprep.subr.bf16.mxu0 %v1909
  %6584 = vmatpush1.bf16.msra.mxu0 %v1908
  %6585 = vmatprep.subr.bf16.mxu0 %v1917
  %6586 = vmatpush1.bf16.msra.mxu0 %v1916
  %6587 = vmatprep.subr.bf16.mxu0 %v1925
  %6588 = vmatpush1.bf16.msra.mxu0 %v1924
  %6589 = vmatprep.subr.bf16.mxu0 %v1933
  %6590 = vmatpush1.bf16.msra.mxu0 %v1932
  %6591 = vmatprep.subr.bf16.mxu0 %v1941
  %6592 = vmatpush1.bf16.msra.mxu0 %v1940
  %6593 = vmatprep.mubr.bf16.mxu0 %v6560
  %6594 = vmatmul.mubr.bf16.gmra.mrb[0].mxu0 %v6559
  %v6595 = vpop.f32.mrb[0].mxu0
  %v6596 = vadd.f32 0.0, %v6595
  %v6597 = vpop.f32.mrb[0].mxu0
  %v6598 = vadd.f32 0.0, %v6597
  %v6599 = vpop.f32.mrb[0].mxu0
  %v6600 = vadd.f32 0.0, %v6599
  %v6601 = vpop.f32.mrb[0].mxu0
  %v6602 = vadd.f32 0.0, %v6601
  %6603 = vdwg.mxu0
  %6604 = vmatprep.subr.bf16.mxu0 %v1823
  %6605 = vmatpush1.bf16.msra.mxu0 %v1822
  %6606 = vmatprep.subr.bf16.mxu0 %v1831
  %6607 = vmatpush1.bf16.msra.mxu0 %v1830
  %6608 = vmatprep.subr.bf16.mxu0 %v1839
  %6609 = vmatpush1.bf16.msra.mxu0 %v1838
  %6610 = vmatprep.subr.bf16.mxu0 %v1847
  %6611 = vmatpush1.bf16.msra.mxu0 %v1846
  %6612 = vmatprep.subr.bf16.mxu0 %v1855
  %6613 = vmatpush1.bf16.msra.mxu0 %v1854
  %6614 = vmatprep.subr.bf16.mxu0 %v1863
  %6615 = vmatpush1.bf16.msra.mxu0 %v1862
  %6616 = vmatprep.subr.bf16.mxu0 %v1871
  %6617 = vmatpush1.bf16.msra.mxu0 %v1870
  %6618 = vmatprep.subr.bf16.mxu0 %v1879
  %6619 = vmatpush1.bf16.msra.mxu0 %v1878
  %6620 = vmatprep.subr.bf16.mxu0 %v1887
  %6621 = vmatpush1.bf16.msra.mxu0 %v1886
  %6622 = vmatprep.subr.bf16.mxu0 %v1895
  %6623 = vmatpush1.bf16.msra.mxu0 %v1894
  %6624 = vmatprep.subr.bf16.mxu0 %v1903
  %6625 = vmatpush1.bf16.msra.mxu0 %v1902
  %6626 = vmatprep.subr.bf16.mxu0 %v1911
  %6627 = vmatpush1.bf16.msra.mxu0 %v1910
  %6628 = vmatprep.subr.bf16.mxu0 %v1919
  %6629 = vmatpush1.bf16.msra.mxu0 %v1918
  %6630 = vmatprep.subr.bf16.mxu0 %v1927
  %6631 = vmatpush1.bf16.msra.mxu0 %v1926
  %6632 = vmatprep.subr.bf16.mxu0 %v1935
  %6633 = vmatpush1.bf16.msra.mxu0 %v1934
  %6634 = vmatprep.subr.bf16.mxu0 %v1943
  %6635 = vmatpush1.bf16.msra.mxu0 %v1942
  %6636 = vmatprep.mubr.bf16.mxu0 %v6560
  %6637 = vmatmul.mubr.bf16.gmra.mrb[0].mxu0 %v6559
  %v6638 = vpop.f32.mrb[0].mxu0
  %v6639 = vadd.f32 0.0, %v6638
  %v6640 = vpop.f32.mrb[0].mxu0
  %v6641 = vadd.f32 0.0, %v6640
  %v6642 = vpop.f32.mrb[0].mxu0
  %v6643 = vadd.f32 0.0, %v6642
  %v6644 = vpop.f32.mrb[0].mxu0
  %v6645 = vadd.f32 0.0, %v6644
  %6646 = vdwg.mxu0
  %6647 = vmatprep.subr.bf16.mxu0 %v1825
  %6648 = vmatpush1.bf16.msra.mxu0 %v1824
  %6649 = vmatprep.subr.bf16.mxu0 %v1833
  %6650 = vmatpush1.bf16.msra.mxu0 %v1832
  %6651 = vmatprep.subr.bf16.mxu0 %v1841
  %6652 = vmatpush1.bf16.msra.mxu0 %v1840
  %6653 = vmatprep.subr.bf16.mxu0 %v1849
  %6654 = vmatpush1.bf16.msra.mxu0 %v1848
  %6655 = vmatprep.subr.bf16.mxu0 %v1857
  %6656 = vmatpush1.bf16.msra.mxu0 %v1856
  %6657 = vmatprep.subr.bf16.mxu0 %v1865
  %6658 = vmatpush1.bf16.msra.mxu0 %v1864
  %6659 = vmatprep.subr.bf16.mxu0 %v1873
  %6660 = vmatpush1.bf16.msra.mxu0 %v1872
  %6661 = vmatprep.subr.bf16.mxu0 %v1881
  %6662 = vmatpush1.bf16.msra.mxu0 %v1880
  %6663 = vmatprep.subr.bf16.mxu0 %v1889
  %6664 = vmatpush1.bf16.msra.mxu0 %v1888
  %6665 = vmatprep.subr.bf16.mxu0 %v1897
  %6666 = vmatpush1.bf16.msra.mxu0 %v1896
  %6667 = vmatprep.subr.bf16.mxu0 %v1905
  %6668 = vmatpush1.bf16.msra.mxu0 %v1904
  %6669 = vmatprep.subr.bf16.mxu0 %v1913
  %6670 = vmatpush1.bf16.msra.mxu0 %v1912
  %6671 = vmatprep.subr.bf16.mxu0 %v1921
  %6672 = vmatpush1.bf16.msra.mxu0 %v1920
  %6673 = vmatprep.subr.bf16.mxu0 %v1929
  %6674 = vmatpush1.bf16.msra.mxu0 %v1928
  %6675 = vmatprep.subr.bf16.mxu0 %v1937
  %6676 = vmatpush1.bf16.msra.mxu0 %v1936
  %6677 = vmatprep.subr.bf16.mxu0 %v1945
  %6678 = vmatpush1.bf16.msra.mxu0 %v1944
  %6679 = vmatprep.mubr.bf16.mxu0 %v6560
  %6680 = vmatmul.mubr.bf16.gmra.mrb[0].mxu0 %v6559
  %v6681 = vpop.f32.mrb[0].mxu0
  %v6682 = vadd.f32 0.0, %v6681
  %v6683 = vpop.f32.mrb[0].mxu0
  %v6684 = vadd.f32 0.0, %v6683
  %v6685 = vpop.f32.mrb[0].mxu0
  %v6686 = vadd.f32 0.0, %v6685
  %v6687 = vpop.f32.mrb[0].mxu0
  %v6688 = vadd.f32 0.0, %v6687
  %6689 = vdwg.mxu0
  %6690 = vmatprep.subr.bf16.mxu0 %v1827
  %6691 = vmatpush1.bf16.msra.mxu0 %v1826
  %6692 = vmatprep.subr.bf16.mxu0 %v1835
  %6693 = vmatpush1.bf16.msra.mxu0 %v1834
  %6694 = vmatprep.subr.bf16.mxu0 %v1843
  %6695 = vmatpush1.bf16.msra.mxu0 %v1842
  %6696 = vmatprep.subr.bf16.mxu0 %v1851
  %6697 = vmatpush1.bf16.msra.mxu0 %v1850
  %6698 = vmatprep.subr.bf16.mxu0 %v1859
  %6699 = vmatpush1.bf16.msra.mxu0 %v1858
  %6700 = vmatprep.subr.bf16.mxu0 %v1867
  %6701 = vmatpush1.bf16.msra.mxu0 %v1866
  %6702 = vmatprep.subr.bf16.mxu0 %v1875
  %6703 = vmatpush1.bf16.msra.mxu0 %v1874
  %6704 = vmatprep.subr.bf16.mxu0 %v1883
  %6705 = vmatpush1.bf16.msra.mxu0 %v1882
  %6706 = vmatprep.subr.bf16.mxu0 %v1891
  %6707 = vmatpush1.bf16.msra.mxu0 %v1890
  %6708 = vmatprep.subr.bf16.mxu0 %v1899
  %6709 = vmatpush1.bf16.msra.mxu0 %v1898
  %6710 = vmatprep.subr.bf16.mxu0 %v1907
  %6711 = vmatpush1.bf16.msra.mxu0 %v1906
  %6712 = vmatprep.subr.bf16.mxu0 %v1915
  %6713 = vmatpush1.bf16.msra.mxu0 %v1914
  %6714 = vmatprep.subr.bf16.mxu0 %v1923
  %6715 = vmatpush1.bf16.msra.mxu0 %v1922
  %6716 = vmatprep.subr.bf16.mxu0 %v1931
  %6717 = vmatpush1.bf16.msra.mxu0 %v1930
  %6718 = vmatprep.subr.bf16.mxu0 %v1939
  %6719 = vmatpush1.bf16.msra.mxu0 %v1938
  %6720 = vmatprep.subr.bf16.mxu0 %v1947
  %6721 = vmatpush1.bf16.msra.mxu0 %v1946
  %6722 = vmatprep.mubr.bf16.mxu0 %v6560
  %6723 = vmatmul.mubr.bf16.gmra.mrb[0].mxu0 %v6559
  %v6724 = vpop.f32.mrb[0].mxu0
  %v6725 = vadd.f32 0.0, %v6724
  %v6726 = vpop.f32.mrb[0].mxu0
  %v6727 = vadd.f32 0.0, %v6726
  %v6728 = vpop.f32.mrb[0].mxu0
  %v6729 = vadd.f32 0.0, %v6728
  %v6730 = vpop.f32.mrb[0].mxu0
  %v6731 = vadd.f32 0.0, %v6730
  %6732 = vdwg.mxu0
  %6733 = vmatprep.subr.bf16.mxu0 %v2633
  %6734 = vmatpush1.bf16.msra.mxu0 %v2632
  %6735 = vmatprep.subr.bf16.mxu0 %v2641
  %6736 = vmatpush1.bf16.msra.mxu0 %v2640
  %6737 = vmatprep.subr.bf16.mxu0 %v2649
  %6738 = vmatpush1.bf16.msra.mxu0 %v2648
  %6739 = vmatprep.subr.bf16.mxu0 %v2657
  %6740 = vmatpush1.bf16.msra.mxu0 %v2656
  %6741 = vmatprep.subr.bf16.mxu0 %v2665
  %6742 = vmatpush1.bf16.msra.mxu0 %v2664
  %6743 = vmatprep.subr.bf16.mxu0 %v2673
  %6744 = vmatpush1.bf16.msra.mxu0 %v2672
  %6745 = vmatprep.subr.bf16.mxu0 %v2681
  %6746 = vmatpush1.bf16.msra.mxu0 %v2680
  %6747 = vmatprep.subr.bf16.mxu0 %v2689
  %6748 = vmatpush1.bf16.msra.mxu0 %v2688
  %6749 = vmatprep.subr.bf16.mxu0 %v2697
  %6750 = vmatpush1.bf16.msra.mxu0 %v2696
  %6751 = vmatprep.subr.bf16.mxu0 %v2705
  %6752 = vmatpush1.bf16.msra.mxu0 %v2704
  %6753 = vmatprep.subr.bf16.mxu0 %v2713
  %6754 = vmatpush1.bf16.msra.mxu0 %v2712
  %6755 = vmatprep.subr.bf16.mxu0 %v2721
  %6756 = vmatpush1.bf16.msra.mxu0 %v2720
  %6757 = vmatprep.subr.bf16.mxu0 %v2729
  %6758 = vmatpush1.bf16.msra.mxu0 %v2728
  %6759 = vmatprep.subr.bf16.mxu0 %v2737
  %6760 = vmatpush1.bf16.msra.mxu0 %v2736
  %6761 = vmatprep.subr.bf16.mxu0 %v2745
  %6762 = vmatpush1.bf16.msra.mxu0 %v2744
  %6763 = vmatprep.subr.bf16.mxu0 %v2753
  %6764 = vmatpush1.bf16.msra.mxu0 %v2752
  %6765 = vmatprep.mubr.bf16.mxu0 %v6249
  %6766 = vmatmul.mubr.bf16.gmra.mrb[0].mxu0 %v6248
  %v6767 = vpop.f32.mrb[0].mxu0
  %v6768 = vadd.f32 %v6596, %v6767
  %v6769 = vpop.f32.mrb[0].mxu0
  %v6770 = vadd.f32 %v6598, %v6769
  %v6771 = vpop.f32.mrb[0].mxu0
  %v6772 = vadd.f32 %v6600, %v6771
  %v6773 = vpop.f32.mrb[0].mxu0
  %v6774 = vadd.f32 %v6602, %v6773
  %6775 = vdwg.mxu0
  %6776 = vmatprep.subr.bf16.mxu0 %v2635
  %6777 = vmatpush1.bf16.msra.mxu0 %v2634
  %6778 = vmatprep.subr.bf16.mxu0 %v2643
  %6779 = vmatpush1.bf16.msra.mxu0 %v2642
  %6780 = vmatprep.subr.bf16.mxu0 %v2651
  %6781 = vmatpush1.bf16.msra.mxu0 %v2650
  %6782 = vmatprep.subr.bf16.mxu0 %v2659
  %6783 = vmatpush1.bf16.msra.mxu0 %v2658
  %6784 = vmatprep.subr.bf16.mxu0 %v2667
  %6785 = vmatpush1.bf16.msra.mxu0 %v2666
  %6786 = vmatprep.subr.bf16.mxu0 %v2675
  %6787 = vmatpush1.bf16.msra.mxu0 %v2674
  %6788 = vmatprep.subr.bf16.mxu0 %v2683
  %6789 = vmatpush1.bf16.msra.mxu0 %v2682
  %6790 = vmatprep.subr.bf16.mxu0 %v2691
  %6791 = vmatpush1.bf16.msra.mxu0 %v2690
  %6792 = vmatprep.subr.bf16.mxu0 %v2699
  %6793 = vmatpush1.bf16.msra.mxu0 %v2698
  %6794 = vmatprep.subr.bf16.mxu0 %v2707
  %6795 = vmatpush1.bf16.msra.mxu0 %v2706
  %6796 = vmatprep.subr.bf16.mxu0 %v2715
  %6797 = vmatpush1.bf16.msra.mxu0 %v2714
  %6798 = vmatprep.subr.bf16.mxu0 %v2723
  %6799 = vmatpush1.bf16.msra.mxu0 %v2722
  %6800 = vmatprep.subr.bf16.mxu0 %v2731
  %6801 = vmatpush1.bf16.msra.mxu0 %v2730
  %6802 = vmatprep.subr.bf16.mxu0 %v2739
  %6803 = vmatpush1.bf16.msra.mxu0 %v2738
  %6804 = vmatprep.subr.bf16.mxu0 %v2747
  %6805 = vmatpush1.bf16.msra.mxu0 %v2746
  %6806 = vmatprep.subr.bf16.mxu0 %v2755
  %6807 = vmatpush1.bf16.msra.mxu0 %v2754
  %6808 = vmatprep.mubr.bf16.mxu0 %v6249
  %6809 = vmatmul.mubr.bf16.gmra.mrb[0].mxu0 %v6248
  %v6810 = vpop.f32.mrb[0].mxu0
  %v6811 = vadd.f32 %v6639, %v6810
  %v6812 = vpop.f32.mrb[0].mxu0
  %v6813 = vadd.f32 %v6641, %v6812
  %v6814 = vpop.f32.mrb[0].mxu0
  %v6815 = vadd.f32 %v6643, %v6814
  %v6816 = vpop.f32.mrb[0].mxu0
  %v6817 = vadd.f32 %v6645, %v6816
  %6818 = vdwg.mxu0
  %6819 = vmatprep.subr.bf16.mxu0 %v2637
  %6820 = vmatpush1.bf16.msra.mxu0 %v2636
  %6821 = vmatprep.subr.bf16.mxu0 %v2645
  %6822 = vmatpush1.bf16.msra.mxu0 %v2644
  %6823 = vmatprep.subr.bf16.mxu0 %v2653
  %6824 = vmatpush1.bf16.msra.mxu0 %v2652
  %6825 = vmatprep.subr.bf16.mxu0 %v2661
  %6826 = vmatpush1.bf16.msra.mxu0 %v2660
  %6827 = vmatprep.subr.bf16.mxu0 %v2669
  %6828 = vmatpush1.bf16.msra.mxu0 %v2668
  %6829 = vmatprep.subr.bf16.mxu0 %v2677
  %6830 = vmatpush1.bf16.msra.mxu0 %v2676
  %6831 = vmatprep.subr.bf16.mxu0 %v2685
  %6832 = vmatpush1.bf16.msra.mxu0 %v2684
  %6833 = vmatprep.subr.bf16.mxu0 %v2693
  %6834 = vmatpush1.bf16.msra.mxu0 %v2692
  %6835 = vmatprep.subr.bf16.mxu0 %v2701
  %6836 = vmatpush1.bf16.msra.mxu0 %v2700
  %6837 = vmatprep.subr.bf16.mxu0 %v2709
  %6838 = vmatpush1.bf16.msra.mxu0 %v2708
  %6839 = vmatprep.subr.bf16.mxu0 %v2717
  %6840 = vmatpush1.bf16.msra.mxu0 %v2716
  %6841 = vmatprep.subr.bf16.mxu0 %v2725
  %6842 = vmatpush1.bf16.msra.mxu0 %v2724
  %6843 = vmatprep.subr.bf16.mxu0 %v2733
  %6844 = vmatpush1.bf16.msra.mxu0 %v2732
  %6845 = vmatprep.subr.bf16.mxu0 %v2741
  %6846 = vmatpush1.bf16.msra.mxu0 %v2740
  %6847 = vmatprep.subr.bf16.mxu0 %v2749
  %6848 = vmatpush1.bf16.msra.mxu0 %v2748
  %6849 = vmatprep.subr.bf16.mxu0 %v2757
  %6850 = vmatpush1.bf16.msra.mxu0 %v2756
  %6851 = vmatprep.mubr.bf16.mxu0 %v6249
  %6852 = vmatmul.mubr.bf16.gmra.mrb[0].mxu0 %v6248
  %v6853 = vpop.f32.mrb[0].mxu0
  %v6854 = vadd.f32 %v6682, %v6853
  %v6855 = vpop.f32.mrb[0].mxu0
  %v6856 = vadd.f32 %v6684, %v6855
  %v6857 = vpop.f32.mrb[0].mxu0
  %v6858 = vadd.f32 %v6686, %v6857
  %v6859 = vpop.f32.mrb[0].mxu0
  %v6860 = vadd.f32 %v6688, %v6859
  %6861 = vdwg.mxu0
  %6862 = vmatprep.subr.bf16.mxu0 %v2639
  %6863 = vmatpush1.bf16.msra.mxu0 %v2638
  %6864 = vmatprep.subr.bf16.mxu0 %v2647
  %6865 = vmatpush1.bf16.msra.mxu0 %v2646
  %6866 = vmatprep.subr.bf16.mxu0 %v2655
  %6867 = vmatpush1.bf16.msra.mxu0 %v2654
  %6868 = vmatprep.subr.bf16.mxu0 %v2663
  %6869 = vmatpush1.bf16.msra.mxu0 %v2662
  %6870 = vmatprep.subr.bf16.mxu0 %v2671
  %6871 = vmatpush1.bf16.msra.mxu0 %v2670
  %6872 = vmatprep.subr.bf16.mxu0 %v2679
  %6873 = vmatpush1.bf16.msra.mxu0 %v2678
  %6874 = vmatprep.subr.bf16.mxu0 %v2687
  %6875 = vmatpush1.bf16.msra.mxu0 %v2686
  %6876 = vmatprep.subr.bf16.mxu0 %v2695
  %6877 = vmatpush1.bf16.msra.mxu0 %v2694
  %6878 = vmatprep.subr.bf16.mxu0 %v2703
  %6879 = vmatpush1.bf16.msra.mxu0 %v2702
  %6880 = vmatprep.subr.bf16.mxu0 %v2711
  %6881 = vmatpush1.bf16.msra.mxu0 %v2710
  %6882 = vmatprep.subr.bf16.mxu0 %v2719
  %6883 = vmatpush1.bf16.msra.mxu0 %v2718
  %6884 = vmatprep.subr.bf16.mxu0 %v2727
  %6885 = vmatpush1.bf16.msra.mxu0 %v2726
  %6886 = vmatprep.subr.bf16.mxu0 %v2735
  %6887 = vmatpush1.bf16.msra.mxu0 %v2734
  %6888 = vmatprep.subr.bf16.mxu0 %v2743
  %6889 = vmatpush1.bf16.msra.mxu0 %v2742
  %6890 = vmatprep.subr.bf16.mxu0 %v2751
  %6891 = vmatpush1.bf16.msra.mxu0 %v2750
  %6892 = vmatprep.subr.bf16.mxu0 %v2759
  %6893 = vmatpush1.bf16.msra.mxu0 %v2758
  %6894 = vmatprep.mubr.bf16.mxu0 %v6249
  %6895 = vmatmul.mubr.bf16.gmra.mrb[0].mxu0 %v6248
  %v6896 = vpop.f32.mrb[0].mxu0
  %v6897 = vadd.f32 %v6725, %v6896
  %v6898 = vpop.f32.mrb[0].mxu0
  %v6899 = vadd.f32 %v6727, %v6898
  %v6900 = vpop.f32.mrb[0].mxu0
  %v6901 = vadd.f32 %v6729, %v6900
  %v6902 = vpop.f32.mrb[0].mxu0
  %v6903 = vadd.f32 %v6731, %v6902
  %6904 = vdwg.mxu0
  %v6905 = vadd.f32 %v6768, %v45
  %v6906 = vadd.f32 %v6770, %v49
  %v6907 = vadd.f32 %v6811, %v53
  %v6908 = vadd.f32 %v6813, %v57
  %v6909 = vadd.f32 %v6854, %v61
  %v6910 = vadd.f32 %v6856, %v65
  %v6911 = vadd.f32 %v6897, %v69
  %v6912 = vadd.f32 %v6899, %v73
  %v6913 = vadd.f32 %v6772, %v45
  %v6914 = vadd.f32 %v6774, %v49
  %v6915 = vadd.f32 %v6815, %v53
  %v6916 = vadd.f32 %v6817, %v57
  %v6917 = vadd.f32 %v6858, %v61
  %v6918 = vadd.f32 %v6860, %v65
  %v6919 = vadd.f32 %v6901, %v69
  %v6920 = vadd.f32 %v6903, %v73
  %v6921 = vxor.u32 %v6905, 2147483648
  %v6922 = vxor.u32 %v6906, 2147483648
  %v6923 = vxor.u32 %v6913, 2147483648
  %v6924 = vxor.u32 %v6914, 2147483648
  %v6925 = vmul.f32 %v6921, 1.442695
  %v6926 = vpow.pop %v6925
  %v6927 = vmul.f32 %v6922, 1.442695
  %v6928 = vpow.pop %v6927
  %v6929 = vmul.f32 %v6923, 1.442695
  %v6930 = vpow.pop %v6929
  %v6931 = vmul.f32 %v6924, 1.442695
  %v6932 = vpow.pop %v6931
  %v6933 = vadd.f32 %v6926, 1.0
  %v6934 = vadd.f32 %v6928, 1.0
  %v6935 = vadd.f32 %v6930, 1.0
  %v6936 = vadd.f32 %v6932, 1.0
  %v6937 = vrcp.pop %v6933
  %v6938 = vmul.f32 1.0, %v6937
  %v6939 = vrcp.pop %v6934
  %v6940 = vmul.f32 1.0, %v6939
  %v6941 = vrcp.pop %v6935
  %v6942 = vmul.f32 1.0, %v6941
  %v6943 = vrcp.pop %v6936
  %v6944 = vmul.f32 1.0, %v6943
  %v6945 = vxor.u32 %v6907, 2147483648
  %v6946 = vxor.u32 %v6908, 2147483648
  %v6947 = vxor.u32 %v6915, 2147483648
  %v6948 = vxor.u32 %v6916, 2147483648
  %v6949 = vmul.f32 %v6945, 1.442695
  %v6950 = vpow.pop %v6949
  %v6951 = vmul.f32 %v6946, 1.442695
  %v6952 = vpow.pop %v6951
  %v6953 = vmul.f32 %v6947, 1.442695
  %v6954 = vpow.pop %v6953
  %v6955 = vmul.f32 %v6948, 1.442695
  %v6956 = vpow.pop %v6955
  %v6957 = vadd.f32 %v6950, 1.0
  %v6958 = vadd.f32 %v6952, 1.0
  %v6959 = vadd.f32 %v6954, 1.0
  %v6960 = vadd.f32 %v6956, 1.0
  %v6961 = vrcp.pop %v6957
  %v6962 = vmul.f32 1.0, %v6961
  %v6963 = vrcp.pop %v6958
  %v6964 = vmul.f32 1.0, %v6963
  %v6965 = vrcp.pop %v6959
  %v6966 = vmul.f32 1.0, %v6965
  %v6967 = vrcp.pop %v6960
  %v6968 = vmul.f32 1.0, %v6967
  %v6969 = vtanh.pop %v6909
  %v6970 = vtanh.pop %v6910
  %v6971 = vtanh.pop %v6917
  %v6972 = vtanh.pop %v6918
  %v6973 = vxor.u32 %v6911, 2147483648
  %v6974 = vxor.u32 %v6912, 2147483648
  %v6975 = vxor.u32 %v6919, 2147483648
  %v6976 = vxor.u32 %v6920, 2147483648
  %v6977 = vmul.f32 %v6973, 1.442695
  %v6978 = vpow.pop %v6977
  %v6979 = vmul.f32 %v6974, 1.442695
  %v6980 = vpow.pop %v6979
  %v6981 = vmul.f32 %v6975, 1.442695
  %v6982 = vpow.pop %v6981
  %v6983 = vmul.f32 %v6976, 1.442695
  %v6984 = vpow.pop %v6983
  %v6985 = vadd.f32 %v6978, 1.0
  %v6986 = vadd.f32 %v6980, 1.0
  %v6987 = vadd.f32 %v6982, 1.0
  %v6988 = vadd.f32 %v6984, 1.0
  %v6989 = vrcp.pop %v6985
  %v6990 = vmul.f32 1.0, %v6989
  %v6991 = vrcp.pop %v6986
  %v6992 = vmul.f32 1.0, %v6991
  %v6993 = vrcp.pop %v6987
  %v6994 = vmul.f32 1.0, %v6993
  %v6995 = vrcp.pop %v6988
  %v6996 = vmul.f32 1.0, %v6995
  %v6997 = vmul.f32 %v6962, %v6236
  %v6998 = vmul.f32 %v6964, %v6237
  %v6999 = vmul.f32 %v6966, %v6238
  %v7000 = vmul.f32 %v6968, %v6239
  %v7001 = vmul.f32 %v6938, %v6969
  %v7002 = vmul.f32 %v6940, %v6970
  %v7003 = vmul.f32 %v6942, %v6971
  %v7004 = vmul.f32 %v6944, %v6972
  %v7005 = vadd.f32 %v6997, %v7001
  %v7006 = vadd.f32 %v6998, %v7002
  %v7007 = vadd.f32 %v6999, %v7003
  %v7008 = vadd.f32 %v7000, %v7004
  %v7009 = vtanh.pop %v7005
  %v7010 = vtanh.pop %v7006
  %v7011 = vtanh.pop %v7007
  %v7012 = vtanh.pop %v7008
  %v7013 = vmul.f32 %v6990, %v7009
  %v7014 = vmul.f32 %v6992, %v7010
  %v7015 = vmul.f32 %v6994, %v7011
  %v7016 = vmul.f32 %v6996, %v7012
  %v7017 = vpack.c.bf16 %v7015, %v7013
  %v7018 = vpack.c.bf16 %v7016, %v7014
  %s7019 = scalar_lea.vmem %s0, 384
  %v7020 = vld [vmem:[%s7019] sm:$0xff]
  %v7021 = vld [vmem:[%s7019 + $0x8] sm:$0xff]
  %v7022 = vld [vmem:[%s7019 + $0x10] sm:$0xff]
  %v7023 = vld [vmem:[%s7019 + $0x18] sm:$0xff]
  %v7024 = vld [vmem:[%s7019 + $0x20] sm:$0xff]
  %v7025 = vld [vmem:[%s7019 + $0x28] sm:$0xff]
  %v7026 = vld [vmem:[%s7019 + $0x30] sm:$0xff]
  %v7027 = vld [vmem:[%s7019 + $0x38] sm:$0xff]
  %v7028 = vunpack.c.l.bf16 %v7020
  %v7029 = vunpack.c.h.bf16 %v7020
  %v7030 = vunpack.c.l.bf16 %v7021
  %v7031 = vunpack.c.h.bf16 %v7021
  %v7032 = vunpack.c.l.bf16 %v7022
  %v7033 = vunpack.c.h.bf16 %v7022
  %v7034 = vunpack.c.l.bf16 %v7023
  %v7035 = vunpack.c.h.bf16 %v7023
  %v7036 = vunpack.c.l.bf16 %v7024
  %v7037 = vunpack.c.h.bf16 %v7024
  %v7038 = vunpack.c.l.bf16 %v7025
  %v7039 = vunpack.c.h.bf16 %v7025
  %v7040 = vunpack.c.l.bf16 %v7026
  %v7041 = vunpack.c.h.bf16 %v7026
  %v7042 = vunpack.c.l.bf16 %v7027
  %v7043 = vunpack.c.h.bf16 %v7027
  %7044 = vmatprep.subr.bf16.mxu0 %v767
  %7045 = vmatpush1.bf16.msra.mxu0 %v766
  %7046 = vmatprep.subr.bf16.mxu0 %v775
  %7047 = vmatpush1.bf16.msra.mxu0 %v774
  %7048 = vmatprep.subr.bf16.mxu0 %v783
  %7049 = vmatpush1.bf16.msra.mxu0 %v782
  %7050 = vmatprep.subr.bf16.mxu0 %v791
  %7051 = vmatpush1.bf16.msra.mxu0 %v790
  %7052 = vmatprep.subr.bf16.mxu0 %v799
  %7053 = vmatpush1.bf16.msra.mxu0 %v798
  %7054 = vmatprep.subr.bf16.mxu0 %v807
  %7055 = vmatpush1.bf16.msra.mxu0 %v806
  %7056 = vmatprep.subr.bf16.mxu0 %v815
  %7057 = vmatpush1.bf16.msra.mxu0 %v814
  %7058 = vmatprep.subr.bf16.mxu0 %v823
  %7059 = vmatpush1.bf16.msra.mxu0 %v822
  %7060 = vmatprep.subr.bf16.mxu0 %v831
  %7061 = vmatpush1.bf16.msra.mxu0 %v830
  %7062 = vmatprep.subr.bf16.mxu0 %v839
  %7063 = vmatpush1.bf16.msra.mxu0 %v838
  %7064 = vmatprep.subr.bf16.mxu0 %v847
  %7065 = vmatpush1.bf16.msra.mxu0 %v846
  %7066 = vmatprep.subr.bf16.mxu0 %v855
  %7067 = vmatpush1.bf16.msra.mxu0 %v854
  %7068 = vmatprep.subr.bf16.mxu0 %v863
  %7069 = vmatpush1.bf16.msra.mxu0 %v862
  %7070 = vmatprep.subr.bf16.mxu0 %v871
  %7071 = vmatpush1.bf16.msra.mxu0 %v870
  %7072 = vmatprep.subr.bf16.mxu0 %v879
  %7073 = vmatpush1.bf16.msra.mxu0 %v878
  %7074 = vmatprep.subr.bf16.mxu0 %v887
  %7075 = vmatpush1.bf16.msra.mxu0 %v886
  %7076 = vmatprep.mubr.bf16.mxu0 %v6560
  %7077 = vmatmul.mubr.bf16.gmra.mrb[0].mxu0 %v6559
  %v7078 = vpop.f32.mrb[0].mxu0
  %v7079 = vadd.f32 0.0, %v7078
  %v7080 = vpop.f32.mrb[0].mxu0
  %v7081 = vadd.f32 0.0, %v7080
  %v7082 = vpop.f32.mrb[0].mxu0
  %v7083 = vadd.f32 0.0, %v7082
  %v7084 = vpop.f32.mrb[0].mxu0
  %v7085 = vadd.f32 0.0, %v7084
  %7086 = vdwg.mxu0
  %7087 = vmatprep.subr.bf16.mxu0 %v769
  %7088 = vmatpush1.bf16.msra.mxu0 %v768
  %7089 = vmatprep.subr.bf16.mxu0 %v777
  %7090 = vmatpush1.bf16.msra.mxu0 %v776
  %7091 = vmatprep.subr.bf16.mxu0 %v785
  %7092 = vmatpush1.bf16.msra.mxu0 %v784
  %7093 = vmatprep.subr.bf16.mxu0 %v793
  %7094 = vmatpush1.bf16.msra.mxu0 %v792
  %7095 = vmatprep.subr.bf16.mxu0 %v801
  %7096 = vmatpush1.bf16.msra.mxu0 %v800
  %7097 = vmatprep.subr.bf16.mxu0 %v809
  %7098 = vmatpush1.bf16.msra.mxu0 %v808
  %7099 = vmatprep.subr.bf16.mxu0 %v817
  %7100 = vmatpush1.bf16.msra.mxu0 %v816
  %7101 = vmatprep.subr.bf16.mxu0 %v825
  %7102 = vmatpush1.bf16.msra.mxu0 %v824
  %7103 = vmatprep.subr.bf16.mxu0 %v833
  %7104 = vmatpush1.bf16.msra.mxu0 %v832
  %7105 = vmatprep.subr.bf16.mxu0 %v841
  %7106 = vmatpush1.bf16.msra.mxu0 %v840
  %7107 = vmatprep.subr.bf16.mxu0 %v849
  %7108 = vmatpush1.bf16.msra.mxu0 %v848
  %7109 = vmatprep.subr.bf16.mxu0 %v857
  %7110 = vmatpush1.bf16.msra.mxu0 %v856
  %7111 = vmatprep.subr.bf16.mxu0 %v865
  %7112 = vmatpush1.bf16.msra.mxu0 %v864
  %7113 = vmatprep.subr.bf16.mxu0 %v873
  %7114 = vmatpush1.bf16.msra.mxu0 %v872
  %7115 = vmatprep.subr.bf16.mxu0 %v881
  %7116 = vmatpush1.bf16.msra.mxu0 %v880
  %7117 = vmatprep.subr.bf16.mxu0 %v889
  %7118 = vmatpush1.bf16.msra.mxu0 %v888
  %7119 = vmatprep.mubr.bf16.mxu0 %v6560
  %7120 = vmatmul.mubr.bf16.gmra.mrb[0].mxu0 %v6559
  %v7121 = vpop.f32.mrb[0].mxu0
  %v7122 = vadd.f32 0.0, %v7121
  %v7123 = vpop.f32.mrb[0].mxu0
  %v7124 = vadd.f32 0.0, %v7123
  %v7125 = vpop.f32.mrb[0].mxu0
  %v7126 = vadd.f32 0.0, %v7125
  %v7127 = vpop.f32.mrb[0].mxu0
  %v7128 = vadd.f32 0.0, %v7127
  %7129 = vdwg.mxu0
  %7130 = vmatprep.subr.bf16.mxu0 %v771
  %7131 = vmatpush1.bf16.msra.mxu0 %v770
  %7132 = vmatprep.subr.bf16.mxu0 %v779
  %7133 = vmatpush1.bf16.msra.mxu0 %v778
  %7134 = vmatprep.subr.bf16.mxu0 %v787
  %7135 = vmatpush1.bf16.msra.mxu0 %v786
  %7136 = vmatprep.subr.bf16.mxu0 %v795
  %7137 = vmatpush1.bf16.msra.mxu0 %v794
  %7138 = vmatprep.subr.bf16.mxu0 %v803
  %7139 = vmatpush1.bf16.msra.mxu0 %v802
  %7140 = vmatprep.subr.bf16.mxu0 %v811
  %7141 = vmatpush1.bf16.msra.mxu0 %v810
  %7142 = vmatprep.subr.bf16.mxu0 %v819
  %7143 = vmatpush1.bf16.msra.mxu0 %v818
  %7144 = vmatprep.subr.bf16.mxu0 %v827
  %7145 = vmatpush1.bf16.msra.mxu0 %v826
  %7146 = vmatprep.subr.bf16.mxu0 %v835
  %7147 = vmatpush1.bf16.msra.mxu0 %v834
  %7148 = vmatprep.subr.bf16.mxu0 %v843
  %7149 = vmatpush1.bf16.msra.mxu0 %v842
  %7150 = vmatprep.subr.bf16.mxu0 %v851
  %7151 = vmatpush1.bf16.msra.mxu0 %v850
  %7152 = vmatprep.subr.bf16.mxu0 %v859
  %7153 = vmatpush1.bf16.msra.mxu0 %v858
  %7154 = vmatprep.subr.bf16.mxu0 %v867
  %7155 = vmatpush1.bf16.msra.mxu0 %v866
  %7156 = vmatprep.subr.bf16.mxu0 %v875
  %7157 = vmatpush1.bf16.msra.mxu0 %v874
  %7158 = vmatprep.subr.bf16.mxu0 %v883
  %7159 = vmatpush1.bf16.msra.mxu0 %v882
  %7160 = vmatprep.subr.bf16.mxu0 %v891
  %7161 = vmatpush1.bf16.msra.mxu0 %v890
  %7162 = vmatprep.mubr.bf16.mxu0 %v6560
  %7163 = vmatmul.mubr.bf16.gmra.mrb[0].mxu0 %v6559
  %v7164 = vpop.f32.mrb[0].mxu0
  %v7165 = vadd.f32 0.0, %v7164
  %v7166 = vpop.f32.mrb[0].mxu0
  %v7167 = vadd.f32 0.0, %v7166
  %v7168 = vpop.f32.mrb[0].mxu0
  %v7169 = vadd.f32 0.0, %v7168
  %v7170 = vpop.f32.mrb[0].mxu0
  %v7171 = vadd.f32 0.0, %v7170
  %7172 = vdwg.mxu0
  %7173 = vmatprep.subr.bf16.mxu0 %v773
  %7174 = vmatpush1.bf16.msra.mxu0 %v772
  %7175 = vmatprep.subr.bf16.mxu0 %v781
  %7176 = vmatpush1.bf16.msra.mxu0 %v780
  %7177 = vmatprep.subr.bf16.mxu0 %v789
  %7178 = vmatpush1.bf16.msra.mxu0 %v788
  %7179 = vmatprep.subr.bf16.mxu0 %v797
  %7180 = vmatpush1.bf16.msra.mxu0 %v796
  %7181 = vmatprep.subr.bf16.mxu0 %v805
  %7182 = vmatpush1.bf16.msra.mxu0 %v804
  %7183 = vmatprep.subr.bf16.mxu0 %v813
  %7184 = vmatpush1.bf16.msra.mxu0 %v812
  %7185 = vmatprep.subr.bf16.mxu0 %v821
  %7186 = vmatpush1.bf16.msra.mxu0 %v820
  %7187 = vmatprep.subr.bf16.mxu0 %v829
  %7188 = vmatpush1.bf16.msra.mxu0 %v828
  %7189 = vmatprep.subr.bf16.mxu0 %v837
  %7190 = vmatpush1.bf16.msra.mxu0 %v836
  %7191 = vmatprep.subr.bf16.mxu0 %v845
  %7192 = vmatpush1.bf16.msra.mxu0 %v844
  %7193 = vmatprep.subr.bf16.mxu0 %v853
  %7194 = vmatpush1.bf16.msra.mxu0 %v852
  %7195 = vmatprep.subr.bf16.mxu0 %v861
  %7196 = vmatpush1.bf16.msra.mxu0 %v860
  %7197 = vmatprep.subr.bf16.mxu0 %v869
  %7198 = vmatpush1.bf16.msra.mxu0 %v868
  %7199 = vmatprep.subr.bf16.mxu0 %v877
  %7200 = vmatpush1.bf16.msra.mxu0 %v876
  %7201 = vmatprep.subr.bf16.mxu0 %v885
  %7202 = vmatpush1.bf16.msra.mxu0 %v884
  %7203 = vmatprep.subr.bf16.mxu0 %v893
  %7204 = vmatpush1.bf16.msra.mxu0 %v892
  %7205 = vmatprep.mubr.bf16.mxu0 %v6560
  %7206 = vmatmul.mubr.bf16.gmra.mrb[0].mxu0 %v6559
  %v7207 = vpop.f32.mrb[0].mxu0
  %v7208 = vadd.f32 0.0, %v7207
  %v7209 = vpop.f32.mrb[0].mxu0
  %v7210 = vadd.f32 0.0, %v7209
  %v7211 = vpop.f32.mrb[0].mxu0
  %v7212 = vadd.f32 0.0, %v7211
  %v7213 = vpop.f32.mrb[0].mxu0
  %v7214 = vadd.f32 0.0, %v7213
  %7215 = vdwg.mxu0
  %v7216 = vadd.f32 %v7028, %v7079
  %v7217 = vadd.f32 %v7029, %v7081
  %v7218 = vadd.f32 %v7030, %v7122
  %v7219 = vadd.f32 %v7031, %v7124
  %v7220 = vadd.f32 %v7032, %v7165
  %v7221 = vadd.f32 %v7033, %v7167
  %v7222 = vadd.f32 %v7034, %v7208
  %v7223 = vadd.f32 %v7035, %v7210
  %v7224 = vadd.f32 %v7036, %v7083
  %v7225 = vadd.f32 %v7037, %v7085
  %v7226 = vadd.f32 %v7038, %v7126
  %v7227 = vadd.f32 %v7039, %v7128
  %v7228 = vadd.f32 %v7040, %v7169
  %v7229 = vadd.f32 %v7041, %v7171
  %v7230 = vadd.f32 %v7042, %v7212
  %v7231 = vadd.f32 %v7043, %v7214
  %v7232 = vxor.u32 %v7216, 2147483648
  %v7233 = vxor.u32 %v7217, 2147483648
  %v7234 = vxor.u32 %v7224, 2147483648
  %v7235 = vxor.u32 %v7225, 2147483648
  %v7236 = vmul.f32 %v7232, 1.442695
  %v7237 = vpow.pop %v7236
  %v7238 = vmul.f32 %v7233, 1.442695
  %v7239 = vpow.pop %v7238
  %v7240 = vmul.f32 %v7234, 1.442695
  %v7241 = vpow.pop %v7240
  %v7242 = vmul.f32 %v7235, 1.442695
  %v7243 = vpow.pop %v7242
  %v7244 = vadd.f32 %v7237, 1.0
  %v7245 = vadd.f32 %v7239, 1.0
  %v7246 = vadd.f32 %v7241, 1.0
  %v7247 = vadd.f32 %v7243, 1.0
  %v7248 = vrcp.pop %v7244
  %v7249 = vmul.f32 1.0, %v7248
  %v7250 = vrcp.pop %v7245
  %v7251 = vmul.f32 1.0, %v7250
  %v7252 = vrcp.pop %v7246
  %v7253 = vmul.f32 1.0, %v7252
  %v7254 = vrcp.pop %v7247
  %v7255 = vmul.f32 1.0, %v7254
  %v7256 = vxor.u32 %v7218, 2147483648
  %v7257 = vxor.u32 %v7219, 2147483648
  %v7258 = vxor.u32 %v7226, 2147483648
  %v7259 = vxor.u32 %v7227, 2147483648
  %v7260 = vmul.f32 %v7256, 1.442695
  %v7261 = vpow.pop %v7260
  %v7262 = vmul.f32 %v7257, 1.442695
  %v7263 = vpow.pop %v7262
  %v7264 = vmul.f32 %v7258, 1.442695
  %v7265 = vpow.pop %v7264
  %v7266 = vmul.f32 %v7259, 1.442695
  %v7267 = vpow.pop %v7266
  %v7268 = vadd.f32 %v7261, 1.0
  %v7269 = vadd.f32 %v7263, 1.0
  %v7270 = vadd.f32 %v7265, 1.0
  %v7271 = vadd.f32 %v7267, 1.0
  %v7272 = vrcp.pop %v7268
  %v7273 = vmul.f32 1.0, %v7272
  %v7274 = vrcp.pop %v7269
  %v7275 = vmul.f32 1.0, %v7274
  %v7276 = vrcp.pop %v7270
  %v7277 = vmul.f32 1.0, %v7276
  %v7278 = vrcp.pop %v7271
  %v7279 = vmul.f32 1.0, %v7278
  %v7280 = vtanh.pop %v7220
  %v7281 = vtanh.pop %v7221
  %v7282 = vtanh.pop %v7228
  %v7283 = vtanh.pop %v7229
  %v7284 = vxor.u32 %v7222, 2147483648
  %v7285 = vxor.u32 %v7223, 2147483648
  %v7286 = vxor.u32 %v7230, 2147483648
  %v7287 = vxor.u32 %v7231, 2147483648
  %v7288 = vmul.f32 %v7284, 1.442695
  %v7289 = vpow.pop %v7288
  %v7290 = vmul.f32 %v7285, 1.442695
  %v7291 = vpow.pop %v7290
  %v7292 = vmul.f32 %v7286, 1.442695
  %v7293 = vpow.pop %v7292
  %v7294 = vmul.f32 %v7287, 1.442695
  %v7295 = vpow.pop %v7294
  %v7296 = vadd.f32 %v7289, 1.0
  %v7297 = vadd.f32 %v7291, 1.0
  %v7298 = vadd.f32 %v7293, 1.0
  %v7299 = vadd.f32 %v7295, 1.0
  %v7300 = vrcp.pop %v7296
  %v7301 = vmul.f32 1.0, %v7300
  %v7302 = vrcp.pop %v7297
  %v7303 = vmul.f32 1.0, %v7302
  %v7304 = vrcp.pop %v7298
  %v7305 = vmul.f32 1.0, %v7304
  %v7306 = vrcp.pop %v7299
  %v7307 = vmul.f32 1.0, %v7306
  %v7308 = vmul.f32 %v7273, %v6547
  %v7309 = vmul.f32 %v7275, %v6548
  %v7310 = vmul.f32 %v7277, %v6549
  %v7311 = vmul.f32 %v7279, %v6550
  %v7312 = vmul.f32 %v7249, %v7280
  %v7313 = vmul.f32 %v7251, %v7281
  %v7314 = vmul.f32 %v7253, %v7282
  %v7315 = vmul.f32 %v7255, %v7283
  %v7316 = vadd.f32 %v7308, %v7312
  %v7317 = vadd.f32 %v7309, %v7313
  %v7318 = vadd.f32 %v7310, %v7314
  %v7319 = vadd.f32 %v7311, %v7315
  %v7320 = vtanh.pop %v7316
  %v7321 = vtanh.pop %v7317
  %v7322 = vtanh.pop %v7318
  %v7323 = vtanh.pop %v7319
  %v7324 = vmul.f32 %v7301, %v7320
  %v7325 = vmul.f32 %v7303, %v7321
  %v7326 = vmul.f32 %v7305, %v7322
  %v7327 = vmul.f32 %v7307, %v7323
  %v7328 = vpack.c.bf16 %v7326, %v7324
  %v7329 = vpack.c.bf16 %v7327, %v7325
  %7330 = vmatprep.subr.bf16.mxu0 %v1821
  %7331 = vmatpush1.bf16.msra.mxu0 %v1820
  %7332 = vmatprep.subr.bf16.mxu0 %v1829
  %7333 = vmatpush1.bf16.msra.mxu0 %v1828
  %7334 = vmatprep.subr.bf16.mxu0 %v1837
  %7335 = vmatpush1.bf16.msra.mxu0 %v1836
  %7336 = vmatprep.subr.bf16.mxu0 %v1845
  %7337 = vmatpush1.bf16.msra.mxu0 %v1844
  %7338 = vmatprep.subr.bf16.mxu0 %v1853
  %7339 = vmatpush1.bf16.msra.mxu0 %v1852
  %7340 = vmatprep.subr.bf16.mxu0 %v1861
  %7341 = vmatpush1.bf16.msra.mxu0 %v1860
  %7342 = vmatprep.subr.bf16.mxu0 %v1869
  %7343 = vmatpush1.bf16.msra.mxu0 %v1868
  %7344 = vmatprep.subr.bf16.mxu0 %v1877
  %7345 = vmatpush1.bf16.msra.mxu0 %v1876
  %7346 = vmatprep.subr.bf16.mxu0 %v1885
  %7347 = vmatpush1.bf16.msra.mxu0 %v1884
  %7348 = vmatprep.subr.bf16.mxu0 %v1893
  %7349 = vmatpush1.bf16.msra.mxu0 %v1892
  %7350 = vmatprep.subr.bf16.mxu0 %v1901
  %7351 = vmatpush1.bf16.msra.mxu0 %v1900
  %7352 = vmatprep.subr.bf16.mxu0 %v1909
  %7353 = vmatpush1.bf16.msra.mxu0 %v1908
  %7354 = vmatprep.subr.bf16.mxu0 %v1917
  %7355 = vmatpush1.bf16.msra.mxu0 %v1916
  %7356 = vmatprep.subr.bf16.mxu0 %v1925
  %7357 = vmatpush1.bf16.msra.mxu0 %v1924
  %7358 = vmatprep.subr.bf16.mxu0 %v1933
  %7359 = vmatpush1.bf16.msra.mxu0 %v1932
  %7360 = vmatprep.subr.bf16.mxu0 %v1941
  %7361 = vmatpush1.bf16.msra.mxu0 %v1940
  %7362 = vmatprep.mubr.bf16.mxu0 %v7329
  %7363 = vmatmul.mubr.bf16.gmra.mrb[0].mxu0 %v7328
  %v7364 = vpop.f32.mrb[0].mxu0
  %v7365 = vadd.f32 0.0, %v7364
  %v7366 = vpop.f32.mrb[0].mxu0
  %v7367 = vadd.f32 0.0, %v7366
  %v7368 = vpop.f32.mrb[0].mxu0
  %v7369 = vadd.f32 0.0, %v7368
  %v7370 = vpop.f32.mrb[0].mxu0
  %v7371 = vadd.f32 0.0, %v7370
  %7372 = vdwg.mxu0
  %7373 = vmatprep.subr.bf16.mxu0 %v1823
  %7374 = vmatpush1.bf16.msra.mxu0 %v1822
  %7375 = vmatprep.subr.bf16.mxu0 %v1831
  %7376 = vmatpush1.bf16.msra.mxu0 %v1830
  %7377 = vmatprep.subr.bf16.mxu0 %v1839
  %7378 = vmatpush1.bf16.msra.mxu0 %v1838
  %7379 = vmatprep.subr.bf16.mxu0 %v1847
  %7380 = vmatpush1.bf16.msra.mxu0 %v1846
  %7381 = vmatprep.subr.bf16.mxu0 %v1855
  %7382 = vmatpush1.bf16.msra.mxu0 %v1854
  %7383 = vmatprep.subr.bf16.mxu0 %v1863
  %7384 = vmatpush1.bf16.msra.mxu0 %v1862
  %7385 = vmatprep.subr.bf16.mxu0 %v1871
  %7386 = vmatpush1.bf16.msra.mxu0 %v1870
  %7387 = vmatprep.subr.bf16.mxu0 %v1879
  %7388 = vmatpush1.bf16.msra.mxu0 %v1878
  %7389 = vmatprep.subr.bf16.mxu0 %v1887
  %7390 = vmatpush1.bf16.msra.mxu0 %v1886
  %7391 = vmatprep.subr.bf16.mxu0 %v1895
  %7392 = vmatpush1.bf16.msra.mxu0 %v1894
  %7393 = vmatprep.subr.bf16.mxu0 %v1903
  %7394 = vmatpush1.bf16.msra.mxu0 %v1902
  %7395 = vmatprep.subr.bf16.mxu0 %v1911
  %7396 = vmatpush1.bf16.msra.mxu0 %v1910
  %7397 = vmatprep.subr.bf16.mxu0 %v1919
  %7398 = vmatpush1.bf16.msra.mxu0 %v1918
  %7399 = vmatprep.subr.bf16.mxu0 %v1927
  %7400 = vmatpush1.bf16.msra.mxu0 %v1926
  %7401 = vmatprep.subr.bf16.mxu0 %v1935
  %7402 = vmatpush1.bf16.msra.mxu0 %v1934
  %7403 = vmatprep.subr.bf16.mxu0 %v1943
  %7404 = vmatpush1.bf16.msra.mxu0 %v1942
  %7405 = vmatprep.mubr.bf16.mxu0 %v7329
  %7406 = vmatmul.mubr.bf16.gmra.mrb[0].mxu0 %v7328
  %v7407 = vpop.f32.mrb[0].mxu0
  %v7408 = vadd.f32 0.0, %v7407
  %v7409 = vpop.f32.mrb[0].mxu0
  %v7410 = vadd.f32 0.0, %v7409
  %v7411 = vpop.f32.mrb[0].mxu0
  %v7412 = vadd.f32 0.0, %v7411
  %v7413 = vpop.f32.mrb[0].mxu0
  %v7414 = vadd.f32 0.0, %v7413
  %7415 = vdwg.mxu0
  %7416 = vmatprep.subr.bf16.mxu0 %v1825
  %7417 = vmatpush1.bf16.msra.mxu0 %v1824
  %7418 = vmatprep.subr.bf16.mxu0 %v1833
  %7419 = vmatpush1.bf16.msra.mxu0 %v1832
  %7420 = vmatprep.subr.bf16.mxu0 %v1841
  %7421 = vmatpush1.bf16.msra.mxu0 %v1840
  %7422 = vmatprep.subr.bf16.mxu0 %v1849
  %7423 = vmatpush1.bf16.msra.mxu0 %v1848
  %7424 = vmatprep.subr.bf16.mxu0 %v1857
  %7425 = vmatpush1.bf16.msra.mxu0 %v1856
  %7426 = vmatprep.subr.bf16.mxu0 %v1865
  %7427 = vmatpush1.bf16.msra.mxu0 %v1864
  %7428 = vmatprep.subr.bf16.mxu0 %v1873
  %7429 = vmatpush1.bf16.msra.mxu0 %v1872
  %7430 = vmatprep.subr.bf16.mxu0 %v1881
  %7431 = vmatpush1.bf16.msra.mxu0 %v1880
  %7432 = vmatprep.subr.bf16.mxu0 %v1889
  %7433 = vmatpush1.bf16.msra.mxu0 %v1888
  %7434 = vmatprep.subr.bf16.mxu0 %v1897
  %7435 = vmatpush1.bf16.msra.mxu0 %v1896
  %7436 = vmatprep.subr.bf16.mxu0 %v1905
  %7437 = vmatpush1.bf16.msra.mxu0 %v1904
  %7438 = vmatprep.subr.bf16.mxu0 %v1913
  %7439 = vmatpush1.bf16.msra.mxu0 %v1912
  %7440 = vmatprep.subr.bf16.mxu0 %v1921
  %7441 = vmatpush1.bf16.msra.mxu0 %v1920
  %7442 = vmatprep.subr.bf16.mxu0 %v1929
  %7443 = vmatpush1.bf16.msra.mxu0 %v1928
  %7444 = vmatprep.subr.bf16.mxu0 %v1937
  %7445 = vmatpush1.bf16.msra.mxu0 %v1936
  %7446 = vmatprep.subr.bf16.mxu0 %v1945
  %7447 = vmatpush1.bf16.msra.mxu0 %v1944
  %7448 = vmatprep.mubr.bf16.mxu0 %v7329
  %7449 = vmatmul.mubr.bf16.gmra.mrb[0].mxu0 %v7328
  %v7450 = vpop.f32.mrb[0].mxu0
  %v7451 = vadd.f32 0.0, %v7450
  %v7452 = vpop.f32.mrb[0].mxu0
  %v7453 = vadd.f32 0.0, %v7452
  %v7454 = vpop.f32.mrb[0].mxu0
  %v7455 = vadd.f32 0.0, %v7454
  %v7456 = vpop.f32.mrb[0].mxu0
  %v7457 = vadd.f32 0.0, %v7456
  %7458 = vdwg.mxu0
  %7459 = vmatprep.subr.bf16.mxu0 %v1827
  %7460 = vmatpush1.bf16.msra.mxu0 %v1826
  %7461 = vmatprep.subr.bf16.mxu0 %v1835
  %7462 = vmatpush1.bf16.msra.mxu0 %v1834
  %7463 = vmatprep.subr.bf16.mxu0 %v1843
  %7464 = vmatpush1.bf16.msra.mxu0 %v1842
  %7465 = vmatprep.subr.bf16.mxu0 %v1851
  %7466 = vmatpush1.bf16.msra.mxu0 %v1850
  %7467 = vmatprep.subr.bf16.mxu0 %v1859
  %7468 = vmatpush1.bf16.msra.mxu0 %v1858
  %7469 = vmatprep.subr.bf16.mxu0 %v1867
  %7470 = vmatpush1.bf16.msra.mxu0 %v1866
  %7471 = vmatprep.subr.bf16.mxu0 %v1875
  %7472 = vmatpush1.bf16.msra.mxu0 %v1874
  %7473 = vmatprep.subr.bf16.mxu0 %v1883
  %7474 = vmatpush1.bf16.msra.mxu0 %v1882
  %7475 = vmatprep.subr.bf16.mxu0 %v1891
  %7476 = vmatpush1.bf16.msra.mxu0 %v1890
  %7477 = vmatprep.subr.bf16.mxu0 %v1899
  %7478 = vmatpush1.bf16.msra.mxu0 %v1898
  %7479 = vmatprep.subr.bf16.mxu0 %v1907
  %7480 = vmatpush1.bf16.msra.mxu0 %v1906
  %7481 = vmatprep.subr.bf16.mxu0 %v1915
  %7482 = vmatpush1.bf16.msra.mxu0 %v1914
  %7483 = vmatprep.subr.bf16.mxu0 %v1923
  %7484 = vmatpush1.bf16.msra.mxu0 %v1922
  %7485 = vmatprep.subr.bf16.mxu0 %v1931
  %7486 = vmatpush1.bf16.msra.mxu0 %v1930
  %7487 = vmatprep.subr.bf16.mxu0 %v1939
  %7488 = vmatpush1.bf16.msra.mxu0 %v1938
  %7489 = vmatprep.subr.bf16.mxu0 %v1947
  %7490 = vmatpush1.bf16.msra.mxu0 %v1946
  %7491 = vmatprep.mubr.bf16.mxu0 %v7329
  %7492 = vmatmul.mubr.bf16.gmra.mrb[0].mxu0 %v7328
  %v7493 = vpop.f32.mrb[0].mxu0
  %v7494 = vadd.f32 0.0, %v7493
  %v7495 = vpop.f32.mrb[0].mxu0
  %v7496 = vadd.f32 0.0, %v7495
  %v7497 = vpop.f32.mrb[0].mxu0
  %v7498 = vadd.f32 0.0, %v7497
  %v7499 = vpop.f32.mrb[0].mxu0
  %v7500 = vadd.f32 0.0, %v7499
  %7501 = vdwg.mxu0
  %7502 = vmatprep.subr.bf16.mxu0 %v2633
  %7503 = vmatpush1.bf16.msra.mxu0 %v2632
  %7504 = vmatprep.subr.bf16.mxu0 %v2641
  %7505 = vmatpush1.bf16.msra.mxu0 %v2640
  %7506 = vmatprep.subr.bf16.mxu0 %v2649
  %7507 = vmatpush1.bf16.msra.mxu0 %v2648
  %7508 = vmatprep.subr.bf16.mxu0 %v2657
  %7509 = vmatpush1.bf16.msra.mxu0 %v2656
  %7510 = vmatprep.subr.bf16.mxu0 %v2665
  %7511 = vmatpush1.bf16.msra.mxu0 %v2664
  %7512 = vmatprep.subr.bf16.mxu0 %v2673
  %7513 = vmatpush1.bf16.msra.mxu0 %v2672
  %7514 = vmatprep.subr.bf16.mxu0 %v2681
  %7515 = vmatpush1.bf16.msra.mxu0 %v2680
  %7516 = vmatprep.subr.bf16.mxu0 %v2689
  %7517 = vmatpush1.bf16.msra.mxu0 %v2688
  %7518 = vmatprep.subr.bf16.mxu0 %v2697
  %7519 = vmatpush1.bf16.msra.mxu0 %v2696
  %7520 = vmatprep.subr.bf16.mxu0 %v2705
  %7521 = vmatpush1.bf16.msra.mxu0 %v2704
  %7522 = vmatprep.subr.bf16.mxu0 %v2713
  %7523 = vmatpush1.bf16.msra.mxu0 %v2712
  %7524 = vmatprep.subr.bf16.mxu0 %v2721
  %7525 = vmatpush1.bf16.msra.mxu0 %v2720
  %7526 = vmatprep.subr.bf16.mxu0 %v2729
  %7527 = vmatpush1.bf16.msra.mxu0 %v2728
  %7528 = vmatprep.subr.bf16.mxu0 %v2737
  %7529 = vmatpush1.bf16.msra.mxu0 %v2736
  %7530 = vmatprep.subr.bf16.mxu0 %v2745
  %7531 = vmatpush1.bf16.msra.mxu0 %v2744
  %7532 = vmatprep.subr.bf16.mxu0 %v2753
  %7533 = vmatpush1.bf16.msra.mxu0 %v2752
  %7534 = vmatprep.mubr.bf16.mxu0 %v7018
  %7535 = vmatmul.mubr.bf16.gmra.mrb[0].mxu0 %v7017
  %v7536 = vpop.f32.mrb[0].mxu0
  %v7537 = vadd.f32 %v7365, %v7536
  %v7538 = vpop.f32.mrb[0].mxu0
  %v7539 = vadd.f32 %v7367, %v7538
  %v7540 = vpop.f32.mrb[0].mxu0
  %v7541 = vadd.f32 %v7369, %v7540
  %v7542 = vpop.f32.mrb[0].mxu0
  %v7543 = vadd.f32 %v7371, %v7542
  %7544 = vdwg.mxu0
  %7545 = vmatprep.subr.bf16.mxu0 %v2635
  %7546 = vmatpush1.bf16.msra.mxu0 %v2634
  %7547 = vmatprep.subr.bf16.mxu0 %v2643
  %7548 = vmatpush1.bf16.msra.mxu0 %v2642
  %7549 = vmatprep.subr.bf16.mxu0 %v2651
  %7550 = vmatpush1.bf16.msra.mxu0 %v2650
  %7551 = vmatprep.subr.bf16.mxu0 %v2659
  %7552 = vmatpush1.bf16.msra.mxu0 %v2658
  %7553 = vmatprep.subr.bf16.mxu0 %v2667
  %7554 = vmatpush1.bf16.msra.mxu0 %v2666
  %7555 = vmatprep.subr.bf16.mxu0 %v2675
  %7556 = vmatpush1.bf16.msra.mxu0 %v2674
  %7557 = vmatprep.subr.bf16.mxu0 %v2683
  %7558 = vmatpush1.bf16.msra.mxu0 %v2682
  %7559 = vmatprep.subr.bf16.mxu0 %v2691
  %7560 = vmatpush1.bf16.msra.mxu0 %v2690
  %7561 = vmatprep.subr.bf16.mxu0 %v2699
  %7562 = vmatpush1.bf16.msra.mxu0 %v2698
  %7563 = vmatprep.subr.bf16.mxu0 %v2707
  %7564 = vmatpush1.bf16.msra.mxu0 %v2706
  %7565 = vmatprep.subr.bf16.mxu0 %v2715
  %7566 = vmatpush1.bf16.msra.mxu0 %v2714
  %7567 = vmatprep.subr.bf16.mxu0 %v2723
  %7568 = vmatpush1.bf16.msra.mxu0 %v2722
  %7569 = vmatprep.subr.bf16.mxu0 %v2731
  %7570 = vmatpush1.bf16.msra.mxu0 %v2730
  %7571 = vmatprep.subr.bf16.mxu0 %v2739
  %7572 = vmatpush1.bf16.msra.mxu0 %v2738
  %7573 = vmatprep.subr.bf16.mxu0 %v2747
  %7574 = vmatpush1.bf16.msra.mxu0 %v2746
  %7575 = vmatprep.subr.bf16.mxu0 %v2755
  %7576 = vmatpush1.bf16.msra.mxu0 %v2754
  %7577 = vmatprep.mubr.bf16.mxu0 %v7018
  %7578 = vmatmul.mubr.bf16.gmra.mrb[0].mxu0 %v7017
  %v7579 = vpop.f32.mrb[0].mxu0
  %v7580 = vadd.f32 %v7408, %v7579
  %v7581 = vpop.f32.mrb[0].mxu0
  %v7582 = vadd.f32 %v7410, %v7581
  %v7583 = vpop.f32.mrb[0].mxu0
  %v7584 = vadd.f32 %v7412, %v7583
  %v7585 = vpop.f32.mrb[0].mxu0
  %v7586 = vadd.f32 %v7414, %v7585
  %7587 = vdwg.mxu0
  %7588 = vmatprep.subr.bf16.mxu0 %v2637
  %7589 = vmatpush1.bf16.msra.mxu0 %v2636
  %7590 = vmatprep.subr.bf16.mxu0 %v2645
  %7591 = vmatpush1.bf16.msra.mxu0 %v2644
  %7592 = vmatprep.subr.bf16.mxu0 %v2653
  %7593 = vmatpush1.bf16.msra.mxu0 %v2652
  %7594 = vmatprep.subr.bf16.mxu0 %v2661
  %7595 = vmatpush1.bf16.msra.mxu0 %v2660
  %7596 = vmatprep.subr.bf16.mxu0 %v2669
  %7597 = vmatpush1.bf16.msra.mxu0 %v2668
  %7598 = vmatprep.subr.bf16.mxu0 %v2677
  %7599 = vmatpush1.bf16.msra.mxu0 %v2676
  %7600 = vmatprep.subr.bf16.mxu0 %v2685
  %7601 = vmatpush1.bf16.msra.mxu0 %v2684
  %7602 = vmatprep.subr.bf16.mxu0 %v2693
  %7603 = vmatpush1.bf16.msra.mxu0 %v2692
  %7604 = vmatprep.subr.bf16.mxu0 %v2701
  %7605 = vmatpush1.bf16.msra.mxu0 %v2700
  %7606 = vmatprep.subr.bf16.mxu0 %v2709
  %7607 = vmatpush1.bf16.msra.mxu0 %v2708
  %7608 = vmatprep.subr.bf16.mxu0 %v2717
  %7609 = vmatpush1.bf16.msra.mxu0 %v2716
  %7610 = vmatprep.subr.bf16.mxu0 %v2725
  %7611 = vmatpush1.bf16.msra.mxu0 %v2724
  %7612 = vmatprep.subr.bf16.mxu0 %v2733
  %7613 = vmatpush1.bf16.msra.mxu0 %v2732
  %7614 = vmatprep.subr.bf16.mxu0 %v2741
  %7615 = vmatpush1.bf16.msra.mxu0 %v2740
  %7616 = vmatprep.subr.bf16.mxu0 %v2749
  %7617 = vmatpush1.bf16.msra.mxu0 %v2748
  %7618 = vmatprep.subr.bf16.mxu0 %v2757
  %7619 = vmatpush1.bf16.msra.mxu0 %v2756
  %7620 = vmatprep.mubr.bf16.mxu0 %v7018
  %7621 = vmatmul.mubr.bf16.gmra.mrb[0].mxu0 %v7017
  %v7622 = vpop.f32.mrb[0].mxu0
  %v7623 = vadd.f32 %v7451, %v7622
  %v7624 = vpop.f32.mrb[0].mxu0
  %v7625 = vadd.f32 %v7453, %v7624
  %v7626 = vpop.f32.mrb[0].mxu0
  %v7627 = vadd.f32 %v7455, %v7626
  %v7628 = vpop.f32.mrb[0].mxu0
  %v7629 = vadd.f32 %v7457, %v7628
  %7630 = vdwg.mxu0
  %7631 = vmatprep.subr.bf16.mxu0 %v2639
  %7632 = vmatpush1.bf16.msra.mxu0 %v2638
  %7633 = vmatprep.subr.bf16.mxu0 %v2647
  %7634 = vmatpush1.bf16.msra.mxu0 %v2646
  %7635 = vmatprep.subr.bf16.mxu0 %v2655
  %7636 = vmatpush1.bf16.msra.mxu0 %v2654
  %7637 = vmatprep.subr.bf16.mxu0 %v2663
  %7638 = vmatpush1.bf16.msra.mxu0 %v2662
  %7639 = vmatprep.subr.bf16.mxu0 %v2671
  %7640 = vmatpush1.bf16.msra.mxu0 %v2670
  %7641 = vmatprep.subr.bf16.mxu0 %v2679
  %7642 = vmatpush1.bf16.msra.mxu0 %v2678
  %7643 = vmatprep.subr.bf16.mxu0 %v2687
  %7644 = vmatpush1.bf16.msra.mxu0 %v2686
  %7645 = vmatprep.subr.bf16.mxu0 %v2695
  %7646 = vmatpush1.bf16.msra.mxu0 %v2694
  %7647 = vmatprep.subr.bf16.mxu0 %v2703
  %7648 = vmatpush1.bf16.msra.mxu0 %v2702
  %7649 = vmatprep.subr.bf16.mxu0 %v2711
  %7650 = vmatpush1.bf16.msra.mxu0 %v2710
  %7651 = vmatprep.subr.bf16.mxu0 %v2719
  %7652 = vmatpush1.bf16.msra.mxu0 %v2718
  %7653 = vmatprep.subr.bf16.mxu0 %v2727
  %7654 = vmatpush1.bf16.msra.mxu0 %v2726
  %7655 = vmatprep.subr.bf16.mxu0 %v2735
  %7656 = vmatpush1.bf16.msra.mxu0 %v2734
  %7657 = vmatprep.subr.bf16.mxu0 %v2743
  %7658 = vmatpush1.bf16.msra.mxu0 %v2742
  %7659 = vmatprep.subr.bf16.mxu0 %v2751
  %7660 = vmatpush1.bf16.msra.mxu0 %v2750
  %7661 = vmatprep.subr.bf16.mxu0 %v2759
  %7662 = vmatpush1.bf16.msra.mxu0 %v2758
  %7663 = vmatprep.mubr.bf16.mxu0 %v7018
  %7664 = vmatmul.mubr.bf16.gmra.mrb[0].mxu0 %v7017
  %v7665 = vpop.f32.mrb[0].mxu0
  %v7666 = vadd.f32 %v7494, %v7665
  %v7667 = vpop.f32.mrb[0].mxu0
  %v7668 = vadd.f32 %v7496, %v7667
  %v7669 = vpop.f32.mrb[0].mxu0
  %v7670 = vadd.f32 %v7498, %v7669
  %v7671 = vpop.f32.mrb[0].mxu0
  %v7672 = vadd.f32 %v7500, %v7671
  %7673 = vdwg.mxu0
  %v7674 = vadd.f32 %v7537, %v45
  %v7675 = vadd.f32 %v7539, %v49
  %v7676 = vadd.f32 %v7580, %v53
  %v7677 = vadd.f32 %v7582, %v57
  %v7678 = vadd.f32 %v7623, %v61
  %v7679 = vadd.f32 %v7625, %v65
  %v7680 = vadd.f32 %v7666, %v69
  %v7681 = vadd.f32 %v7668, %v73
  %v7682 = vadd.f32 %v7541, %v45
  %v7683 = vadd.f32 %v7543, %v49
  %v7684 = vadd.f32 %v7584, %v53
  %v7685 = vadd.f32 %v7586, %v57
  %v7686 = vadd.f32 %v7627, %v61
  %v7687 = vadd.f32 %v7629, %v65
  %v7688 = vadd.f32 %v7670, %v69
  %v7689 = vadd.f32 %v7672, %v73
  %v7690 = vxor.u32 %v7674, 2147483648
  %v7691 = vxor.u32 %v7675, 2147483648
  %v7692 = vxor.u32 %v7682, 2147483648
  %v7693 = vxor.u32 %v7683, 2147483648
  %v7694 = vmul.f32 %v7690, 1.442695
  %v7695 = vpow.pop %v7694
  %v7696 = vmul.f32 %v7691, 1.442695
  %v7697 = vpow.pop %v7696
  %v7698 = vmul.f32 %v7692, 1.442695
  %v7699 = vpow.pop %v7698
  %v7700 = vmul.f32 %v7693, 1.442695
  %v7701 = vpow.pop %v7700
  %v7702 = vadd.f32 %v7695, 1.0
  %v7703 = vadd.f32 %v7697, 1.0
  %v7704 = vadd.f32 %v7699, 1.0
  %v7705 = vadd.f32 %v7701, 1.0
  %v7706 = vrcp.pop %v7702
  %v7707 = vmul.f32 1.0, %v7706
  %v7708 = vrcp.pop %v7703
  %v7709 = vmul.f32 1.0, %v7708
  %v7710 = vrcp.pop %v7704
  %v7711 = vmul.f32 1.0, %v7710
  %v7712 = vrcp.pop %v7705
  %v7713 = vmul.f32 1.0, %v7712
  %v7714 = vxor.u32 %v7676, 2147483648
  %v7715 = vxor.u32 %v7677, 2147483648
  %v7716 = vxor.u32 %v7684, 2147483648
  %v7717 = vxor.u32 %v7685, 2147483648
  %v7718 = vmul.f32 %v7714, 1.442695
  %v7719 = vpow.pop %v7718
  %v7720 = vmul.f32 %v7715, 1.442695
  %v7721 = vpow.pop %v7720
  %v7722 = vmul.f32 %v7716, 1.442695
  %v7723 = vpow.pop %v7722
  %v7724 = vmul.f32 %v7717, 1.442695
  %v7725 = vpow.pop %v7724
  %v7726 = vadd.f32 %v7719, 1.0
  %v7727 = vadd.f32 %v7721, 1.0
  %v7728 = vadd.f32 %v7723, 1.0
  %v7729 = vadd.f32 %v7725, 1.0
  %v7730 = vrcp.pop %v7726
  %v7731 = vmul.f32 1.0, %v7730
  %v7732 = vrcp.pop %v7727
  %v7733 = vmul.f32 1.0, %v7732
  %v7734 = vrcp.pop %v7728
  %v7735 = vmul.f32 1.0, %v7734
  %v7736 = vrcp.pop %v7729
  %v7737 = vmul.f32 1.0, %v7736
  %v7738 = vtanh.pop %v7678
  %v7739 = vtanh.pop %v7679
  %v7740 = vtanh.pop %v7686
  %v7741 = vtanh.pop %v7687
  %v7742 = vxor.u32 %v7680, 2147483648
  %v7743 = vxor.u32 %v7681, 2147483648
  %v7744 = vxor.u32 %v7688, 2147483648
  %v7745 = vxor.u32 %v7689, 2147483648
  %v7746 = vmul.f32 %v7742, 1.442695
  %v7747 = vpow.pop %v7746
  %v7748 = vmul.f32 %v7743, 1.442695
  %v7749 = vpow.pop %v7748
  %v7750 = vmul.f32 %v7744, 1.442695
  %v7751 = vpow.pop %v7750
  %v7752 = vmul.f32 %v7745, 1.442695
  %v7753 = vpow.pop %v7752
  %v7754 = vadd.f32 %v7747, 1.0
  %v7755 = vadd.f32 %v7749, 1.0
  %v7756 = vadd.f32 %v7751, 1.0
  %v7757 = vadd.f32 %v7753, 1.0
  %v7758 = vrcp.pop %v7754
  %v7759 = vmul.f32 1.0, %v7758
  %v7760 = vrcp.pop %v7755
  %v7761 = vmul.f32 1.0, %v7760
  %v7762 = vrcp.pop %v7756
  %v7763 = vmul.f32 1.0, %v7762
  %v7764 = vrcp.pop %v7757
  %v7765 = vmul.f32 1.0, %v7764
  %v7766 = vmul.f32 %v7731, %v7005
  %v7767 = vmul.f32 %v7733, %v7006
  %v7768 = vmul.f32 %v7735, %v7007
  %v7769 = vmul.f32 %v7737, %v7008
  %v7770 = vmul.f32 %v7707, %v7738
  %v7771 = vmul.f32 %v7709, %v7739
  %v7772 = vmul.f32 %v7711, %v7740
  %v7773 = vmul.f32 %v7713, %v7741
  %v7774 = vadd.f32 %v7766, %v7770
  %v7775 = vadd.f32 %v7767, %v7771
  %v7776 = vadd.f32 %v7768, %v7772
  %v7777 = vadd.f32 %v7769, %v7773
  %v7778 = vtanh.pop %v7774
  %v7779 = vtanh.pop %v7775
  %v7780 = vtanh.pop %v7776
  %v7781 = vtanh.pop %v7777
  %v7782 = vmul.f32 %v7759, %v7778
  %v7783 = vmul.f32 %v7761, %v7779
  %v7784 = vmul.f32 %v7763, %v7780
  %v7785 = vmul.f32 %v7765, %v7781
  %v7786 = vpack.c.bf16 %v7784, %v7782
  %v7787 = vpack.c.bf16 %v7785, %v7783
  %s7788 = scalar_lea.vmem %s0, 448
  %v7789 = vld [vmem:[%s7788] sm:$0xff]
  %v7790 = vld [vmem:[%s7788 + $0x8] sm:$0xff]
  %v7791 = vld [vmem:[%s7788 + $0x10] sm:$0xff]
  %v7792 = vld [vmem:[%s7788 + $0x18] sm:$0xff]
  %v7793 = vld [vmem:[%s7788 + $0x20] sm:$0xff]
  %v7794 = vld [vmem:[%s7788 + $0x28] sm:$0xff]
  %v7795 = vld [vmem:[%s7788 + $0x30] sm:$0xff]
  %v7796 = vld [vmem:[%s7788 + $0x38] sm:$0xff]
  %v7797 = vunpack.c.l.bf16 %v7789
  %v7798 = vunpack.c.h.bf16 %v7789
  %v7799 = vunpack.c.l.bf16 %v7790
  %v7800 = vunpack.c.h.bf16 %v7790
  %v7801 = vunpack.c.l.bf16 %v7791
  %v7802 = vunpack.c.h.bf16 %v7791
  %v7803 = vunpack.c.l.bf16 %v7792
  %v7804 = vunpack.c.h.bf16 %v7792
  %v7805 = vunpack.c.l.bf16 %v7793
  %v7806 = vunpack.c.h.bf16 %v7793
  %v7807 = vunpack.c.l.bf16 %v7794
  %v7808 = vunpack.c.h.bf16 %v7794
  %v7809 = vunpack.c.l.bf16 %v7795
  %v7810 = vunpack.c.h.bf16 %v7795
  %v7811 = vunpack.c.l.bf16 %v7796
  %v7812 = vunpack.c.h.bf16 %v7796
  %7813 = vmatprep.subr.bf16.mxu0 %v767
  %7814 = vmatpush1.bf16.msra.mxu0 %v766
  %7815 = vmatprep.subr.bf16.mxu0 %v775
  %7816 = vmatpush1.bf16.msra.mxu0 %v774
  %7817 = vmatprep.subr.bf16.mxu0 %v783
  %7818 = vmatpush1.bf16.msra.mxu0 %v782
  %7819 = vmatprep.subr.bf16.mxu0 %v791
  %7820 = vmatpush1.bf16.msra.mxu0 %v790
  %7821 = vmatprep.subr.bf16.mxu0 %v799
  %7822 = vmatpush1.bf16.msra.mxu0 %v798
  %7823 = vmatprep.subr.bf16.mxu0 %v807
  %7824 = vmatpush1.bf16.msra.mxu0 %v806
  %7825 = vmatprep.subr.bf16.mxu0 %v815
  %7826 = vmatpush1.bf16.msra.mxu0 %v814
  %7827 = vmatprep.subr.bf16.mxu0 %v823
  %7828 = vmatpush1.bf16.msra.mxu0 %v822
  %7829 = vmatprep.subr.bf16.mxu0 %v831
  %7830 = vmatpush1.bf16.msra.mxu0 %v830
  %7831 = vmatprep.subr.bf16.mxu0 %v839
  %7832 = vmatpush1.bf16.msra.mxu0 %v838
  %7833 = vmatprep.subr.bf16.mxu0 %v847
  %7834 = vmatpush1.bf16.msra.mxu0 %v846
  %7835 = vmatprep.subr.bf16.mxu0 %v855
  %7836 = vmatpush1.bf16.msra.mxu0 %v854
  %7837 = vmatprep.subr.bf16.mxu0 %v863
  %7838 = vmatpush1.bf16.msra.mxu0 %v862
  %7839 = vmatprep.subr.bf16.mxu0 %v871
  %7840 = vmatpush1.bf16.msra.mxu0 %v870
  %7841 = vmatprep.subr.bf16.mxu0 %v879
  %7842 = vmatpush1.bf16.msra.mxu0 %v878
  %7843 = vmatprep.subr.bf16.mxu0 %v887
  %7844 = vmatpush1.bf16.msra.mxu0 %v886
  %7845 = vmatprep.mubr.bf16.mxu0 %v7329
  %7846 = vmatmul.mubr.bf16.gmra.mrb[0].mxu0 %v7328
  %v7847 = vpop.f32.mrb[0].mxu0
  %v7848 = vadd.f32 0.0, %v7847
  %v7849 = vpop.f32.mrb[0].mxu0
  %v7850 = vadd.f32 0.0, %v7849
  %v7851 = vpop.f32.mrb[0].mxu0
  %v7852 = vadd.f32 0.0, %v7851
  %v7853 = vpop.f32.mrb[0].mxu0
  %v7854 = vadd.f32 0.0, %v7853
  %7855 = vdwg.mxu0
  %7856 = vmatprep.subr.bf16.mxu0 %v769
  %7857 = vmatpush1.bf16.msra.mxu0 %v768
  %7858 = vmatprep.subr.bf16.mxu0 %v777
  %7859 = vmatpush1.bf16.msra.mxu0 %v776
  %7860 = vmatprep.subr.bf16.mxu0 %v785
  %7861 = vmatpush1.bf16.msra.mxu0 %v784
  %7862 = vmatprep.subr.bf16.mxu0 %v793
  %7863 = vmatpush1.bf16.msra.mxu0 %v792
  %7864 = vmatprep.subr.bf16.mxu0 %v801
  %7865 = vmatpush1.bf16.msra.mxu0 %v800
  %7866 = vmatprep.subr.bf16.mxu0 %v809
  %7867 = vmatpush1.bf16.msra.mxu0 %v808
  %7868 = vmatprep.subr.bf16.mxu0 %v817
  %7869 = vmatpush1.bf16.msra.mxu0 %v816
  %7870 = vmatprep.subr.bf16.mxu0 %v825
  %7871 = vmatpush1.bf16.msra.mxu0 %v824
  %7872 = vmatprep.subr.bf16.mxu0 %v833
  %7873 = vmatpush1.bf16.msra.mxu0 %v832
  %7874 = vmatprep.subr.bf16.mxu0 %v841
  %7875 = vmatpush1.bf16.msra.mxu0 %v840
  %7876 = vmatprep.subr.bf16.mxu0 %v849
  %7877 = vmatpush1.bf16.msra.mxu0 %v848
  %7878 = vmatprep.subr.bf16.mxu0 %v857
  %7879 = vmatpush1.bf16.msra.mxu0 %v856
  %7880 = vmatprep.subr.bf16.mxu0 %v865
  %7881 = vmatpush1.bf16.msra.mxu0 %v864
  %7882 = vmatprep.subr.bf16.mxu0 %v873
  %7883 = vmatpush1.bf16.msra.mxu0 %v872
  %7884 = vmatprep.subr.bf16.mxu0 %v881
  %7885 = vmatpush1.bf16.msra.mxu0 %v880
  %7886 = vmatprep.subr.bf16.mxu0 %v889
  %7887 = vmatpush1.bf16.msra.mxu0 %v888
  %7888 = vmatprep.mubr.bf16.mxu0 %v7329
  %7889 = vmatmul.mubr.bf16.gmra.mrb[0].mxu0 %v7328
  %v7890 = vpop.f32.mrb[0].mxu0
  %v7891 = vadd.f32 0.0, %v7890
  %v7892 = vpop.f32.mrb[0].mxu0
  %v7893 = vadd.f32 0.0, %v7892
  %v7894 = vpop.f32.mrb[0].mxu0
  %v7895 = vadd.f32 0.0, %v7894
  %v7896 = vpop.f32.mrb[0].mxu0
  %v7897 = vadd.f32 0.0, %v7896
  %7898 = vdwg.mxu0
  %7899 = vmatprep.subr.bf16.mxu0 %v771
  %7900 = vmatpush1.bf16.msra.mxu0 %v770
  %7901 = vmatprep.subr.bf16.mxu0 %v779
  %7902 = vmatpush1.bf16.msra.mxu0 %v778
  %7903 = vmatprep.subr.bf16.mxu0 %v787
  %7904 = vmatpush1.bf16.msra.mxu0 %v786
  %7905 = vmatprep.subr.bf16.mxu0 %v795
  %7906 = vmatpush1.bf16.msra.mxu0 %v794
  %7907 = vmatprep.subr.bf16.mxu0 %v803
  %7908 = vmatpush1.bf16.msra.mxu0 %v802
  %7909 = vmatprep.subr.bf16.mxu0 %v811
  %7910 = vmatpush1.bf16.msra.mxu0 %v810
  %7911 = vmatprep.subr.bf16.mxu0 %v819
  %7912 = vmatpush1.bf16.msra.mxu0 %v818
  %7913 = vmatprep.subr.bf16.mxu0 %v827
  %7914 = vmatpush1.bf16.msra.mxu0 %v826
  %7915 = vmatprep.subr.bf16.mxu0 %v835
  %7916 = vmatpush1.bf16.msra.mxu0 %v834
  %7917 = vmatprep.subr.bf16.mxu0 %v843
  %7918 = vmatpush1.bf16.msra.mxu0 %v842
  %7919 = vmatprep.subr.bf16.mxu0 %v851
  %7920 = vmatpush1.bf16.msra.mxu0 %v850
  %7921 = vmatprep.subr.bf16.mxu0 %v859
  %7922 = vmatpush1.bf16.msra.mxu0 %v858
  %7923 = vmatprep.subr.bf16.mxu0 %v867
  %7924 = vmatpush1.bf16.msra.mxu0 %v866
  %7925 = vmatprep.subr.bf16.mxu0 %v875
  %7926 = vmatpush1.bf16.msra.mxu0 %v874
  %7927 = vmatprep.subr.bf16.mxu0 %v883
  %7928 = vmatpush1.bf16.msra.mxu0 %v882
  %7929 = vmatprep.subr.bf16.mxu0 %v891
  %7930 = vmatpush1.bf16.msra.mxu0 %v890
  %7931 = vmatprep.mubr.bf16.mxu0 %v7329
  %7932 = vmatmul.mubr.bf16.gmra.mrb[0].mxu0 %v7328
  %v7933 = vpop.f32.mrb[0].mxu0
  %v7934 = vadd.f32 0.0, %v7933
  %v7935 = vpop.f32.mrb[0].mxu0
  %v7936 = vadd.f32 0.0, %v7935
  %v7937 = vpop.f32.mrb[0].mxu0
  %v7938 = vadd.f32 0.0, %v7937
  %v7939 = vpop.f32.mrb[0].mxu0
  %v7940 = vadd.f32 0.0, %v7939
  %7941 = vdwg.mxu0
  %7942 = vmatprep.subr.bf16.mxu0 %v773
  %7943 = vmatpush1.bf16.msra.mxu0 %v772
  %7944 = vmatprep.subr.bf16.mxu0 %v781
  %7945 = vmatpush1.bf16.msra.mxu0 %v780
  %7946 = vmatprep.subr.bf16.mxu0 %v789
  %7947 = vmatpush1.bf16.msra.mxu0 %v788
  %7948 = vmatprep.subr.bf16.mxu0 %v797
  %7949 = vmatpush1.bf16.msra.mxu0 %v796
  %7950 = vmatprep.subr.bf16.mxu0 %v805
  %7951 = vmatpush1.bf16.msra.mxu0 %v804
  %7952 = vmatprep.subr.bf16.mxu0 %v813
  %7953 = vmatpush1.bf16.msra.mxu0 %v812
  %7954 = vmatprep.subr.bf16.mxu0 %v821
  %7955 = vmatpush1.bf16.msra.mxu0 %v820
  %7956 = vmatprep.subr.bf16.mxu0 %v829
  %7957 = vmatpush1.bf16.msra.mxu0 %v828
  %7958 = vmatprep.subr.bf16.mxu0 %v837
  %7959 = vmatpush1.bf16.msra.mxu0 %v836
  %7960 = vmatprep.subr.bf16.mxu0 %v845
  %7961 = vmatpush1.bf16.msra.mxu0 %v844
  %7962 = vmatprep.subr.bf16.mxu0 %v853
  %7963 = vmatpush1.bf16.msra.mxu0 %v852
  %7964 = vmatprep.subr.bf16.mxu0 %v861
  %7965 = vmatpush1.bf16.msra.mxu0 %v860
  %7966 = vmatprep.subr.bf16.mxu0 %v869
  %7967 = vmatpush1.bf16.msra.mxu0 %v868
  %7968 = vmatprep.subr.bf16.mxu0 %v877
  %7969 = vmatpush1.bf16.msra.mxu0 %v876
  %7970 = vmatprep.subr.bf16.mxu0 %v885
  %7971 = vmatpush1.bf16.msra.mxu0 %v884
  %7972 = vmatprep.subr.bf16.mxu0 %v893
  %7973 = vmatpush1.bf16.msra.mxu0 %v892
  %7974 = vmatprep.mubr.bf16.mxu0 %v7329
  %7975 = vmatmul.mubr.bf16.gmra.mrb[0].mxu0 %v7328
  %v7976 = vpop.f32.mrb[0].mxu0
  %v7977 = vadd.f32 0.0, %v7976
  %v7978 = vpop.f32.mrb[0].mxu0
  %v7979 = vadd.f32 0.0, %v7978
  %v7980 = vpop.f32.mrb[0].mxu0
  %v7981 = vadd.f32 0.0, %v7980
  %v7982 = vpop.f32.mrb[0].mxu0
  %v7983 = vadd.f32 0.0, %v7982
  %7984 = vdwg.mxu0
  %v7985 = vadd.f32 %v7797, %v7848
  %v7986 = vadd.f32 %v7798, %v7850
  %v7987 = vadd.f32 %v7799, %v7891
  %v7988 = vadd.f32 %v7800, %v7893
  %v7989 = vadd.f32 %v7801, %v7934
  %v7990 = vadd.f32 %v7802, %v7936
  %v7991 = vadd.f32 %v7803, %v7977
  %v7992 = vadd.f32 %v7804, %v7979
  %v7993 = vadd.f32 %v7805, %v7852
  %v7994 = vadd.f32 %v7806, %v7854
  %v7995 = vadd.f32 %v7807, %v7895
  %v7996 = vadd.f32 %v7808, %v7897
  %v7997 = vadd.f32 %v7809, %v7938
  %v7998 = vadd.f32 %v7810, %v7940
  %v7999 = vadd.f32 %v7811, %v7981
  %v8000 = vadd.f32 %v7812, %v7983
  %v8001 = vxor.u32 %v7985, 2147483648
  %v8002 = vxor.u32 %v7986, 2147483648
  %v8003 = vxor.u32 %v7993, 2147483648
  %v8004 = vxor.u32 %v7994, 2147483648
  %v8005 = vmul.f32 %v8001, 1.442695
  %v8006 = vpow.pop %v8005
  %v8007 = vmul.f32 %v8002, 1.442695
  %v8008 = vpow.pop %v8007
  %v8009 = vmul.f32 %v8003, 1.442695
  %v8010 = vpow.pop %v8009
  %v8011 = vmul.f32 %v8004, 1.442695
  %v8012 = vpow.pop %v8011
  %v8013 = vadd.f32 %v8006, 1.0
  %v8014 = vadd.f32 %v8008, 1.0
  %v8015 = vadd.f32 %v8010, 1.0
  %v8016 = vadd.f32 %v8012, 1.0
  %v8017 = vrcp.pop %v8013
  %v8018 = vmul.f32 1.0, %v8017
  %v8019 = vrcp.pop %v8014
  %v8020 = vmul.f32 1.0, %v8019
  %v8021 = vrcp.pop %v8015
  %v8022 = vmul.f32 1.0, %v8021
  %v8023 = vrcp.pop %v8016
  %v8024 = vmul.f32 1.0, %v8023
  %v8025 = vxor.u32 %v7987, 2147483648
  %v8026 = vxor.u32 %v7988, 2147483648
  %v8027 = vxor.u32 %v7995, 2147483648
  %v8028 = vxor.u32 %v7996, 2147483648
  %v8029 = vmul.f32 %v8025, 1.442695
  %v8030 = vpow.pop %v8029
  %v8031 = vmul.f32 %v8026, 1.442695
  %v8032 = vpow.pop %v8031
  %v8033 = vmul.f32 %v8027, 1.442695
  %v8034 = vpow.pop %v8033
  %v8035 = vmul.f32 %v8028, 1.442695
  %v8036 = vpow.pop %v8035
  %v8037 = vadd.f32 %v8030, 1.0
  %v8038 = vadd.f32 %v8032, 1.0
  %v8039 = vadd.f32 %v8034, 1.0
  %v8040 = vadd.f32 %v8036, 1.0
  %v8041 = vrcp.pop %v8037
  %v8042 = vmul.f32 1.0, %v8041
  %v8043 = vrcp.pop %v8038
  %v8044 = vmul.f32 1.0, %v8043
  %v8045 = vrcp.pop %v8039
  %v8046 = vmul.f32 1.0, %v8045
  %v8047 = vrcp.pop %v8040
  %v8048 = vmul.f32 1.0, %v8047
  %v8049 = vtanh.pop %v7989
  %v8050 = vtanh.pop %v7990
  %v8051 = vtanh.pop %v7997
  %v8052 = vtanh.pop %v7998
  %v8053 = vxor.u32 %v7991, 2147483648
  %v8054 = vxor.u32 %v7992, 2147483648
  %v8055 = vxor.u32 %v7999, 2147483648
  %v8056 = vxor.u32 %v8000, 2147483648
  %v8057 = vmul.f32 %v8053, 1.442695
  %v8058 = vpow.pop %v8057
  %v8059 = vmul.f32 %v8054, 1.442695
  %v8060 = vpow.pop %v8059
  %v8061 = vmul.f32 %v8055, 1.442695
  %v8062 = vpow.pop %v8061
  %v8063 = vmul.f32 %v8056, 1.442695
  %v8064 = vpow.pop %v8063
  %v8065 = vadd.f32 %v8058, 1.0
  %v8066 = vadd.f32 %v8060, 1.0
  %v8067 = vadd.f32 %v8062, 1.0
  %v8068 = vadd.f32 %v8064, 1.0
  %v8069 = vrcp.pop %v8065
  %v8070 = vmul.f32 1.0, %v8069
  %v8071 = vrcp.pop %v8066
  %v8072 = vmul.f32 1.0, %v8071
  %v8073 = vrcp.pop %v8067
  %v8074 = vmul.f32 1.0, %v8073
  %v8075 = vrcp.pop %v8068
  %v8076 = vmul.f32 1.0, %v8075
  %v8077 = vmul.f32 %v8042, %v7316
  %v8078 = vmul.f32 %v8044, %v7317
  %v8079 = vmul.f32 %v8046, %v7318
  %v8080 = vmul.f32 %v8048, %v7319
  %v8081 = vmul.f32 %v8018, %v8049
  %v8082 = vmul.f32 %v8020, %v8050
  %v8083 = vmul.f32 %v8022, %v8051
  %v8084 = vmul.f32 %v8024, %v8052
  %v8085 = vadd.f32 %v8077, %v8081
  %v8086 = vadd.f32 %v8078, %v8082
  %v8087 = vadd.f32 %v8079, %v8083
  %v8088 = vadd.f32 %v8080, %v8084
  %v8089 = vtanh.pop %v8085
  %v8090 = vtanh.pop %v8086
  %v8091 = vtanh.pop %v8087
  %v8092 = vtanh.pop %v8088
  %v8093 = vmul.f32 %v8070, %v8089
  %v8094 = vmul.f32 %v8072, %v8090
  %v8095 = vmul.f32 %v8074, %v8091
  %v8096 = vmul.f32 %v8076, %v8092
  %v8097 = vpack.c.bf16 %v8095, %v8093
  %v8098 = vpack.c.bf16 %v8096, %v8094
  %8099 = vmatprep.subr.bf16.mxu0 %v1821
  %8100 = vmatpush1.bf16.msra.mxu0 %v1820
  %8101 = vmatprep.subr.bf16.mxu0 %v1829
  %8102 = vmatpush1.bf16.msra.mxu0 %v1828
  %8103 = vmatprep.subr.bf16.mxu0 %v1837
  %8104 = vmatpush1.bf16.msra.mxu0 %v1836
  %8105 = vmatprep.subr.bf16.mxu0 %v1845
  %8106 = vmatpush1.bf16.msra.mxu0 %v1844
  %8107 = vmatprep.subr.bf16.mxu0 %v1853
  %8108 = vmatpush1.bf16.msra.mxu0 %v1852
  %8109 = vmatprep.subr.bf16.mxu0 %v1861
  %8110 = vmatpush1.bf16.msra.mxu0 %v1860
  %8111 = vmatprep.subr.bf16.mxu0 %v1869
  %8112 = vmatpush1.bf16.msra.mxu0 %v1868
  %8113 = vmatprep.subr.bf16.mxu0 %v1877
  %8114 = vmatpush1.bf16.msra.mxu0 %v1876
  %8115 = vmatprep.subr.bf16.mxu0 %v1885
  %8116 = vmatpush1.bf16.msra.mxu0 %v1884
  %8117 = vmatprep.subr.bf16.mxu0 %v1893
  %8118 = vmatpush1.bf16.msra.mxu0 %v1892
  %8119 = vmatprep.subr.bf16.mxu0 %v1901
  %8120 = vmatpush1.bf16.msra.mxu0 %v1900
  %8121 = vmatprep.subr.bf16.mxu0 %v1909
  %8122 = vmatpush1.bf16.msra.mxu0 %v1908
  %8123 = vmatprep.subr.bf16.mxu0 %v1917
  %8124 = vmatpush1.bf16.msra.mxu0 %v1916
  %8125 = vmatprep.subr.bf16.mxu0 %v1925
  %8126 = vmatpush1.bf16.msra.mxu0 %v1924
  %8127 = vmatprep.subr.bf16.mxu0 %v1933
  %8128 = vmatpush1.bf16.msra.mxu0 %v1932
  %8129 = vmatprep.subr.bf16.mxu0 %v1941
  %8130 = vmatpush1.bf16.msra.mxu0 %v1940
  %8131 = vmatprep.mubr.bf16.mxu0 %v8098
  %8132 = vmatmul.mubr.bf16.gmra.mrb[0].mxu0 %v8097
  %v8133 = vpop.f32.mrb[0].mxu0
  %v8134 = vadd.f32 0.0, %v8133
  %v8135 = vpop.f32.mrb[0].mxu0
  %v8136 = vadd.f32 0.0, %v8135
  %v8137 = vpop.f32.mrb[0].mxu0
  %v8138 = vadd.f32 0.0, %v8137
  %v8139 = vpop.f32.mrb[0].mxu0
  %v8140 = vadd.f32 0.0, %v8139
  %8141 = vdwg.mxu0
  %8142 = vmatprep.subr.bf16.mxu0 %v1823
  %8143 = vmatpush1.bf16.msra.mxu0 %v1822
  %8144 = vmatprep.subr.bf16.mxu0 %v1831
  %8145 = vmatpush1.bf16.msra.mxu0 %v1830
  %8146 = vmatprep.subr.bf16.mxu0 %v1839
  %8147 = vmatpush1.bf16.msra.mxu0 %v1838
  %8148 = vmatprep.subr.bf16.mxu0 %v1847
  %8149 = vmatpush1.bf16.msra.mxu0 %v1846
  %8150 = vmatprep.subr.bf16.mxu0 %v1855
  %8151 = vmatpush1.bf16.msra.mxu0 %v1854
  %8152 = vmatprep.subr.bf16.mxu0 %v1863
  %8153 = vmatpush1.bf16.msra.mxu0 %v1862
  %8154 = vmatprep.subr.bf16.mxu0 %v1871
  %8155 = vmatpush1.bf16.msra.mxu0 %v1870
  %8156 = vmatprep.subr.bf16.mxu0 %v1879
  %8157 = vmatpush1.bf16.msra.mxu0 %v1878
  %8158 = vmatprep.subr.bf16.mxu0 %v1887
  %8159 = vmatpush1.bf16.msra.mxu0 %v1886
  %8160 = vmatprep.subr.bf16.mxu0 %v1895
  %8161 = vmatpush1.bf16.msra.mxu0 %v1894
  %8162 = vmatprep.subr.bf16.mxu0 %v1903
  %8163 = vmatpush1.bf16.msra.mxu0 %v1902
  %8164 = vmatprep.subr.bf16.mxu0 %v1911
  %8165 = vmatpush1.bf16.msra.mxu0 %v1910
  %8166 = vmatprep.subr.bf16.mxu0 %v1919
  %8167 = vmatpush1.bf16.msra.mxu0 %v1918
  %8168 = vmatprep.subr.bf16.mxu0 %v1927
  %8169 = vmatpush1.bf16.msra.mxu0 %v1926
  %8170 = vmatprep.subr.bf16.mxu0 %v1935
  %8171 = vmatpush1.bf16.msra.mxu0 %v1934
  %8172 = vmatprep.subr.bf16.mxu0 %v1943
  %8173 = vmatpush1.bf16.msra.mxu0 %v1942
  %8174 = vmatprep.mubr.bf16.mxu0 %v8098
  %8175 = vmatmul.mubr.bf16.gmra.mrb[0].mxu0 %v8097
  %v8176 = vpop.f32.mrb[0].mxu0
  %v8177 = vadd.f32 0.0, %v8176
  %v8178 = vpop.f32.mrb[0].mxu0
  %v8179 = vadd.f32 0.0, %v8178
  %v8180 = vpop.f32.mrb[0].mxu0
  %v8181 = vadd.f32 0.0, %v8180
  %v8182 = vpop.f32.mrb[0].mxu0
  %v8183 = vadd.f32 0.0, %v8182
  %8184 = vdwg.mxu0
  %8185 = vmatprep.subr.bf16.mxu0 %v1825
  %8186 = vmatpush1.bf16.msra.mxu0 %v1824
  %8187 = vmatprep.subr.bf16.mxu0 %v1833
  %8188 = vmatpush1.bf16.msra.mxu0 %v1832
  %8189 = vmatprep.subr.bf16.mxu0 %v1841
  %8190 = vmatpush1.bf16.msra.mxu0 %v1840
  %8191 = vmatprep.subr.bf16.mxu0 %v1849
  %8192 = vmatpush1.bf16.msra.mxu0 %v1848
  %8193 = vmatprep.subr.bf16.mxu0 %v1857
  %8194 = vmatpush1.bf16.msra.mxu0 %v1856
  %8195 = vmatprep.subr.bf16.mxu0 %v1865
  %8196 = vmatpush1.bf16.msra.mxu0 %v1864
  %8197 = vmatprep.subr.bf16.mxu0 %v1873
  %8198 = vmatpush1.bf16.msra.mxu0 %v1872
  %8199 = vmatprep.subr.bf16.mxu0 %v1881
  %8200 = vmatpush1.bf16.msra.mxu0 %v1880
  %8201 = vmatprep.subr.bf16.mxu0 %v1889
  %8202 = vmatpush1.bf16.msra.mxu0 %v1888
  %8203 = vmatprep.subr.bf16.mxu0 %v1897
  %8204 = vmatpush1.bf16.msra.mxu0 %v1896
  %8205 = vmatprep.subr.bf16.mxu0 %v1905
  %8206 = vmatpush1.bf16.msra.mxu0 %v1904
  %8207 = vmatprep.subr.bf16.mxu0 %v1913
  %8208 = vmatpush1.bf16.msra.mxu0 %v1912
  %8209 = vmatprep.subr.bf16.mxu0 %v1921
  %8210 = vmatpush1.bf16.msra.mxu0 %v1920
  %8211 = vmatprep.subr.bf16.mxu0 %v1929
  %8212 = vmatpush1.bf16.msra.mxu0 %v1928
  %8213 = vmatprep.subr.bf16.mxu0 %v1937
  %8214 = vmatpush1.bf16.msra.mxu0 %v1936
  %8215 = vmatprep.subr.bf16.mxu0 %v1945
  %8216 = vmatpush1.bf16.msra.mxu0 %v1944
  %8217 = vmatprep.mubr.bf16.mxu0 %v8098
  %8218 = vmatmul.mubr.bf16.gmra.mrb[0].mxu0 %v8097
  %v8219 = vpop.f32.mrb[0].mxu0
  %v8220 = vadd.f32 0.0, %v8219
  %v8221 = vpop.f32.mrb[0].mxu0
  %v8222 = vadd.f32 0.0, %v8221
  %v8223 = vpop.f32.mrb[0].mxu0
  %v8224 = vadd.f32 0.0, %v8223
  %v8225 = vpop.f32.mrb[0].mxu0
  %v8226 = vadd.f32 0.0, %v8225
  %8227 = vdwg.mxu0
  %8228 = vmatprep.subr.bf16.mxu0 %v1827
  %8229 = vmatpush1.bf16.msra.mxu0 %v1826
  %8230 = vmatprep.subr.bf16.mxu0 %v1835
  %8231 = vmatpush1.bf16.msra.mxu0 %v1834
  %8232 = vmatprep.subr.bf16.mxu0 %v1843
  %8233 = vmatpush1.bf16.msra.mxu0 %v1842
  %8234 = vmatprep.subr.bf16.mxu0 %v1851
  %8235 = vmatpush1.bf16.msra.mxu0 %v1850
  %8236 = vmatprep.subr.bf16.mxu0 %v1859
  %8237 = vmatpush1.bf16.msra.mxu0 %v1858
  %8238 = vmatprep.subr.bf16.mxu0 %v1867
  %8239 = vmatpush1.bf16.msra.mxu0 %v1866
  %8240 = vmatprep.subr.bf16.mxu0 %v1875
  %8241 = vmatpush1.bf16.msra.mxu0 %v1874
  %8242 = vmatprep.subr.bf16.mxu0 %v1883
  %8243 = vmatpush1.bf16.msra.mxu0 %v1882
  %8244 = vmatprep.subr.bf16.mxu0 %v1891
  %8245 = vmatpush1.bf16.msra.mxu0 %v1890
  %8246 = vmatprep.subr.bf16.mxu0 %v1899
  %8247 = vmatpush1.bf16.msra.mxu0 %v1898
  %8248 = vmatprep.subr.bf16.mxu0 %v1907
  %8249 = vmatpush1.bf16.msra.mxu0 %v1906
  %8250 = vmatprep.subr.bf16.mxu0 %v1915
  %8251 = vmatpush1.bf16.msra.mxu0 %v1914
  %8252 = vmatprep.subr.bf16.mxu0 %v1923
  %8253 = vmatpush1.bf16.msra.mxu0 %v1922
  %8254 = vmatprep.subr.bf16.mxu0 %v1931
  %8255 = vmatpush1.bf16.msra.mxu0 %v1930
  %8256 = vmatprep.subr.bf16.mxu0 %v1939
  %8257 = vmatpush1.bf16.msra.mxu0 %v1938
  %8258 = vmatprep.subr.bf16.mxu0 %v1947
  %8259 = vmatpush1.bf16.msra.mxu0 %v1946
  %8260 = vmatprep.mubr.bf16.mxu0 %v8098
  %8261 = vmatmul.mubr.bf16.gmra.mrb[0].mxu0 %v8097
  %v8262 = vpop.f32.mrb[0].mxu0
  %v8263 = vadd.f32 0.0, %v8262
  %v8264 = vpop.f32.mrb[0].mxu0
  %v8265 = vadd.f32 0.0, %v8264
  %v8266 = vpop.f32.mrb[0].mxu0
  %v8267 = vadd.f32 0.0, %v8266
  %v8268 = vpop.f32.mrb[0].mxu0
  %v8269 = vadd.f32 0.0, %v8268
  %8270 = vdwg.mxu0
  %8271 = vmatprep.subr.bf16.mxu0 %v2633
  %8272 = vmatpush1.bf16.msra.mxu0 %v2632
  %8273 = vmatprep.subr.bf16.mxu0 %v2641
  %8274 = vmatpush1.bf16.msra.mxu0 %v2640
  %8275 = vmatprep.subr.bf16.mxu0 %v2649
  %8276 = vmatpush1.bf16.msra.mxu0 %v2648
  %8277 = vmatprep.subr.bf16.mxu0 %v2657
  %8278 = vmatpush1.bf16.msra.mxu0 %v2656
  %8279 = vmatprep.subr.bf16.mxu0 %v2665
  %8280 = vmatpush1.bf16.msra.mxu0 %v2664
  %8281 = vmatprep.subr.bf16.mxu0 %v2673
  %8282 = vmatpush1.bf16.msra.mxu0 %v2672
  %8283 = vmatprep.subr.bf16.mxu0 %v2681
  %8284 = vmatpush1.bf16.msra.mxu0 %v2680
  %8285 = vmatprep.subr.bf16.mxu0 %v2689
  %8286 = vmatpush1.bf16.msra.mxu0 %v2688
  %8287 = vmatprep.subr.bf16.mxu0 %v2697
  %8288 = vmatpush1.bf16.msra.mxu0 %v2696
  %8289 = vmatprep.subr.bf16.mxu0 %v2705
  %8290 = vmatpush1.bf16.msra.mxu0 %v2704
  %8291 = vmatprep.subr.bf16.mxu0 %v2713
  %8292 = vmatpush1.bf16.msra.mxu0 %v2712
  %8293 = vmatprep.subr.bf16.mxu0 %v2721
  %8294 = vmatpush1.bf16.msra.mxu0 %v2720
  %8295 = vmatprep.subr.bf16.mxu0 %v2729
  %8296 = vmatpush1.bf16.msra.mxu0 %v2728
  %8297 = vmatprep.subr.bf16.mxu0 %v2737
  %8298 = vmatpush1.bf16.msra.mxu0 %v2736
  %8299 = vmatprep.subr.bf16.mxu0 %v2745
  %8300 = vmatpush1.bf16.msra.mxu0 %v2744
  %8301 = vmatprep.subr.bf16.mxu0 %v2753
  %8302 = vmatpush1.bf16.msra.mxu0 %v2752
  %8303 = vmatprep.mubr.bf16.mxu0 %v7787
  %8304 = vmatmul.mubr.bf16.gmra.mrb[0].mxu0 %v7786
  %v8305 = vpop.f32.mrb[0].mxu0
  %v8306 = vadd.f32 %v8134, %v8305
  %v8307 = vpop.f32.mrb[0].mxu0
  %v8308 = vadd.f32 %v8136, %v8307
  %v8309 = vpop.f32.mrb[0].mxu0
  %v8310 = vadd.f32 %v8138, %v8309
  %v8311 = vpop.f32.mrb[0].mxu0
  %v8312 = vadd.f32 %v8140, %v8311
  %8313 = vdwg.mxu0
  %8314 = vmatprep.subr.bf16.mxu0 %v2635
  %8315 = vmatpush1.bf16.msra.mxu0 %v2634
  %8316 = vmatprep.subr.bf16.mxu0 %v2643
  %8317 = vmatpush1.bf16.msra.mxu0 %v2642
  %8318 = vmatprep.subr.bf16.mxu0 %v2651
  %8319 = vmatpush1.bf16.msra.mxu0 %v2650
  %8320 = vmatprep.subr.bf16.mxu0 %v2659
  %8321 = vmatpush1.bf16.msra.mxu0 %v2658
  %8322 = vmatprep.subr.bf16.mxu0 %v2667
  %8323 = vmatpush1.bf16.msra.mxu0 %v2666
  %8324 = vmatprep.subr.bf16.mxu0 %v2675
  %8325 = vmatpush1.bf16.msra.mxu0 %v2674
  %8326 = vmatprep.subr.bf16.mxu0 %v2683
  %8327 = vmatpush1.bf16.msra.mxu0 %v2682
  %8328 = vmatprep.subr.bf16.mxu0 %v2691
  %8329 = vmatpush1.bf16.msra.mxu0 %v2690
  %8330 = vmatprep.subr.bf16.mxu0 %v2699
  %8331 = vmatpush1.bf16.msra.mxu0 %v2698
  %8332 = vmatprep.subr.bf16.mxu0 %v2707
  %8333 = vmatpush1.bf16.msra.mxu0 %v2706
  %8334 = vmatprep.subr.bf16.mxu0 %v2715
  %8335 = vmatpush1.bf16.msra.mxu0 %v2714
  %8336 = vmatprep.subr.bf16.mxu0 %v2723
  %8337 = vmatpush1.bf16.msra.mxu0 %v2722
  %8338 = vmatprep.subr.bf16.mxu0 %v2731
  %8339 = vmatpush1.bf16.msra.mxu0 %v2730
  %8340 = vmatprep.subr.bf16.mxu0 %v2739
  %8341 = vmatpush1.bf16.msra.mxu0 %v2738
  %8342 = vmatprep.subr.bf16.mxu0 %v2747
  %8343 = vmatpush1.bf16.msra.mxu0 %v2746
  %8344 = vmatprep.subr.bf16.mxu0 %v2755
  %8345 = vmatpush1.bf16.msra.mxu0 %v2754
  %8346 = vmatprep.mubr.bf16.mxu0 %v7787
  %8347 = vmatmul.mubr.bf16.gmra.mrb[0].mxu0 %v7786
  %v8348 = vpop.f32.mrb[0].mxu0
  %v8349 = vadd.f32 %v8177, %v8348
  %v8350 = vpop.f32.mrb[0].mxu0
  %v8351 = vadd.f32 %v8179, %v8350
  %v8352 = vpop.f32.mrb[0].mxu0
  %v8353 = vadd.f32 %v8181, %v8352
  %v8354 = vpop.f32.mrb[0].mxu0
  %v8355 = vadd.f32 %v8183, %v8354
  %8356 = vdwg.mxu0
  %8357 = vmatprep.subr.bf16.mxu0 %v2637
  %8358 = vmatpush1.bf16.msra.mxu0 %v2636
  %8359 = vmatprep.subr.bf16.mxu0 %v2645
  %8360 = vmatpush1.bf16.msra.mxu0 %v2644
  %8361 = vmatprep.subr.bf16.mxu0 %v2653
  %8362 = vmatpush1.bf16.msra.mxu0 %v2652
  %8363 = vmatprep.subr.bf16.mxu0 %v2661
  %8364 = vmatpush1.bf16.msra.mxu0 %v2660
  %8365 = vmatprep.subr.bf16.mxu0 %v2669
  %8366 = vmatpush1.bf16.msra.mxu0 %v2668
  %8367 = vmatprep.subr.bf16.mxu0 %v2677
  %8368 = vmatpush1.bf16.msra.mxu0 %v2676
  %8369 = vmatprep.subr.bf16.mxu0 %v2685
  %8370 = vmatpush1.bf16.msra.mxu0 %v2684
  %8371 = vmatprep.subr.bf16.mxu0 %v2693
  %8372 = vmatpush1.bf16.msra.mxu0 %v2692
  %8373 = vmatprep.subr.bf16.mxu0 %v2701
  %8374 = vmatpush1.bf16.msra.mxu0 %v2700
  %8375 = vmatprep.subr.bf16.mxu0 %v2709
  %8376 = vmatpush1.bf16.msra.mxu0 %v2708
  %8377 = vmatprep.subr.bf16.mxu0 %v2717
  %8378 = vmatpush1.bf16.msra.mxu0 %v2716
  %8379 = vmatprep.subr.bf16.mxu0 %v2725
  %8380 = vmatpush1.bf16.msra.mxu0 %v2724
  %8381 = vmatprep.subr.bf16.mxu0 %v2733
  %8382 = vmatpush1.bf16.msra.mxu0 %v2732
  %8383 = vmatprep.subr.bf16.mxu0 %v2741
  %8384 = vmatpush1.bf16.msra.mxu0 %v2740
  %8385 = vmatprep.subr.bf16.mxu0 %v2749
  %8386 = vmatpush1.bf16.msra.mxu0 %v2748
  %8387 = vmatprep.subr.bf16.mxu0 %v2757
  %8388 = vmatpush1.bf16.msra.mxu0 %v2756
  %8389 = vmatprep.mubr.bf16.mxu0 %v7787
  %8390 = vmatmul.mubr.bf16.gmra.mrb[0].mxu0 %v7786
  %v8391 = vpop.f32.mrb[0].mxu0
  %v8392 = vadd.f32 %v8220, %v8391
  %v8393 = vpop.f32.mrb[0].mxu0
  %v8394 = vadd.f32 %v8222, %v8393
  %v8395 = vpop.f32.mrb[0].mxu0
  %v8396 = vadd.f32 %v8224, %v8395
  %v8397 = vpop.f32.mrb[0].mxu0
  %v8398 = vadd.f32 %v8226, %v8397
  %8399 = vdwg.mxu0
  %8400 = vmatprep.subr.bf16.mxu0 %v2639
  %8401 = vmatpush1.bf16.msra.mxu0 %v2638
  %8402 = vmatprep.subr.bf16.mxu0 %v2647
  %8403 = vmatpush1.bf16.msra.mxu0 %v2646
  %8404 = vmatprep.subr.bf16.mxu0 %v2655
  %8405 = vmatpush1.bf16.msra.mxu0 %v2654
  %8406 = vmatprep.subr.bf16.mxu0 %v2663
  %8407 = vmatpush1.bf16.msra.mxu0 %v2662
  %8408 = vmatprep.subr.bf16.mxu0 %v2671
  %8409 = vmatpush1.bf16.msra.mxu0 %v2670
  %8410 = vmatprep.subr.bf16.mxu0 %v2679
  %8411 = vmatpush1.bf16.msra.mxu0 %v2678
  %8412 = vmatprep.subr.bf16.mxu0 %v2687
  %8413 = vmatpush1.bf16.msra.mxu0 %v2686
  %8414 = vmatprep.subr.bf16.mxu0 %v2695
  %8415 = vmatpush1.bf16.msra.mxu0 %v2694
  %8416 = vmatprep.subr.bf16.mxu0 %v2703
  %8417 = vmatpush1.bf16.msra.mxu0 %v2702
  %8418 = vmatprep.subr.bf16.mxu0 %v2711
  %8419 = vmatpush1.bf16.msra.mxu0 %v2710
  %8420 = vmatprep.subr.bf16.mxu0 %v2719
  %8421 = vmatpush1.bf16.msra.mxu0 %v2718
  %8422 = vmatprep.subr.bf16.mxu0 %v2727
  %8423 = vmatpush1.bf16.msra.mxu0 %v2726
  %8424 = vmatprep.subr.bf16.mxu0 %v2735
  %8425 = vmatpush1.bf16.msra.mxu0 %v2734
  %8426 = vmatprep.subr.bf16.mxu0 %v2743
  %8427 = vmatpush1.bf16.msra.mxu0 %v2742
  %8428 = vmatprep.subr.bf16.mxu0 %v2751
  %8429 = vmatpush1.bf16.msra.mxu0 %v2750
  %8430 = vmatprep.subr.bf16.mxu0 %v2759
  %8431 = vmatpush1.bf16.msra.mxu0 %v2758
  %8432 = vmatprep.mubr.bf16.mxu0 %v7787
  %8433 = vmatmul.mubr.bf16.gmra.mrb[0].mxu0 %v7786
  %v8434 = vpop.f32.mrb[0].mxu0
  %v8435 = vadd.f32 %v8263, %v8434
  %v8436 = vpop.f32.mrb[0].mxu0
  %v8437 = vadd.f32 %v8265, %v8436
  %v8438 = vpop.f32.mrb[0].mxu0
  %v8439 = vadd.f32 %v8267, %v8438
  %v8440 = vpop.f32.mrb[0].mxu0
  %v8441 = vadd.f32 %v8269, %v8440
  %8442 = vdwg.mxu0
  %v8443 = vadd.f32 %v8306, %v45
  %v8444 = vadd.f32 %v8308, %v49
  %v8445 = vadd.f32 %v8349, %v53
  %v8446 = vadd.f32 %v8351, %v57
  %v8447 = vadd.f32 %v8392, %v61
  %v8448 = vadd.f32 %v8394, %v65
  %v8449 = vadd.f32 %v8435, %v69
  %v8450 = vadd.f32 %v8437, %v73
  %v8451 = vadd.f32 %v8310, %v45
  %v8452 = vadd.f32 %v8312, %v49
  %v8453 = vadd.f32 %v8353, %v53
  %v8454 = vadd.f32 %v8355, %v57
  %v8455 = vadd.f32 %v8396, %v61
  %v8456 = vadd.f32 %v8398, %v65
  %v8457 = vadd.f32 %v8439, %v69
  %v8458 = vadd.f32 %v8441, %v73
  %v8459 = vxor.u32 %v8443, 2147483648
  %v8460 = vxor.u32 %v8444, 2147483648
  %v8461 = vxor.u32 %v8451, 2147483648
  %v8462 = vxor.u32 %v8452, 2147483648
  %v8463 = vmul.f32 %v8459, 1.442695
  %v8464 = vpow.pop %v8463
  %v8465 = vmul.f32 %v8460, 1.442695
  %v8466 = vpow.pop %v8465
  %v8467 = vmul.f32 %v8461, 1.442695
  %v8468 = vpow.pop %v8467
  %v8469 = vmul.f32 %v8462, 1.442695
  %v8470 = vpow.pop %v8469
  %v8471 = vadd.f32 %v8464, 1.0
  %v8472 = vadd.f32 %v8466, 1.0
  %v8473 = vadd.f32 %v8468, 1.0
  %v8474 = vadd.f32 %v8470, 1.0
  %v8475 = vrcp.pop %v8471
  %v8476 = vmul.f32 1.0, %v8475
  %v8477 = vrcp.pop %v8472
  %v8478 = vmul.f32 1.0, %v8477
  %v8479 = vrcp.pop %v8473
  %v8480 = vmul.f32 1.0, %v8479
  %v8481 = vrcp.pop %v8474
  %v8482 = vmul.f32 1.0, %v8481
  %v8483 = vxor.u32 %v8445, 2147483648
  %v8484 = vxor.u32 %v8446, 2147483648
  %v8485 = vxor.u32 %v8453, 2147483648
  %v8486 = vxor.u32 %v8454, 2147483648
  %v8487 = vmul.f32 %v8483, 1.442695
  %v8488 = vpow.pop %v8487
  %v8489 = vmul.f32 %v8484, 1.442695
  %v8490 = vpow.pop %v8489
  %v8491 = vmul.f32 %v8485, 1.442695
  %v8492 = vpow.pop %v8491
  %v8493 = vmul.f32 %v8486, 1.442695
  %v8494 = vpow.pop %v8493
  %v8495 = vadd.f32 %v8488, 1.0
  %v8496 = vadd.f32 %v8490, 1.0
  %v8497 = vadd.f32 %v8492, 1.0
  %v8498 = vadd.f32 %v8494, 1.0
  %v8499 = vrcp.pop %v8495
  %v8500 = vmul.f32 1.0, %v8499
  %v8501 = vrcp.pop %v8496
  %v8502 = vmul.f32 1.0, %v8501
  %v8503 = vrcp.pop %v8497
  %v8504 = vmul.f32 1.0, %v8503
  %v8505 = vrcp.pop %v8498
  %v8506 = vmul.f32 1.0, %v8505
  %v8507 = vtanh.pop %v8447
  %v8508 = vtanh.pop %v8448
  %v8509 = vtanh.pop %v8455
  %v8510 = vtanh.pop %v8456
  %v8511 = vxor.u32 %v8449, 2147483648
  %v8512 = vxor.u32 %v8450, 2147483648
  %v8513 = vxor.u32 %v8457, 2147483648
  %v8514 = vxor.u32 %v8458, 2147483648
  %v8515 = vmul.f32 %v8511, 1.442695
  %v8516 = vpow.pop %v8515
  %v8517 = vmul.f32 %v8512, 1.442695
  %v8518 = vpow.pop %v8517
  %v8519 = vmul.f32 %v8513, 1.442695
  %v8520 = vpow.pop %v8519
  %v8521 = vmul.f32 %v8514, 1.442695
  %v8522 = vpow.pop %v8521
  %v8523 = vadd.f32 %v8516, 1.0
  %v8524 = vadd.f32 %v8518, 1.0
  %v8525 = vadd.f32 %v8520, 1.0
  %v8526 = vadd.f32 %v8522, 1.0
  %v8527 = vrcp.pop %v8523
  %v8528 = vmul.f32 1.0, %v8527
  %v8529 = vrcp.pop %v8524
  %v8530 = vmul.f32 1.0, %v8529
  %v8531 = vrcp.pop %v8525
  %v8532 = vmul.f32 1.0, %v8531
  %v8533 = vrcp.pop %v8526
  %v8534 = vmul.f32 1.0, %v8533
  %v8535 = vmul.f32 %v8500, %v7774
  %v8536 = vmul.f32 %v8502, %v7775
  %v8537 = vmul.f32 %v8504, %v7776
  %v8538 = vmul.f32 %v8506, %v7777
  %v8539 = vmul.f32 %v8476, %v8507
  %v8540 = vmul.f32 %v8478, %v8508
  %v8541 = vmul.f32 %v8480, %v8509
  %v8542 = vmul.f32 %v8482, %v8510
  %v8543 = vadd.f32 %v8535, %v8539
  %v8544 = vadd.f32 %v8536, %v8540
  %v8545 = vadd.f32 %v8537, %v8541
  %v8546 = vadd.f32 %v8538, %v8542
  %v8547 = vtanh.pop %v8543
  %v8548 = vtanh.pop %v8544
  %v8549 = vtanh.pop %v8545
  %v8550 = vtanh.pop %v8546
  %v8551 = vmul.f32 %v8528, %v8547
  %v8552 = vmul.f32 %v8530, %v8548
  %v8553 = vmul.f32 %v8532, %v8549
  %v8554 = vmul.f32 %v8534, %v8550
  %8555 = vst [vmem:[#allocation2] sm:$0xff] %v8093
  %8556 = vst [vmem:[#allocation2 + $0x8] sm:$0xff] %v8094
  %8557 = vst [vmem:[#allocation2 + $0x10] sm:$0xff] %v8095
  %8558 = vst [vmem:[#allocation2 + $0x18] sm:$0xff] %v8096
  %8559 = vst [vmem:[#allocation3] sm:$0xff] %v8085
  %8560 = vst [vmem:[#allocation3 + $0x8] sm:$0xff] %v8086
  %8561 = vst [vmem:[#allocation3 + $0x10] sm:$0xff] %v8087
  %8562 = vst [vmem:[#allocation3 + $0x18] sm:$0xff] %v8088
  %8563 = vst [vmem:[#allocation4] sm:$0xff] %v8551
  %8564 = vst [vmem:[#allocation4 + $0x8] sm:$0xff] %v8552
  %8565 = vst [vmem:[#allocation4 + $0x10] sm:$0xff] %v8553
  %8566 = vst [vmem:[#allocation4 + $0x18] sm:$0xff] %v8554
  %8567 = vst [vmem:[#allocation5] sm:$0xff] %v8543
  %8568 = vst [vmem:[#allocation5 + $0x8] sm:$0xff] %v8544
  %8569 = vst [vmem:[#allocation5 + $0x10] sm:$0xff] %v8545
  %8570 = vst [vmem:[#allocation5 + $0x18] sm:$0xff] %v8546
  // Predicated region
  $region26: #{rnn_forward.1} parent=0 // pred_check
    %p8571 = pneg %p20
  $region27: #{rnn_forward.1} parent=0 // pred_check_branch
    %8573 = sbr.rel (%p8571) target = $region29
  $region28: #{rnn_forward.1} parent=0 // pred_region
    %8574 = vst [vmem:[%s5] sm:$0xff] %v8551
    %8575 = vst [vmem:[%s5 + $0x8] sm:$0xff] %v8552
    %8576 = vst [vmem:[%s5 + $0x10] sm:$0xff] %v8553
    %8577 = vst [vmem:[%s5 + $0x18] sm:$0xff] %v8554
  $region29: #{rnn_forward.1} parent=0 // pred_fallthru
    _
  // Predicated region
  $region30: #{rnn_forward.1} parent=0 // pred_check
    _
  $region31: #{rnn_forward.1} parent=0 // pred_check_branch
    %8579 = sbr.rel (0) target = $region33
  $region32: #{rnn_forward.1} parent=0 // pred_region
    _
  $region33: #{rnn_forward.1} parent=0 // pred_fallthru
    _
  // Predicated region
  $region34: #{rnn_forward.1} parent=0 // pred_check
    _
  $region35: #{rnn_forward.1} parent=0 // pred_check_branch
    %8581 = sbr.rel (0) target = $region37
  $region36: #{rnn_forward.1} parent=0 // pred_region
    _
  $region37: #{rnn_forward.1} parent=0 // pred_fallthru
    _

</llo_original>
